<compile_context>
chip_gen: v6e
topology: v6e:2x2x1
jax: 0.10.0
libtpu: 0.0.40
codegen_flags: <defaults>
</compile_context>

<pallas_src>
import functools

import jax
import jax.numpy as jnp
from jax.experimental import pallas as pl
from jax.experimental.pallas import tpu as pltpu

_EPS = 1e-5          # PyTorch BatchNorm1d default eps
_LANES = 128
_NUM_CORES = 2       # v7x TensorCores per chip; harmless on 1-TC v5e/v6e


# --------------------------------------------------------------------------
# Stage 1: streaming spatial-sum kernel (memory-bound on the feature stream)
# --------------------------------------------------------------------------
def _pool_kernel(feat_ref, out_ref, acc_ref, *, s_total):
    """Streaming global-avg-pool partial sums with lane-preserving accumulation."""
    p = pl.program_id(0)                 # parallel S partition (TensorCore)
    si = pl.program_id(2)                # S-tile index within the partition
    tiles_per_part = pl.num_programs(2)
    _, _, ts = feat_ref.shape

    @pl.when(si == 0)
    def _init():
        acc_ref[...] = jnp.zeros_like(acc_ref)

    block_start = (p * tiles_per_part + si) * ts      # raw (un-clamped) offset

    @pl.when(block_start < s_total)                   # skip clamped duplicates
    def _accumulate():
        # Mask the ragged spatial tail (zeros do not change the sum).
        lane = jax.lax.broadcasted_iota(jnp.int32, (1, 1, ts), 2)
        mask = (block_start + lane) < s_total
        x = jnp.where(mask, feat_ref[...].astype(jnp.float32), 0.0)

        # Lane-preserving partial sum: aligned 128-lane slices, pure VPU adds
        # (no per-block XLU cross-lane reduce, no layout change).
        nfull, rem = divmod(ts, _LANES)
        if nfull:
            part = x[:, :, 0:_LANES]
            for k in range(1, nfull):
                part = part + x[:, :, k * _LANES:(k + 1) * _LANES]
            acc_ref[...] += part
            if rem:                                   # not hit with current tiling
                acc_ref[:, :, :rem] += x[:, :, nfull * _LANES:]
        else:                                         # tiny S (< 128): ts == S
            acc_ref[:, :, :ts] += x

    @pl.when(si == tiles_per_part - 1)
    def _finalize():
        # Single cross-lane reduce per partial — XLU used once, off the hot loop.
        out_ref[...] = jnp.sum(acc_ref[...], axis=-1)[None].astype(out_ref.dtype)


# --------------------------------------------------------------------------
# Stage 2: tiny fused MLP / BN(folded) / ReLU / softmax head (one-shot)
# --------------------------------------------------------------------------
def _head_kernel(part_ref, w1_ref, b1_ref, w2_ref, out_ref, *, inv_s):
    # AdaptiveAvgPool3d(1) + Flatten: finish the mean from the per-core partials.
    pooled = jnp.sum(part_ref[...], axis=0) * inv_s                 # (N, C)

    # out_linear1 (+ folded out_bn1) -> ReLU.
    h1 = jnp.dot(pooled, w1_ref[...],
                 preferred_element_type=jnp.float32) + b1_ref[...]
    h1 = jnp.maximum(h1, 0.0)

    # out_linear2 (+ folded out_bn2 scale).  The Linear2 bias / BN2 shift is
    # omitted: Softmax over dim=0 is invariant to a per-column constant.
    h2 = jnp.dot(h1, w2_ref[...], preferred_element_type=jnp.float32)

    # dropout: identity in eval mode.  classifier: Softmax over dim=0 (batch).
    m = jnp.max(h2, axis=0, keepdims=True)
    e = jnp.exp(h2 - m)
    out_ref[...] = (e / jnp.sum(e, axis=0, keepdims=True)).astype(out_ref.dtype)


def _choose_tiles(n, c, s, itemsize, max_block_bytes=8 << 20):
    """Pick (tn, ts) for the streamed (tn, c, ts) feature block."""
    if s < _LANES:
        ts = s                                   # single full-extent lane block
    else:
        s_floor = (s // _LANES) * _LANES         # every block start stays in-bounds
        for cand in (2048, 1024, 512):
            if cand <= s_floor and n * c * cand * itemsize <= max_block_bytes:
                ts = cand
                break
        else:
            ts = min(512, s_floor)               # keep the stream wide; tile N instead
    if n * c * ts * itemsize <= max_block_bytes:
        tn = n
    else:
        # Sublane-aligned batch tile (multiple of 8 keeps the output BlockSpec legal).
        tn = max(8, int(max_block_bytes // (c * ts * itemsize)) // 8 * 8)
        tn = min(tn, n)
    return tn, ts


def medicalnet_out_layer(feat_ncdhw, params):
    """Apply the MedicalNetClassifier output block to backbone features.

    feat_ncdhw: (N, 512, D, H, W) backbone feature map (native NCDHW, f32/bf16).
    Returns: (N, 1) float32 — softmax over the batch dimension.
    """
    n, c, d, h, w = feat_ncdhw.shape
    s = d * h * w
    # NCDHW -> (N, C, S): contiguous reshape only, no transpose / extra HBM pass.
    feat = feat_ncdhw.reshape(n, c, s)
    itemsize = jnp.dtype(feat.dtype).itemsize

    # Fold eval-mode BatchNorm1d into the Linear layers (exact math):
    #   y = (x@W + b)*g/sqrt(v+eps) + (beta - m*g/sqrt(v+eps))
    inv1 = 1.0 / jnp.sqrt(params["v1"] + _EPS)
    s1 = params["g1"] * inv1
    t1 = params["bt1"] - params["m1"] * s1
    w1 = (params["w1"] * s1[None, :]).astype(jnp.float32)        # (512, 256)
    b1 = (params["b1"] * s1 + t1).reshape(1, -1).astype(jnp.float32)

    inv2 = 1.0 / jnp.sqrt(params["v2"] + _EPS)
    s2 = params["g2"] * inv2
    w2 = (params["w2"] * s2[None, :]).astype(jnp.float32)        # (256, 1)
    # (Linear2 bias + BN2 shift dropped: additive constants cancel in Softmax(dim=0).)

    # ---- Stage 1: streaming partial spatial sums --------------------------
    tn, ts = _choose_tiles(n, c, s, itemsize)
    num_s_blocks = pl.cdiv(s, ts)
    tiles_per_part = pl.cdiv(num_s_blocks, _NUM_CORES)
    last_block = num_s_blocks - 1
    n_tiles = pl.cdiv(n, tn)
    grid = (_NUM_CORES, n_tiles, tiles_per_part)

    blk_bytes = tn * c * ts * itemsize
    acc_bytes = tn * c * _LANES * 4
    vmem_need = 2 * blk_bytes + acc_bytes + 2 * tn * c * 4 + (4 << 20)
    vmem_limit = int(min(48 << 20, max(32 << 20, vmem_need)))    # v7x-safe cap

    cost = pl.CostEstimate(
        flops=int(n * c * s),
        transcendentals=0,
        bytes_accessed=int(feat.size * itemsize + _NUM_CORES * n * c * 4),
    )

    def _feat_index(p, ni, si):
        # Contiguous S range per parallel part; clamp keeps every DMA in-bounds
        # (the kernel skips clamped duplicate blocks via pl.when).
        return (ni, 0, jnp.minimum(p * tiles_per_part + si, last_block))

    partials = pl.pallas_call(
        functools.partial(_pool_kernel, s_total=s),
        out_shape=jax.ShapeDtypeStruct((_NUM_CORES, n, c), jnp.float32),
        grid_spec=pltpu.PrefetchScalarGridSpec(
            num_scalar_prefetch=0,
            grid=grid,
            in_specs=[pl.BlockSpec((tn, c, ts), _feat_index)],
            out_specs=pl.BlockSpec((1, tn, c), lambda p, ni, si: (p, ni, 0)),
            scratch_shapes=[pltpu.VMEM((tn, c, _LANES), jnp.float32)],
        ),
        compiler_params=pltpu.CompilerParams(
            dimension_semantics=("parallel", "parallel", "arbitrary"),
            vmem_limit_bytes=vmem_limit,
        ),
        cost_estimate=cost,
    )(feat)

    # ---- Stage 2: combine partials + fused head (all operands fit VMEM) ----
    out = pl.pallas_call(
        functools.partial(_head_kernel, inv_s=float(1.0 / s)),
        out_shape=jax.ShapeDtypeStruct((n, 1), jnp.float32),
    )(partials, w1, b1, w2)
    return out


def init_params(key, in_dim=512, hidden=256):
    """Deterministic parameter init (shapes match nn.Linear / nn.BatchNorm1d)."""
    k = jax.random.split(key, 6)
    lim1 = 1.0 / jnp.sqrt(jnp.float32(in_dim))
    lim2 = 1.0 / jnp.sqrt(jnp.float32(hidden))
    return {
        # out_linear1: Linear(512, 256)  (w stored transposed: (in, out))
        "w1": jax.random.uniform(k[0], (in_dim, hidden), jnp.float32, -lim1, lim1),
        "b1": jax.random.uniform(k[1], (hidden,), jnp.float32, -lim1, lim1),
        # out_bn1: BatchNorm1d(256) — eval-mode running stats
        "g1": jnp.ones((hidden,), jnp.float32),
        "bt1": jnp.zeros((hidden,), jnp.float32),
        "m1": 0.1 * jax.random.normal(k[2], (hidden,), jnp.float32),
        "v1": 0.5 + jax.random.uniform(k[3], (hidden,), jnp.float32),
        # out_linear2: Linear(256, 1)
        "w2": jax.random.uniform(k[4], (hidden, 1), jnp.float32, -lim2, lim2),
        "b2": jax.random.uniform(k[5], (1,), jnp.float32, -lim2, lim2),
        # out_bn2: BatchNorm1d(1)
        "g2": jnp.ones((1,), jnp.float32),
        "bt2": jnp.zeros((1,), jnp.float32),
        "m2": jnp.zeros((1,), jnp.float32),
        "v2": jnp.ones((1,), jnp.float32),
    }


def _reference(feat_ncdhw, params):
    """Pure-JAX reference of the output block (eval mode, full BN2 incl. shift)."""
    n, c = feat_ncdhw.shape[:2]
    pooled = jnp.mean(feat_ncdhw.reshape(n, c, -1), axis=-1)
    h1 = pooled @ params["w1"] + params["b1"]
    h1 = (h1 - params["m1"]) / jnp.sqrt(params["v1"] + _EPS) * params["g1"] + params["bt1"]
    h1 = jnp.maximum(h1, 0.0)
    h2 = h1 @ params["w2"] + params["b2"]
    h2 = (h2 - params["m2"]) / jnp.sqrt(params["v2"] + _EPS) * params["g2"] + params["bt2"]
    return jax.nn.softmax(h2, axis=0)


if __name__ == "__main__":
    key = jax.random.PRNGKey(0)
    k_feat, k_par = jax.random.split(key)

    # Small, shape-consistent backbone feature map: (N=2, C=512, D=7, H=7, W=7)
    # -> S = 343 (not a multiple of 128), exercising the 2-way parallel S split,
    # the ragged-tail masking and the lane-preserving accumulation path.
    feat = jax.random.normal(k_feat, (2, 512, 7, 7, 7), jnp.float32)
    params = init_params(k_par)

    out = jax.block_until_ready(medicalnet_out_layer(feat, params))
    ref = jax.block_until_ready(_reference(feat, params))

    assert out.shape == (2, 1) and out.dtype == jnp.float32
    assert bool(jnp.all(jnp.isfinite(out)))
    # Softmax over dim=0 ⇒ the single output column sums to 1 over the batch.
    assert bool(jnp.allclose(jnp.sum(out, axis=0), 1.0, atol=1e-5))
    assert bool(jnp.allclose(out, ref, atol=1e-5, rtol=1e-5))
    print("KERNEL_OK")
</pallas_src>

<mosaic_0001>
module attributes {stable_mosaic.version = 11 : i64} {
  func.func @_pool_kernel(%arg0: i32, %arg1: i32, %arg2: i32, %arg3: memref<2x512x256xf32, #tpu.memory_space<vmem>>, %arg4: memref<1x2x512xf32, #tpu.memory_space<vmem>>, %arg5: memref<2x512x128xf32, #tpu.memory_space<vmem>>) attributes {dimension_semantics = [#tpu.dimension_semantics<parallel>, #tpu.dimension_semantics<parallel>, #tpu.dimension_semantics<arbitrary>], iteration_bounds = array<i64: 2, 1, 1>, scalar_prefetch = 0 : i64, scratch_operands = 1 : i64, tpu.core_type = #tpu.core_type<tc>, window_params = [{transform_indices = @transform_0, window_bounds = array<i64: 2, 512, 256>}, {transform_indices = @transform_1, window_bounds = array<i64: 1, 2, 512>}]} {
    %c0_i32 = arith.constant 0 : i32
    %0 = arith.cmpi eq, %arg2, %c0_i32 : i32
    %1 = arith.extui %0 : i1 to i32
    %c0_i32_0 = arith.constant 0 : i32
    %2 = arith.cmpi ne, %1, %c0_i32_0 : i32
    scf.if %2 {
      %cst = arith.constant 0.000000e+00 : f32
      %12 = vector.broadcast %cst : f32 to vector<2x512x128xf32>
      %c0 = arith.constant 0 : index
      %c0_4 = arith.constant 0 : index
      %c0_5 = arith.constant 0 : index
      %13 = vector.load %arg5[%c0, %c0_4, %c0_5] : memref<2x512x128xf32, #tpu.memory_space<vmem>>, vector<2x512x128xf32>
      tpu.vector_store %arg5[%c0, %c0_4, %c0_5], %12 {strides = array<i32>} : memref<2x512x128xf32, #tpu.memory_space<vmem>>, vector<2x512x128xf32>,
    } else {
    }
    %c1_i32 = arith.constant 1 : i32
    %3 = arith.muli %arg0, %c1_i32 : i32
    %4 = arith.addi %3, %arg2 : i32
    %c256_i32 = arith.constant 256 : i32
    %5 = arith.muli %4, %c256_i32 : i32
    %c343_i32 = arith.constant 343 : i32
    %6 = arith.cmpi slt, %5, %c343_i32 : i32
    %7 = arith.extui %6 : i1 to i32
    %c0_i32_1 = arith.constant 0 : i32
    %8 = arith.cmpi ne, %7, %c0_i32_1 : i32
    scf.if %8 {
      %12 = tpu.iota {dimensions = array<i32: 2>} : vector<1x1x256xi32>
      %13 = vector.broadcast %5 : i32 to vector<1x1x256xi32>
      %14 = arith.addi %13, %12 : vector<1x1x256xi32>
      %c343_i32_4 = arith.constant 343 : i32
      %15 = vector.broadcast %c343_i32_4 : i32 to vector<1x1x256xi32>
      %16 = arith.cmpi slt, %14, %15 : vector<1x1x256xi32>
      %c0 = arith.constant 0 : index
      %c0_5 = arith.constant 0 : index
      %c0_6 = arith.constant 0 : index
      %17 = vector.load %arg3[%c0, %c0_5, %c0_6] : memref<2x512x256xf32, #tpu.memory_space<vmem>>, vector<2x512x256xf32>
      %cst = arith.constant 0.000000e+00 : f32
      %18 = vector.shape_cast %16 : vector<1x1x256xi1> to vector<1x1x256xi1>
      %19 = vector.broadcast %18 : vector<1x1x256xi1> to vector<2x512x256xi1>
      %20 = vector.broadcast %cst : f32 to vector<2x512x256xf32>
      %21 = arith.select %19, %17, %20 : vector<2x512x256xi1>, vector<2x512x256xf32>
      %22 = vector.extract_strided_slice %21 {offsets = [0, 0, 0], sizes = [2, 512, 128], strides = [1, 1, 1]} : vector<2x512x256xf32> to vector<2x512x128xf32>
      %23 = vector.extract_strided_slice %21 {offsets = [0, 0, 128], sizes = [2, 512, 128], strides = [1, 1, 1]} : vector<2x512x256xf32> to vector<2x512x128xf32>
      %24 = arith.addf %22, %23 : vector<2x512x128xf32>
      %c0_7 = arith.constant 0 : index
      %c0_8 = arith.constant 0 : index
      %c0_9 = arith.constant 0 : index
      %25 = vector.load %arg5[%c0_7, %c0_8, %c0_9] : memref<2x512x128xf32, #tpu.memory_space<vmem>>, vector<2x512x128xf32>
      %26 = arith.addf %25, %24 : vector<2x512x128xf32>
      %c0_10 = arith.constant 0 : index
      %c0_11 = arith.constant 0 : index
      %c0_12 = arith.constant 0 : index
      %27 = vector.load %arg5[%c0_10, %c0_11, %c0_12] : memref<2x512x128xf32, #tpu.memory_space<vmem>>, vector<2x512x128xf32>
      tpu.vector_store %arg5[%c0_10, %c0_11, %c0_12], %26 {strides = array<i32>} : memref<2x512x128xf32, #tpu.memory_space<vmem>>, vector<2x512x128xf32>,
    } else {
    }
    %c0_i32_2 = arith.constant 0 : i32
    %9 = arith.cmpi eq, %arg2, %c0_i32_2 : i32
    %10 = arith.extui %9 : i1 to i32
    %c0_i32_3 = arith.constant 0 : i32
    %11 = arith.cmpi ne, %10, %c0_i32_3 : i32
    scf.if %11 {
      %c0 = arith.constant 0 : index
      %c0_4 = arith.constant 0 : index
      %c0_5 = arith.constant 0 : index
      %12 = vector.load %arg5[%c0, %c0_4, %c0_5] : memref<2x512x128xf32, #tpu.memory_space<vmem>>, vector<2x512x128xf32>
      %cst = arith.constant dense<0.000000e+00> : vector<2x512xf32>
      %13 = vector.multi_reduction <add>, %12, %cst [2] : vector<2x512x128xf32> to vector<2x512xf32>
      %14 = vector.shape_cast %13 : vector<2x512xf32> to vector<1x2x512xf32>
      %c0_6 = arith.constant 0 : index
      %c0_7 = arith.constant 0 : index
      %c0_8 = arith.constant 0 : index
      %15 = vector.load %arg4[%c0_6, %c0_7, %c0_8] : memref<1x2x512xf32, #tpu.memory_space<vmem>>, vector<1x2x512xf32>
      tpu.vector_store %arg4[%c0_6, %c0_7, %c0_8], %14 {strides = array<i32>} : memref<1x2x512xf32, #tpu.memory_space<vmem>>, vector<1x2x512xf32>,
    } else {
    }
    return
  }
  func.func @transform_0(%arg0: i32, %arg1: i32, %arg2: i32) -> (i32, i32, i32) {
    %c1_i32 = arith.constant 1 : i32
    %0 = arith.muli %arg0, %c1_i32 : i32
    %1 = arith.addi %0, %arg2 : i32
    %c1_i32_0 = arith.constant 1 : i32
    %2 = arith.minsi %1, %c1_i32_0 : i32
    %c0_i32 = arith.constant 0 : i32
    %c0_i32_1 = arith.constant 0 : i32
    return %arg1, %c0_i32, %2 : i32, i32, i32
  }
  func.func @transform_1(%arg0: i32, %arg1: i32, %arg2: i32) -> (i32, i32, i32) {
    %c0_i32 = arith.constant 0 : i32
    %c0_i32_0 = arith.constant 0 : i32
    return %arg0, %arg1, %c0_i32 : i32, i32, i32
  }
}

</mosaic_0001>

<llo_original>
// kernel: tpu_custom_call.1
$region0: #{tpu_custom_call.1}
  #allocation0 [shape = 'u32[]', space=smem, size = 0x4, offset = 0x4, fixed_abs, tag = 'smem constant byte address 0x4 - core index']
  #allocation1 [shape = 'u32[144,128]{1,0:T(1,128)}', space=vmem, size = 0x12000, scoped, tag = 'internal scratch']
  #allocation2 [shape = 'f32[2,512,128]{2,1,0:T(8,128)}', space=vmem, size = 0x80000, scoped, tag = 'scratch operand']
  %s0 = inlined_call_operand.vmem [shape: f32[2,512,343], index: 0, kind: input, shape index: {}]
  %s1 = inlined_call_operand.hbm [shape: f32[2,2,512], index: 1, kind: output, shape index: {}]
  %s2 = sld [smem:[#allocation0]]
  $region101: #{tpu_custom_call.1} parent=0
    _
  %s4 = ssub.s32 1, %s2
  %s5 = scalar_select 0, %s4, %s2
  $region1: #{tpu_custom_call.1} parent=0
    #allocation3 [shape = 'u8[2097152]{0}', space=vmem, size = 0x200000, scoped, tag = 'input window, operand 0']
    #allocation4 [shape = 'u8[8192]{0}', space=vmem, size = 0x2000, scoped, tag = 'output window, operand 0']
    #allocation5 [shape = 's32[2]{0}', space=sflag, size = 0x8, scoped, tag = 'scoped memory for tpu_custom_call.1']
    %6 = vsyncpa [#allocation5], 0
    %s7 = scalar_lea.sflag [#allocation5], 1
    %8 = vsyncpa %s7, 0
    loop: start=0, step=1, limit=4
    $region2: #{tpu_custom_call.1} parent=1 // loop_pre_header
      _
    $region3: #{tpu_custom_call.1} parent=1 // loop_header
      %s10 = sphi 0, %s14
      %p11 = scmp.ge.s32.totalorder %s10, 4
      %s17 = sphi 0, %s36
      %s18 = sphi 0, %s32
      %s19 = sphi 0, %s28
      %s20 = sphi 0, %s17
      %s21 = sphi 0, %s18
      %s22 = sphi 0, %s19
      %s23 = sphi 0, %s20
      %s24 = sphi 0, %s21
      %s25 = sphi 0, %s22
      %s47 = sphi 0, %s49
      %s50 = sphi 0, %s47
      %s51 = sphi 0, %s50
      %s67 = sphi 0, %s51
      %s75 = sphi 0, %s77
      %s78 = sphi 0, %s75
      %s79 = sphi 0, %s78
      %s95 = sphi 0, %s79
    $region4: #{tpu_custom_call.1} parent=1 // loop_header_branch
      %13 = sbr.rel (%p11) target = $region8
    $region5: #{tpu_custom_call.1} parent=1 // loop_body
      %s15 = ssub.s32 %s10, 1
      %s16 = ssub.s32 %s10, 2
      %s26 = sadd.s32 1, %s19
      %p27 = scmp.ge.s32.totalorder %s26, 1
      %s28 = scalar_select %p27, 0, %s26
      %s29 = sadd.s32 1, %s18
      %s30 = scalar_select %p27, %s29, %s18
      %p31 = scmp.ge.s32.totalorder %s30, 1
      %s32 = scalar_select %p31, 0, %s30
      %s33 = sadd.s32 1, %s17
      %s34 = scalar_select %p31, %s33, %s17
      %p35 = scmp.ge.s32.totalorder %s34, 2
      %s36 = scalar_select %p35, 0, %s34
      %s37 = sadd.s32 %s17, %s19
      %p38 = scmp.lt.s32.totalorder %s37, 1
      %s39 = scalar_select %p38, %s37, 1
      %s40 = sadd.s32 %s36, %s28
      %p41 = scmp.lt.s32.totalorder %s40, 1
      %s42 = scalar_select %p41, %s40, 1
      %s43 = ssub.s32 %s18, %s32
      %s44 = ssub.s32 %s39, %s42
      %s45 = sor.u32 %s43, %s44
      %p46 = scmp.eq.s32.totalorder %s45, 0
      %s48 = sadd.s32 %s47, 1
      %s49 = scalar_select %p46, %s47, %s48
      %p52 = pneg %p46
      %p53 = scmp.eq.s32.totalorder %s10, 1
      %p54 = por %p52, %p53
      %p55 = scmp.ne.s32.totalorder %s47, %s50
      %p56 = scmp.eq.s32.totalorder %s10, 0
      %p57 = por %p55, %p56
      %p58 = scmp.ne.s32.totalorder %s47, %s50
      %p59 = scmp.eq.s32.totalorder %s15, 1
      %p60 = por %p58, %p59
      %p61 = scmp.ne.s32.totalorder %s50, %s51
      %p62 = scmp.eq.s32.totalorder %s15, 0
      %p63 = por %p61, %p62
      %p64 = scmp.ne.s32.totalorder %s50, %s51
      %p65 = scmp.eq.s32.totalorder %s16, 1
      %p66 = por %p64, %p65
      %p68 = scmp.ne.s32.totalorder %s51, %s67
      %p69 = scmp.eq.s32.totalorder %s16, 0
      %p70 = por %p68, %p69
      %s71 = ssub.s32 %s17, %s36
      %s72 = ssub.s32 %s18, %s32
      %s73 = sor.u32 %s71, %s72
      %p74 = scmp.eq.s32.totalorder %s73, 0
      %s76 = sadd.s32 %s75, 1
      %s77 = scalar_select %p74, %s75, %s76
      %p80 = pneg %p74
      %p81 = scmp.eq.s32.totalorder %s10, 1
      %p82 = por %p80, %p81
      %p83 = scmp.ne.s32.totalorder %s75, %s78
      %p84 = scmp.eq.s32.totalorder %s10, 0
      %p85 = por %p83, %p84
      %p86 = scmp.ne.s32.totalorder %s75, %s78
      %p87 = scmp.eq.s32.totalorder %s15, 1
      %p88 = por %p86, %p87
      %p89 = scmp.ne.s32.totalorder %s78, %s79
      %p90 = scmp.eq.s32.totalorder %s15, 0
      %p91 = por %p89, %p90
      %p92 = scmp.ne.s32.totalorder %s78, %s79
      %p93 = scmp.eq.s32.totalorder %s16, 1
      %p94 = por %p92, %p93
      %p96 = scmp.ne.s32.totalorder %s79, %s95
      %p97 = scmp.eq.s32.totalorder %s16, 0
      %p98 = por %p96, %p97
      %p99 = scmp.le.s32.totalorder 1, %s10
      %p100 = scmp.lt.s32.totalorder %s10, 3
      %p101 = pnand %p99, %p100
      %p102 = pneg %p101
      // Predicated region
      $region9: #{tpu_custom_call.1} parent=5 // pred_check
        _
      $region10: #{tpu_custom_call.1} parent=5 // pred_check_branch
        %104 = sbr.rel (%p101) target = $region12
      $region11: #{tpu_custom_call.1} parent=5 // pred_region
        %s105 = ssub.s32 %s10, 1
      $region12: #{tpu_custom_call.1} parent=5 // pred_fallthru
        _
      %p106 = scmp.lt.s32.totalorder %s10, 2
      // Predicated region
      $region13: #{tpu_custom_call.1} parent=5 // pred_check
        %p107 = pneg %p106
      $region14: #{tpu_custom_call.1} parent=5 // pred_check_branch
        %109 = sbr.rel (%p107) target = $region16
      $region15: #{tpu_custom_call.1} parent=5 // pred_region
        // Predicated region
        $region17: #{tpu_custom_call.1} parent=15 // pred_check
          %p110 = pneg %p57
        $region18: #{tpu_custom_call.1} parent=15 // pred_check_branch
          %112 = sbr.rel (%p110) target = $region20
        $region19: #{tpu_custom_call.1} parent=15 // pred_region
          %s113 = sand.u32 %s47, 1
          %s114 = sand.u32 %s47, 1
          %s115 = smul.addr %s114, 2048
          %s116 = scalar_lea.vmem [#allocation3], %s115
          %s117 = sadd.s32 %s17, %s19
          %p118 = scmp.lt.s32.totalorder %s117, 1
          %s119 = scalar_select %p118, %s117, 1
          %s120 = smul.u32 2, %s18
          %s121 = smul.u32 2, %s119
          %s122 = ssub.s32 3, %s121
          %p123 = scmp.lt.s32.totalorder %s122, 2
          %s124 = scalar_select %p123, %s122, 2
          %s125 = smul.u32 16384, %s124
          %p126 = scmp.ne.s32.totalorder 0, %s125
          %s127 = smul.addr %s120, 192
          %s128 = sadd.s32 %s121, %s127
          %s129 = smul.addr %s128, 8
          %s130 = scalar_lea.vmem %s0, %s129
          %s131 = smul.u32 %s124, 8
          // Predicated region
          $region21: #{tpu_custom_call.1} parent=19 // pred_check
            %p132 = pneg %p126
          $region22: #{tpu_custom_call.1} parent=19 // pred_check_branch
            %134 = sbr.rel (%p132) target = $region24
          $region23: #{tpu_custom_call.1} parent=19 // pred_region
            %p135 = scmp.lt.u32.totalorder %s131, 8
            %p136 = pneg %p135
            // Predicated region
            $region25: #{tpu_custom_call.1} parent=23 // pred_check
              _
            $region26: #{tpu_custom_call.1} parent=23 // pred_check_branch
              %138 = sbr.rel (%p135) target = $region28
            $region27: #{tpu_custom_call.1} parent=23 // pred_region
              %s408 = sand.u32 %s131, 7
              %p409 = scmp.eq.s32.totalorder %s408, 0
              // Predicated region
              $region40: #{tpu_custom_call.1} parent=27 // pred_check
                %p410 = pneg %p409
              $region41: #{tpu_custom_call.1} parent=27 // pred_check_branch
                %412 = sbr.rel (%p410) target = $region43
              $region42: #{tpu_custom_call.1} parent=27 // pred_region
                %s413 = sshrl.u32 %s131, 3
                // While loop
                $region44: #{tpu_custom_call.1} parent=42 // loop_pre_header
                  _
                $region45: #{tpu_custom_call.1} parent=42 // loop_header
                  %s417 = sphi 0, %s419
                  %p418 = scmp.ge.s32.totalorder %s417, %s413
                  %s422 = sphi 0, %s683
                  %s423 = sphi %s130, %s686
                  %s424 = sphi %s116, %s687
                $region46: #{tpu_custom_call.1} parent=42 // loop_header_branch
                  %421 = sbr.rel (%p418) target = $region50
                $region47: #{tpu_custom_call.1} parent=42 // loop_body
                  %v425 = vld [vmem:[%s423] sm:$0xff]
                  %426 = vst [vmem:[%s424] sm:$0xff] %v425
                  %v427 = vld [vmem:[%s423 + $0x18] sm:$0xff]
                  %428 = vst [vmem:[%s424 + $0x10] sm:$0xff] %v427
                  %v429 = vld [vmem:[%s423 + $0x30] sm:$0xff]
                  %430 = vst [vmem:[%s424 + $0x20] sm:$0xff] %v429
                  %v431 = vld [vmem:[%s423 + $0x48] sm:$0xff]
                  %432 = vst [vmem:[%s424 + $0x30] sm:$0xff] %v431
                  %v433 = vld [vmem:[%s423 + $0x60] sm:$0xff]
                  %434 = vst [vmem:[%s424 + $0x40] sm:$0xff] %v433
                  %v435 = vld [vmem:[%s423 + $0x78] sm:$0xff]
                  %436 = vst [vmem:[%s424 + $0x50] sm:$0xff] %v435
                  %v437 = vld [vmem:[%s423 + $0x90] sm:$0xff]
                  %438 = vst [vmem:[%s424 + $0x60] sm:$0xff] %v437
                  %v439 = vld [vmem:[%s423 + $0xa8] sm:$0xff]
                  %440 = vst [vmem:[%s424 + $0x70] sm:$0xff] %v439
                  %v441 = vld [vmem:[%s423 + $0xc0] sm:$0xff]
                  %442 = vst [vmem:[%s424 + $0x80] sm:$0xff] %v441
                  %v443 = vld [vmem:[%s423 + $0xd8] sm:$0xff]
                  %444 = vst [vmem:[%s424 + $0x90] sm:$0xff] %v443
                  %v445 = vld [vmem:[%s423 + $0xf0] sm:$0xff]
                  %446 = vst [vmem:[%s424 + $0xa0] sm:$0xff] %v445
                  %v447 = vld [vmem:[%s423 + $0x108] sm:$0xff]
                  %448 = vst [vmem:[%s424 + $0xb0] sm:$0xff] %v447
                  %v449 = vld [vmem:[%s423 + $0x120] sm:$0xff]
                  %450 = vst [vmem:[%s424 + $0xc0] sm:$0xff] %v449
                  %v451 = vld [vmem:[%s423 + $0x138] sm:$0xff]
                  %452 = vst [vmem:[%s424 + $0xd0] sm:$0xff] %v451
                  %v453 = vld [vmem:[%s423 + $0x150] sm:$0xff]
                  %454 = vst [vmem:[%s424 + $0xe0] sm:$0xff] %v453
                  %v455 = vld [vmem:[%s423 + $0x168] sm:$0xff]
                  %456 = vst [vmem:[%s424 + $0xf0] sm:$0xff] %v455
                  %v457 = vld [vmem:[%s423 + $0x180] sm:$0xff]
                  %458 = vst [vmem:[%s424 + $0x100] sm:$0xff] %v457
                  %v459 = vld [vmem:[%s423 + $0x198] sm:$0xff]
                  %460 = vst [vmem:[%s424 + $0x110] sm:$0xff] %v459
                  %v461 = vld [vmem:[%s423 + $0x1b0] sm:$0xff]
                  %462 = vst [vmem:[%s424 + $0x120] sm:$0xff] %v461
                  %v463 = vld [vmem:[%s423 + $0x1c8] sm:$0xff]
                  %464 = vst [vmem:[%s424 + $0x130] sm:$0xff] %v463
                  %v465 = vld [vmem:[%s423 + $0x1e0] sm:$0xff]
                  %466 = vst [vmem:[%s424 + $0x140] sm:$0xff] %v465
                  %v467 = vld [vmem:[%s423 + $0x1f8] sm:$0xff]
                  %468 = vst [vmem:[%s424 + $0x150] sm:$0xff] %v467
                  %v469 = vld [vmem:[%s423 + $0x210] sm:$0xff]
                  %470 = vst [vmem:[%s424 + $0x160] sm:$0xff] %v469
                  %v471 = vld [vmem:[%s423 + $0x228] sm:$0xff]
                  %472 = vst [vmem:[%s424 + $0x170] sm:$0xff] %v471
                  %v473 = vld [vmem:[%s423 + $0x240] sm:$0xff]
                  %474 = vst [vmem:[%s424 + $0x180] sm:$0xff] %v473
                  %v475 = vld [vmem:[%s423 + $0x258] sm:$0xff]
                  %476 = vst [vmem:[%s424 + $0x190] sm:$0xff] %v475
                  %v477 = vld [vmem:[%s423 + $0x270] sm:$0xff]
                  %478 = vst [vmem:[%s424 + $0x1a0] sm:$0xff] %v477
                  %v479 = vld [vmem:[%s423 + $0x288] sm:$0xff]
                  %480 = vst [vmem:[%s424 + $0x1b0] sm:$0xff] %v479
                  %v481 = vld [vmem:[%s423 + $0x2a0] sm:$0xff]
                  %482 = vst [vmem:[%s424 + $0x1c0] sm:$0xff] %v481
                  %v483 = vld [vmem:[%s423 + $0x2b8] sm:$0xff]
                  %484 = vst [vmem:[%s424 + $0x1d0] sm:$0xff] %v483
                  %v485 = vld [vmem:[%s423 + $0x2d0] sm:$0xff]
                  %486 = vst [vmem:[%s424 + $0x1e0] sm:$0xff] %v485
                  %v487 = vld [vmem:[%s423 + $0x2e8] sm:$0xff]
                  %488 = vst [vmem:[%s424 + $0x1f0] sm:$0xff] %v487
                  %v489 = vld [vmem:[%s423 + $0x300] sm:$0xff]
                  %490 = vst [vmem:[%s424 + $0x200] sm:$0xff] %v489
                  %v491 = vld [vmem:[%s423 + $0x318] sm:$0xff]
                  %492 = vst [vmem:[%s424 + $0x210] sm:$0xff] %v491
                  %v493 = vld [vmem:[%s423 + $0x330] sm:$0xff]
                  %494 = vst [vmem:[%s424 + $0x220] sm:$0xff] %v493
                  %v495 = vld [vmem:[%s423 + $0x348] sm:$0xff]
                  %496 = vst [vmem:[%s424 + $0x230] sm:$0xff] %v495
                  %v497 = vld [vmem:[%s423 + $0x360] sm:$0xff]
                  %498 = vst [vmem:[%s424 + $0x240] sm:$0xff] %v497
                  %v499 = vld [vmem:[%s423 + $0x378] sm:$0xff]
                  %500 = vst [vmem:[%s424 + $0x250] sm:$0xff] %v499
                  %v501 = vld [vmem:[%s423 + $0x390] sm:$0xff]
                  %502 = vst [vmem:[%s424 + $0x260] sm:$0xff] %v501
                  %v503 = vld [vmem:[%s423 + $0x3a8] sm:$0xff]
                  %504 = vst [vmem:[%s424 + $0x270] sm:$0xff] %v503
                  %v505 = vld [vmem:[%s423 + $0x3c0] sm:$0xff]
                  %506 = vst [vmem:[%s424 + $0x280] sm:$0xff] %v505
                  %v507 = vld [vmem:[%s423 + $0x3d8] sm:$0xff]
                  %508 = vst [vmem:[%s424 + $0x290] sm:$0xff] %v507
                  %v509 = vld [vmem:[%s423 + $0x3f0] sm:$0xff]
                  %510 = vst [vmem:[%s424 + $0x2a0] sm:$0xff] %v509
                  %v511 = vld [vmem:[%s423 + $0x408] sm:$0xff]
                  %512 = vst [vmem:[%s424 + $0x2b0] sm:$0xff] %v511
                  %v513 = vld [vmem:[%s423 + $0x420] sm:$0xff]
                  %514 = vst [vmem:[%s424 + $0x2c0] sm:$0xff] %v513
                  %v515 = vld [vmem:[%s423 + $0x438] sm:$0xff]
                  %516 = vst [vmem:[%s424 + $0x2d0] sm:$0xff] %v515
                  %v517 = vld [vmem:[%s423 + $0x450] sm:$0xff]
                  %518 = vst [vmem:[%s424 + $0x2e0] sm:$0xff] %v517
                  %v519 = vld [vmem:[%s423 + $0x468] sm:$0xff]
                  %520 = vst [vmem:[%s424 + $0x2f0] sm:$0xff] %v519
                  %v521 = vld [vmem:[%s423 + $0x480] sm:$0xff]
                  %522 = vst [vmem:[%s424 + $0x300] sm:$0xff] %v521
                  %v523 = vld [vmem:[%s423 + $0x498] sm:$0xff]
                  %524 = vst [vmem:[%s424 + $0x310] sm:$0xff] %v523
                  %v525 = vld [vmem:[%s423 + $0x4b0] sm:$0xff]
                  %526 = vst [vmem:[%s424 + $0x320] sm:$0xff] %v525
                  %v527 = vld [vmem:[%s423 + $0x4c8] sm:$0xff]
                  %528 = vst [vmem:[%s424 + $0x330] sm:$0xff] %v527
                  %v529 = vld [vmem:[%s423 + $0x4e0] sm:$0xff]
                  %530 = vst [vmem:[%s424 + $0x340] sm:$0xff] %v529
                  %v531 = vld [vmem:[%s423 + $0x4f8] sm:$0xff]
                  %532 = vst [vmem:[%s424 + $0x350] sm:$0xff] %v531
                  %v533 = vld [vmem:[%s423 + $0x510] sm:$0xff]
                  %534 = vst [vmem:[%s424 + $0x360] sm:$0xff] %v533
                  %v535 = vld [vmem:[%s423 + $0x528] sm:$0xff]
                  %536 = vst [vmem:[%s424 + $0x370] sm:$0xff] %v535
                  %v537 = vld [vmem:[%s423 + $0x540] sm:$0xff]
                  %538 = vst [vmem:[%s424 + $0x380] sm:$0xff] %v537
                  %v539 = vld [vmem:[%s423 + $0x558] sm:$0xff]
                  %540 = vst [vmem:[%s424 + $0x390] sm:$0xff] %v539
                  %v541 = vld [vmem:[%s423 + $0x570] sm:$0xff]
                  %542 = vst [vmem:[%s424 + $0x3a0] sm:$0xff] %v541
                  %v543 = vld [vmem:[%s423 + $0x588] sm:$0xff]
                  %544 = vst [vmem:[%s424 + $0x3b0] sm:$0xff] %v543
                  %v545 = vld [vmem:[%s423 + $0x5a0] sm:$0xff]
                  %546 = vst [vmem:[%s424 + $0x3c0] sm:$0xff] %v545
                  %v547 = vld [vmem:[%s423 + $0x5b8] sm:$0xff]
                  %548 = vst [vmem:[%s424 + $0x3d0] sm:$0xff] %v547
                  %v549 = vld [vmem:[%s423 + $0x5d0] sm:$0xff]
                  %550 = vst [vmem:[%s424 + $0x3e0] sm:$0xff] %v549
                  %v551 = vld [vmem:[%s423 + $0x5e8] sm:$0xff]
                  %552 = vst [vmem:[%s424 + $0x3f0] sm:$0xff] %v551
                  %v553 = vld [vmem:[%s423 + $0x600] sm:$0xff]
                  %554 = vst [vmem:[%s424 + $0x400] sm:$0xff] %v553
                  %v555 = vld [vmem:[%s423 + $0x618] sm:$0xff]
                  %556 = vst [vmem:[%s424 + $0x410] sm:$0xff] %v555
                  %v557 = vld [vmem:[%s423 + $0x630] sm:$0xff]
                  %558 = vst [vmem:[%s424 + $0x420] sm:$0xff] %v557
                  %v559 = vld [vmem:[%s423 + $0x648] sm:$0xff]
                  %560 = vst [vmem:[%s424 + $0x430] sm:$0xff] %v559
                  %v561 = vld [vmem:[%s423 + $0x660] sm:$0xff]
                  %562 = vst [vmem:[%s424 + $0x440] sm:$0xff] %v561
                  %v563 = vld [vmem:[%s423 + $0x678] sm:$0xff]
                  %564 = vst [vmem:[%s424 + $0x450] sm:$0xff] %v563
                  %v565 = vld [vmem:[%s423 + $0x690] sm:$0xff]
                  %566 = vst [vmem:[%s424 + $0x460] sm:$0xff] %v565
                  %v567 = vld [vmem:[%s423 + $0x6a8] sm:$0xff]
                  %568 = vst [vmem:[%s424 + $0x470] sm:$0xff] %v567
                  %v569 = vld [vmem:[%s423 + $0x6c0] sm:$0xff]
                  %570 = vst [vmem:[%s424 + $0x480] sm:$0xff] %v569
                  %v571 = vld [vmem:[%s423 + $0x6d8] sm:$0xff]
                  %572 = vst [vmem:[%s424 + $0x490] sm:$0xff] %v571
                  %v573 = vld [vmem:[%s423 + $0x6f0] sm:$0xff]
                  %574 = vst [vmem:[%s424 + $0x4a0] sm:$0xff] %v573
                  %v575 = vld [vmem:[%s423 + $0x708] sm:$0xff]
                  %576 = vst [vmem:[%s424 + $0x4b0] sm:$0xff] %v575
                  %v577 = vld [vmem:[%s423 + $0x720] sm:$0xff]
                  %578 = vst [vmem:[%s424 + $0x4c0] sm:$0xff] %v577
                  %v579 = vld [vmem:[%s423 + $0x738] sm:$0xff]
                  %580 = vst [vmem:[%s424 + $0x4d0] sm:$0xff] %v579
                  %v581 = vld [vmem:[%s423 + $0x750] sm:$0xff]
                  %582 = vst [vmem:[%s424 + $0x4e0] sm:$0xff] %v581
                  %v583 = vld [vmem:[%s423 + $0x768] sm:$0xff]
                  %584 = vst [vmem:[%s424 + $0x4f0] sm:$0xff] %v583
                  %v585 = vld [vmem:[%s423 + $0x780] sm:$0xff]
                  %586 = vst [vmem:[%s424 + $0x500] sm:$0xff] %v585
                  %v587 = vld [vmem:[%s423 + $0x798] sm:$0xff]
                  %588 = vst [vmem:[%s424 + $0x510] sm:$0xff] %v587
                  %v589 = vld [vmem:[%s423 + $0x7b0] sm:$0xff]
                  %590 = vst [vmem:[%s424 + $0x520] sm:$0xff] %v589
                  %v591 = vld [vmem:[%s423 + $0x7c8] sm:$0xff]
                  %592 = vst [vmem:[%s424 + $0x530] sm:$0xff] %v591
                  %v593 = vld [vmem:[%s423 + $0x7e0] sm:$0xff]
                  %594 = vst [vmem:[%s424 + $0x540] sm:$0xff] %v593
                  %v595 = vld [vmem:[%s423 + $0x7f8] sm:$0xff]
                  %596 = vst [vmem:[%s424 + $0x550] sm:$0xff] %v595
                  %v597 = vld [vmem:[%s423 + $0x810] sm:$0xff]
                  %598 = vst [vmem:[%s424 + $0x560] sm:$0xff] %v597
                  %v599 = vld [vmem:[%s423 + $0x828] sm:$0xff]
                  %600 = vst [vmem:[%s424 + $0x570] sm:$0xff] %v599
                  %v601 = vld [vmem:[%s423 + $0x840] sm:$0xff]
                  %602 = vst [vmem:[%s424 + $0x580] sm:$0xff] %v601
                  %v603 = vld [vmem:[%s423 + $0x858] sm:$0xff]
                  %604 = vst [vmem:[%s424 + $0x590] sm:$0xff] %v603
                  %v605 = vld [vmem:[%s423 + $0x870] sm:$0xff]
                  %606 = vst [vmem:[%s424 + $0x5a0] sm:$0xff] %v605
                  %v607 = vld [vmem:[%s423 + $0x888] sm:$0xff]
                  %608 = vst [vmem:[%s424 + $0x5b0] sm:$0xff] %v607
                  %v609 = vld [vmem:[%s423 + $0x8a0] sm:$0xff]
                  %610 = vst [vmem:[%s424 + $0x5c0] sm:$0xff] %v609
                  %v611 = vld [vmem:[%s423 + $0x8b8] sm:$0xff]
                  %612 = vst [vmem:[%s424 + $0x5d0] sm:$0xff] %v611
                  %v613 = vld [vmem:[%s423 + $0x8d0] sm:$0xff]
                  %614 = vst [vmem:[%s424 + $0x5e0] sm:$0xff] %v613
                  %v615 = vld [vmem:[%s423 + $0x8e8] sm:$0xff]
                  %616 = vst [vmem:[%s424 + $0x5f0] sm:$0xff] %v615
                  %v617 = vld [vmem:[%s423 + $0x900] sm:$0xff]
                  %618 = vst [vmem:[%s424 + $0x600] sm:$0xff] %v617
                  %v619 = vld [vmem:[%s423 + $0x918] sm:$0xff]
                  %620 = vst [vmem:[%s424 + $0x610] sm:$0xff] %v619
                  %v621 = vld [vmem:[%s423 + $0x930] sm:$0xff]
                  %622 = vst [vmem:[%s424 + $0x620] sm:$0xff] %v621
                  %v623 = vld [vmem:[%s423 + $0x948] sm:$0xff]
                  %624 = vst [vmem:[%s424 + $0x630] sm:$0xff] %v623
                  %v625 = vld [vmem:[%s423 + $0x960] sm:$0xff]
                  %626 = vst [vmem:[%s424 + $0x640] sm:$0xff] %v625
                  %v627 = vld [vmem:[%s423 + $0x978] sm:$0xff]
                  %628 = vst [vmem:[%s424 + $0x650] sm:$0xff] %v627
                  %v629 = vld [vmem:[%s423 + $0x990] sm:$0xff]
                  %630 = vst [vmem:[%s424 + $0x660] sm:$0xff] %v629
                  %v631 = vld [vmem:[%s423 + $0x9a8] sm:$0xff]
                  %632 = vst [vmem:[%s424 + $0x670] sm:$0xff] %v631
                  %v633 = vld [vmem:[%s423 + $0x9c0] sm:$0xff]
                  %634 = vst [vmem:[%s424 + $0x680] sm:$0xff] %v633
                  %v635 = vld [vmem:[%s423 + $0x9d8] sm:$0xff]
                  %636 = vst [vmem:[%s424 + $0x690] sm:$0xff] %v635
                  %v637 = vld [vmem:[%s423 + $0x9f0] sm:$0xff]
                  %638 = vst [vmem:[%s424 + $0x6a0] sm:$0xff] %v637
                  %v639 = vld [vmem:[%s423 + $0xa08] sm:$0xff]
                  %640 = vst [vmem:[%s424 + $0x6b0] sm:$0xff] %v639
                  %v641 = vld [vmem:[%s423 + $0xa20] sm:$0xff]
                  %642 = vst [vmem:[%s424 + $0x6c0] sm:$0xff] %v641
                  %v643 = vld [vmem:[%s423 + $0xa38] sm:$0xff]
                  %644 = vst [vmem:[%s424 + $0x6d0] sm:$0xff] %v643
                  %v645 = vld [vmem:[%s423 + $0xa50] sm:$0xff]
                  %646 = vst [vmem:[%s424 + $0x6e0] sm:$0xff] %v645
                  %v647 = vld [vmem:[%s423 + $0xa68] sm:$0xff]
                  %648 = vst [vmem:[%s424 + $0x6f0] sm:$0xff] %v647
                  %v649 = vld [vmem:[%s423 + $0xa80] sm:$0xff]
                  %650 = vst [vmem:[%s424 + $0x700] sm:$0xff] %v649
                  %v651 = vld [vmem:[%s423 + $0xa98] sm:$0xff]
                  %652 = vst [vmem:[%s424 + $0x710] sm:$0xff] %v651
                  %v653 = vld [vmem:[%s423 + $0xab0] sm:$0xff]
                  %654 = vst [vmem:[%s424 + $0x720] sm:$0xff] %v653
                  %v655 = vld [vmem:[%s423 + $0xac8] sm:$0xff]
                  %656 = vst [vmem:[%s424 + $0x730] sm:$0xff] %v655
                  %v657 = vld [vmem:[%s423 + $0xae0] sm:$0xff]
                  %658 = vst [vmem:[%s424 + $0x740] sm:$0xff] %v657
                  %v659 = vld [vmem:[%s423 + $0xaf8] sm:$0xff]
                  %660 = vst [vmem:[%s424 + $0x750] sm:$0xff] %v659
                  %v661 = vld [vmem:[%s423 + $0xb10] sm:$0xff]
                  %662 = vst [vmem:[%s424 + $0x760] sm:$0xff] %v661
                  %v663 = vld [vmem:[%s423 + $0xb28] sm:$0xff]
                  %664 = vst [vmem:[%s424 + $0x770] sm:$0xff] %v663
                  %v665 = vld [vmem:[%s423 + $0xb40] sm:$0xff]
                  %666 = vst [vmem:[%s424 + $0x780] sm:$0xff] %v665
                  %v667 = vld [vmem:[%s423 + $0xb58] sm:$0xff]
                  %668 = vst [vmem:[%s424 + $0x790] sm:$0xff] %v667
                  %v669 = vld [vmem:[%s423 + $0xb70] sm:$0xff]
                  %670 = vst [vmem:[%s424 + $0x7a0] sm:$0xff] %v669
                  %v671 = vld [vmem:[%s423 + $0xb88] sm:$0xff]
                  %672 = vst [vmem:[%s424 + $0x7b0] sm:$0xff] %v671
                  %v673 = vld [vmem:[%s423 + $0xba0] sm:$0xff]
                  %674 = vst [vmem:[%s424 + $0x7c0] sm:$0xff] %v673
                  %v675 = vld [vmem:[%s423 + $0xbb8] sm:$0xff]
                  %676 = vst [vmem:[%s424 + $0x7d0] sm:$0xff] %v675
                  %v677 = vld [vmem:[%s423 + $0xbd0] sm:$0xff]
                  %678 = vst [vmem:[%s424 + $0x7e0] sm:$0xff] %v677
                  %v679 = vld [vmem:[%s423 + $0xbe8] sm:$0xff]
                  %680 = vst [vmem:[%s424 + $0x7f0] sm:$0xff] %v679
                  %s681 = sadd.s32 1, %s422
                  %p682 = scmp.ge.s32.totalorder %s681, %s413
                  %s683 = scalar_select %p682, 0, %s681
                  %s684 = smul.u32 %s683, 8
                  %s685 = smul.u32 %s683, 8
                  %s686 = scalar_lea.vmem %s130, %s684
                  %s687 = scalar_lea.vmem %s116, %s685 [#allocation3]
                $region48: #{tpu_custom_call.1} parent=42 // loop_footer
                  %s419 = sadd.s32 %s417, 1
                $region49: #{tpu_custom_call.1} parent=42 // loop_footer_branch
                  %416 = sbr.rel target = $region45
                $region50: #{tpu_custom_call.1} parent=42 // loop_exit
                  _
              $region43: #{tpu_custom_call.1} parent=27 // pred_fallthru
                _
              %p688 = pneg %p409
              // Predicated region
              $region51: #{tpu_custom_call.1} parent=27 // pred_check
                _
              $region52: #{tpu_custom_call.1} parent=27 // pred_check_branch
                %690 = sbr.rel (%p409) target = $region54
              $region53: #{tpu_custom_call.1} parent=27 // pred_region
                %s691 = sand.u32 %s131, 7
                %s692 = ssub.s32 %s131, %s691
                %s693 = scalar_lea.vmem %s130, %s692
                %s694 = ssub.s32 %s131, %s691
                %s695 = scalar_lea.vmem %s116, %s694 [#allocation3]
                %s696 = sshrl.u32 %s131, 3
                // While loop
                $region55: #{tpu_custom_call.1} parent=53 // loop_pre_header
                  _
                $region56: #{tpu_custom_call.1} parent=53 // loop_header
                  %s700 = sphi 0, %s702
                  %p701 = scmp.ge.s32.totalorder %s700, %s696
                  %s705 = sphi 0, %s966
                  %s706 = sphi %s130, %s969
                  %s707 = sphi %s116, %s970
                $region57: #{tpu_custom_call.1} parent=53 // loop_header_branch
                  %704 = sbr.rel (%p701) target = $region61
                $region58: #{tpu_custom_call.1} parent=53 // loop_body
                  %v708 = vld [vmem:[%s706] sm:$0xff]
                  %709 = vst [vmem:[%s707] sm:$0xff] %v708
                  %v710 = vld [vmem:[%s706 + $0x18] sm:$0xff]
                  %711 = vst [vmem:[%s707 + $0x10] sm:$0xff] %v710
                  %v712 = vld [vmem:[%s706 + $0x30] sm:$0xff]
                  %713 = vst [vmem:[%s707 + $0x20] sm:$0xff] %v712
                  %v714 = vld [vmem:[%s706 + $0x48] sm:$0xff]
                  %715 = vst [vmem:[%s707 + $0x30] sm:$0xff] %v714
                  %v716 = vld [vmem:[%s706 + $0x60] sm:$0xff]
                  %717 = vst [vmem:[%s707 + $0x40] sm:$0xff] %v716
                  %v718 = vld [vmem:[%s706 + $0x78] sm:$0xff]
                  %719 = vst [vmem:[%s707 + $0x50] sm:$0xff] %v718
                  %v720 = vld [vmem:[%s706 + $0x90] sm:$0xff]
                  %721 = vst [vmem:[%s707 + $0x60] sm:$0xff] %v720
                  %v722 = vld [vmem:[%s706 + $0xa8] sm:$0xff]
                  %723 = vst [vmem:[%s707 + $0x70] sm:$0xff] %v722
                  %v724 = vld [vmem:[%s706 + $0xc0] sm:$0xff]
                  %725 = vst [vmem:[%s707 + $0x80] sm:$0xff] %v724
                  %v726 = vld [vmem:[%s706 + $0xd8] sm:$0xff]
                  %727 = vst [vmem:[%s707 + $0x90] sm:$0xff] %v726
                  %v728 = vld [vmem:[%s706 + $0xf0] sm:$0xff]
                  %729 = vst [vmem:[%s707 + $0xa0] sm:$0xff] %v728
                  %v730 = vld [vmem:[%s706 + $0x108] sm:$0xff]
                  %731 = vst [vmem:[%s707 + $0xb0] sm:$0xff] %v730
                  %v732 = vld [vmem:[%s706 + $0x120] sm:$0xff]
                  %733 = vst [vmem:[%s707 + $0xc0] sm:$0xff] %v732
                  %v734 = vld [vmem:[%s706 + $0x138] sm:$0xff]
                  %735 = vst [vmem:[%s707 + $0xd0] sm:$0xff] %v734
                  %v736 = vld [vmem:[%s706 + $0x150] sm:$0xff]
                  %737 = vst [vmem:[%s707 + $0xe0] sm:$0xff] %v736
                  %v738 = vld [vmem:[%s706 + $0x168] sm:$0xff]
                  %739 = vst [vmem:[%s707 + $0xf0] sm:$0xff] %v738
                  %v740 = vld [vmem:[%s706 + $0x180] sm:$0xff]
                  %741 = vst [vmem:[%s707 + $0x100] sm:$0xff] %v740
                  %v742 = vld [vmem:[%s706 + $0x198] sm:$0xff]
                  %743 = vst [vmem:[%s707 + $0x110] sm:$0xff] %v742
                  %v744 = vld [vmem:[%s706 + $0x1b0] sm:$0xff]
                  %745 = vst [vmem:[%s707 + $0x120] sm:$0xff] %v744
                  %v746 = vld [vmem:[%s706 + $0x1c8] sm:$0xff]
                  %747 = vst [vmem:[%s707 + $0x130] sm:$0xff] %v746
                  %v748 = vld [vmem:[%s706 + $0x1e0] sm:$0xff]
                  %749 = vst [vmem:[%s707 + $0x140] sm:$0xff] %v748
                  %v750 = vld [vmem:[%s706 + $0x1f8] sm:$0xff]
                  %751 = vst [vmem:[%s707 + $0x150] sm:$0xff] %v750
                  %v752 = vld [vmem:[%s706 + $0x210] sm:$0xff]
                  %753 = vst [vmem:[%s707 + $0x160] sm:$0xff] %v752
                  %v754 = vld [vmem:[%s706 + $0x228] sm:$0xff]
                  %755 = vst [vmem:[%s707 + $0x170] sm:$0xff] %v754
                  %v756 = vld [vmem:[%s706 + $0x240] sm:$0xff]
                  %757 = vst [vmem:[%s707 + $0x180] sm:$0xff] %v756
                  %v758 = vld [vmem:[%s706 + $0x258] sm:$0xff]
                  %759 = vst [vmem:[%s707 + $0x190] sm:$0xff] %v758
                  %v760 = vld [vmem:[%s706 + $0x270] sm:$0xff]
                  %761 = vst [vmem:[%s707 + $0x1a0] sm:$0xff] %v760
                  %v762 = vld [vmem:[%s706 + $0x288] sm:$0xff]
                  %763 = vst [vmem:[%s707 + $0x1b0] sm:$0xff] %v762
                  %v764 = vld [vmem:[%s706 + $0x2a0] sm:$0xff]
                  %765 = vst [vmem:[%s707 + $0x1c0] sm:$0xff] %v764
                  %v766 = vld [vmem:[%s706 + $0x2b8] sm:$0xff]
                  %767 = vst [vmem:[%s707 + $0x1d0] sm:$0xff] %v766
                  %v768 = vld [vmem:[%s706 + $0x2d0] sm:$0xff]
                  %769 = vst [vmem:[%s707 + $0x1e0] sm:$0xff] %v768
                  %v770 = vld [vmem:[%s706 + $0x2e8] sm:$0xff]
                  %771 = vst [vmem:[%s707 + $0x1f0] sm:$0xff] %v770
                  %v772 = vld [vmem:[%s706 + $0x300] sm:$0xff]
                  %773 = vst [vmem:[%s707 + $0x200] sm:$0xff] %v772
                  %v774 = vld [vmem:[%s706 + $0x318] sm:$0xff]
                  %775 = vst [vmem:[%s707 + $0x210] sm:$0xff] %v774
                  %v776 = vld [vmem:[%s706 + $0x330] sm:$0xff]
                  %777 = vst [vmem:[%s707 + $0x220] sm:$0xff] %v776
                  %v778 = vld [vmem:[%s706 + $0x348] sm:$0xff]
                  %779 = vst [vmem:[%s707 + $0x230] sm:$0xff] %v778
                  %v780 = vld [vmem:[%s706 + $0x360] sm:$0xff]
                  %781 = vst [vmem:[%s707 + $0x240] sm:$0xff] %v780
                  %v782 = vld [vmem:[%s706 + $0x378] sm:$0xff]
                  %783 = vst [vmem:[%s707 + $0x250] sm:$0xff] %v782
                  %v784 = vld [vmem:[%s706 + $0x390] sm:$0xff]
                  %785 = vst [vmem:[%s707 + $0x260] sm:$0xff] %v784
                  %v786 = vld [vmem:[%s706 + $0x3a8] sm:$0xff]
                  %787 = vst [vmem:[%s707 + $0x270] sm:$0xff] %v786
                  %v788 = vld [vmem:[%s706 + $0x3c0] sm:$0xff]
                  %789 = vst [vmem:[%s707 + $0x280] sm:$0xff] %v788
                  %v790 = vld [vmem:[%s706 + $0x3d8] sm:$0xff]
                  %791 = vst [vmem:[%s707 + $0x290] sm:$0xff] %v790
                  %v792 = vld [vmem:[%s706 + $0x3f0] sm:$0xff]
                  %793 = vst [vmem:[%s707 + $0x2a0] sm:$0xff] %v792
                  %v794 = vld [vmem:[%s706 + $0x408] sm:$0xff]
                  %795 = vst [vmem:[%s707 + $0x2b0] sm:$0xff] %v794
                  %v796 = vld [vmem:[%s706 + $0x420] sm:$0xff]
                  %797 = vst [vmem:[%s707 + $0x2c0] sm:$0xff] %v796
                  %v798 = vld [vmem:[%s706 + $0x438] sm:$0xff]
                  %799 = vst [vmem:[%s707 + $0x2d0] sm:$0xff] %v798
                  %v800 = vld [vmem:[%s706 + $0x450] sm:$0xff]
                  %801 = vst [vmem:[%s707 + $0x2e0] sm:$0xff] %v800
                  %v802 = vld [vmem:[%s706 + $0x468] sm:$0xff]
                  %803 = vst [vmem:[%s707 + $0x2f0] sm:$0xff] %v802
                  %v804 = vld [vmem:[%s706 + $0x480] sm:$0xff]
                  %805 = vst [vmem:[%s707 + $0x300] sm:$0xff] %v804
                  %v806 = vld [vmem:[%s706 + $0x498] sm:$0xff]
                  %807 = vst [vmem:[%s707 + $0x310] sm:$0xff] %v806
                  %v808 = vld [vmem:[%s706 + $0x4b0] sm:$0xff]
                  %809 = vst [vmem:[%s707 + $0x320] sm:$0xff] %v808
                  %v810 = vld [vmem:[%s706 + $0x4c8] sm:$0xff]
                  %811 = vst [vmem:[%s707 + $0x330] sm:$0xff] %v810
                  %v812 = vld [vmem:[%s706 + $0x4e0] sm:$0xff]
                  %813 = vst [vmem:[%s707 + $0x340] sm:$0xff] %v812
                  %v814 = vld [vmem:[%s706 + $0x4f8] sm:$0xff]
                  %815 = vst [vmem:[%s707 + $0x350] sm:$0xff] %v814
                  %v816 = vld [vmem:[%s706 + $0x510] sm:$0xff]
                  %817 = vst [vmem:[%s707 + $0x360] sm:$0xff] %v816
                  %v818 = vld [vmem:[%s706 + $0x528] sm:$0xff]
                  %819 = vst [vmem:[%s707 + $0x370] sm:$0xff] %v818
                  %v820 = vld [vmem:[%s706 + $0x540] sm:$0xff]
                  %821 = vst [vmem:[%s707 + $0x380] sm:$0xff] %v820
                  %v822 = vld [vmem:[%s706 + $0x558] sm:$0xff]
                  %823 = vst [vmem:[%s707 + $0x390] sm:$0xff] %v822
                  %v824 = vld [vmem:[%s706 + $0x570] sm:$0xff]
                  %825 = vst [vmem:[%s707 + $0x3a0] sm:$0xff] %v824
                  %v826 = vld [vmem:[%s706 + $0x588] sm:$0xff]
                  %827 = vst [vmem:[%s707 + $0x3b0] sm:$0xff] %v826
                  %v828 = vld [vmem:[%s706 + $0x5a0] sm:$0xff]
                  %829 = vst [vmem:[%s707 + $0x3c0] sm:$0xff] %v828
                  %v830 = vld [vmem:[%s706 + $0x5b8] sm:$0xff]
                  %831 = vst [vmem:[%s707 + $0x3d0] sm:$0xff] %v830
                  %v832 = vld [vmem:[%s706 + $0x5d0] sm:$0xff]
                  %833 = vst [vmem:[%s707 + $0x3e0] sm:$0xff] %v832
                  %v834 = vld [vmem:[%s706 + $0x5e8] sm:$0xff]
                  %835 = vst [vmem:[%s707 + $0x3f0] sm:$0xff] %v834
                  %v836 = vld [vmem:[%s706 + $0x600] sm:$0xff]
                  %837 = vst [vmem:[%s707 + $0x400] sm:$0xff] %v836
                  %v838 = vld [vmem:[%s706 + $0x618] sm:$0xff]
                  %839 = vst [vmem:[%s707 + $0x410] sm:$0xff] %v838
                  %v840 = vld [vmem:[%s706 + $0x630] sm:$0xff]
                  %841 = vst [vmem:[%s707 + $0x420] sm:$0xff] %v840
                  %v842 = vld [vmem:[%s706 + $0x648] sm:$0xff]
                  %843 = vst [vmem:[%s707 + $0x430] sm:$0xff] %v842
                  %v844 = vld [vmem:[%s706 + $0x660] sm:$0xff]
                  %845 = vst [vmem:[%s707 + $0x440] sm:$0xff] %v844
                  %v846 = vld [vmem:[%s706 + $0x678] sm:$0xff]
                  %847 = vst [vmem:[%s707 + $0x450] sm:$0xff] %v846
                  %v848 = vld [vmem:[%s706 + $0x690] sm:$0xff]
                  %849 = vst [vmem:[%s707 + $0x460] sm:$0xff] %v848
                  %v850 = vld [vmem:[%s706 + $0x6a8] sm:$0xff]
                  %851 = vst [vmem:[%s707 + $0x470] sm:$0xff] %v850
                  %v852 = vld [vmem:[%s706 + $0x6c0] sm:$0xff]
                  %853 = vst [vmem:[%s707 + $0x480] sm:$0xff] %v852
                  %v854 = vld [vmem:[%s706 + $0x6d8] sm:$0xff]
                  %855 = vst [vmem:[%s707 + $0x490] sm:$0xff] %v854
                  %v856 = vld [vmem:[%s706 + $0x6f0] sm:$0xff]
                  %857 = vst [vmem:[%s707 + $0x4a0] sm:$0xff] %v856
                  %v858 = vld [vmem:[%s706 + $0x708] sm:$0xff]
                  %859 = vst [vmem:[%s707 + $0x4b0] sm:$0xff] %v858
                  %v860 = vld [vmem:[%s706 + $0x720] sm:$0xff]
                  %861 = vst [vmem:[%s707 + $0x4c0] sm:$0xff] %v860
                  %v862 = vld [vmem:[%s706 + $0x738] sm:$0xff]
                  %863 = vst [vmem:[%s707 + $0x4d0] sm:$0xff] %v862
                  %v864 = vld [vmem:[%s706 + $0x750] sm:$0xff]
                  %865 = vst [vmem:[%s707 + $0x4e0] sm:$0xff] %v864
                  %v866 = vld [vmem:[%s706 + $0x768] sm:$0xff]
                  %867 = vst [vmem:[%s707 + $0x4f0] sm:$0xff] %v866
                  %v868 = vld [vmem:[%s706 + $0x780] sm:$0xff]
                  %869 = vst [vmem:[%s707 + $0x500] sm:$0xff] %v868
                  %v870 = vld [vmem:[%s706 + $0x798] sm:$0xff]
                  %871 = vst [vmem:[%s707 + $0x510] sm:$0xff] %v870
                  %v872 = vld [vmem:[%s706 + $0x7b0] sm:$0xff]
                  %873 = vst [vmem:[%s707 + $0x520] sm:$0xff] %v872
                  %v874 = vld [vmem:[%s706 + $0x7c8] sm:$0xff]
                  %875 = vst [vmem:[%s707 + $0x530] sm:$0xff] %v874
                  %v876 = vld [vmem:[%s706 + $0x7e0] sm:$0xff]
                  %877 = vst [vmem:[%s707 + $0x540] sm:$0xff] %v876
                  %v878 = vld [vmem:[%s706 + $0x7f8] sm:$0xff]
                  %879 = vst [vmem:[%s707 + $0x550] sm:$0xff] %v878
                  %v880 = vld [vmem:[%s706 + $0x810] sm:$0xff]
                  %881 = vst [vmem:[%s707 + $0x560] sm:$0xff] %v880
                  %v882 = vld [vmem:[%s706 + $0x828] sm:$0xff]
                  %883 = vst [vmem:[%s707 + $0x570] sm:$0xff] %v882
                  %v884 = vld [vmem:[%s706 + $0x840] sm:$0xff]
                  %885 = vst [vmem:[%s707 + $0x580] sm:$0xff] %v884
                  %v886 = vld [vmem:[%s706 + $0x858] sm:$0xff]
                  %887 = vst [vmem:[%s707 + $0x590] sm:$0xff] %v886
                  %v888 = vld [vmem:[%s706 + $0x870] sm:$0xff]
                  %889 = vst [vmem:[%s707 + $0x5a0] sm:$0xff] %v888
                  %v890 = vld [vmem:[%s706 + $0x888] sm:$0xff]
                  %891 = vst [vmem:[%s707 + $0x5b0] sm:$0xff] %v890
                  %v892 = vld [vmem:[%s706 + $0x8a0] sm:$0xff]
                  %893 = vst [vmem:[%s707 + $0x5c0] sm:$0xff] %v892
                  %v894 = vld [vmem:[%s706 + $0x8b8] sm:$0xff]
                  %895 = vst [vmem:[%s707 + $0x5d0] sm:$0xff] %v894
                  %v896 = vld [vmem:[%s706 + $0x8d0] sm:$0xff]
                  %897 = vst [vmem:[%s707 + $0x5e0] sm:$0xff] %v896
                  %v898 = vld [vmem:[%s706 + $0x8e8] sm:$0xff]
                  %899 = vst [vmem:[%s707 + $0x5f0] sm:$0xff] %v898
                  %v900 = vld [vmem:[%s706 + $0x900] sm:$0xff]
                  %901 = vst [vmem:[%s707 + $0x600] sm:$0xff] %v900
                  %v902 = vld [vmem:[%s706 + $0x918] sm:$0xff]
                  %903 = vst [vmem:[%s707 + $0x610] sm:$0xff] %v902
                  %v904 = vld [vmem:[%s706 + $0x930] sm:$0xff]
                  %905 = vst [vmem:[%s707 + $0x620] sm:$0xff] %v904
                  %v906 = vld [vmem:[%s706 + $0x948] sm:$0xff]
                  %907 = vst [vmem:[%s707 + $0x630] sm:$0xff] %v906
                  %v908 = vld [vmem:[%s706 + $0x960] sm:$0xff]
                  %909 = vst [vmem:[%s707 + $0x640] sm:$0xff] %v908
                  %v910 = vld [vmem:[%s706 + $0x978] sm:$0xff]
                  %911 = vst [vmem:[%s707 + $0x650] sm:$0xff] %v910
                  %v912 = vld [vmem:[%s706 + $0x990] sm:$0xff]
                  %913 = vst [vmem:[%s707 + $0x660] sm:$0xff] %v912
                  %v914 = vld [vmem:[%s706 + $0x9a8] sm:$0xff]
                  %915 = vst [vmem:[%s707 + $0x670] sm:$0xff] %v914
                  %v916 = vld [vmem:[%s706 + $0x9c0] sm:$0xff]
                  %917 = vst [vmem:[%s707 + $0x680] sm:$0xff] %v916
                  %v918 = vld [vmem:[%s706 + $0x9d8] sm:$0xff]
                  %919 = vst [vmem:[%s707 + $0x690] sm:$0xff] %v918
                  %v920 = vld [vmem:[%s706 + $0x9f0] sm:$0xff]
                  %921 = vst [vmem:[%s707 + $0x6a0] sm:$0xff] %v920
                  %v922 = vld [vmem:[%s706 + $0xa08] sm:$0xff]
                  %923 = vst [vmem:[%s707 + $0x6b0] sm:$0xff] %v922
                  %v924 = vld [vmem:[%s706 + $0xa20] sm:$0xff]
                  %925 = vst [vmem:[%s707 + $0x6c0] sm:$0xff] %v924
                  %v926 = vld [vmem:[%s706 + $0xa38] sm:$0xff]
                  %927 = vst [vmem:[%s707 + $0x6d0] sm:$0xff] %v926
                  %v928 = vld [vmem:[%s706 + $0xa50] sm:$0xff]
                  %929 = vst [vmem:[%s707 + $0x6e0] sm:$0xff] %v928
                  %v930 = vld [vmem:[%s706 + $0xa68] sm:$0xff]
                  %931 = vst [vmem:[%s707 + $0x6f0] sm:$0xff] %v930
                  %v932 = vld [vmem:[%s706 + $0xa80] sm:$0xff]
                  %933 = vst [vmem:[%s707 + $0x700] sm:$0xff] %v932
                  %v934 = vld [vmem:[%s706 + $0xa98] sm:$0xff]
                  %935 = vst [vmem:[%s707 + $0x710] sm:$0xff] %v934
                  %v936 = vld [vmem:[%s706 + $0xab0] sm:$0xff]
                  %937 = vst [vmem:[%s707 + $0x720] sm:$0xff] %v936
                  %v938 = vld [vmem:[%s706 + $0xac8] sm:$0xff]
                  %939 = vst [vmem:[%s707 + $0x730] sm:$0xff] %v938
                  %v940 = vld [vmem:[%s706 + $0xae0] sm:$0xff]
                  %941 = vst [vmem:[%s707 + $0x740] sm:$0xff] %v940
                  %v942 = vld [vmem:[%s706 + $0xaf8] sm:$0xff]
                  %943 = vst [vmem:[%s707 + $0x750] sm:$0xff] %v942
                  %v944 = vld [vmem:[%s706 + $0xb10] sm:$0xff]
                  %945 = vst [vmem:[%s707 + $0x760] sm:$0xff] %v944
                  %v946 = vld [vmem:[%s706 + $0xb28] sm:$0xff]
                  %947 = vst [vmem:[%s707 + $0x770] sm:$0xff] %v946
                  %v948 = vld [vmem:[%s706 + $0xb40] sm:$0xff]
                  %949 = vst [vmem:[%s707 + $0x780] sm:$0xff] %v948
                  %v950 = vld [vmem:[%s706 + $0xb58] sm:$0xff]
                  %951 = vst [vmem:[%s707 + $0x790] sm:$0xff] %v950
                  %v952 = vld [vmem:[%s706 + $0xb70] sm:$0xff]
                  %953 = vst [vmem:[%s707 + $0x7a0] sm:$0xff] %v952
                  %v954 = vld [vmem:[%s706 + $0xb88] sm:$0xff]
                  %955 = vst [vmem:[%s707 + $0x7b0] sm:$0xff] %v954
                  %v956 = vld [vmem:[%s706 + $0xba0] sm:$0xff]
                  %957 = vst [vmem:[%s707 + $0x7c0] sm:$0xff] %v956
                  %v958 = vld [vmem:[%s706 + $0xbb8] sm:$0xff]
                  %959 = vst [vmem:[%s707 + $0x7d0] sm:$0xff] %v958
                  %v960 = vld [vmem:[%s706 + $0xbd0] sm:$0xff]
                  %961 = vst [vmem:[%s707 + $0x7e0] sm:$0xff] %v960
                  %v962 = vld [vmem:[%s706 + $0xbe8] sm:$0xff]
                  %963 = vst [vmem:[%s707 + $0x7f0] sm:$0xff] %v962
                  %s964 = sadd.s32 1, %s705
                  %p965 = scmp.ge.s32.totalorder %s964, %s696
                  %s966 = scalar_select %p965, 0, %s964
                  %s967 = smul.u32 %s966, 8
                  %s968 = smul.u32 %s966, 8
                  %s969 = scalar_lea.vmem %s130, %s967
                  %s970 = scalar_lea.vmem %s116, %s968 [#allocation3]
                $region59: #{tpu_custom_call.1} parent=53 // loop_footer
                  %s702 = sadd.s32 %s700, 1
                $region60: #{tpu_custom_call.1} parent=53 // loop_footer_branch
                  %699 = sbr.rel target = $region56
                $region61: #{tpu_custom_call.1} parent=53 // loop_exit
                  _
                %s971 = sshll.u32 1, %s691
                %s972 = ssub.s32 %s971, 1
                loop: start=0, step=1, limit=1
                $region62: #{tpu_custom_call.1} parent=53 // loop_pre_header
                  _
                $region63: #{tpu_custom_call.1} parent=53 // loop_header
                  %s974 = sphi 0, %s978
                  %p975 = scmp.ge.s32.totalorder %s974, 1
                  %s979 = sphi %s693, %s693
                  %s980 = sphi %s695, %s695
                $region64: #{tpu_custom_call.1} parent=53 // loop_header_branch
                  %977 = sbr.rel (%p975) target = $region68
                $region65: #{tpu_custom_call.1} parent=53 // loop_body
                  %v981 = vld [vmem:[%s979] sm:%s972]
                  %982 = vst [vmem:[%s980] sm:%s972] %v981
                  %v983 = vld [vmem:[%s979 + $0x18] sm:%s972]
                  %984 = vst [vmem:[%s980 + $0x10] sm:%s972] %v983
                  %v985 = vld [vmem:[%s979 + $0x30] sm:%s972]
                  %986 = vst [vmem:[%s980 + $0x20] sm:%s972] %v985
                  %v987 = vld [vmem:[%s979 + $0x48] sm:%s972]
                  %988 = vst [vmem:[%s980 + $0x30] sm:%s972] %v987
                  %v989 = vld [vmem:[%s979 + $0x60] sm:%s972]
                  %990 = vst [vmem:[%s980 + $0x40] sm:%s972] %v989
                  %v991 = vld [vmem:[%s979 + $0x78] sm:%s972]
                  %992 = vst [vmem:[%s980 + $0x50] sm:%s972] %v991
                  %v993 = vld [vmem:[%s979 + $0x90] sm:%s972]
                  %994 = vst [vmem:[%s980 + $0x60] sm:%s972] %v993
                  %v995 = vld [vmem:[%s979 + $0xa8] sm:%s972]
                  %996 = vst [vmem:[%s980 + $0x70] sm:%s972] %v995
                  %v997 = vld [vmem:[%s979 + $0xc0] sm:%s972]
                  %998 = vst [vmem:[%s980 + $0x80] sm:%s972] %v997
                  %v999 = vld [vmem:[%s979 + $0xd8] sm:%s972]
                  %1000 = vst [vmem:[%s980 + $0x90] sm:%s972] %v999
                  %v1001 = vld [vmem:[%s979 + $0xf0] sm:%s972]
                  %1002 = vst [vmem:[%s980 + $0xa0] sm:%s972] %v1001
                  %v1003 = vld [vmem:[%s979 + $0x108] sm:%s972]
                  %1004 = vst [vmem:[%s980 + $0xb0] sm:%s972] %v1003
                  %v1005 = vld [vmem:[%s979 + $0x120] sm:%s972]
                  %1006 = vst [vmem:[%s980 + $0xc0] sm:%s972] %v1005
                  %v1007 = vld [vmem:[%s979 + $0x138] sm:%s972]
                  %1008 = vst [vmem:[%s980 + $0xd0] sm:%s972] %v1007
                  %v1009 = vld [vmem:[%s979 + $0x150] sm:%s972]
                  %1010 = vst [vmem:[%s980 + $0xe0] sm:%s972] %v1009
                  %v1011 = vld [vmem:[%s979 + $0x168] sm:%s972]
                  %1012 = vst [vmem:[%s980 + $0xf0] sm:%s972] %v1011
                  %v1013 = vld [vmem:[%s979 + $0x180] sm:%s972]
                  %1014 = vst [vmem:[%s980 + $0x100] sm:%s972] %v1013
                  %v1015 = vld [vmem:[%s979 + $0x198] sm:%s972]
                  %1016 = vst [vmem:[%s980 + $0x110] sm:%s972] %v1015
                  %v1017 = vld [vmem:[%s979 + $0x1b0] sm:%s972]
                  %1018 = vst [vmem:[%s980 + $0x120] sm:%s972] %v1017
                  %v1019 = vld [vmem:[%s979 + $0x1c8] sm:%s972]
                  %1020 = vst [vmem:[%s980 + $0x130] sm:%s972] %v1019
                  %v1021 = vld [vmem:[%s979 + $0x1e0] sm:%s972]
                  %1022 = vst [vmem:[%s980 + $0x140] sm:%s972] %v1021
                  %v1023 = vld [vmem:[%s979 + $0x1f8] sm:%s972]
                  %1024 = vst [vmem:[%s980 + $0x150] sm:%s972] %v1023
                  %v1025 = vld [vmem:[%s979 + $0x210] sm:%s972]
                  %1026 = vst [vmem:[%s980 + $0x160] sm:%s972] %v1025
                  %v1027 = vld [vmem:[%s979 + $0x228] sm:%s972]
                  %1028 = vst [vmem:[%s980 + $0x170] sm:%s972] %v1027
                  %v1029 = vld [vmem:[%s979 + $0x240] sm:%s972]
                  %1030 = vst [vmem:[%s980 + $0x180] sm:%s972] %v1029
                  %v1031 = vld [vmem:[%s979 + $0x258] sm:%s972]
                  %1032 = vst [vmem:[%s980 + $0x190] sm:%s972] %v1031
                  %v1033 = vld [vmem:[%s979 + $0x270] sm:%s972]
                  %1034 = vst [vmem:[%s980 + $0x1a0] sm:%s972] %v1033
                  %v1035 = vld [vmem:[%s979 + $0x288] sm:%s972]
                  %1036 = vst [vmem:[%s980 + $0x1b0] sm:%s972] %v1035
                  %v1037 = vld [vmem:[%s979 + $0x2a0] sm:%s972]
                  %1038 = vst [vmem:[%s980 + $0x1c0] sm:%s972] %v1037
                  %v1039 = vld [vmem:[%s979 + $0x2b8] sm:%s972]
                  %1040 = vst [vmem:[%s980 + $0x1d0] sm:%s972] %v1039
                  %v1041 = vld [vmem:[%s979 + $0x2d0] sm:%s972]
                  %1042 = vst [vmem:[%s980 + $0x1e0] sm:%s972] %v1041
                  %v1043 = vld [vmem:[%s979 + $0x2e8] sm:%s972]
                  %1044 = vst [vmem:[%s980 + $0x1f0] sm:%s972] %v1043
                  %v1045 = vld [vmem:[%s979 + $0x300] sm:%s972]
                  %1046 = vst [vmem:[%s980 + $0x200] sm:%s972] %v1045
                  %v1047 = vld [vmem:[%s979 + $0x318] sm:%s972]
                  %1048 = vst [vmem:[%s980 + $0x210] sm:%s972] %v1047
                  %v1049 = vld [vmem:[%s979 + $0x330] sm:%s972]
                  %1050 = vst [vmem:[%s980 + $0x220] sm:%s972] %v1049
                  %v1051 = vld [vmem:[%s979 + $0x348] sm:%s972]
                  %1052 = vst [vmem:[%s980 + $0x230] sm:%s972] %v1051
                  %v1053 = vld [vmem:[%s979 + $0x360] sm:%s972]
                  %1054 = vst [vmem:[%s980 + $0x240] sm:%s972] %v1053
                  %v1055 = vld [vmem:[%s979 + $0x378] sm:%s972]
                  %1056 = vst [vmem:[%s980 + $0x250] sm:%s972] %v1055
                  %v1057 = vld [vmem:[%s979 + $0x390] sm:%s972]
                  %1058 = vst [vmem:[%s980 + $0x260] sm:%s972] %v1057
                  %v1059 = vld [vmem:[%s979 + $0x3a8] sm:%s972]
                  %1060 = vst [vmem:[%s980 + $0x270] sm:%s972] %v1059
                  %v1061 = vld [vmem:[%s979 + $0x3c0] sm:%s972]
                  %1062 = vst [vmem:[%s980 + $0x280] sm:%s972] %v1061
                  %v1063 = vld [vmem:[%s979 + $0x3d8] sm:%s972]
                  %1064 = vst [vmem:[%s980 + $0x290] sm:%s972] %v1063
                  %v1065 = vld [vmem:[%s979 + $0x3f0] sm:%s972]
                  %1066 = vst [vmem:[%s980 + $0x2a0] sm:%s972] %v1065
                  %v1067 = vld [vmem:[%s979 + $0x408] sm:%s972]
                  %1068 = vst [vmem:[%s980 + $0x2b0] sm:%s972] %v1067
                  %v1069 = vld [vmem:[%s979 + $0x420] sm:%s972]
                  %1070 = vst [vmem:[%s980 + $0x2c0] sm:%s972] %v1069
                  %v1071 = vld [vmem:[%s979 + $0x438] sm:%s972]
                  %1072 = vst [vmem:[%s980 + $0x2d0] sm:%s972] %v1071
                  %v1073 = vld [vmem:[%s979 + $0x450] sm:%s972]
                  %1074 = vst [vmem:[%s980 + $0x2e0] sm:%s972] %v1073
                  %v1075 = vld [vmem:[%s979 + $0x468] sm:%s972]
                  %1076 = vst [vmem:[%s980 + $0x2f0] sm:%s972] %v1075
                  %v1077 = vld [vmem:[%s979 + $0x480] sm:%s972]
                  %1078 = vst [vmem:[%s980 + $0x300] sm:%s972] %v1077
                  %v1079 = vld [vmem:[%s979 + $0x498] sm:%s972]
                  %1080 = vst [vmem:[%s980 + $0x310] sm:%s972] %v1079
                  %v1081 = vld [vmem:[%s979 + $0x4b0] sm:%s972]
                  %1082 = vst [vmem:[%s980 + $0x320] sm:%s972] %v1081
                  %v1083 = vld [vmem:[%s979 + $0x4c8] sm:%s972]
                  %1084 = vst [vmem:[%s980 + $0x330] sm:%s972] %v1083
                  %v1085 = vld [vmem:[%s979 + $0x4e0] sm:%s972]
                  %1086 = vst [vmem:[%s980 + $0x340] sm:%s972] %v1085
                  %v1087 = vld [vmem:[%s979 + $0x4f8] sm:%s972]
                  %1088 = vst [vmem:[%s980 + $0x350] sm:%s972] %v1087
                  %v1089 = vld [vmem:[%s979 + $0x510] sm:%s972]
                  %1090 = vst [vmem:[%s980 + $0x360] sm:%s972] %v1089
                  %v1091 = vld [vmem:[%s979 + $0x528] sm:%s972]
                  %1092 = vst [vmem:[%s980 + $0x370] sm:%s972] %v1091
                  %v1093 = vld [vmem:[%s979 + $0x540] sm:%s972]
                  %1094 = vst [vmem:[%s980 + $0x380] sm:%s972] %v1093
                  %v1095 = vld [vmem:[%s979 + $0x558] sm:%s972]
                  %1096 = vst [vmem:[%s980 + $0x390] sm:%s972] %v1095
                  %v1097 = vld [vmem:[%s979 + $0x570] sm:%s972]
                  %1098 = vst [vmem:[%s980 + $0x3a0] sm:%s972] %v1097
                  %v1099 = vld [vmem:[%s979 + $0x588] sm:%s972]
                  %1100 = vst [vmem:[%s980 + $0x3b0] sm:%s972] %v1099
                  %v1101 = vld [vmem:[%s979 + $0x5a0] sm:%s972]
                  %1102 = vst [vmem:[%s980 + $0x3c0] sm:%s972] %v1101
                  %v1103 = vld [vmem:[%s979 + $0x5b8] sm:%s972]
                  %1104 = vst [vmem:[%s980 + $0x3d0] sm:%s972] %v1103
                  %v1105 = vld [vmem:[%s979 + $0x5d0] sm:%s972]
                  %1106 = vst [vmem:[%s980 + $0x3e0] sm:%s972] %v1105
                  %v1107 = vld [vmem:[%s979 + $0x5e8] sm:%s972]
                  %1108 = vst [vmem:[%s980 + $0x3f0] sm:%s972] %v1107
                  %v1109 = vld [vmem:[%s979 + $0x600] sm:%s972]
                  %1110 = vst [vmem:[%s980 + $0x400] sm:%s972] %v1109
                  %v1111 = vld [vmem:[%s979 + $0x618] sm:%s972]
                  %1112 = vst [vmem:[%s980 + $0x410] sm:%s972] %v1111
                  %v1113 = vld [vmem:[%s979 + $0x630] sm:%s972]
                  %1114 = vst [vmem:[%s980 + $0x420] sm:%s972] %v1113
                  %v1115 = vld [vmem:[%s979 + $0x648] sm:%s972]
                  %1116 = vst [vmem:[%s980 + $0x430] sm:%s972] %v1115
                  %v1117 = vld [vmem:[%s979 + $0x660] sm:%s972]
                  %1118 = vst [vmem:[%s980 + $0x440] sm:%s972] %v1117
                  %v1119 = vld [vmem:[%s979 + $0x678] sm:%s972]
                  %1120 = vst [vmem:[%s980 + $0x450] sm:%s972] %v1119
                  %v1121 = vld [vmem:[%s979 + $0x690] sm:%s972]
                  %1122 = vst [vmem:[%s980 + $0x460] sm:%s972] %v1121
                  %v1123 = vld [vmem:[%s979 + $0x6a8] sm:%s972]
                  %1124 = vst [vmem:[%s980 + $0x470] sm:%s972] %v1123
                  %v1125 = vld [vmem:[%s979 + $0x6c0] sm:%s972]
                  %1126 = vst [vmem:[%s980 + $0x480] sm:%s972] %v1125
                  %v1127 = vld [vmem:[%s979 + $0x6d8] sm:%s972]
                  %1128 = vst [vmem:[%s980 + $0x490] sm:%s972] %v1127
                  %v1129 = vld [vmem:[%s979 + $0x6f0] sm:%s972]
                  %1130 = vst [vmem:[%s980 + $0x4a0] sm:%s972] %v1129
                  %v1131 = vld [vmem:[%s979 + $0x708] sm:%s972]
                  %1132 = vst [vmem:[%s980 + $0x4b0] sm:%s972] %v1131
                  %v1133 = vld [vmem:[%s979 + $0x720] sm:%s972]
                  %1134 = vst [vmem:[%s980 + $0x4c0] sm:%s972] %v1133
                  %v1135 = vld [vmem:[%s979 + $0x738] sm:%s972]
                  %1136 = vst [vmem:[%s980 + $0x4d0] sm:%s972] %v1135
                  %v1137 = vld [vmem:[%s979 + $0x750] sm:%s972]
                  %1138 = vst [vmem:[%s980 + $0x4e0] sm:%s972] %v1137
                  %v1139 = vld [vmem:[%s979 + $0x768] sm:%s972]
                  %1140 = vst [vmem:[%s980 + $0x4f0] sm:%s972] %v1139
                  %v1141 = vld [vmem:[%s979 + $0x780] sm:%s972]
                  %1142 = vst [vmem:[%s980 + $0x500] sm:%s972] %v1141
                  %v1143 = vld [vmem:[%s979 + $0x798] sm:%s972]
                  %1144 = vst [vmem:[%s980 + $0x510] sm:%s972] %v1143
                  %v1145 = vld [vmem:[%s979 + $0x7b0] sm:%s972]
                  %1146 = vst [vmem:[%s980 + $0x520] sm:%s972] %v1145
                  %v1147 = vld [vmem:[%s979 + $0x7c8] sm:%s972]
                  %1148 = vst [vmem:[%s980 + $0x530] sm:%s972] %v1147
                  %v1149 = vld [vmem:[%s979 + $0x7e0] sm:%s972]
                  %1150 = vst [vmem:[%s980 + $0x540] sm:%s972] %v1149
                  %v1151 = vld [vmem:[%s979 + $0x7f8] sm:%s972]
                  %1152 = vst [vmem:[%s980 + $0x550] sm:%s972] %v1151
                  %v1153 = vld [vmem:[%s979 + $0x810] sm:%s972]
                  %1154 = vst [vmem:[%s980 + $0x560] sm:%s972] %v1153
                  %v1155 = vld [vmem:[%s979 + $0x828] sm:%s972]
                  %1156 = vst [vmem:[%s980 + $0x570] sm:%s972] %v1155
                  %v1157 = vld [vmem:[%s979 + $0x840] sm:%s972]
                  %1158 = vst [vmem:[%s980 + $0x580] sm:%s972] %v1157
                  %v1159 = vld [vmem:[%s979 + $0x858] sm:%s972]
                  %1160 = vst [vmem:[%s980 + $0x590] sm:%s972] %v1159
                  %v1161 = vld [vmem:[%s979 + $0x870] sm:%s972]
                  %1162 = vst [vmem:[%s980 + $0x5a0] sm:%s972] %v1161
                  %v1163 = vld [vmem:[%s979 + $0x888] sm:%s972]
                  %1164 = vst [vmem:[%s980 + $0x5b0] sm:%s972] %v1163
                  %v1165 = vld [vmem:[%s979 + $0x8a0] sm:%s972]
                  %1166 = vst [vmem:[%s980 + $0x5c0] sm:%s972] %v1165
                  %v1167 = vld [vmem:[%s979 + $0x8b8] sm:%s972]
                  %1168 = vst [vmem:[%s980 + $0x5d0] sm:%s972] %v1167
                  %v1169 = vld [vmem:[%s979 + $0x8d0] sm:%s972]
                  %1170 = vst [vmem:[%s980 + $0x5e0] sm:%s972] %v1169
                  %v1171 = vld [vmem:[%s979 + $0x8e8] sm:%s972]
                  %1172 = vst [vmem:[%s980 + $0x5f0] sm:%s972] %v1171
                  %v1173 = vld [vmem:[%s979 + $0x900] sm:%s972]
                  %1174 = vst [vmem:[%s980 + $0x600] sm:%s972] %v1173
                  %v1175 = vld [vmem:[%s979 + $0x918] sm:%s972]
                  %1176 = vst [vmem:[%s980 + $0x610] sm:%s972] %v1175
                  %v1177 = vld [vmem:[%s979 + $0x930] sm:%s972]
                  %1178 = vst [vmem:[%s980 + $0x620] sm:%s972] %v1177
                  %v1179 = vld [vmem:[%s979 + $0x948] sm:%s972]
                  %1180 = vst [vmem:[%s980 + $0x630] sm:%s972] %v1179
                  %v1181 = vld [vmem:[%s979 + $0x960] sm:%s972]
                  %1182 = vst [vmem:[%s980 + $0x640] sm:%s972] %v1181
                  %v1183 = vld [vmem:[%s979 + $0x978] sm:%s972]
                  %1184 = vst [vmem:[%s980 + $0x650] sm:%s972] %v1183
                  %v1185 = vld [vmem:[%s979 + $0x990] sm:%s972]
                  %1186 = vst [vmem:[%s980 + $0x660] sm:%s972] %v1185
                  %v1187 = vld [vmem:[%s979 + $0x9a8] sm:%s972]
                  %1188 = vst [vmem:[%s980 + $0x670] sm:%s972] %v1187
                  %v1189 = vld [vmem:[%s979 + $0x9c0] sm:%s972]
                  %1190 = vst [vmem:[%s980 + $0x680] sm:%s972] %v1189
                  %v1191 = vld [vmem:[%s979 + $0x9d8] sm:%s972]
                  %1192 = vst [vmem:[%s980 + $0x690] sm:%s972] %v1191
                  %v1193 = vld [vmem:[%s979 + $0x9f0] sm:%s972]
                  %1194 = vst [vmem:[%s980 + $0x6a0] sm:%s972] %v1193
                  %v1195 = vld [vmem:[%s979 + $0xa08] sm:%s972]
                  %1196 = vst [vmem:[%s980 + $0x6b0] sm:%s972] %v1195
                  %v1197 = vld [vmem:[%s979 + $0xa20] sm:%s972]
                  %1198 = vst [vmem:[%s980 + $0x6c0] sm:%s972] %v1197
                  %v1199 = vld [vmem:[%s979 + $0xa38] sm:%s972]
                  %1200 = vst [vmem:[%s980 + $0x6d0] sm:%s972] %v1199
                  %v1201 = vld [vmem:[%s979 + $0xa50] sm:%s972]
                  %1202 = vst [vmem:[%s980 + $0x6e0] sm:%s972] %v1201
                  %v1203 = vld [vmem:[%s979 + $0xa68] sm:%s972]
                  %1204 = vst [vmem:[%s980 + $0x6f0] sm:%s972] %v1203
                  %v1205 = vld [vmem:[%s979 + $0xa80] sm:%s972]
                  %1206 = vst [vmem:[%s980 + $0x700] sm:%s972] %v1205
                  %v1207 = vld [vmem:[%s979 + $0xa98] sm:%s972]
                  %1208 = vst [vmem:[%s980 + $0x710] sm:%s972] %v1207
                  %v1209 = vld [vmem:[%s979 + $0xab0] sm:%s972]
                  %1210 = vst [vmem:[%s980 + $0x720] sm:%s972] %v1209
                  %v1211 = vld [vmem:[%s979 + $0xac8] sm:%s972]
                  %1212 = vst [vmem:[%s980 + $0x730] sm:%s972] %v1211
                  %v1213 = vld [vmem:[%s979 + $0xae0] sm:%s972]
                  %1214 = vst [vmem:[%s980 + $0x740] sm:%s972] %v1213
                  %v1215 = vld [vmem:[%s979 + $0xaf8] sm:%s972]
                  %1216 = vst [vmem:[%s980 + $0x750] sm:%s972] %v1215
                  %v1217 = vld [vmem:[%s979 + $0xb10] sm:%s972]
                  %1218 = vst [vmem:[%s980 + $0x760] sm:%s972] %v1217
                  %v1219 = vld [vmem:[%s979 + $0xb28] sm:%s972]
                  %1220 = vst [vmem:[%s980 + $0x770] sm:%s972] %v1219
                  %v1221 = vld [vmem:[%s979 + $0xb40] sm:%s972]
                  %1222 = vst [vmem:[%s980 + $0x780] sm:%s972] %v1221
                  %v1223 = vld [vmem:[%s979 + $0xb58] sm:%s972]
                  %1224 = vst [vmem:[%s980 + $0x790] sm:%s972] %v1223
                  %v1225 = vld [vmem:[%s979 + $0xb70] sm:%s972]
                  %1226 = vst [vmem:[%s980 + $0x7a0] sm:%s972] %v1225
                  %v1227 = vld [vmem:[%s979 + $0xb88] sm:%s972]
                  %1228 = vst [vmem:[%s980 + $0x7b0] sm:%s972] %v1227
                  %v1229 = vld [vmem:[%s979 + $0xba0] sm:%s972]
                  %1230 = vst [vmem:[%s980 + $0x7c0] sm:%s972] %v1229
                  %v1231 = vld [vmem:[%s979 + $0xbb8] sm:%s972]
                  %1232 = vst [vmem:[%s980 + $0x7d0] sm:%s972] %v1231
                  %v1233 = vld [vmem:[%s979 + $0xbd0] sm:%s972]
                  %1234 = vst [vmem:[%s980 + $0x7e0] sm:%s972] %v1233
                  %v1235 = vld [vmem:[%s979 + $0xbe8] sm:%s972]
                  %1236 = vst [vmem:[%s980 + $0x7f0] sm:%s972] %v1235
                $region66: #{tpu_custom_call.1} parent=53 // loop_footer
                  %s978 = sadd.s32 1, %s974
                $region67: #{tpu_custom_call.1} parent=53 // loop_footer_branch
                  %973 = sbr.rel target = $region63
                $region68: #{tpu_custom_call.1} parent=53 // loop_exit
                  _
              $region54: #{tpu_custom_call.1} parent=27 // pred_fallthru
                _
            $region28: #{tpu_custom_call.1} parent=23 // pred_fallthru
              _
            // Predicated region
            $region29: #{tpu_custom_call.1} parent=23 // pred_check
              %p139 = pneg %p135
            $region30: #{tpu_custom_call.1} parent=23 // pred_check_branch
              %141 = sbr.rel (%p139) target = $region32
            $region31: #{tpu_custom_call.1} parent=23 // pred_region
              %s142 = sshll.u32 1, %s131
              %s143 = ssub.s32 %s142, 1
              loop: start=0, step=1, limit=1
              $region33: #{tpu_custom_call.1} parent=31 // loop_pre_header
                _
              $region34: #{tpu_custom_call.1} parent=31 // loop_header
                %s145 = sphi 0, %s149
                %p146 = scmp.ge.s32.totalorder %s145, 1
                %s150 = sphi %s130, %s130
                %s151 = sphi %s116, %s116
              $region35: #{tpu_custom_call.1} parent=31 // loop_header_branch
                %148 = sbr.rel (%p146) target = $region39
              $region36: #{tpu_custom_call.1} parent=31 // loop_body
                %v152 = vld [vmem:[%s150] sm:%s143]
                %153 = vst [vmem:[%s151] sm:%s143] %v152
                %v154 = vld [vmem:[%s150 + $0x18] sm:%s143]
                %155 = vst [vmem:[%s151 + $0x10] sm:%s143] %v154
                %v156 = vld [vmem:[%s150 + $0x30] sm:%s143]
                %157 = vst [vmem:[%s151 + $0x20] sm:%s143] %v156
                %v158 = vld [vmem:[%s150 + $0x48] sm:%s143]
                %159 = vst [vmem:[%s151 + $0x30] sm:%s143] %v158
                %v160 = vld [vmem:[%s150 + $0x60] sm:%s143]
                %161 = vst [vmem:[%s151 + $0x40] sm:%s143] %v160
                %v162 = vld [vmem:[%s150 + $0x78] sm:%s143]
                %163 = vst [vmem:[%s151 + $0x50] sm:%s143] %v162
                %v164 = vld [vmem:[%s150 + $0x90] sm:%s143]
                %165 = vst [vmem:[%s151 + $0x60] sm:%s143] %v164
                %v166 = vld [vmem:[%s150 + $0xa8] sm:%s143]
                %167 = vst [vmem:[%s151 + $0x70] sm:%s143] %v166
                %v168 = vld [vmem:[%s150 + $0xc0] sm:%s143]
                %169 = vst [vmem:[%s151 + $0x80] sm:%s143] %v168
                %v170 = vld [vmem:[%s150 + $0xd8] sm:%s143]
                %171 = vst [vmem:[%s151 + $0x90] sm:%s143] %v170
                %v172 = vld [vmem:[%s150 + $0xf0] sm:%s143]
                %173 = vst [vmem:[%s151 + $0xa0] sm:%s143] %v172
                %v174 = vld [vmem:[%s150 + $0x108] sm:%s143]
                %175 = vst [vmem:[%s151 + $0xb0] sm:%s143] %v174
                %v176 = vld [vmem:[%s150 + $0x120] sm:%s143]
                %177 = vst [vmem:[%s151 + $0xc0] sm:%s143] %v176
                %v178 = vld [vmem:[%s150 + $0x138] sm:%s143]
                %179 = vst [vmem:[%s151 + $0xd0] sm:%s143] %v178
                %v180 = vld [vmem:[%s150 + $0x150] sm:%s143]
                %181 = vst [vmem:[%s151 + $0xe0] sm:%s143] %v180
                %v182 = vld [vmem:[%s150 + $0x168] sm:%s143]
                %183 = vst [vmem:[%s151 + $0xf0] sm:%s143] %v182
                %v184 = vld [vmem:[%s150 + $0x180] sm:%s143]
                %185 = vst [vmem:[%s151 + $0x100] sm:%s143] %v184
                %v186 = vld [vmem:[%s150 + $0x198] sm:%s143]
                %187 = vst [vmem:[%s151 + $0x110] sm:%s143] %v186
                %v188 = vld [vmem:[%s150 + $0x1b0] sm:%s143]
                %189 = vst [vmem:[%s151 + $0x120] sm:%s143] %v188
                %v190 = vld [vmem:[%s150 + $0x1c8] sm:%s143]
                %191 = vst [vmem:[%s151 + $0x130] sm:%s143] %v190
                %v192 = vld [vmem:[%s150 + $0x1e0] sm:%s143]
                %193 = vst [vmem:[%s151 + $0x140] sm:%s143] %v192
                %v194 = vld [vmem:[%s150 + $0x1f8] sm:%s143]
                %195 = vst [vmem:[%s151 + $0x150] sm:%s143] %v194
                %v196 = vld [vmem:[%s150 + $0x210] sm:%s143]
                %197 = vst [vmem:[%s151 + $0x160] sm:%s143] %v196
                %v198 = vld [vmem:[%s150 + $0x228] sm:%s143]
                %199 = vst [vmem:[%s151 + $0x170] sm:%s143] %v198
                %v200 = vld [vmem:[%s150 + $0x240] sm:%s143]
                %201 = vst [vmem:[%s151 + $0x180] sm:%s143] %v200
                %v202 = vld [vmem:[%s150 + $0x258] sm:%s143]
                %203 = vst [vmem:[%s151 + $0x190] sm:%s143] %v202
                %v204 = vld [vmem:[%s150 + $0x270] sm:%s143]
                %205 = vst [vmem:[%s151 + $0x1a0] sm:%s143] %v204
                %v206 = vld [vmem:[%s150 + $0x288] sm:%s143]
                %207 = vst [vmem:[%s151 + $0x1b0] sm:%s143] %v206
                %v208 = vld [vmem:[%s150 + $0x2a0] sm:%s143]
                %209 = vst [vmem:[%s151 + $0x1c0] sm:%s143] %v208
                %v210 = vld [vmem:[%s150 + $0x2b8] sm:%s143]
                %211 = vst [vmem:[%s151 + $0x1d0] sm:%s143] %v210
                %v212 = vld [vmem:[%s150 + $0x2d0] sm:%s143]
                %213 = vst [vmem:[%s151 + $0x1e0] sm:%s143] %v212
                %v214 = vld [vmem:[%s150 + $0x2e8] sm:%s143]
                %215 = vst [vmem:[%s151 + $0x1f0] sm:%s143] %v214
                %v216 = vld [vmem:[%s150 + $0x300] sm:%s143]
                %217 = vst [vmem:[%s151 + $0x200] sm:%s143] %v216
                %v218 = vld [vmem:[%s150 + $0x318] sm:%s143]
                %219 = vst [vmem:[%s151 + $0x210] sm:%s143] %v218
                %v220 = vld [vmem:[%s150 + $0x330] sm:%s143]
                %221 = vst [vmem:[%s151 + $0x220] sm:%s143] %v220
                %v222 = vld [vmem:[%s150 + $0x348] sm:%s143]
                %223 = vst [vmem:[%s151 + $0x230] sm:%s143] %v222
                %v224 = vld [vmem:[%s150 + $0x360] sm:%s143]
                %225 = vst [vmem:[%s151 + $0x240] sm:%s143] %v224
                %v226 = vld [vmem:[%s150 + $0x378] sm:%s143]
                %227 = vst [vmem:[%s151 + $0x250] sm:%s143] %v226
                %v228 = vld [vmem:[%s150 + $0x390] sm:%s143]
                %229 = vst [vmem:[%s151 + $0x260] sm:%s143] %v228
                %v230 = vld [vmem:[%s150 + $0x3a8] sm:%s143]
                %231 = vst [vmem:[%s151 + $0x270] sm:%s143] %v230
                %v232 = vld [vmem:[%s150 + $0x3c0] sm:%s143]
                %233 = vst [vmem:[%s151 + $0x280] sm:%s143] %v232
                %v234 = vld [vmem:[%s150 + $0x3d8] sm:%s143]
                %235 = vst [vmem:[%s151 + $0x290] sm:%s143] %v234
                %v236 = vld [vmem:[%s150 + $0x3f0] sm:%s143]
                %237 = vst [vmem:[%s151 + $0x2a0] sm:%s143] %v236
                %v238 = vld [vmem:[%s150 + $0x408] sm:%s143]
                %239 = vst [vmem:[%s151 + $0x2b0] sm:%s143] %v238
                %v240 = vld [vmem:[%s150 + $0x420] sm:%s143]
                %241 = vst [vmem:[%s151 + $0x2c0] sm:%s143] %v240
                %v242 = vld [vmem:[%s150 + $0x438] sm:%s143]
                %243 = vst [vmem:[%s151 + $0x2d0] sm:%s143] %v242
                %v244 = vld [vmem:[%s150 + $0x450] sm:%s143]
                %245 = vst [vmem:[%s151 + $0x2e0] sm:%s143] %v244
                %v246 = vld [vmem:[%s150 + $0x468] sm:%s143]
                %247 = vst [vmem:[%s151 + $0x2f0] sm:%s143] %v246
                %v248 = vld [vmem:[%s150 + $0x480] sm:%s143]
                %249 = vst [vmem:[%s151 + $0x300] sm:%s143] %v248
                %v250 = vld [vmem:[%s150 + $0x498] sm:%s143]
                %251 = vst [vmem:[%s151 + $0x310] sm:%s143] %v250
                %v252 = vld [vmem:[%s150 + $0x4b0] sm:%s143]
                %253 = vst [vmem:[%s151 + $0x320] sm:%s143] %v252
                %v254 = vld [vmem:[%s150 + $0x4c8] sm:%s143]
                %255 = vst [vmem:[%s151 + $0x330] sm:%s143] %v254
                %v256 = vld [vmem:[%s150 + $0x4e0] sm:%s143]
                %257 = vst [vmem:[%s151 + $0x340] sm:%s143] %v256
                %v258 = vld [vmem:[%s150 + $0x4f8] sm:%s143]
                %259 = vst [vmem:[%s151 + $0x350] sm:%s143] %v258
                %v260 = vld [vmem:[%s150 + $0x510] sm:%s143]
                %261 = vst [vmem:[%s151 + $0x360] sm:%s143] %v260
                %v262 = vld [vmem:[%s150 + $0x528] sm:%s143]
                %263 = vst [vmem:[%s151 + $0x370] sm:%s143] %v262
                %v264 = vld [vmem:[%s150 + $0x540] sm:%s143]
                %265 = vst [vmem:[%s151 + $0x380] sm:%s143] %v264
                %v266 = vld [vmem:[%s150 + $0x558] sm:%s143]
                %267 = vst [vmem:[%s151 + $0x390] sm:%s143] %v266
                %v268 = vld [vmem:[%s150 + $0x570] sm:%s143]
                %269 = vst [vmem:[%s151 + $0x3a0] sm:%s143] %v268
                %v270 = vld [vmem:[%s150 + $0x588] sm:%s143]
                %271 = vst [vmem:[%s151 + $0x3b0] sm:%s143] %v270
                %v272 = vld [vmem:[%s150 + $0x5a0] sm:%s143]
                %273 = vst [vmem:[%s151 + $0x3c0] sm:%s143] %v272
                %v274 = vld [vmem:[%s150 + $0x5b8] sm:%s143]
                %275 = vst [vmem:[%s151 + $0x3d0] sm:%s143] %v274
                %v276 = vld [vmem:[%s150 + $0x5d0] sm:%s143]
                %277 = vst [vmem:[%s151 + $0x3e0] sm:%s143] %v276
                %v278 = vld [vmem:[%s150 + $0x5e8] sm:%s143]
                %279 = vst [vmem:[%s151 + $0x3f0] sm:%s143] %v278
                %v280 = vld [vmem:[%s150 + $0x600] sm:%s143]
                %281 = vst [vmem:[%s151 + $0x400] sm:%s143] %v280
                %v282 = vld [vmem:[%s150 + $0x618] sm:%s143]
                %283 = vst [vmem:[%s151 + $0x410] sm:%s143] %v282
                %v284 = vld [vmem:[%s150 + $0x630] sm:%s143]
                %285 = vst [vmem:[%s151 + $0x420] sm:%s143] %v284
                %v286 = vld [vmem:[%s150 + $0x648] sm:%s143]
                %287 = vst [vmem:[%s151 + $0x430] sm:%s143] %v286
                %v288 = vld [vmem:[%s150 + $0x660] sm:%s143]
                %289 = vst [vmem:[%s151 + $0x440] sm:%s143] %v288
                %v290 = vld [vmem:[%s150 + $0x678] sm:%s143]
                %291 = vst [vmem:[%s151 + $0x450] sm:%s143] %v290
                %v292 = vld [vmem:[%s150 + $0x690] sm:%s143]
                %293 = vst [vmem:[%s151 + $0x460] sm:%s143] %v292
                %v294 = vld [vmem:[%s150 + $0x6a8] sm:%s143]
                %295 = vst [vmem:[%s151 + $0x470] sm:%s143] %v294
                %v296 = vld [vmem:[%s150 + $0x6c0] sm:%s143]
                %297 = vst [vmem:[%s151 + $0x480] sm:%s143] %v296
                %v298 = vld [vmem:[%s150 + $0x6d8] sm:%s143]
                %299 = vst [vmem:[%s151 + $0x490] sm:%s143] %v298
                %v300 = vld [vmem:[%s150 + $0x6f0] sm:%s143]
                %301 = vst [vmem:[%s151 + $0x4a0] sm:%s143] %v300
                %v302 = vld [vmem:[%s150 + $0x708] sm:%s143]
                %303 = vst [vmem:[%s151 + $0x4b0] sm:%s143] %v302
                %v304 = vld [vmem:[%s150 + $0x720] sm:%s143]
                %305 = vst [vmem:[%s151 + $0x4c0] sm:%s143] %v304
                %v306 = vld [vmem:[%s150 + $0x738] sm:%s143]
                %307 = vst [vmem:[%s151 + $0x4d0] sm:%s143] %v306
                %v308 = vld [vmem:[%s150 + $0x750] sm:%s143]
                %309 = vst [vmem:[%s151 + $0x4e0] sm:%s143] %v308
                %v310 = vld [vmem:[%s150 + $0x768] sm:%s143]
                %311 = vst [vmem:[%s151 + $0x4f0] sm:%s143] %v310
                %v312 = vld [vmem:[%s150 + $0x780] sm:%s143]
                %313 = vst [vmem:[%s151 + $0x500] sm:%s143] %v312
                %v314 = vld [vmem:[%s150 + $0x798] sm:%s143]
                %315 = vst [vmem:[%s151 + $0x510] sm:%s143] %v314
                %v316 = vld [vmem:[%s150 + $0x7b0] sm:%s143]
                %317 = vst [vmem:[%s151 + $0x520] sm:%s143] %v316
                %v318 = vld [vmem:[%s150 + $0x7c8] sm:%s143]
                %319 = vst [vmem:[%s151 + $0x530] sm:%s143] %v318
                %v320 = vld [vmem:[%s150 + $0x7e0] sm:%s143]
                %321 = vst [vmem:[%s151 + $0x540] sm:%s143] %v320
                %v322 = vld [vmem:[%s150 + $0x7f8] sm:%s143]
                %323 = vst [vmem:[%s151 + $0x550] sm:%s143] %v322
                %v324 = vld [vmem:[%s150 + $0x810] sm:%s143]
                %325 = vst [vmem:[%s151 + $0x560] sm:%s143] %v324
                %v326 = vld [vmem:[%s150 + $0x828] sm:%s143]
                %327 = vst [vmem:[%s151 + $0x570] sm:%s143] %v326
                %v328 = vld [vmem:[%s150 + $0x840] sm:%s143]
                %329 = vst [vmem:[%s151 + $0x580] sm:%s143] %v328
                %v330 = vld [vmem:[%s150 + $0x858] sm:%s143]
                %331 = vst [vmem:[%s151 + $0x590] sm:%s143] %v330
                %v332 = vld [vmem:[%s150 + $0x870] sm:%s143]
                %333 = vst [vmem:[%s151 + $0x5a0] sm:%s143] %v332
                %v334 = vld [vmem:[%s150 + $0x888] sm:%s143]
                %335 = vst [vmem:[%s151 + $0x5b0] sm:%s143] %v334
                %v336 = vld [vmem:[%s150 + $0x8a0] sm:%s143]
                %337 = vst [vmem:[%s151 + $0x5c0] sm:%s143] %v336
                %v338 = vld [vmem:[%s150 + $0x8b8] sm:%s143]
                %339 = vst [vmem:[%s151 + $0x5d0] sm:%s143] %v338
                %v340 = vld [vmem:[%s150 + $0x8d0] sm:%s143]
                %341 = vst [vmem:[%s151 + $0x5e0] sm:%s143] %v340
                %v342 = vld [vmem:[%s150 + $0x8e8] sm:%s143]
                %343 = vst [vmem:[%s151 + $0x5f0] sm:%s143] %v342
                %v344 = vld [vmem:[%s150 + $0x900] sm:%s143]
                %345 = vst [vmem:[%s151 + $0x600] sm:%s143] %v344
                %v346 = vld [vmem:[%s150 + $0x918] sm:%s143]
                %347 = vst [vmem:[%s151 + $0x610] sm:%s143] %v346
                %v348 = vld [vmem:[%s150 + $0x930] sm:%s143]
                %349 = vst [vmem:[%s151 + $0x620] sm:%s143] %v348
                %v350 = vld [vmem:[%s150 + $0x948] sm:%s143]
                %351 = vst [vmem:[%s151 + $0x630] sm:%s143] %v350
                %v352 = vld [vmem:[%s150 + $0x960] sm:%s143]
                %353 = vst [vmem:[%s151 + $0x640] sm:%s143] %v352
                %v354 = vld [vmem:[%s150 + $0x978] sm:%s143]
                %355 = vst [vmem:[%s151 + $0x650] sm:%s143] %v354
                %v356 = vld [vmem:[%s150 + $0x990] sm:%s143]
                %357 = vst [vmem:[%s151 + $0x660] sm:%s143] %v356
                %v358 = vld [vmem:[%s150 + $0x9a8] sm:%s143]
                %359 = vst [vmem:[%s151 + $0x670] sm:%s143] %v358
                %v360 = vld [vmem:[%s150 + $0x9c0] sm:%s143]
                %361 = vst [vmem:[%s151 + $0x680] sm:%s143] %v360
                %v362 = vld [vmem:[%s150 + $0x9d8] sm:%s143]
                %363 = vst [vmem:[%s151 + $0x690] sm:%s143] %v362
                %v364 = vld [vmem:[%s150 + $0x9f0] sm:%s143]
                %365 = vst [vmem:[%s151 + $0x6a0] sm:%s143] %v364
                %v366 = vld [vmem:[%s150 + $0xa08] sm:%s143]
                %367 = vst [vmem:[%s151 + $0x6b0] sm:%s143] %v366
                %v368 = vld [vmem:[%s150 + $0xa20] sm:%s143]
                %369 = vst [vmem:[%s151 + $0x6c0] sm:%s143] %v368
                %v370 = vld [vmem:[%s150 + $0xa38] sm:%s143]
                %371 = vst [vmem:[%s151 + $0x6d0] sm:%s143] %v370
                %v372 = vld [vmem:[%s150 + $0xa50] sm:%s143]
                %373 = vst [vmem:[%s151 + $0x6e0] sm:%s143] %v372
                %v374 = vld [vmem:[%s150 + $0xa68] sm:%s143]
                %375 = vst [vmem:[%s151 + $0x6f0] sm:%s143] %v374
                %v376 = vld [vmem:[%s150 + $0xa80] sm:%s143]
                %377 = vst [vmem:[%s151 + $0x700] sm:%s143] %v376
                %v378 = vld [vmem:[%s150 + $0xa98] sm:%s143]
                %379 = vst [vmem:[%s151 + $0x710] sm:%s143] %v378
                %v380 = vld [vmem:[%s150 + $0xab0] sm:%s143]
                %381 = vst [vmem:[%s151 + $0x720] sm:%s143] %v380
                %v382 = vld [vmem:[%s150 + $0xac8] sm:%s143]
                %383 = vst [vmem:[%s151 + $0x730] sm:%s143] %v382
                %v384 = vld [vmem:[%s150 + $0xae0] sm:%s143]
                %385 = vst [vmem:[%s151 + $0x740] sm:%s143] %v384
                %v386 = vld [vmem:[%s150 + $0xaf8] sm:%s143]
                %387 = vst [vmem:[%s151 + $0x750] sm:%s143] %v386
                %v388 = vld [vmem:[%s150 + $0xb10] sm:%s143]
                %389 = vst [vmem:[%s151 + $0x760] sm:%s143] %v388
                %v390 = vld [vmem:[%s150 + $0xb28] sm:%s143]
                %391 = vst [vmem:[%s151 + $0x770] sm:%s143] %v390
                %v392 = vld [vmem:[%s150 + $0xb40] sm:%s143]
                %393 = vst [vmem:[%s151 + $0x780] sm:%s143] %v392
                %v394 = vld [vmem:[%s150 + $0xb58] sm:%s143]
                %395 = vst [vmem:[%s151 + $0x790] sm:%s143] %v394
                %v396 = vld [vmem:[%s150 + $0xb70] sm:%s143]
                %397 = vst [vmem:[%s151 + $0x7a0] sm:%s143] %v396
                %v398 = vld [vmem:[%s150 + $0xb88] sm:%s143]
                %399 = vst [vmem:[%s151 + $0x7b0] sm:%s143] %v398
                %v400 = vld [vmem:[%s150 + $0xba0] sm:%s143]
                %401 = vst [vmem:[%s151 + $0x7c0] sm:%s143] %v400
                %v402 = vld [vmem:[%s150 + $0xbb8] sm:%s143]
                %403 = vst [vmem:[%s151 + $0x7d0] sm:%s143] %v402
                %v404 = vld [vmem:[%s150 + $0xbd0] sm:%s143]
                %405 = vst [vmem:[%s151 + $0x7e0] sm:%s143] %v404
                %v406 = vld [vmem:[%s150 + $0xbe8] sm:%s143]
                %407 = vst [vmem:[%s151 + $0x7f0] sm:%s143] %v406
              $region37: #{tpu_custom_call.1} parent=31 // loop_footer
                %s149 = sadd.s32 1, %s145
              $region38: #{tpu_custom_call.1} parent=31 // loop_footer_branch
                %144 = sbr.rel target = $region34
              $region39: #{tpu_custom_call.1} parent=31 // loop_exit
                _
            $region32: #{tpu_custom_call.1} parent=23 // pred_fallthru
              _
          $region24: #{tpu_custom_call.1} parent=19 // pred_fallthru
            _
          %1237 = vnop
        $region20: #{tpu_custom_call.1} parent=15 // pred_fallthru
          _
      $region16: #{tpu_custom_call.1} parent=5 // pred_fallthru
        _
      %p1238 = scmp.le.s32.totalorder 1, %s10
      %p1239 = scmp.lt.s32.totalorder %s10, 3
      %p1240 = pnand %p1238, %p1239
      %p1241 = pneg %p1240
      // Predicated region
      $region69: #{tpu_custom_call.1} parent=5 // pred_check
        _
      $region70: #{tpu_custom_call.1} parent=5 // pred_check_branch
        %1243 = sbr.rel (%p1240) target = $region72
      $region71: #{tpu_custom_call.1} parent=5 // pred_region
        %s1244 = ssub.s32 %s10, 1
        %s1245 = sand.u32 %s50, 1
        %s1246 = sand.u32 %s50, 1
        %s1247 = smul.addr %s1246, 2048
        %s1248 = scalar_lea.vmem [#allocation3], %s1247
        // Predicated region
        $region73: #{tpu_custom_call.1} parent=71 // pred_check
          %p1249 = pneg %p63
        $region74: #{tpu_custom_call.1} parent=71 // pred_check_branch
          %1251 = sbr.rel (%p1249) target = $region76
        $region75: #{tpu_custom_call.1} parent=71 // pred_region
          _
        $region76: #{tpu_custom_call.1} parent=71 // pred_fallthru
          _
        %s1252 = sand.u32 %s50, 1
        %s1253 = sand.u32 %s50, 1
        %s1254 = smul.addr %s1253, 2048
        %s1255 = scalar_lea.vmem [#allocation3], %s1254
        %p1256 = pneg %p63
        %p1257 = pneg %p60
        %p1258 = pneg %p91
        %p1259 = pneg %p88
        %s1260 = sand.u32 %s78, 1
        %s1261 = scalar_lea.sflag [#allocation5], %s1260
        %s1262 = sand.u32 %s78, 1
        %s1263 = smul.addr %s1262, 8
        %s1264 = scalar_lea.vmem [#allocation4], %s1263
        %s1265 = sadd.s32 %s20, %s22
        %p1266 = scmp.lt.s32.totalorder %s1265, 1
        %s1267 = scalar_select %p1266, %s1265, 1
        %s1268 = smul.u32 2, %s21
        %s1269 = smul.u32 2, %s1267
        %s1270 = ssub.s32 3, %s1269
        %p1271 = scmp.lt.s32.totalorder %s1270, 2
        %s1272 = scalar_select %p1271, %s1270, 2
        %s1273 = smul.u32 16384, %s1272
        %p1274 = scmp.eq.s32.totalorder %s22, 0
        // Predicated region
        $region77: #{tpu_custom_call.1} parent=71 // pred_check
          %p1275 = pneg %p1274
        $region78: #{tpu_custom_call.1} parent=71 // pred_check_branch
          %1277 = sbr.rel (%p1275) target = $region80
        $region79: #{tpu_custom_call.1} parent=71 // pred_region
          %1278 = vst [vmem:[#allocation2] sm:$0xff] 0.0
          %1279 = vst [vmem:[#allocation2 + $0x8] sm:$0xff] 0.0
          %1280 = vst [vmem:[#allocation2 + $0x10] sm:$0xff] 0.0
          %1281 = vst [vmem:[#allocation2 + $0x18] sm:$0xff] 0.0
          %1282 = vst [vmem:[#allocation2 + $0x20] sm:$0xff] 0.0
          %1283 = vst [vmem:[#allocation2 + $0x28] sm:$0xff] 0.0
          %1284 = vst [vmem:[#allocation2 + $0x30] sm:$0xff] 0.0
          %1285 = vst [vmem:[#allocation2 + $0x38] sm:$0xff] 0.0
          %1286 = vst [vmem:[#allocation2 + $0x40] sm:$0xff] 0.0
          %1287 = vst [vmem:[#allocation2 + $0x48] sm:$0xff] 0.0
          %1288 = vst [vmem:[#allocation2 + $0x50] sm:$0xff] 0.0
          %1289 = vst [vmem:[#allocation2 + $0x58] sm:$0xff] 0.0
          %1290 = vst [vmem:[#allocation2 + $0x60] sm:$0xff] 0.0
          %1291 = vst [vmem:[#allocation2 + $0x68] sm:$0xff] 0.0
          %1292 = vst [vmem:[#allocation2 + $0x70] sm:$0xff] 0.0
          %1293 = vst [vmem:[#allocation2 + $0x78] sm:$0xff] 0.0
          %1294 = vst [vmem:[#allocation2 + $0x80] sm:$0xff] 0.0
          %1295 = vst [vmem:[#allocation2 + $0x88] sm:$0xff] 0.0
          %1296 = vst [vmem:[#allocation2 + $0x90] sm:$0xff] 0.0
          %1297 = vst [vmem:[#allocation2 + $0x98] sm:$0xff] 0.0
          %1298 = vst [vmem:[#allocation2 + $0xa0] sm:$0xff] 0.0
          %1299 = vst [vmem:[#allocation2 + $0xa8] sm:$0xff] 0.0
          %1300 = vst [vmem:[#allocation2 + $0xb0] sm:$0xff] 0.0
          %1301 = vst [vmem:[#allocation2 + $0xb8] sm:$0xff] 0.0
          %1302 = vst [vmem:[#allocation2 + $0xc0] sm:$0xff] 0.0
          %1303 = vst [vmem:[#allocation2 + $0xc8] sm:$0xff] 0.0
          %1304 = vst [vmem:[#allocation2 + $0xd0] sm:$0xff] 0.0
          %1305 = vst [vmem:[#allocation2 + $0xd8] sm:$0xff] 0.0
          %1306 = vst [vmem:[#allocation2 + $0xe0] sm:$0xff] 0.0
          %1307 = vst [vmem:[#allocation2 + $0xe8] sm:$0xff] 0.0
          %1308 = vst [vmem:[#allocation2 + $0xf0] sm:$0xff] 0.0
          %1309 = vst [vmem:[#allocation2 + $0xf8] sm:$0xff] 0.0
          %1310 = vst [vmem:[#allocation2 + $0x100] sm:$0xff] 0.0
          %1311 = vst [vmem:[#allocation2 + $0x108] sm:$0xff] 0.0
          %1312 = vst [vmem:[#allocation2 + $0x110] sm:$0xff] 0.0
          %1313 = vst [vmem:[#allocation2 + $0x118] sm:$0xff] 0.0
          %1314 = vst [vmem:[#allocation2 + $0x120] sm:$0xff] 0.0
          %1315 = vst [vmem:[#allocation2 + $0x128] sm:$0xff] 0.0
          %1316 = vst [vmem:[#allocation2 + $0x130] sm:$0xff] 0.0
          %1317 = vst [vmem:[#allocation2 + $0x138] sm:$0xff] 0.0
          %1318 = vst [vmem:[#allocation2 + $0x140] sm:$0xff] 0.0
          %1319 = vst [vmem:[#allocation2 + $0x148] sm:$0xff] 0.0
          %1320 = vst [vmem:[#allocation2 + $0x150] sm:$0xff] 0.0
          %1321 = vst [vmem:[#allocation2 + $0x158] sm:$0xff] 0.0
          %1322 = vst [vmem:[#allocation2 + $0x160] sm:$0xff] 0.0
          %1323 = vst [vmem:[#allocation2 + $0x168] sm:$0xff] 0.0
          %1324 = vst [vmem:[#allocation2 + $0x170] sm:$0xff] 0.0
          %1325 = vst [vmem:[#allocation2 + $0x178] sm:$0xff] 0.0
          %1326 = vst [vmem:[#allocation2 + $0x180] sm:$0xff] 0.0
          %1327 = vst [vmem:[#allocation2 + $0x188] sm:$0xff] 0.0
          %1328 = vst [vmem:[#allocation2 + $0x190] sm:$0xff] 0.0
          %1329 = vst [vmem:[#allocation2 + $0x198] sm:$0xff] 0.0
          %1330 = vst [vmem:[#allocation2 + $0x1a0] sm:$0xff] 0.0
          %1331 = vst [vmem:[#allocation2 + $0x1a8] sm:$0xff] 0.0
          %1332 = vst [vmem:[#allocation2 + $0x1b0] sm:$0xff] 0.0
          %1333 = vst [vmem:[#allocation2 + $0x1b8] sm:$0xff] 0.0
          %1334 = vst [vmem:[#allocation2 + $0x1c0] sm:$0xff] 0.0
          %1335 = vst [vmem:[#allocation2 + $0x1c8] sm:$0xff] 0.0
          %1336 = vst [vmem:[#allocation2 + $0x1d0] sm:$0xff] 0.0
          %1337 = vst [vmem:[#allocation2 + $0x1d8] sm:$0xff] 0.0
          %1338 = vst [vmem:[#allocation2 + $0x1e0] sm:$0xff] 0.0
          %1339 = vst [vmem:[#allocation2 + $0x1e8] sm:$0xff] 0.0
          %1340 = vst [vmem:[#allocation2 + $0x1f0] sm:$0xff] 0.0
          %1341 = vst [vmem:[#allocation2 + $0x1f8] sm:$0xff] 0.0
          %1342 = vst [vmem:[#allocation2 + $0x200] sm:$0xff] 0.0
          %1343 = vst [vmem:[#allocation2 + $0x208] sm:$0xff] 0.0
          %1344 = vst [vmem:[#allocation2 + $0x210] sm:$0xff] 0.0
          %1345 = vst [vmem:[#allocation2 + $0x218] sm:$0xff] 0.0
          %1346 = vst [vmem:[#allocation2 + $0x220] sm:$0xff] 0.0
          %1347 = vst [vmem:[#allocation2 + $0x228] sm:$0xff] 0.0
          %1348 = vst [vmem:[#allocation2 + $0x230] sm:$0xff] 0.0
          %1349 = vst [vmem:[#allocation2 + $0x238] sm:$0xff] 0.0
          %1350 = vst [vmem:[#allocation2 + $0x240] sm:$0xff] 0.0
          %1351 = vst [vmem:[#allocation2 + $0x248] sm:$0xff] 0.0
          %1352 = vst [vmem:[#allocation2 + $0x250] sm:$0xff] 0.0
          %1353 = vst [vmem:[#allocation2 + $0x258] sm:$0xff] 0.0
          %1354 = vst [vmem:[#allocation2 + $0x260] sm:$0xff] 0.0
          %1355 = vst [vmem:[#allocation2 + $0x268] sm:$0xff] 0.0
          %1356 = vst [vmem:[#allocation2 + $0x270] sm:$0xff] 0.0
          %1357 = vst [vmem:[#allocation2 + $0x278] sm:$0xff] 0.0
          %1358 = vst [vmem:[#allocation2 + $0x280] sm:$0xff] 0.0
          %1359 = vst [vmem:[#allocation2 + $0x288] sm:$0xff] 0.0
          %1360 = vst [vmem:[#allocation2 + $0x290] sm:$0xff] 0.0
          %1361 = vst [vmem:[#allocation2 + $0x298] sm:$0xff] 0.0
          %1362 = vst [vmem:[#allocation2 + $0x2a0] sm:$0xff] 0.0
          %1363 = vst [vmem:[#allocation2 + $0x2a8] sm:$0xff] 0.0
          %1364 = vst [vmem:[#allocation2 + $0x2b0] sm:$0xff] 0.0
          %1365 = vst [vmem:[#allocation2 + $0x2b8] sm:$0xff] 0.0
          %1366 = vst [vmem:[#allocation2 + $0x2c0] sm:$0xff] 0.0
          %1367 = vst [vmem:[#allocation2 + $0x2c8] sm:$0xff] 0.0
          %1368 = vst [vmem:[#allocation2 + $0x2d0] sm:$0xff] 0.0
          %1369 = vst [vmem:[#allocation2 + $0x2d8] sm:$0xff] 0.0
          %1370 = vst [vmem:[#allocation2 + $0x2e0] sm:$0xff] 0.0
          %1371 = vst [vmem:[#allocation2 + $0x2e8] sm:$0xff] 0.0
          %1372 = vst [vmem:[#allocation2 + $0x2f0] sm:$0xff] 0.0
          %1373 = vst [vmem:[#allocation2 + $0x2f8] sm:$0xff] 0.0
          %1374 = vst [vmem:[#allocation2 + $0x300] sm:$0xff] 0.0
          %1375 = vst [vmem:[#allocation2 + $0x308] sm:$0xff] 0.0
          %1376 = vst [vmem:[#allocation2 + $0x310] sm:$0xff] 0.0
          %1377 = vst [vmem:[#allocation2 + $0x318] sm:$0xff] 0.0
          %1378 = vst [vmem:[#allocation2 + $0x320] sm:$0xff] 0.0
          %1379 = vst [vmem:[#allocation2 + $0x328] sm:$0xff] 0.0
          %1380 = vst [vmem:[#allocation2 + $0x330] sm:$0xff] 0.0
          %1381 = vst [vmem:[#allocation2 + $0x338] sm:$0xff] 0.0
          %1382 = vst [vmem:[#allocation2 + $0x340] sm:$0xff] 0.0
          %1383 = vst [vmem:[#allocation2 + $0x348] sm:$0xff] 0.0
          %1384 = vst [vmem:[#allocation2 + $0x350] sm:$0xff] 0.0
          %1385 = vst [vmem:[#allocation2 + $0x358] sm:$0xff] 0.0
          %1386 = vst [vmem:[#allocation2 + $0x360] sm:$0xff] 0.0
          %1387 = vst [vmem:[#allocation2 + $0x368] sm:$0xff] 0.0
          %1388 = vst [vmem:[#allocation2 + $0x370] sm:$0xff] 0.0
          %1389 = vst [vmem:[#allocation2 + $0x378] sm:$0xff] 0.0
          %1390 = vst [vmem:[#allocation2 + $0x380] sm:$0xff] 0.0
          %1391 = vst [vmem:[#allocation2 + $0x388] sm:$0xff] 0.0
          %1392 = vst [vmem:[#allocation2 + $0x390] sm:$0xff] 0.0
          %1393 = vst [vmem:[#allocation2 + $0x398] sm:$0xff] 0.0
          %1394 = vst [vmem:[#allocation2 + $0x3a0] sm:$0xff] 0.0
          %1395 = vst [vmem:[#allocation2 + $0x3a8] sm:$0xff] 0.0
          %1396 = vst [vmem:[#allocation2 + $0x3b0] sm:$0xff] 0.0
          %1397 = vst [vmem:[#allocation2 + $0x3b8] sm:$0xff] 0.0
          %1398 = vst [vmem:[#allocation2 + $0x3c0] sm:$0xff] 0.0
          %1399 = vst [vmem:[#allocation2 + $0x3c8] sm:$0xff] 0.0
          %1400 = vst [vmem:[#allocation2 + $0x3d0] sm:$0xff] 0.0
          %1401 = vst [vmem:[#allocation2 + $0x3d8] sm:$0xff] 0.0
          %1402 = vst [vmem:[#allocation2 + $0x3e0] sm:$0xff] 0.0
          %1403 = vst [vmem:[#allocation2 + $0x3e8] sm:$0xff] 0.0
          %1404 = vst [vmem:[#allocation2 + $0x3f0] sm:$0xff] 0.0
          %1405 = vst [vmem:[#allocation2 + $0x3f8] sm:$0xff] 0.0
        $region80: #{tpu_custom_call.1} parent=71 // pred_fallthru
          _
        %s1406 = sadd.s32 %s20, %s22
        %s1407 = smul.u32 %s1406, 256
        %p1408 = scmp.lt.s32.totalorder %s1407, 343
        // Predicated region
        $region81: #{tpu_custom_call.1} parent=71 // pred_check
          %p1409 = pneg %p1408
        $region82: #{tpu_custom_call.1} parent=71 // pred_check_branch
          %1411 = sbr.rel (%p1409) target = $region84
        $region83: #{tpu_custom_call.1} parent=71 // pred_region
          %v1412 = vlaneseq
          %v1413 = vand.u32 %v1412, 127
          %v1414 = vadd.s32 %v1413, 128
          %v1415 = vstv %s1407
          %v1416 = vadd.s32 %v1415, %v1413
          %v1417 = vadd.s32 %v1415, %v1414
          %vm1418 = vcmp.lt.s32.totalorder %v1416, 343
          %vm1419 = vcmp.lt.s32.totalorder %v1417, 343
          %v1420 = vld [vmem:[%s1248] sm:$0xff]
          %v1421 = vld [vmem:[%s1248 + $0x8] sm:$0xff]
          %v1422 = vld [vmem:[%s1248 + $0x10] sm:$0xff]
          %v1423 = vld [vmem:[%s1248 + $0x18] sm:$0xff]
          %v1424 = vld [vmem:[%s1248 + $0x20] sm:$0xff]
          %v1425 = vld [vmem:[%s1248 + $0x28] sm:$0xff]
          %v1426 = vld [vmem:[%s1248 + $0x30] sm:$0xff]
          %v1427 = vld [vmem:[%s1248 + $0x38] sm:$0xff]
          %v1428 = vld [vmem:[%s1248 + $0x40] sm:$0xff]
          %v1429 = vld [vmem:[%s1248 + $0x48] sm:$0xff]
          %v1430 = vld [vmem:[%s1248 + $0x50] sm:$0xff]
          %v1431 = vld [vmem:[%s1248 + $0x58] sm:$0xff]
          %v1432 = vld [vmem:[%s1248 + $0x60] sm:$0xff]
          %v1433 = vld [vmem:[%s1248 + $0x68] sm:$0xff]
          %v1434 = vld [vmem:[%s1248 + $0x70] sm:$0xff]
          %v1435 = vld [vmem:[%s1248 + $0x78] sm:$0xff]
          %v1436 = vld [vmem:[%s1248 + $0x80] sm:$0xff]
          %v1437 = vld [vmem:[%s1248 + $0x88] sm:$0xff]
          %v1438 = vld [vmem:[%s1248 + $0x90] sm:$0xff]
          %v1439 = vld [vmem:[%s1248 + $0x98] sm:$0xff]
          %v1440 = vld [vmem:[%s1248 + $0xa0] sm:$0xff]
          %v1441 = vld [vmem:[%s1248 + $0xa8] sm:$0xff]
          %v1442 = vld [vmem:[%s1248 + $0xb0] sm:$0xff]
          %v1443 = vld [vmem:[%s1248 + $0xb8] sm:$0xff]
          %v1444 = vld [vmem:[%s1248 + $0xc0] sm:$0xff]
          %v1445 = vld [vmem:[%s1248 + $0xc8] sm:$0xff]
          %v1446 = vld [vmem:[%s1248 + $0xd0] sm:$0xff]
          %v1447 = vld [vmem:[%s1248 + $0xd8] sm:$0xff]
          %v1448 = vld [vmem:[%s1248 + $0xe0] sm:$0xff]
          %v1449 = vld [vmem:[%s1248 + $0xe8] sm:$0xff]
          %v1450 = vld [vmem:[%s1248 + $0xf0] sm:$0xff]
          %v1451 = vld [vmem:[%s1248 + $0xf8] sm:$0xff]
          %v1452 = vld [vmem:[%s1248 + $0x100] sm:$0xff]
          %v1453 = vld [vmem:[%s1248 + $0x108] sm:$0xff]
          %v1454 = vld [vmem:[%s1248 + $0x110] sm:$0xff]
          %v1455 = vld [vmem:[%s1248 + $0x118] sm:$0xff]
          %v1456 = vld [vmem:[%s1248 + $0x120] sm:$0xff]
          %v1457 = vld [vmem:[%s1248 + $0x128] sm:$0xff]
          %v1458 = vld [vmem:[%s1248 + $0x130] sm:$0xff]
          %v1459 = vld [vmem:[%s1248 + $0x138] sm:$0xff]
          %v1460 = vld [vmem:[%s1248 + $0x140] sm:$0xff]
          %v1461 = vld [vmem:[%s1248 + $0x148] sm:$0xff]
          %v1462 = vld [vmem:[%s1248 + $0x150] sm:$0xff]
          %v1463 = vld [vmem:[%s1248 + $0x158] sm:$0xff]
          %v1464 = vld [vmem:[%s1248 + $0x160] sm:$0xff]
          %v1465 = vld [vmem:[%s1248 + $0x168] sm:$0xff]
          %v1466 = vld [vmem:[%s1248 + $0x170] sm:$0xff]
          %v1467 = vld [vmem:[%s1248 + $0x178] sm:$0xff]
          %v1468 = vld [vmem:[%s1248 + $0x180] sm:$0xff]
          %v1469 = vld [vmem:[%s1248 + $0x188] sm:$0xff]
          %v1470 = vld [vmem:[%s1248 + $0x190] sm:$0xff]
          %v1471 = vld [vmem:[%s1248 + $0x198] sm:$0xff]
          %v1472 = vld [vmem:[%s1248 + $0x1a0] sm:$0xff]
          %v1473 = vld [vmem:[%s1248 + $0x1a8] sm:$0xff]
          %v1474 = vld [vmem:[%s1248 + $0x1b0] sm:$0xff]
          %v1475 = vld [vmem:[%s1248 + $0x1b8] sm:$0xff]
          %v1476 = vld [vmem:[%s1248 + $0x1c0] sm:$0xff]
          %v1477 = vld [vmem:[%s1248 + $0x1c8] sm:$0xff]
          %v1478 = vld [vmem:[%s1248 + $0x1d0] sm:$0xff]
          %v1479 = vld [vmem:[%s1248 + $0x1d8] sm:$0xff]
          %v1480 = vld [vmem:[%s1248 + $0x1e0] sm:$0xff]
          %v1481 = vld [vmem:[%s1248 + $0x1e8] sm:$0xff]
          %v1482 = vld [vmem:[%s1248 + $0x1f0] sm:$0xff]
          %v1483 = vld [vmem:[%s1248 + $0x1f8] sm:$0xff]
          %v1484 = vld [vmem:[%s1248 + $0x200] sm:$0xff]
          %v1485 = vld [vmem:[%s1248 + $0x208] sm:$0xff]
          %v1486 = vld [vmem:[%s1248 + $0x210] sm:$0xff]
          %v1487 = vld [vmem:[%s1248 + $0x218] sm:$0xff]
          %v1488 = vld [vmem:[%s1248 + $0x220] sm:$0xff]
          %v1489 = vld [vmem:[%s1248 + $0x228] sm:$0xff]
          %v1490 = vld [vmem:[%s1248 + $0x230] sm:$0xff]
          %v1491 = vld [vmem:[%s1248 + $0x238] sm:$0xff]
          %v1492 = vld [vmem:[%s1248 + $0x240] sm:$0xff]
          %v1493 = vld [vmem:[%s1248 + $0x248] sm:$0xff]
          %v1494 = vld [vmem:[%s1248 + $0x250] sm:$0xff]
          %v1495 = vld [vmem:[%s1248 + $0x258] sm:$0xff]
          %v1496 = vld [vmem:[%s1248 + $0x260] sm:$0xff]
          %v1497 = vld [vmem:[%s1248 + $0x268] sm:$0xff]
          %v1498 = vld [vmem:[%s1248 + $0x270] sm:$0xff]
          %v1499 = vld [vmem:[%s1248 + $0x278] sm:$0xff]
          %v1500 = vld [vmem:[%s1248 + $0x280] sm:$0xff]
          %v1501 = vld [vmem:[%s1248 + $0x288] sm:$0xff]
          %v1502 = vld [vmem:[%s1248 + $0x290] sm:$0xff]
          %v1503 = vld [vmem:[%s1248 + $0x298] sm:$0xff]
          %v1504 = vld [vmem:[%s1248 + $0x2a0] sm:$0xff]
          %v1505 = vld [vmem:[%s1248 + $0x2a8] sm:$0xff]
          %v1506 = vld [vmem:[%s1248 + $0x2b0] sm:$0xff]
          %v1507 = vld [vmem:[%s1248 + $0x2b8] sm:$0xff]
          %v1508 = vld [vmem:[%s1248 + $0x2c0] sm:$0xff]
          %v1509 = vld [vmem:[%s1248 + $0x2c8] sm:$0xff]
          %v1510 = vld [vmem:[%s1248 + $0x2d0] sm:$0xff]
          %v1511 = vld [vmem:[%s1248 + $0x2d8] sm:$0xff]
          %v1512 = vld [vmem:[%s1248 + $0x2e0] sm:$0xff]
          %v1513 = vld [vmem:[%s1248 + $0x2e8] sm:$0xff]
          %v1514 = vld [vmem:[%s1248 + $0x2f0] sm:$0xff]
          %v1515 = vld [vmem:[%s1248 + $0x2f8] sm:$0xff]
          %v1516 = vld [vmem:[%s1248 + $0x300] sm:$0xff]
          %v1517 = vld [vmem:[%s1248 + $0x308] sm:$0xff]
          %v1518 = vld [vmem:[%s1248 + $0x310] sm:$0xff]
          %v1519 = vld [vmem:[%s1248 + $0x318] sm:$0xff]
          %v1520 = vld [vmem:[%s1248 + $0x320] sm:$0xff]
          %v1521 = vld [vmem:[%s1248 + $0x328] sm:$0xff]
          %v1522 = vld [vmem:[%s1248 + $0x330] sm:$0xff]
          %v1523 = vld [vmem:[%s1248 + $0x338] sm:$0xff]
          %v1524 = vld [vmem:[%s1248 + $0x340] sm:$0xff]
          %v1525 = vld [vmem:[%s1248 + $0x348] sm:$0xff]
          %v1526 = vld [vmem:[%s1248 + $0x350] sm:$0xff]
          %v1527 = vld [vmem:[%s1248 + $0x358] sm:$0xff]
          %v1528 = vld [vmem:[%s1248 + $0x360] sm:$0xff]
          %v1529 = vld [vmem:[%s1248 + $0x368] sm:$0xff]
          %v1530 = vld [vmem:[%s1248 + $0x370] sm:$0xff]
          %v1531 = vld [vmem:[%s1248 + $0x378] sm:$0xff]
          %v1532 = vld [vmem:[%s1248 + $0x380] sm:$0xff]
          %v1533 = vld [vmem:[%s1248 + $0x388] sm:$0xff]
          %v1534 = vld [vmem:[%s1248 + $0x390] sm:$0xff]
          %v1535 = vld [vmem:[%s1248 + $0x398] sm:$0xff]
          %v1536 = vld [vmem:[%s1248 + $0x3a0] sm:$0xff]
          %v1537 = vld [vmem:[%s1248 + $0x3a8] sm:$0xff]
          %v1538 = vld [vmem:[%s1248 + $0x3b0] sm:$0xff]
          %v1539 = vld [vmem:[%s1248 + $0x3b8] sm:$0xff]
          %v1540 = vld [vmem:[%s1248 + $0x3c0] sm:$0xff]
          %v1541 = vld [vmem:[%s1248 + $0x3c8] sm:$0xff]
          %v1542 = vld [vmem:[%s1248 + $0x3d0] sm:$0xff]
          %v1543 = vld [vmem:[%s1248 + $0x3d8] sm:$0xff]
          %v1544 = vld [vmem:[%s1248 + $0x3e0] sm:$0xff]
          %v1545 = vld [vmem:[%s1248 + $0x3e8] sm:$0xff]
          %v1546 = vld [vmem:[%s1248 + $0x3f0] sm:$0xff]
          %v1547 = vld [vmem:[%s1248 + $0x3f8] sm:$0xff]
          %v1548 = vld [vmem:[%s1248 + $0x400] sm:$0xff]
          %v1549 = vld [vmem:[%s1248 + $0x408] sm:$0xff]
          %v1550 = vld [vmem:[%s1248 + $0x410] sm:$0xff]
          %v1551 = vld [vmem:[%s1248 + $0x418] sm:$0xff]
          %v1552 = vld [vmem:[%s1248 + $0x420] sm:$0xff]
          %v1553 = vld [vmem:[%s1248 + $0x428] sm:$0xff]
          %v1554 = vld [vmem:[%s1248 + $0x430] sm:$0xff]
          %v1555 = vld [vmem:[%s1248 + $0x438] sm:$0xff]
          %v1556 = vld [vmem:[%s1248 + $0x440] sm:$0xff]
          %v1557 = vld [vmem:[%s1248 + $0x448] sm:$0xff]
          %v1558 = vld [vmem:[%s1248 + $0x450] sm:$0xff]
          %v1559 = vld [vmem:[%s1248 + $0x458] sm:$0xff]
          %v1560 = vld [vmem:[%s1248 + $0x460] sm:$0xff]
          %v1561 = vld [vmem:[%s1248 + $0x468] sm:$0xff]
          %v1562 = vld [vmem:[%s1248 + $0x470] sm:$0xff]
          %v1563 = vld [vmem:[%s1248 + $0x478] sm:$0xff]
          %v1564 = vld [vmem:[%s1248 + $0x480] sm:$0xff]
          %v1565 = vld [vmem:[%s1248 + $0x488] sm:$0xff]
          %v1566 = vld [vmem:[%s1248 + $0x490] sm:$0xff]
          %v1567 = vld [vmem:[%s1248 + $0x498] sm:$0xff]
          %v1568 = vld [vmem:[%s1248 + $0x4a0] sm:$0xff]
          %v1569 = vld [vmem:[%s1248 + $0x4a8] sm:$0xff]
          %v1570 = vld [vmem:[%s1248 + $0x4b0] sm:$0xff]
          %v1571 = vld [vmem:[%s1248 + $0x4b8] sm:$0xff]
          %v1572 = vld [vmem:[%s1248 + $0x4c0] sm:$0xff]
          %v1573 = vld [vmem:[%s1248 + $0x4c8] sm:$0xff]
          %v1574 = vld [vmem:[%s1248 + $0x4d0] sm:$0xff]
          %v1575 = vld [vmem:[%s1248 + $0x4d8] sm:$0xff]
          %v1576 = vld [vmem:[%s1248 + $0x4e0] sm:$0xff]
          %v1577 = vld [vmem:[%s1248 + $0x4e8] sm:$0xff]
          %v1578 = vld [vmem:[%s1248 + $0x4f0] sm:$0xff]
          %v1579 = vld [vmem:[%s1248 + $0x4f8] sm:$0xff]
          %v1580 = vld [vmem:[%s1248 + $0x500] sm:$0xff]
          %v1581 = vld [vmem:[%s1248 + $0x508] sm:$0xff]
          %v1582 = vld [vmem:[%s1248 + $0x510] sm:$0xff]
          %v1583 = vld [vmem:[%s1248 + $0x518] sm:$0xff]
          %v1584 = vld [vmem:[%s1248 + $0x520] sm:$0xff]
          %v1585 = vld [vmem:[%s1248 + $0x528] sm:$0xff]
          %v1586 = vld [vmem:[%s1248 + $0x530] sm:$0xff]
          %v1587 = vld [vmem:[%s1248 + $0x538] sm:$0xff]
          %v1588 = vld [vmem:[%s1248 + $0x540] sm:$0xff]
          %v1589 = vld [vmem:[%s1248 + $0x548] sm:$0xff]
          %v1590 = vld [vmem:[%s1248 + $0x550] sm:$0xff]
          %v1591 = vld [vmem:[%s1248 + $0x558] sm:$0xff]
          %v1592 = vld [vmem:[%s1248 + $0x560] sm:$0xff]
          %v1593 = vld [vmem:[%s1248 + $0x568] sm:$0xff]
          %v1594 = vld [vmem:[%s1248 + $0x570] sm:$0xff]
          %v1595 = vld [vmem:[%s1248 + $0x578] sm:$0xff]
          %v1596 = vld [vmem:[%s1248 + $0x580] sm:$0xff]
          %v1597 = vld [vmem:[%s1248 + $0x588] sm:$0xff]
          %v1598 = vld [vmem:[%s1248 + $0x590] sm:$0xff]
          %v1599 = vld [vmem:[%s1248 + $0x598] sm:$0xff]
          %v1600 = vld [vmem:[%s1248 + $0x5a0] sm:$0xff]
          %v1601 = vld [vmem:[%s1248 + $0x5a8] sm:$0xff]
          %v1602 = vld [vmem:[%s1248 + $0x5b0] sm:$0xff]
          %v1603 = vld [vmem:[%s1248 + $0x5b8] sm:$0xff]
          %v1604 = vld [vmem:[%s1248 + $0x5c0] sm:$0xff]
          %v1605 = vld [vmem:[%s1248 + $0x5c8] sm:$0xff]
          %v1606 = vld [vmem:[%s1248 + $0x5d0] sm:$0xff]
          %v1607 = vld [vmem:[%s1248 + $0x5d8] sm:$0xff]
          %v1608 = vld [vmem:[%s1248 + $0x5e0] sm:$0xff]
          %v1609 = vld [vmem:[%s1248 + $0x5e8] sm:$0xff]
          %v1610 = vld [vmem:[%s1248 + $0x5f0] sm:$0xff]
          %v1611 = vld [vmem:[%s1248 + $0x5f8] sm:$0xff]
          %v1612 = vld [vmem:[%s1248 + $0x600] sm:$0xff]
          %v1613 = vld [vmem:[%s1248 + $0x608] sm:$0xff]
          %v1614 = vld [vmem:[%s1248 + $0x610] sm:$0xff]
          %v1615 = vld [vmem:[%s1248 + $0x618] sm:$0xff]
          %v1616 = vld [vmem:[%s1248 + $0x620] sm:$0xff]
          %v1617 = vld [vmem:[%s1248 + $0x628] sm:$0xff]
          %v1618 = vld [vmem:[%s1248 + $0x630] sm:$0xff]
          %v1619 = vld [vmem:[%s1248 + $0x638] sm:$0xff]
          %v1620 = vld [vmem:[%s1248 + $0x640] sm:$0xff]
          %v1621 = vld [vmem:[%s1248 + $0x648] sm:$0xff]
          %v1622 = vld [vmem:[%s1248 + $0x650] sm:$0xff]
          %v1623 = vld [vmem:[%s1248 + $0x658] sm:$0xff]
          %v1624 = vld [vmem:[%s1248 + $0x660] sm:$0xff]
          %v1625 = vld [vmem:[%s1248 + $0x668] sm:$0xff]
          %v1626 = vld [vmem:[%s1248 + $0x670] sm:$0xff]
          %v1627 = vld [vmem:[%s1248 + $0x678] sm:$0xff]
          %v1628 = vld [vmem:[%s1248 + $0x680] sm:$0xff]
          %v1629 = vld [vmem:[%s1248 + $0x688] sm:$0xff]
          %v1630 = vld [vmem:[%s1248 + $0x690] sm:$0xff]
          %v1631 = vld [vmem:[%s1248 + $0x698] sm:$0xff]
          %v1632 = vld [vmem:[%s1248 + $0x6a0] sm:$0xff]
          %v1633 = vld [vmem:[%s1248 + $0x6a8] sm:$0xff]
          %v1634 = vld [vmem:[%s1248 + $0x6b0] sm:$0xff]
          %v1635 = vld [vmem:[%s1248 + $0x6b8] sm:$0xff]
          %v1636 = vld [vmem:[%s1248 + $0x6c0] sm:$0xff]
          %v1637 = vld [vmem:[%s1248 + $0x6c8] sm:$0xff]
          %v1638 = vld [vmem:[%s1248 + $0x6d0] sm:$0xff]
          %v1639 = vld [vmem:[%s1248 + $0x6d8] sm:$0xff]
          %v1640 = vld [vmem:[%s1248 + $0x6e0] sm:$0xff]
          %v1641 = vld [vmem:[%s1248 + $0x6e8] sm:$0xff]
          %v1642 = vld [vmem:[%s1248 + $0x6f0] sm:$0xff]
          %v1643 = vld [vmem:[%s1248 + $0x6f8] sm:$0xff]
          %v1644 = vld [vmem:[%s1248 + $0x700] sm:$0xff]
          %v1645 = vld [vmem:[%s1248 + $0x708] sm:$0xff]
          %v1646 = vld [vmem:[%s1248 + $0x710] sm:$0xff]
          %v1647 = vld [vmem:[%s1248 + $0x718] sm:$0xff]
          %v1648 = vld [vmem:[%s1248 + $0x720] sm:$0xff]
          %v1649 = vld [vmem:[%s1248 + $0x728] sm:$0xff]
          %v1650 = vld [vmem:[%s1248 + $0x730] sm:$0xff]
          %v1651 = vld [vmem:[%s1248 + $0x738] sm:$0xff]
          %v1652 = vld [vmem:[%s1248 + $0x740] sm:$0xff]
          %v1653 = vld [vmem:[%s1248 + $0x748] sm:$0xff]
          %v1654 = vld [vmem:[%s1248 + $0x750] sm:$0xff]
          %v1655 = vld [vmem:[%s1248 + $0x758] sm:$0xff]
          %v1656 = vld [vmem:[%s1248 + $0x760] sm:$0xff]
          %v1657 = vld [vmem:[%s1248 + $0x768] sm:$0xff]
          %v1658 = vld [vmem:[%s1248 + $0x770] sm:$0xff]
          %v1659 = vld [vmem:[%s1248 + $0x778] sm:$0xff]
          %v1660 = vld [vmem:[%s1248 + $0x780] sm:$0xff]
          %v1661 = vld [vmem:[%s1248 + $0x788] sm:$0xff]
          %v1662 = vld [vmem:[%s1248 + $0x790] sm:$0xff]
          %v1663 = vld [vmem:[%s1248 + $0x798] sm:$0xff]
          %v1664 = vld [vmem:[%s1248 + $0x7a0] sm:$0xff]
          %v1665 = vld [vmem:[%s1248 + $0x7a8] sm:$0xff]
          %v1666 = vld [vmem:[%s1248 + $0x7b0] sm:$0xff]
          %v1667 = vld [vmem:[%s1248 + $0x7b8] sm:$0xff]
          %v1668 = vld [vmem:[%s1248 + $0x7c0] sm:$0xff]
          %v1669 = vld [vmem:[%s1248 + $0x7c8] sm:$0xff]
          %v1670 = vld [vmem:[%s1248 + $0x7d0] sm:$0xff]
          %v1671 = vld [vmem:[%s1248 + $0x7d8] sm:$0xff]
          %v1672 = vld [vmem:[%s1248 + $0x7e0] sm:$0xff]
          %v1673 = vld [vmem:[%s1248 + $0x7e8] sm:$0xff]
          %v1674 = vld [vmem:[%s1248 + $0x7f0] sm:$0xff]
          %v1675 = vld [vmem:[%s1248 + $0x7f8] sm:$0xff]
          %v1676 = vsel %vm1418, 1, 0
          %v1677 = vsel %vm1419, 1, 0
          %vm1678 = vcmp.eq.s32.totalorder %v1676, 1
          %vm1679 = vcmp.eq.s32.totalorder %v1677, 1
          %v1680 = vsel %vm1678, %v1420, 0.0
          %v1681 = vsel %vm1679, %v1421, 0.0
          %v1682 = vsel %vm1678, %v1422, 0.0
          %v1683 = vsel %vm1679, %v1423, 0.0
          %v1684 = vsel %vm1678, %v1424, 0.0
          %v1685 = vsel %vm1679, %v1425, 0.0
          %v1686 = vsel %vm1678, %v1426, 0.0
          %v1687 = vsel %vm1679, %v1427, 0.0
          %v1688 = vsel %vm1678, %v1428, 0.0
          %v1689 = vsel %vm1679, %v1429, 0.0
          %v1690 = vsel %vm1678, %v1430, 0.0
          %v1691 = vsel %vm1679, %v1431, 0.0
          %v1692 = vsel %vm1678, %v1432, 0.0
          %v1693 = vsel %vm1679, %v1433, 0.0
          %v1694 = vsel %vm1678, %v1434, 0.0
          %v1695 = vsel %vm1679, %v1435, 0.0
          %v1696 = vsel %vm1678, %v1436, 0.0
          %v1697 = vsel %vm1679, %v1437, 0.0
          %v1698 = vsel %vm1678, %v1438, 0.0
          %v1699 = vsel %vm1679, %v1439, 0.0
          %v1700 = vsel %vm1678, %v1440, 0.0
          %v1701 = vsel %vm1679, %v1441, 0.0
          %v1702 = vsel %vm1678, %v1442, 0.0
          %v1703 = vsel %vm1679, %v1443, 0.0
          %v1704 = vsel %vm1678, %v1444, 0.0
          %v1705 = vsel %vm1679, %v1445, 0.0
          %v1706 = vsel %vm1678, %v1446, 0.0
          %v1707 = vsel %vm1679, %v1447, 0.0
          %v1708 = vsel %vm1678, %v1448, 0.0
          %v1709 = vsel %vm1679, %v1449, 0.0
          %v1710 = vsel %vm1678, %v1450, 0.0
          %v1711 = vsel %vm1679, %v1451, 0.0
          %v1712 = vsel %vm1678, %v1452, 0.0
          %v1713 = vsel %vm1679, %v1453, 0.0
          %v1714 = vsel %vm1678, %v1454, 0.0
          %v1715 = vsel %vm1679, %v1455, 0.0
          %v1716 = vsel %vm1678, %v1456, 0.0
          %v1717 = vsel %vm1679, %v1457, 0.0
          %v1718 = vsel %vm1678, %v1458, 0.0
          %v1719 = vsel %vm1679, %v1459, 0.0
          %v1720 = vsel %vm1678, %v1460, 0.0
          %v1721 = vsel %vm1679, %v1461, 0.0
          %v1722 = vsel %vm1678, %v1462, 0.0
          %v1723 = vsel %vm1679, %v1463, 0.0
          %v1724 = vsel %vm1678, %v1464, 0.0
          %v1725 = vsel %vm1679, %v1465, 0.0
          %v1726 = vsel %vm1678, %v1466, 0.0
          %v1727 = vsel %vm1679, %v1467, 0.0
          %v1728 = vsel %vm1678, %v1468, 0.0
          %v1729 = vsel %vm1679, %v1469, 0.0
          %v1730 = vsel %vm1678, %v1470, 0.0
          %v1731 = vsel %vm1679, %v1471, 0.0
          %v1732 = vsel %vm1678, %v1472, 0.0
          %v1733 = vsel %vm1679, %v1473, 0.0
          %v1734 = vsel %vm1678, %v1474, 0.0
          %v1735 = vsel %vm1679, %v1475, 0.0
          %v1736 = vsel %vm1678, %v1476, 0.0
          %v1737 = vsel %vm1679, %v1477, 0.0
          %v1738 = vsel %vm1678, %v1478, 0.0
          %v1739 = vsel %vm1679, %v1479, 0.0
          %v1740 = vsel %vm1678, %v1480, 0.0
          %v1741 = vsel %vm1679, %v1481, 0.0
          %v1742 = vsel %vm1678, %v1482, 0.0
          %v1743 = vsel %vm1679, %v1483, 0.0
          %v1744 = vsel %vm1678, %v1484, 0.0
          %v1745 = vsel %vm1679, %v1485, 0.0
          %v1746 = vsel %vm1678, %v1486, 0.0
          %v1747 = vsel %vm1679, %v1487, 0.0
          %v1748 = vsel %vm1678, %v1488, 0.0
          %v1749 = vsel %vm1679, %v1489, 0.0
          %v1750 = vsel %vm1678, %v1490, 0.0
          %v1751 = vsel %vm1679, %v1491, 0.0
          %v1752 = vsel %vm1678, %v1492, 0.0
          %v1753 = vsel %vm1679, %v1493, 0.0
          %v1754 = vsel %vm1678, %v1494, 0.0
          %v1755 = vsel %vm1679, %v1495, 0.0
          %v1756 = vsel %vm1678, %v1496, 0.0
          %v1757 = vsel %vm1679, %v1497, 0.0
          %v1758 = vsel %vm1678, %v1498, 0.0
          %v1759 = vsel %vm1679, %v1499, 0.0
          %v1760 = vsel %vm1678, %v1500, 0.0
          %v1761 = vsel %vm1679, %v1501, 0.0
          %v1762 = vsel %vm1678, %v1502, 0.0
          %v1763 = vsel %vm1679, %v1503, 0.0
          %v1764 = vsel %vm1678, %v1504, 0.0
          %v1765 = vsel %vm1679, %v1505, 0.0
          %v1766 = vsel %vm1678, %v1506, 0.0
          %v1767 = vsel %vm1679, %v1507, 0.0
          %v1768 = vsel %vm1678, %v1508, 0.0
          %v1769 = vsel %vm1679, %v1509, 0.0
          %v1770 = vsel %vm1678, %v1510, 0.0
          %v1771 = vsel %vm1679, %v1511, 0.0
          %v1772 = vsel %vm1678, %v1512, 0.0
          %v1773 = vsel %vm1679, %v1513, 0.0
          %v1774 = vsel %vm1678, %v1514, 0.0
          %v1775 = vsel %vm1679, %v1515, 0.0
          %v1776 = vsel %vm1678, %v1516, 0.0
          %v1777 = vsel %vm1679, %v1517, 0.0
          %v1778 = vsel %vm1678, %v1518, 0.0
          %v1779 = vsel %vm1679, %v1519, 0.0
          %v1780 = vsel %vm1678, %v1520, 0.0
          %v1781 = vsel %vm1679, %v1521, 0.0
          %v1782 = vsel %vm1678, %v1522, 0.0
          %v1783 = vsel %vm1679, %v1523, 0.0
          %v1784 = vsel %vm1678, %v1524, 0.0
          %v1785 = vsel %vm1679, %v1525, 0.0
          %v1786 = vsel %vm1678, %v1526, 0.0
          %v1787 = vsel %vm1679, %v1527, 0.0
          %v1788 = vsel %vm1678, %v1528, 0.0
          %v1789 = vsel %vm1679, %v1529, 0.0
          %v1790 = vsel %vm1678, %v1530, 0.0
          %v1791 = vsel %vm1679, %v1531, 0.0
          %v1792 = vsel %vm1678, %v1532, 0.0
          %v1793 = vsel %vm1679, %v1533, 0.0
          %v1794 = vsel %vm1678, %v1534, 0.0
          %v1795 = vsel %vm1679, %v1535, 0.0
          %v1796 = vsel %vm1678, %v1536, 0.0
          %v1797 = vsel %vm1679, %v1537, 0.0
          %v1798 = vsel %vm1678, %v1538, 0.0
          %v1799 = vsel %vm1679, %v1539, 0.0
          %v1800 = vsel %vm1678, %v1540, 0.0
          %v1801 = vsel %vm1679, %v1541, 0.0
          %v1802 = vsel %vm1678, %v1542, 0.0
          %v1803 = vsel %vm1679, %v1543, 0.0
          %v1804 = vsel %vm1678, %v1544, 0.0
          %v1805 = vsel %vm1679, %v1545, 0.0
          %v1806 = vsel %vm1678, %v1546, 0.0
          %v1807 = vsel %vm1679, %v1547, 0.0
          %v1808 = vsel %vm1678, %v1548, 0.0
          %v1809 = vsel %vm1679, %v1549, 0.0
          %v1810 = vsel %vm1678, %v1550, 0.0
          %v1811 = vsel %vm1679, %v1551, 0.0
          %v1812 = vsel %vm1678, %v1552, 0.0
          %v1813 = vsel %vm1679, %v1553, 0.0
          %v1814 = vsel %vm1678, %v1554, 0.0
          %v1815 = vsel %vm1679, %v1555, 0.0
          %v1816 = vsel %vm1678, %v1556, 0.0
          %v1817 = vsel %vm1679, %v1557, 0.0
          %v1818 = vsel %vm1678, %v1558, 0.0
          %v1819 = vsel %vm1679, %v1559, 0.0
          %v1820 = vsel %vm1678, %v1560, 0.0
          %v1821 = vsel %vm1679, %v1561, 0.0
          %v1822 = vsel %vm1678, %v1562, 0.0
          %v1823 = vsel %vm1679, %v1563, 0.0
          %v1824 = vsel %vm1678, %v1564, 0.0
          %v1825 = vsel %vm1679, %v1565, 0.0
          %v1826 = vsel %vm1678, %v1566, 0.0
          %v1827 = vsel %vm1679, %v1567, 0.0
          %v1828 = vsel %vm1678, %v1568, 0.0
          %v1829 = vsel %vm1679, %v1569, 0.0
          %v1830 = vsel %vm1678, %v1570, 0.0
          %v1831 = vsel %vm1679, %v1571, 0.0
          %v1832 = vsel %vm1678, %v1572, 0.0
          %v1833 = vsel %vm1679, %v1573, 0.0
          %v1834 = vsel %vm1678, %v1574, 0.0
          %v1835 = vsel %vm1679, %v1575, 0.0
          %v1836 = vsel %vm1678, %v1576, 0.0
          %v1837 = vsel %vm1679, %v1577, 0.0
          %v1838 = vsel %vm1678, %v1578, 0.0
          %v1839 = vsel %vm1679, %v1579, 0.0
          %v1840 = vsel %vm1678, %v1580, 0.0
          %v1841 = vsel %vm1679, %v1581, 0.0
          %v1842 = vsel %vm1678, %v1582, 0.0
          %v1843 = vsel %vm1679, %v1583, 0.0
          %v1844 = vsel %vm1678, %v1584, 0.0
          %v1845 = vsel %vm1679, %v1585, 0.0
          %v1846 = vsel %vm1678, %v1586, 0.0
          %v1847 = vsel %vm1679, %v1587, 0.0
          %v1848 = vsel %vm1678, %v1588, 0.0
          %v1849 = vsel %vm1679, %v1589, 0.0
          %v1850 = vsel %vm1678, %v1590, 0.0
          %v1851 = vsel %vm1679, %v1591, 0.0
          %v1852 = vsel %vm1678, %v1592, 0.0
          %v1853 = vsel %vm1679, %v1593, 0.0
          %v1854 = vsel %vm1678, %v1594, 0.0
          %v1855 = vsel %vm1679, %v1595, 0.0
          %v1856 = vsel %vm1678, %v1596, 0.0
          %v1857 = vsel %vm1679, %v1597, 0.0
          %v1858 = vsel %vm1678, %v1598, 0.0
          %v1859 = vsel %vm1679, %v1599, 0.0
          %v1860 = vsel %vm1678, %v1600, 0.0
          %v1861 = vsel %vm1679, %v1601, 0.0
          %v1862 = vsel %vm1678, %v1602, 0.0
          %v1863 = vsel %vm1679, %v1603, 0.0
          %v1864 = vsel %vm1678, %v1604, 0.0
          %v1865 = vsel %vm1679, %v1605, 0.0
          %v1866 = vsel %vm1678, %v1606, 0.0
          %v1867 = vsel %vm1679, %v1607, 0.0
          %v1868 = vsel %vm1678, %v1608, 0.0
          %v1869 = vsel %vm1679, %v1609, 0.0
          %v1870 = vsel %vm1678, %v1610, 0.0
          %v1871 = vsel %vm1679, %v1611, 0.0
          %v1872 = vsel %vm1678, %v1612, 0.0
          %v1873 = vsel %vm1679, %v1613, 0.0
          %v1874 = vsel %vm1678, %v1614, 0.0
          %v1875 = vsel %vm1679, %v1615, 0.0
          %v1876 = vsel %vm1678, %v1616, 0.0
          %v1877 = vsel %vm1679, %v1617, 0.0
          %v1878 = vsel %vm1678, %v1618, 0.0
          %v1879 = vsel %vm1679, %v1619, 0.0
          %v1880 = vsel %vm1678, %v1620, 0.0
          %v1881 = vsel %vm1679, %v1621, 0.0
          %v1882 = vsel %vm1678, %v1622, 0.0
          %v1883 = vsel %vm1679, %v1623, 0.0
          %v1884 = vsel %vm1678, %v1624, 0.0
          %v1885 = vsel %vm1679, %v1625, 0.0
          %v1886 = vsel %vm1678, %v1626, 0.0
          %v1887 = vsel %vm1679, %v1627, 0.0
          %v1888 = vsel %vm1678, %v1628, 0.0
          %v1889 = vsel %vm1679, %v1629, 0.0
          %v1890 = vsel %vm1678, %v1630, 0.0
          %v1891 = vsel %vm1679, %v1631, 0.0
          %v1892 = vsel %vm1678, %v1632, 0.0
          %v1893 = vsel %vm1679, %v1633, 0.0
          %v1894 = vsel %vm1678, %v1634, 0.0
          %v1895 = vsel %vm1679, %v1635, 0.0
          %v1896 = vsel %vm1678, %v1636, 0.0
          %v1897 = vsel %vm1679, %v1637, 0.0
          %v1898 = vsel %vm1678, %v1638, 0.0
          %v1899 = vsel %vm1679, %v1639, 0.0
          %v1900 = vsel %vm1678, %v1640, 0.0
          %v1901 = vsel %vm1679, %v1641, 0.0
          %v1902 = vsel %vm1678, %v1642, 0.0
          %v1903 = vsel %vm1679, %v1643, 0.0
          %v1904 = vsel %vm1678, %v1644, 0.0
          %v1905 = vsel %vm1679, %v1645, 0.0
          %v1906 = vsel %vm1678, %v1646, 0.0
          %v1907 = vsel %vm1679, %v1647, 0.0
          %v1908 = vsel %vm1678, %v1648, 0.0
          %v1909 = vsel %vm1679, %v1649, 0.0
          %v1910 = vsel %vm1678, %v1650, 0.0
          %v1911 = vsel %vm1679, %v1651, 0.0
          %v1912 = vsel %vm1678, %v1652, 0.0
          %v1913 = vsel %vm1679, %v1653, 0.0
          %v1914 = vsel %vm1678, %v1654, 0.0
          %v1915 = vsel %vm1679, %v1655, 0.0
          %v1916 = vsel %vm1678, %v1656, 0.0
          %v1917 = vsel %vm1679, %v1657, 0.0
          %v1918 = vsel %vm1678, %v1658, 0.0
          %v1919 = vsel %vm1679, %v1659, 0.0
          %v1920 = vsel %vm1678, %v1660, 0.0
          %v1921 = vsel %vm1679, %v1661, 0.0
          %v1922 = vsel %vm1678, %v1662, 0.0
          %v1923 = vsel %vm1679, %v1663, 0.0
          %v1924 = vsel %vm1678, %v1664, 0.0
          %v1925 = vsel %vm1679, %v1665, 0.0
          %v1926 = vsel %vm1678, %v1666, 0.0
          %v1927 = vsel %vm1679, %v1667, 0.0
          %v1928 = vsel %vm1678, %v1668, 0.0
          %v1929 = vsel %vm1679, %v1669, 0.0
          %v1930 = vsel %vm1678, %v1670, 0.0
          %v1931 = vsel %vm1679, %v1671, 0.0
          %v1932 = vsel %vm1678, %v1672, 0.0
          %v1933 = vsel %vm1679, %v1673, 0.0
          %v1934 = vsel %vm1678, %v1674, 0.0
          %v1935 = vsel %vm1679, %v1675, 0.0
          %v1936 = vadd.f32 %v1680, %v1681
          %v1937 = vadd.f32 %v1682, %v1683
          %v1938 = vadd.f32 %v1684, %v1685
          %v1939 = vadd.f32 %v1686, %v1687
          %v1940 = vadd.f32 %v1688, %v1689
          %v1941 = vadd.f32 %v1690, %v1691
          %v1942 = vadd.f32 %v1692, %v1693
          %v1943 = vadd.f32 %v1694, %v1695
          %v1944 = vadd.f32 %v1696, %v1697
          %v1945 = vadd.f32 %v1698, %v1699
          %v1946 = vadd.f32 %v1700, %v1701
          %v1947 = vadd.f32 %v1702, %v1703
          %v1948 = vadd.f32 %v1704, %v1705
          %v1949 = vadd.f32 %v1706, %v1707
          %v1950 = vadd.f32 %v1708, %v1709
          %v1951 = vadd.f32 %v1710, %v1711
          %v1952 = vadd.f32 %v1712, %v1713
          %v1953 = vadd.f32 %v1714, %v1715
          %v1954 = vadd.f32 %v1716, %v1717
          %v1955 = vadd.f32 %v1718, %v1719
          %v1956 = vadd.f32 %v1720, %v1721
          %v1957 = vadd.f32 %v1722, %v1723
          %v1958 = vadd.f32 %v1724, %v1725
          %v1959 = vadd.f32 %v1726, %v1727
          %v1960 = vadd.f32 %v1728, %v1729
          %v1961 = vadd.f32 %v1730, %v1731
          %v1962 = vadd.f32 %v1732, %v1733
          %v1963 = vadd.f32 %v1734, %v1735
          %v1964 = vadd.f32 %v1736, %v1737
          %v1965 = vadd.f32 %v1738, %v1739
          %v1966 = vadd.f32 %v1740, %v1741
          %v1967 = vadd.f32 %v1742, %v1743
          %v1968 = vadd.f32 %v1744, %v1745
          %v1969 = vadd.f32 %v1746, %v1747
          %v1970 = vadd.f32 %v1748, %v1749
          %v1971 = vadd.f32 %v1750, %v1751
          %v1972 = vadd.f32 %v1752, %v1753
          %v1973 = vadd.f32 %v1754, %v1755
          %v1974 = vadd.f32 %v1756, %v1757
          %v1975 = vadd.f32 %v1758, %v1759
          %v1976 = vadd.f32 %v1760, %v1761
          %v1977 = vadd.f32 %v1762, %v1763
          %v1978 = vadd.f32 %v1764, %v1765
          %v1979 = vadd.f32 %v1766, %v1767
          %v1980 = vadd.f32 %v1768, %v1769
          %v1981 = vadd.f32 %v1770, %v1771
          %v1982 = vadd.f32 %v1772, %v1773
          %v1983 = vadd.f32 %v1774, %v1775
          %v1984 = vadd.f32 %v1776, %v1777
          %v1985 = vadd.f32 %v1778, %v1779
          %v1986 = vadd.f32 %v1780, %v1781
          %v1987 = vadd.f32 %v1782, %v1783
          %v1988 = vadd.f32 %v1784, %v1785
          %v1989 = vadd.f32 %v1786, %v1787
          %v1990 = vadd.f32 %v1788, %v1789
          %v1991 = vadd.f32 %v1790, %v1791
          %v1992 = vadd.f32 %v1792, %v1793
          %v1993 = vadd.f32 %v1794, %v1795
          %v1994 = vadd.f32 %v1796, %v1797
          %v1995 = vadd.f32 %v1798, %v1799
          %v1996 = vadd.f32 %v1800, %v1801
          %v1997 = vadd.f32 %v1802, %v1803
          %v1998 = vadd.f32 %v1804, %v1805
          %v1999 = vadd.f32 %v1806, %v1807
          %v2000 = vadd.f32 %v1808, %v1809
          %v2001 = vadd.f32 %v1810, %v1811
          %v2002 = vadd.f32 %v1812, %v1813
          %v2003 = vadd.f32 %v1814, %v1815
          %v2004 = vadd.f32 %v1816, %v1817
          %v2005 = vadd.f32 %v1818, %v1819
          %v2006 = vadd.f32 %v1820, %v1821
          %v2007 = vadd.f32 %v1822, %v1823
          %v2008 = vadd.f32 %v1824, %v1825
          %v2009 = vadd.f32 %v1826, %v1827
          %v2010 = vadd.f32 %v1828, %v1829
          %v2011 = vadd.f32 %v1830, %v1831
          %v2012 = vadd.f32 %v1832, %v1833
          %v2013 = vadd.f32 %v1834, %v1835
          %v2014 = vadd.f32 %v1836, %v1837
          %v2015 = vadd.f32 %v1838, %v1839
          %v2016 = vadd.f32 %v1840, %v1841
          %v2017 = vadd.f32 %v1842, %v1843
          %v2018 = vadd.f32 %v1844, %v1845
          %v2019 = vadd.f32 %v1846, %v1847
          %v2020 = vadd.f32 %v1848, %v1849
          %v2021 = vadd.f32 %v1850, %v1851
          %v2022 = vadd.f32 %v1852, %v1853
          %v2023 = vadd.f32 %v1854, %v1855
          %v2024 = vadd.f32 %v1856, %v1857
          %v2025 = vadd.f32 %v1858, %v1859
          %v2026 = vadd.f32 %v1860, %v1861
          %v2027 = vadd.f32 %v1862, %v1863
          %v2028 = vadd.f32 %v1864, %v1865
          %v2029 = vadd.f32 %v1866, %v1867
          %v2030 = vadd.f32 %v1868, %v1869
          %v2031 = vadd.f32 %v1870, %v1871
          %v2032 = vadd.f32 %v1872, %v1873
          %v2033 = vadd.f32 %v1874, %v1875
          %v2034 = vadd.f32 %v1876, %v1877
          %v2035 = vadd.f32 %v1878, %v1879
          %v2036 = vadd.f32 %v1880, %v1881
          %v2037 = vadd.f32 %v1882, %v1883
          %v2038 = vadd.f32 %v1884, %v1885
          %v2039 = vadd.f32 %v1886, %v1887
          %v2040 = vadd.f32 %v1888, %v1889
          %v2041 = vadd.f32 %v1890, %v1891
          %v2042 = vadd.f32 %v1892, %v1893
          %v2043 = vadd.f32 %v1894, %v1895
          %v2044 = vadd.f32 %v1896, %v1897
          %v2045 = vadd.f32 %v1898, %v1899
          %v2046 = vadd.f32 %v1900, %v1901
          %v2047 = vadd.f32 %v1902, %v1903
          %v2048 = vadd.f32 %v1904, %v1905
          %v2049 = vadd.f32 %v1906, %v1907
          %v2050 = vadd.f32 %v1908, %v1909
          %v2051 = vadd.f32 %v1910, %v1911
          %v2052 = vadd.f32 %v1912, %v1913
          %v2053 = vadd.f32 %v1914, %v1915
          %v2054 = vadd.f32 %v1916, %v1917
          %v2055 = vadd.f32 %v1918, %v1919
          %v2056 = vadd.f32 %v1920, %v1921
          %v2057 = vadd.f32 %v1922, %v1923
          %v2058 = vadd.f32 %v1924, %v1925
          %v2059 = vadd.f32 %v1926, %v1927
          %v2060 = vadd.f32 %v1928, %v1929
          %v2061 = vadd.f32 %v1930, %v1931
          %v2062 = vadd.f32 %v1932, %v1933
          %v2063 = vadd.f32 %v1934, %v1935
          %v2064 = vld [vmem:[#allocation2] sm:$0xff]
          %v2065 = vld [vmem:[#allocation2 + $0x8] sm:$0xff]
          %v2066 = vld [vmem:[#allocation2 + $0x10] sm:$0xff]
          %v2067 = vld [vmem:[#allocation2 + $0x18] sm:$0xff]
          %v2068 = vld [vmem:[#allocation2 + $0x20] sm:$0xff]
          %v2069 = vld [vmem:[#allocation2 + $0x28] sm:$0xff]
          %v2070 = vld [vmem:[#allocation2 + $0x30] sm:$0xff]
          %v2071 = vld [vmem:[#allocation2 + $0x38] sm:$0xff]
          %v2072 = vld [vmem:[#allocation2 + $0x40] sm:$0xff]
          %v2073 = vld [vmem:[#allocation2 + $0x48] sm:$0xff]
          %v2074 = vld [vmem:[#allocation2 + $0x50] sm:$0xff]
          %v2075 = vld [vmem:[#allocation2 + $0x58] sm:$0xff]
          %v2076 = vld [vmem:[#allocation2 + $0x60] sm:$0xff]
          %v2077 = vld [vmem:[#allocation2 + $0x68] sm:$0xff]
          %v2078 = vld [vmem:[#allocation2 + $0x70] sm:$0xff]
          %v2079 = vld [vmem:[#allocation2 + $0x78] sm:$0xff]
          %v2080 = vld [vmem:[#allocation2 + $0x80] sm:$0xff]
          %v2081 = vld [vmem:[#allocation2 + $0x88] sm:$0xff]
          %v2082 = vld [vmem:[#allocation2 + $0x90] sm:$0xff]
          %v2083 = vld [vmem:[#allocation2 + $0x98] sm:$0xff]
          %v2084 = vld [vmem:[#allocation2 + $0xa0] sm:$0xff]
          %v2085 = vld [vmem:[#allocation2 + $0xa8] sm:$0xff]
          %v2086 = vld [vmem:[#allocation2 + $0xb0] sm:$0xff]
          %v2087 = vld [vmem:[#allocation2 + $0xb8] sm:$0xff]
          %v2088 = vld [vmem:[#allocation2 + $0xc0] sm:$0xff]
          %v2089 = vld [vmem:[#allocation2 + $0xc8] sm:$0xff]
          %v2090 = vld [vmem:[#allocation2 + $0xd0] sm:$0xff]
          %v2091 = vld [vmem:[#allocation2 + $0xd8] sm:$0xff]
          %v2092 = vld [vmem:[#allocation2 + $0xe0] sm:$0xff]
          %v2093 = vld [vmem:[#allocation2 + $0xe8] sm:$0xff]
          %v2094 = vld [vmem:[#allocation2 + $0xf0] sm:$0xff]
          %v2095 = vld [vmem:[#allocation2 + $0xf8] sm:$0xff]
          %v2096 = vld [vmem:[#allocation2 + $0x100] sm:$0xff]
          %v2097 = vld [vmem:[#allocation2 + $0x108] sm:$0xff]
          %v2098 = vld [vmem:[#allocation2 + $0x110] sm:$0xff]
          %v2099 = vld [vmem:[#allocation2 + $0x118] sm:$0xff]
          %v2100 = vld [vmem:[#allocation2 + $0x120] sm:$0xff]
          %v2101 = vld [vmem:[#allocation2 + $0x128] sm:$0xff]
          %v2102 = vld [vmem:[#allocation2 + $0x130] sm:$0xff]
          %v2103 = vld [vmem:[#allocation2 + $0x138] sm:$0xff]
          %v2104 = vld [vmem:[#allocation2 + $0x140] sm:$0xff]
          %v2105 = vld [vmem:[#allocation2 + $0x148] sm:$0xff]
          %v2106 = vld [vmem:[#allocation2 + $0x150] sm:$0xff]
          %v2107 = vld [vmem:[#allocation2 + $0x158] sm:$0xff]
          %v2108 = vld [vmem:[#allocation2 + $0x160] sm:$0xff]
          %v2109 = vld [vmem:[#allocation2 + $0x168] sm:$0xff]
          %v2110 = vld [vmem:[#allocation2 + $0x170] sm:$0xff]
          %v2111 = vld [vmem:[#allocation2 + $0x178] sm:$0xff]
          %v2112 = vld [vmem:[#allocation2 + $0x180] sm:$0xff]
          %v2113 = vld [vmem:[#allocation2 + $0x188] sm:$0xff]
          %v2114 = vld [vmem:[#allocation2 + $0x190] sm:$0xff]
          %v2115 = vld [vmem:[#allocation2 + $0x198] sm:$0xff]
          %v2116 = vld [vmem:[#allocation2 + $0x1a0] sm:$0xff]
          %v2117 = vld [vmem:[#allocation2 + $0x1a8] sm:$0xff]
          %v2118 = vld [vmem:[#allocation2 + $0x1b0] sm:$0xff]
          %v2119 = vld [vmem:[#allocation2 + $0x1b8] sm:$0xff]
          %v2120 = vld [vmem:[#allocation2 + $0x1c0] sm:$0xff]
          %v2121 = vld [vmem:[#allocation2 + $0x1c8] sm:$0xff]
          %v2122 = vld [vmem:[#allocation2 + $0x1d0] sm:$0xff]
          %v2123 = vld [vmem:[#allocation2 + $0x1d8] sm:$0xff]
          %v2124 = vld [vmem:[#allocation2 + $0x1e0] sm:$0xff]
          %v2125 = vld [vmem:[#allocation2 + $0x1e8] sm:$0xff]
          %v2126 = vld [vmem:[#allocation2 + $0x1f0] sm:$0xff]
          %v2127 = vld [vmem:[#allocation2 + $0x1f8] sm:$0xff]
          %v2128 = vld [vmem:[#allocation2 + $0x200] sm:$0xff]
          %v2129 = vld [vmem:[#allocation2 + $0x208] sm:$0xff]
          %v2130 = vld [vmem:[#allocation2 + $0x210] sm:$0xff]
          %v2131 = vld [vmem:[#allocation2 + $0x218] sm:$0xff]
          %v2132 = vld [vmem:[#allocation2 + $0x220] sm:$0xff]
          %v2133 = vld [vmem:[#allocation2 + $0x228] sm:$0xff]
          %v2134 = vld [vmem:[#allocation2 + $0x230] sm:$0xff]
          %v2135 = vld [vmem:[#allocation2 + $0x238] sm:$0xff]
          %v2136 = vld [vmem:[#allocation2 + $0x240] sm:$0xff]
          %v2137 = vld [vmem:[#allocation2 + $0x248] sm:$0xff]
          %v2138 = vld [vmem:[#allocation2 + $0x250] sm:$0xff]
          %v2139 = vld [vmem:[#allocation2 + $0x258] sm:$0xff]
          %v2140 = vld [vmem:[#allocation2 + $0x260] sm:$0xff]
          %v2141 = vld [vmem:[#allocation2 + $0x268] sm:$0xff]
          %v2142 = vld [vmem:[#allocation2 + $0x270] sm:$0xff]
          %v2143 = vld [vmem:[#allocation2 + $0x278] sm:$0xff]
          %v2144 = vld [vmem:[#allocation2 + $0x280] sm:$0xff]
          %v2145 = vld [vmem:[#allocation2 + $0x288] sm:$0xff]
          %v2146 = vld [vmem:[#allocation2 + $0x290] sm:$0xff]
          %v2147 = vld [vmem:[#allocation2 + $0x298] sm:$0xff]
          %v2148 = vld [vmem:[#allocation2 + $0x2a0] sm:$0xff]
          %v2149 = vld [vmem:[#allocation2 + $0x2a8] sm:$0xff]
          %v2150 = vld [vmem:[#allocation2 + $0x2b0] sm:$0xff]
          %v2151 = vld [vmem:[#allocation2 + $0x2b8] sm:$0xff]
          %v2152 = vld [vmem:[#allocation2 + $0x2c0] sm:$0xff]
          %v2153 = vld [vmem:[#allocation2 + $0x2c8] sm:$0xff]
          %v2154 = vld [vmem:[#allocation2 + $0x2d0] sm:$0xff]
          %v2155 = vld [vmem:[#allocation2 + $0x2d8] sm:$0xff]
          %v2156 = vld [vmem:[#allocation2 + $0x2e0] sm:$0xff]
          %v2157 = vld [vmem:[#allocation2 + $0x2e8] sm:$0xff]
          %v2158 = vld [vmem:[#allocation2 + $0x2f0] sm:$0xff]
          %v2159 = vld [vmem:[#allocation2 + $0x2f8] sm:$0xff]
          %v2160 = vld [vmem:[#allocation2 + $0x300] sm:$0xff]
          %v2161 = vld [vmem:[#allocation2 + $0x308] sm:$0xff]
          %v2162 = vld [vmem:[#allocation2 + $0x310] sm:$0xff]
          %v2163 = vld [vmem:[#allocation2 + $0x318] sm:$0xff]
          %v2164 = vld [vmem:[#allocation2 + $0x320] sm:$0xff]
          %v2165 = vld [vmem:[#allocation2 + $0x328] sm:$0xff]
          %v2166 = vld [vmem:[#allocation2 + $0x330] sm:$0xff]
          %v2167 = vld [vmem:[#allocation2 + $0x338] sm:$0xff]
          %v2168 = vld [vmem:[#allocation2 + $0x340] sm:$0xff]
          %v2169 = vld [vmem:[#allocation2 + $0x348] sm:$0xff]
          %v2170 = vld [vmem:[#allocation2 + $0x350] sm:$0xff]
          %v2171 = vld [vmem:[#allocation2 + $0x358] sm:$0xff]
          %v2172 = vld [vmem:[#allocation2 + $0x360] sm:$0xff]
          %v2173 = vld [vmem:[#allocation2 + $0x368] sm:$0xff]
          %v2174 = vld [vmem:[#allocation2 + $0x370] sm:$0xff]
          %v2175 = vld [vmem:[#allocation2 + $0x378] sm:$0xff]
          %v2176 = vld [vmem:[#allocation2 + $0x380] sm:$0xff]
          %v2177 = vld [vmem:[#allocation2 + $0x388] sm:$0xff]
          %v2178 = vld [vmem:[#allocation2 + $0x390] sm:$0xff]
          %v2179 = vld [vmem:[#allocation2 + $0x398] sm:$0xff]
          %v2180 = vld [vmem:[#allocation2 + $0x3a0] sm:$0xff]
          %v2181 = vld [vmem:[#allocation2 + $0x3a8] sm:$0xff]
          %v2182 = vld [vmem:[#allocation2 + $0x3b0] sm:$0xff]
          %v2183 = vld [vmem:[#allocation2 + $0x3b8] sm:$0xff]
          %v2184 = vld [vmem:[#allocation2 + $0x3c0] sm:$0xff]
          %v2185 = vld [vmem:[#allocation2 + $0x3c8] sm:$0xff]
          %v2186 = vld [vmem:[#allocation2 + $0x3d0] sm:$0xff]
          %v2187 = vld [vmem:[#allocation2 + $0x3d8] sm:$0xff]
          %v2188 = vld [vmem:[#allocation2 + $0x3e0] sm:$0xff]
          %v2189 = vld [vmem:[#allocation2 + $0x3e8] sm:$0xff]
          %v2190 = vld [vmem:[#allocation2 + $0x3f0] sm:$0xff]
          %v2191 = vld [vmem:[#allocation2 + $0x3f8] sm:$0xff]
          %v2192 = vadd.f32 %v2064, %v1936
          %v2193 = vadd.f32 %v2065, %v1937
          %v2194 = vadd.f32 %v2066, %v1938
          %v2195 = vadd.f32 %v2067, %v1939
          %v2196 = vadd.f32 %v2068, %v1940
          %v2197 = vadd.f32 %v2069, %v1941
          %v2198 = vadd.f32 %v2070, %v1942
          %v2199 = vadd.f32 %v2071, %v1943
          %v2200 = vadd.f32 %v2072, %v1944
          %v2201 = vadd.f32 %v2073, %v1945
          %v2202 = vadd.f32 %v2074, %v1946
          %v2203 = vadd.f32 %v2075, %v1947
          %v2204 = vadd.f32 %v2076, %v1948
          %v2205 = vadd.f32 %v2077, %v1949
          %v2206 = vadd.f32 %v2078, %v1950
          %v2207 = vadd.f32 %v2079, %v1951
          %v2208 = vadd.f32 %v2080, %v1952
          %v2209 = vadd.f32 %v2081, %v1953
          %v2210 = vadd.f32 %v2082, %v1954
          %v2211 = vadd.f32 %v2083, %v1955
          %v2212 = vadd.f32 %v2084, %v1956
          %v2213 = vadd.f32 %v2085, %v1957
          %v2214 = vadd.f32 %v2086, %v1958
          %v2215 = vadd.f32 %v2087, %v1959
          %v2216 = vadd.f32 %v2088, %v1960
          %v2217 = vadd.f32 %v2089, %v1961
          %v2218 = vadd.f32 %v2090, %v1962
          %v2219 = vadd.f32 %v2091, %v1963
          %v2220 = vadd.f32 %v2092, %v1964
          %v2221 = vadd.f32 %v2093, %v1965
          %v2222 = vadd.f32 %v2094, %v1966
          %v2223 = vadd.f32 %v2095, %v1967
          %v2224 = vadd.f32 %v2096, %v1968
          %v2225 = vadd.f32 %v2097, %v1969
          %v2226 = vadd.f32 %v2098, %v1970
          %v2227 = vadd.f32 %v2099, %v1971
          %v2228 = vadd.f32 %v2100, %v1972
          %v2229 = vadd.f32 %v2101, %v1973
          %v2230 = vadd.f32 %v2102, %v1974
          %v2231 = vadd.f32 %v2103, %v1975
          %v2232 = vadd.f32 %v2104, %v1976
          %v2233 = vadd.f32 %v2105, %v1977
          %v2234 = vadd.f32 %v2106, %v1978
          %v2235 = vadd.f32 %v2107, %v1979
          %v2236 = vadd.f32 %v2108, %v1980
          %v2237 = vadd.f32 %v2109, %v1981
          %v2238 = vadd.f32 %v2110, %v1982
          %v2239 = vadd.f32 %v2111, %v1983
          %v2240 = vadd.f32 %v2112, %v1984
          %v2241 = vadd.f32 %v2113, %v1985
          %v2242 = vadd.f32 %v2114, %v1986
          %v2243 = vadd.f32 %v2115, %v1987
          %v2244 = vadd.f32 %v2116, %v1988
          %v2245 = vadd.f32 %v2117, %v1989
          %v2246 = vadd.f32 %v2118, %v1990
          %v2247 = vadd.f32 %v2119, %v1991
          %v2248 = vadd.f32 %v2120, %v1992
          %v2249 = vadd.f32 %v2121, %v1993
          %v2250 = vadd.f32 %v2122, %v1994
          %v2251 = vadd.f32 %v2123, %v1995
          %v2252 = vadd.f32 %v2124, %v1996
          %v2253 = vadd.f32 %v2125, %v1997
          %v2254 = vadd.f32 %v2126, %v1998
          %v2255 = vadd.f32 %v2127, %v1999
          %v2256 = vadd.f32 %v2128, %v2000
          %v2257 = vadd.f32 %v2129, %v2001
          %v2258 = vadd.f32 %v2130, %v2002
          %v2259 = vadd.f32 %v2131, %v2003
          %v2260 = vadd.f32 %v2132, %v2004
          %v2261 = vadd.f32 %v2133, %v2005
          %v2262 = vadd.f32 %v2134, %v2006
          %v2263 = vadd.f32 %v2135, %v2007
          %v2264 = vadd.f32 %v2136, %v2008
          %v2265 = vadd.f32 %v2137, %v2009
          %v2266 = vadd.f32 %v2138, %v2010
          %v2267 = vadd.f32 %v2139, %v2011
          %v2268 = vadd.f32 %v2140, %v2012
          %v2269 = vadd.f32 %v2141, %v2013
          %v2270 = vadd.f32 %v2142, %v2014
          %v2271 = vadd.f32 %v2143, %v2015
          %v2272 = vadd.f32 %v2144, %v2016
          %v2273 = vadd.f32 %v2145, %v2017
          %v2274 = vadd.f32 %v2146, %v2018
          %v2275 = vadd.f32 %v2147, %v2019
          %v2276 = vadd.f32 %v2148, %v2020
          %v2277 = vadd.f32 %v2149, %v2021
          %v2278 = vadd.f32 %v2150, %v2022
          %v2279 = vadd.f32 %v2151, %v2023
          %v2280 = vadd.f32 %v2152, %v2024
          %v2281 = vadd.f32 %v2153, %v2025
          %v2282 = vadd.f32 %v2154, %v2026
          %v2283 = vadd.f32 %v2155, %v2027
          %v2284 = vadd.f32 %v2156, %v2028
          %v2285 = vadd.f32 %v2157, %v2029
          %v2286 = vadd.f32 %v2158, %v2030
          %v2287 = vadd.f32 %v2159, %v2031
          %v2288 = vadd.f32 %v2160, %v2032
          %v2289 = vadd.f32 %v2161, %v2033
          %v2290 = vadd.f32 %v2162, %v2034
          %v2291 = vadd.f32 %v2163, %v2035
          %v2292 = vadd.f32 %v2164, %v2036
          %v2293 = vadd.f32 %v2165, %v2037
          %v2294 = vadd.f32 %v2166, %v2038
          %v2295 = vadd.f32 %v2167, %v2039
          %v2296 = vadd.f32 %v2168, %v2040
          %v2297 = vadd.f32 %v2169, %v2041
          %v2298 = vadd.f32 %v2170, %v2042
          %v2299 = vadd.f32 %v2171, %v2043
          %v2300 = vadd.f32 %v2172, %v2044
          %v2301 = vadd.f32 %v2173, %v2045
          %v2302 = vadd.f32 %v2174, %v2046
          %v2303 = vadd.f32 %v2175, %v2047
          %v2304 = vadd.f32 %v2176, %v2048
          %v2305 = vadd.f32 %v2177, %v2049
          %v2306 = vadd.f32 %v2178, %v2050
          %v2307 = vadd.f32 %v2179, %v2051
          %v2308 = vadd.f32 %v2180, %v2052
          %v2309 = vadd.f32 %v2181, %v2053
          %v2310 = vadd.f32 %v2182, %v2054
          %v2311 = vadd.f32 %v2183, %v2055
          %v2312 = vadd.f32 %v2184, %v2056
          %v2313 = vadd.f32 %v2185, %v2057
          %v2314 = vadd.f32 %v2186, %v2058
          %v2315 = vadd.f32 %v2187, %v2059
          %v2316 = vadd.f32 %v2188, %v2060
          %v2317 = vadd.f32 %v2189, %v2061
          %v2318 = vadd.f32 %v2190, %v2062
          %v2319 = vadd.f32 %v2191, %v2063
          %2320 = vst [vmem:[#allocation2] sm:$0xff] %v2192
          %2321 = vst [vmem:[#allocation2 + $0x8] sm:$0xff] %v2193
          %2322 = vst [vmem:[#allocation2 + $0x10] sm:$0xff] %v2194
          %2323 = vst [vmem:[#allocation2 + $0x18] sm:$0xff] %v2195
          %2324 = vst [vmem:[#allocation2 + $0x20] sm:$0xff] %v2196
          %2325 = vst [vmem:[#allocation2 + $0x28] sm:$0xff] %v2197
          %2326 = vst [vmem:[#allocation2 + $0x30] sm:$0xff] %v2198
          %2327 = vst [vmem:[#allocation2 + $0x38] sm:$0xff] %v2199
          %2328 = vst [vmem:[#allocation2 + $0x40] sm:$0xff] %v2200
          %2329 = vst [vmem:[#allocation2 + $0x48] sm:$0xff] %v2201
          %2330 = vst [vmem:[#allocation2 + $0x50] sm:$0xff] %v2202
          %2331 = vst [vmem:[#allocation2 + $0x58] sm:$0xff] %v2203
          %2332 = vst [vmem:[#allocation2 + $0x60] sm:$0xff] %v2204
          %2333 = vst [vmem:[#allocation2 + $0x68] sm:$0xff] %v2205
          %2334 = vst [vmem:[#allocation2 + $0x70] sm:$0xff] %v2206
          %2335 = vst [vmem:[#allocation2 + $0x78] sm:$0xff] %v2207
          %2336 = vst [vmem:[#allocation2 + $0x80] sm:$0xff] %v2208
          %2337 = vst [vmem:[#allocation2 + $0x88] sm:$0xff] %v2209
          %2338 = vst [vmem:[#allocation2 + $0x90] sm:$0xff] %v2210
          %2339 = vst [vmem:[#allocation2 + $0x98] sm:$0xff] %v2211
          %2340 = vst [vmem:[#allocation2 + $0xa0] sm:$0xff] %v2212
          %2341 = vst [vmem:[#allocation2 + $0xa8] sm:$0xff] %v2213
          %2342 = vst [vmem:[#allocation2 + $0xb0] sm:$0xff] %v2214
          %2343 = vst [vmem:[#allocation2 + $0xb8] sm:$0xff] %v2215
          %2344 = vst [vmem:[#allocation2 + $0xc0] sm:$0xff] %v2216
          %2345 = vst [vmem:[#allocation2 + $0xc8] sm:$0xff] %v2217
          %2346 = vst [vmem:[#allocation2 + $0xd0] sm:$0xff] %v2218
          %2347 = vst [vmem:[#allocation2 + $0xd8] sm:$0xff] %v2219
          %2348 = vst [vmem:[#allocation2 + $0xe0] sm:$0xff] %v2220
          %2349 = vst [vmem:[#allocation2 + $0xe8] sm:$0xff] %v2221
          %2350 = vst [vmem:[#allocation2 + $0xf0] sm:$0xff] %v2222
          %2351 = vst [vmem:[#allocation2 + $0xf8] sm:$0xff] %v2223
          %2352 = vst [vmem:[#allocation2 + $0x100] sm:$0xff] %v2224
          %2353 = vst [vmem:[#allocation2 + $0x108] sm:$0xff] %v2225
          %2354 = vst [vmem:[#allocation2 + $0x110] sm:$0xff] %v2226
          %2355 = vst [vmem:[#allocation2 + $0x118] sm:$0xff] %v2227
          %2356 = vst [vmem:[#allocation2 + $0x120] sm:$0xff] %v2228
          %2357 = vst [vmem:[#allocation2 + $0x128] sm:$0xff] %v2229
          %2358 = vst [vmem:[#allocation2 + $0x130] sm:$0xff] %v2230
          %2359 = vst [vmem:[#allocation2 + $0x138] sm:$0xff] %v2231
          %2360 = vst [vmem:[#allocation2 + $0x140] sm:$0xff] %v2232
          %2361 = vst [vmem:[#allocation2 + $0x148] sm:$0xff] %v2233
          %2362 = vst [vmem:[#allocation2 + $0x150] sm:$0xff] %v2234
          %2363 = vst [vmem:[#allocation2 + $0x158] sm:$0xff] %v2235
          %2364 = vst [vmem:[#allocation2 + $0x160] sm:$0xff] %v2236
          %2365 = vst [vmem:[#allocation2 + $0x168] sm:$0xff] %v2237
          %2366 = vst [vmem:[#allocation2 + $0x170] sm:$0xff] %v2238
          %2367 = vst [vmem:[#allocation2 + $0x178] sm:$0xff] %v2239
          %2368 = vst [vmem:[#allocation2 + $0x180] sm:$0xff] %v2240
          %2369 = vst [vmem:[#allocation2 + $0x188] sm:$0xff] %v2241
          %2370 = vst [vmem:[#allocation2 + $0x190] sm:$0xff] %v2242
          %2371 = vst [vmem:[#allocation2 + $0x198] sm:$0xff] %v2243
          %2372 = vst [vmem:[#allocation2 + $0x1a0] sm:$0xff] %v2244
          %2373 = vst [vmem:[#allocation2 + $0x1a8] sm:$0xff] %v2245
          %2374 = vst [vmem:[#allocation2 + $0x1b0] sm:$0xff] %v2246
          %2375 = vst [vmem:[#allocation2 + $0x1b8] sm:$0xff] %v2247
          %2376 = vst [vmem:[#allocation2 + $0x1c0] sm:$0xff] %v2248
          %2377 = vst [vmem:[#allocation2 + $0x1c8] sm:$0xff] %v2249
          %2378 = vst [vmem:[#allocation2 + $0x1d0] sm:$0xff] %v2250
          %2379 = vst [vmem:[#allocation2 + $0x1d8] sm:$0xff] %v2251
          %2380 = vst [vmem:[#allocation2 + $0x1e0] sm:$0xff] %v2252
          %2381 = vst [vmem:[#allocation2 + $0x1e8] sm:$0xff] %v2253
          %2382 = vst [vmem:[#allocation2 + $0x1f0] sm:$0xff] %v2254
          %2383 = vst [vmem:[#allocation2 + $0x1f8] sm:$0xff] %v2255
          %2384 = vst [vmem:[#allocation2 + $0x200] sm:$0xff] %v2256
          %2385 = vst [vmem:[#allocation2 + $0x208] sm:$0xff] %v2257
          %2386 = vst [vmem:[#allocation2 + $0x210] sm:$0xff] %v2258
          %2387 = vst [vmem:[#allocation2 + $0x218] sm:$0xff] %v2259
          %2388 = vst [vmem:[#allocation2 + $0x220] sm:$0xff] %v2260
          %2389 = vst [vmem:[#allocation2 + $0x228] sm:$0xff] %v2261
          %2390 = vst [vmem:[#allocation2 + $0x230] sm:$0xff] %v2262
          %2391 = vst [vmem:[#allocation2 + $0x238] sm:$0xff] %v2263
          %2392 = vst [vmem:[#allocation2 + $0x240] sm:$0xff] %v2264
          %2393 = vst [vmem:[#allocation2 + $0x248] sm:$0xff] %v2265
          %2394 = vst [vmem:[#allocation2 + $0x250] sm:$0xff] %v2266
          %2395 = vst [vmem:[#allocation2 + $0x258] sm:$0xff] %v2267
          %2396 = vst [vmem:[#allocation2 + $0x260] sm:$0xff] %v2268
          %2397 = vst [vmem:[#allocation2 + $0x268] sm:$0xff] %v2269
          %2398 = vst [vmem:[#allocation2 + $0x270] sm:$0xff] %v2270
          %2399 = vst [vmem:[#allocation2 + $0x278] sm:$0xff] %v2271
          %2400 = vst [vmem:[#allocation2 + $0x280] sm:$0xff] %v2272
          %2401 = vst [vmem:[#allocation2 + $0x288] sm:$0xff] %v2273
          %2402 = vst [vmem:[#allocation2 + $0x290] sm:$0xff] %v2274
          %2403 = vst [vmem:[#allocation2 + $0x298] sm:$0xff] %v2275
          %2404 = vst [vmem:[#allocation2 + $0x2a0] sm:$0xff] %v2276
          %2405 = vst [vmem:[#allocation2 + $0x2a8] sm:$0xff] %v2277
          %2406 = vst [vmem:[#allocation2 + $0x2b0] sm:$0xff] %v2278
          %2407 = vst [vmem:[#allocation2 + $0x2b8] sm:$0xff] %v2279
          %2408 = vst [vmem:[#allocation2 + $0x2c0] sm:$0xff] %v2280
          %2409 = vst [vmem:[#allocation2 + $0x2c8] sm:$0xff] %v2281
          %2410 = vst [vmem:[#allocation2 + $0x2d0] sm:$0xff] %v2282
          %2411 = vst [vmem:[#allocation2 + $0x2d8] sm:$0xff] %v2283
          %2412 = vst [vmem:[#allocation2 + $0x2e0] sm:$0xff] %v2284
          %2413 = vst [vmem:[#allocation2 + $0x2e8] sm:$0xff] %v2285
          %2414 = vst [vmem:[#allocation2 + $0x2f0] sm:$0xff] %v2286
          %2415 = vst [vmem:[#allocation2 + $0x2f8] sm:$0xff] %v2287
          %2416 = vst [vmem:[#allocation2 + $0x300] sm:$0xff] %v2288
          %2417 = vst [vmem:[#allocation2 + $0x308] sm:$0xff] %v2289
          %2418 = vst [vmem:[#allocation2 + $0x310] sm:$0xff] %v2290
          %2419 = vst [vmem:[#allocation2 + $0x318] sm:$0xff] %v2291
          %2420 = vst [vmem:[#allocation2 + $0x320] sm:$0xff] %v2292
          %2421 = vst [vmem:[#allocation2 + $0x328] sm:$0xff] %v2293
          %2422 = vst [vmem:[#allocation2 + $0x330] sm:$0xff] %v2294
          %2423 = vst [vmem:[#allocation2 + $0x338] sm:$0xff] %v2295
          %2424 = vst [vmem:[#allocation2 + $0x340] sm:$0xff] %v2296
          %2425 = vst [vmem:[#allocation2 + $0x348] sm:$0xff] %v2297
          %2426 = vst [vmem:[#allocation2 + $0x350] sm:$0xff] %v2298
          %2427 = vst [vmem:[#allocation2 + $0x358] sm:$0xff] %v2299
          %2428 = vst [vmem:[#allocation2 + $0x360] sm:$0xff] %v2300
          %2429 = vst [vmem:[#allocation2 + $0x368] sm:$0xff] %v2301
          %2430 = vst [vmem:[#allocation2 + $0x370] sm:$0xff] %v2302
          %2431 = vst [vmem:[#allocation2 + $0x378] sm:$0xff] %v2303
          %2432 = vst [vmem:[#allocation2 + $0x380] sm:$0xff] %v2304
          %2433 = vst [vmem:[#allocation2 + $0x388] sm:$0xff] %v2305
          %2434 = vst [vmem:[#allocation2 + $0x390] sm:$0xff] %v2306
          %2435 = vst [vmem:[#allocation2 + $0x398] sm:$0xff] %v2307
          %2436 = vst [vmem:[#allocation2 + $0x3a0] sm:$0xff] %v2308
          %2437 = vst [vmem:[#allocation2 + $0x3a8] sm:$0xff] %v2309
          %2438 = vst [vmem:[#allocation2 + $0x3b0] sm:$0xff] %v2310
          %2439 = vst [vmem:[#allocation2 + $0x3b8] sm:$0xff] %v2311
          %2440 = vst [vmem:[#allocation2 + $0x3c0] sm:$0xff] %v2312
          %2441 = vst [vmem:[#allocation2 + $0x3c8] sm:$0xff] %v2313
          %2442 = vst [vmem:[#allocation2 + $0x3d0] sm:$0xff] %v2314
          %2443 = vst [vmem:[#allocation2 + $0x3d8] sm:$0xff] %v2315
          %2444 = vst [vmem:[#allocation2 + $0x3e0] sm:$0xff] %v2316
          %2445 = vst [vmem:[#allocation2 + $0x3e8] sm:$0xff] %v2317
          %2446 = vst [vmem:[#allocation2 + $0x3f0] sm:$0xff] %v2318
          %2447 = vst [vmem:[#allocation2 + $0x3f8] sm:$0xff] %v2319
        $region84: #{tpu_custom_call.1} parent=71 // pred_fallthru
          _
        // Predicated region
        $region85: #{tpu_custom_call.1} parent=71 // pred_check
          %p2448 = pneg %p1274
        $region86: #{tpu_custom_call.1} parent=71 // pred_check_branch
          %2450 = sbr.rel (%p2448) target = $region88
        $region87: #{tpu_custom_call.1} parent=71 // pred_region
          %v2451 = vld [vmem:[#allocation2] sm:$0xff]
          %v2452 = vld [vmem:[#allocation2 + $0x8] sm:$0xff]
          %v2453 = vld [vmem:[#allocation2 + $0x10] sm:$0xff]
          %v2454 = vld [vmem:[#allocation2 + $0x18] sm:$0xff]
          %v2455 = vld [vmem:[#allocation2 + $0x20] sm:$0xff]
          %v2456 = vld [vmem:[#allocation2 + $0x28] sm:$0xff]
          %v2457 = vld [vmem:[#allocation2 + $0x30] sm:$0xff]
          %v2458 = vld [vmem:[#allocation2 + $0x38] sm:$0xff]
          %v2459 = vld [vmem:[#allocation2 + $0x40] sm:$0xff]
          %v2460 = vld [vmem:[#allocation2 + $0x48] sm:$0xff]
          %v2461 = vld [vmem:[#allocation2 + $0x50] sm:$0xff]
          %v2462 = vld [vmem:[#allocation2 + $0x58] sm:$0xff]
          %v2463 = vld [vmem:[#allocation2 + $0x60] sm:$0xff]
          %v2464 = vld [vmem:[#allocation2 + $0x68] sm:$0xff]
          %v2465 = vld [vmem:[#allocation2 + $0x70] sm:$0xff]
          %v2466 = vld [vmem:[#allocation2 + $0x78] sm:$0xff]
          %v2467 = vld [vmem:[#allocation2 + $0x80] sm:$0xff]
          %v2468 = vld [vmem:[#allocation2 + $0x88] sm:$0xff]
          %v2469 = vld [vmem:[#allocation2 + $0x90] sm:$0xff]
          %v2470 = vld [vmem:[#allocation2 + $0x98] sm:$0xff]
          %v2471 = vld [vmem:[#allocation2 + $0xa0] sm:$0xff]
          %v2472 = vld [vmem:[#allocation2 + $0xa8] sm:$0xff]
          %v2473 = vld [vmem:[#allocation2 + $0xb0] sm:$0xff]
          %v2474 = vld [vmem:[#allocation2 + $0xb8] sm:$0xff]
          %v2475 = vld [vmem:[#allocation2 + $0xc0] sm:$0xff]
          %v2476 = vld [vmem:[#allocation2 + $0xc8] sm:$0xff]
          %v2477 = vld [vmem:[#allocation2 + $0xd0] sm:$0xff]
          %v2478 = vld [vmem:[#allocation2 + $0xd8] sm:$0xff]
          %v2479 = vld [vmem:[#allocation2 + $0xe0] sm:$0xff]
          %v2480 = vld [vmem:[#allocation2 + $0xe8] sm:$0xff]
          %v2481 = vld [vmem:[#allocation2 + $0xf0] sm:$0xff]
          %v2482 = vld [vmem:[#allocation2 + $0xf8] sm:$0xff]
          %v2483 = vld [vmem:[#allocation2 + $0x100] sm:$0xff]
          %v2484 = vld [vmem:[#allocation2 + $0x108] sm:$0xff]
          %v2485 = vld [vmem:[#allocation2 + $0x110] sm:$0xff]
          %v2486 = vld [vmem:[#allocation2 + $0x118] sm:$0xff]
          %v2487 = vld [vmem:[#allocation2 + $0x120] sm:$0xff]
          %v2488 = vld [vmem:[#allocation2 + $0x128] sm:$0xff]
          %v2489 = vld [vmem:[#allocation2 + $0x130] sm:$0xff]
          %v2490 = vld [vmem:[#allocation2 + $0x138] sm:$0xff]
          %v2491 = vld [vmem:[#allocation2 + $0x140] sm:$0xff]
          %v2492 = vld [vmem:[#allocation2 + $0x148] sm:$0xff]
          %v2493 = vld [vmem:[#allocation2 + $0x150] sm:$0xff]
          %v2494 = vld [vmem:[#allocation2 + $0x158] sm:$0xff]
          %v2495 = vld [vmem:[#allocation2 + $0x160] sm:$0xff]
          %v2496 = vld [vmem:[#allocation2 + $0x168] sm:$0xff]
          %v2497 = vld [vmem:[#allocation2 + $0x170] sm:$0xff]
          %v2498 = vld [vmem:[#allocation2 + $0x178] sm:$0xff]
          %v2499 = vld [vmem:[#allocation2 + $0x180] sm:$0xff]
          %v2500 = vld [vmem:[#allocation2 + $0x188] sm:$0xff]
          %v2501 = vld [vmem:[#allocation2 + $0x190] sm:$0xff]
          %v2502 = vld [vmem:[#allocation2 + $0x198] sm:$0xff]
          %v2503 = vld [vmem:[#allocation2 + $0x1a0] sm:$0xff]
          %v2504 = vld [vmem:[#allocation2 + $0x1a8] sm:$0xff]
          %v2505 = vld [vmem:[#allocation2 + $0x1b0] sm:$0xff]
          %v2506 = vld [vmem:[#allocation2 + $0x1b8] sm:$0xff]
          %v2507 = vld [vmem:[#allocation2 + $0x1c0] sm:$0xff]
          %v2508 = vld [vmem:[#allocation2 + $0x1c8] sm:$0xff]
          %v2509 = vld [vmem:[#allocation2 + $0x1d0] sm:$0xff]
          %v2510 = vld [vmem:[#allocation2 + $0x1d8] sm:$0xff]
          %v2511 = vld [vmem:[#allocation2 + $0x1e0] sm:$0xff]
          %v2512 = vld [vmem:[#allocation2 + $0x1e8] sm:$0xff]
          %v2513 = vld [vmem:[#allocation2 + $0x1f0] sm:$0xff]
          %v2514 = vld [vmem:[#allocation2 + $0x1f8] sm:$0xff]
          %v2515 = vld [vmem:[#allocation2 + $0x200] sm:$0xff]
          %v2516 = vld [vmem:[#allocation2 + $0x208] sm:$0xff]
          %v2517 = vld [vmem:[#allocation2 + $0x210] sm:$0xff]
          %v2518 = vld [vmem:[#allocation2 + $0x218] sm:$0xff]
          %v2519 = vld [vmem:[#allocation2 + $0x220] sm:$0xff]
          %v2520 = vld [vmem:[#allocation2 + $0x228] sm:$0xff]
          %v2521 = vld [vmem:[#allocation2 + $0x230] sm:$0xff]
          %v2522 = vld [vmem:[#allocation2 + $0x238] sm:$0xff]
          %v2523 = vld [vmem:[#allocation2 + $0x240] sm:$0xff]
          %v2524 = vld [vmem:[#allocation2 + $0x248] sm:$0xff]
          %v2525 = vld [vmem:[#allocation2 + $0x250] sm:$0xff]
          %v2526 = vld [vmem:[#allocation2 + $0x258] sm:$0xff]
          %v2527 = vld [vmem:[#allocation2 + $0x260] sm:$0xff]
          %v2528 = vld [vmem:[#allocation2 + $0x268] sm:$0xff]
          %v2529 = vld [vmem:[#allocation2 + $0x270] sm:$0xff]
          %v2530 = vld [vmem:[#allocation2 + $0x278] sm:$0xff]
          %v2531 = vld [vmem:[#allocation2 + $0x280] sm:$0xff]
          %v2532 = vld [vmem:[#allocation2 + $0x288] sm:$0xff]
          %v2533 = vld [vmem:[#allocation2 + $0x290] sm:$0xff]
          %v2534 = vld [vmem:[#allocation2 + $0x298] sm:$0xff]
          %v2535 = vld [vmem:[#allocation2 + $0x2a0] sm:$0xff]
          %v2536 = vld [vmem:[#allocation2 + $0x2a8] sm:$0xff]
          %v2537 = vld [vmem:[#allocation2 + $0x2b0] sm:$0xff]
          %v2538 = vld [vmem:[#allocation2 + $0x2b8] sm:$0xff]
          %v2539 = vld [vmem:[#allocation2 + $0x2c0] sm:$0xff]
          %v2540 = vld [vmem:[#allocation2 + $0x2c8] sm:$0xff]
          %v2541 = vld [vmem:[#allocation2 + $0x2d0] sm:$0xff]
          %v2542 = vld [vmem:[#allocation2 + $0x2d8] sm:$0xff]
          %v2543 = vld [vmem:[#allocation2 + $0x2e0] sm:$0xff]
          %v2544 = vld [vmem:[#allocation2 + $0x2e8] sm:$0xff]
          %v2545 = vld [vmem:[#allocation2 + $0x2f0] sm:$0xff]
          %v2546 = vld [vmem:[#allocation2 + $0x2f8] sm:$0xff]
          %v2547 = vld [vmem:[#allocation2 + $0x300] sm:$0xff]
          %v2548 = vld [vmem:[#allocation2 + $0x308] sm:$0xff]
          %v2549 = vld [vmem:[#allocation2 + $0x310] sm:$0xff]
          %v2550 = vld [vmem:[#allocation2 + $0x318] sm:$0xff]
          %v2551 = vld [vmem:[#allocation2 + $0x320] sm:$0xff]
          %v2552 = vld [vmem:[#allocation2 + $0x328] sm:$0xff]
          %v2553 = vld [vmem:[#allocation2 + $0x330] sm:$0xff]
          %v2554 = vld [vmem:[#allocation2 + $0x338] sm:$0xff]
          %v2555 = vld [vmem:[#allocation2 + $0x340] sm:$0xff]
          %v2556 = vld [vmem:[#allocation2 + $0x348] sm:$0xff]
          %v2557 = vld [vmem:[#allocation2 + $0x350] sm:$0xff]
          %v2558 = vld [vmem:[#allocation2 + $0x358] sm:$0xff]
          %v2559 = vld [vmem:[#allocation2 + $0x360] sm:$0xff]
          %v2560 = vld [vmem:[#allocation2 + $0x368] sm:$0xff]
          %v2561 = vld [vmem:[#allocation2 + $0x370] sm:$0xff]
          %v2562 = vld [vmem:[#allocation2 + $0x378] sm:$0xff]
          %v2563 = vld [vmem:[#allocation2 + $0x380] sm:$0xff]
          %v2564 = vld [vmem:[#allocation2 + $0x388] sm:$0xff]
          %v2565 = vld [vmem:[#allocation2 + $0x390] sm:$0xff]
          %v2566 = vld [vmem:[#allocation2 + $0x398] sm:$0xff]
          %v2567 = vld [vmem:[#allocation2 + $0x3a0] sm:$0xff]
          %v2568 = vld [vmem:[#allocation2 + $0x3a8] sm:$0xff]
          %v2569 = vld [vmem:[#allocation2 + $0x3b0] sm:$0xff]
          %v2570 = vld [vmem:[#allocation2 + $0x3b8] sm:$0xff]
          %v2571 = vld [vmem:[#allocation2 + $0x3c0] sm:$0xff]
          %v2572 = vld [vmem:[#allocation2 + $0x3c8] sm:$0xff]
          %v2573 = vld [vmem:[#allocation2 + $0x3d0] sm:$0xff]
          %v2574 = vld [vmem:[#allocation2 + $0x3d8] sm:$0xff]
          %v2575 = vld [vmem:[#allocation2 + $0x3e0] sm:$0xff]
          %v2576 = vld [vmem:[#allocation2 + $0x3e8] sm:$0xff]
          %v2577 = vld [vmem:[#allocation2 + $0x3f0] sm:$0xff]
          %v2578 = vld [vmem:[#allocation2 + $0x3f8] sm:$0xff]
          %2579 = vadd.xlane.f32.xlu0 %v2451
          %v2580 = vpop.xlane.xlu0 %2579
          %2581 = vadd.xlane.f32.xlu0 %v2452
          %v2582 = vpop.xlane.xlu0 %2581
          %2583 = vadd.xlane.f32.xlu0 %v2453
          %v2584 = vpop.xlane.xlu0 %2583
          %2585 = vadd.xlane.f32.xlu0 %v2454
          %v2586 = vpop.xlane.xlu0 %2585
          %2587 = vadd.xlane.f32.xlu0 %v2455
          %v2588 = vpop.xlane.xlu0 %2587
          %2589 = vadd.xlane.f32.xlu0 %v2456
          %v2590 = vpop.xlane.xlu0 %2589
          %2591 = vadd.xlane.f32.xlu0 %v2457
          %v2592 = vpop.xlane.xlu0 %2591
          %2593 = vadd.xlane.f32.xlu0 %v2458
          %v2594 = vpop.xlane.xlu0 %2593
          %2595 = vadd.xlane.f32.xlu0 %v2459
          %v2596 = vpop.xlane.xlu0 %2595
          %2597 = vadd.xlane.f32.xlu0 %v2460
          %v2598 = vpop.xlane.xlu0 %2597
          %2599 = vadd.xlane.f32.xlu0 %v2461
          %v2600 = vpop.xlane.xlu0 %2599
          %2601 = vadd.xlane.f32.xlu0 %v2462
          %v2602 = vpop.xlane.xlu0 %2601
          %2603 = vadd.xlane.f32.xlu0 %v2463
          %v2604 = vpop.xlane.xlu0 %2603
          %2605 = vadd.xlane.f32.xlu0 %v2464
          %v2606 = vpop.xlane.xlu0 %2605
          %2607 = vadd.xlane.f32.xlu0 %v2465
          %v2608 = vpop.xlane.xlu0 %2607
          %2609 = vadd.xlane.f32.xlu0 %v2466
          %v2610 = vpop.xlane.xlu0 %2609
          %2611 = vadd.xlane.f32.xlu0 %v2467
          %v2612 = vpop.xlane.xlu0 %2611
          %2613 = vadd.xlane.f32.xlu0 %v2468
          %v2614 = vpop.xlane.xlu0 %2613
          %2615 = vadd.xlane.f32.xlu0 %v2469
          %v2616 = vpop.xlane.xlu0 %2615
          %2617 = vadd.xlane.f32.xlu0 %v2470
          %v2618 = vpop.xlane.xlu0 %2617
          %2619 = vadd.xlane.f32.xlu0 %v2471
          %v2620 = vpop.xlane.xlu0 %2619
          %2621 = vadd.xlane.f32.xlu0 %v2472
          %v2622 = vpop.xlane.xlu0 %2621
          %2623 = vadd.xlane.f32.xlu0 %v2473
          %v2624 = vpop.xlane.xlu0 %2623
          %2625 = vadd.xlane.f32.xlu0 %v2474
          %v2626 = vpop.xlane.xlu0 %2625
          %2627 = vadd.xlane.f32.xlu0 %v2475
          %v2628 = vpop.xlane.xlu0 %2627
          %2629 = vadd.xlane.f32.xlu0 %v2476
          %v2630 = vpop.xlane.xlu0 %2629
          %2631 = vadd.xlane.f32.xlu0 %v2477
          %v2632 = vpop.xlane.xlu0 %2631
          %2633 = vadd.xlane.f32.xlu0 %v2478
          %v2634 = vpop.xlane.xlu0 %2633
          %2635 = vadd.xlane.f32.xlu0 %v2479
          %v2636 = vpop.xlane.xlu0 %2635
          %2637 = vadd.xlane.f32.xlu0 %v2480
          %v2638 = vpop.xlane.xlu0 %2637
          %2639 = vadd.xlane.f32.xlu0 %v2481
          %v2640 = vpop.xlane.xlu0 %2639
          %2641 = vadd.xlane.f32.xlu0 %v2482
          %v2642 = vpop.xlane.xlu0 %2641
          %2643 = vadd.xlane.f32.xlu0 %v2483
          %v2644 = vpop.xlane.xlu0 %2643
          %2645 = vadd.xlane.f32.xlu0 %v2484
          %v2646 = vpop.xlane.xlu0 %2645
          %2647 = vadd.xlane.f32.xlu0 %v2485
          %v2648 = vpop.xlane.xlu0 %2647
          %2649 = vadd.xlane.f32.xlu0 %v2486
          %v2650 = vpop.xlane.xlu0 %2649
          %2651 = vadd.xlane.f32.xlu0 %v2487
          %v2652 = vpop.xlane.xlu0 %2651
          %2653 = vadd.xlane.f32.xlu0 %v2488
          %v2654 = vpop.xlane.xlu0 %2653
          %2655 = vadd.xlane.f32.xlu0 %v2489
          %v2656 = vpop.xlane.xlu0 %2655
          %2657 = vadd.xlane.f32.xlu0 %v2490
          %v2658 = vpop.xlane.xlu0 %2657
          %2659 = vadd.xlane.f32.xlu0 %v2491
          %v2660 = vpop.xlane.xlu0 %2659
          %2661 = vadd.xlane.f32.xlu0 %v2492
          %v2662 = vpop.xlane.xlu0 %2661
          %2663 = vadd.xlane.f32.xlu0 %v2493
          %v2664 = vpop.xlane.xlu0 %2663
          %2665 = vadd.xlane.f32.xlu0 %v2494
          %v2666 = vpop.xlane.xlu0 %2665
          %2667 = vadd.xlane.f32.xlu0 %v2495
          %v2668 = vpop.xlane.xlu0 %2667
          %2669 = vadd.xlane.f32.xlu0 %v2496
          %v2670 = vpop.xlane.xlu0 %2669
          %2671 = vadd.xlane.f32.xlu0 %v2497
          %v2672 = vpop.xlane.xlu0 %2671
          %2673 = vadd.xlane.f32.xlu0 %v2498
          %v2674 = vpop.xlane.xlu0 %2673
          %2675 = vadd.xlane.f32.xlu0 %v2499
          %v2676 = vpop.xlane.xlu0 %2675
          %2677 = vadd.xlane.f32.xlu0 %v2500
          %v2678 = vpop.xlane.xlu0 %2677
          %2679 = vadd.xlane.f32.xlu0 %v2501
          %v2680 = vpop.xlane.xlu0 %2679
          %2681 = vadd.xlane.f32.xlu0 %v2502
          %v2682 = vpop.xlane.xlu0 %2681
          %2683 = vadd.xlane.f32.xlu0 %v2503
          %v2684 = vpop.xlane.xlu0 %2683
          %2685 = vadd.xlane.f32.xlu0 %v2504
          %v2686 = vpop.xlane.xlu0 %2685
          %2687 = vadd.xlane.f32.xlu0 %v2505
          %v2688 = vpop.xlane.xlu0 %2687
          %2689 = vadd.xlane.f32.xlu0 %v2506
          %v2690 = vpop.xlane.xlu0 %2689
          %2691 = vadd.xlane.f32.xlu0 %v2507
          %v2692 = vpop.xlane.xlu0 %2691
          %2693 = vadd.xlane.f32.xlu0 %v2508
          %v2694 = vpop.xlane.xlu0 %2693
          %2695 = vadd.xlane.f32.xlu0 %v2509
          %v2696 = vpop.xlane.xlu0 %2695
          %2697 = vadd.xlane.f32.xlu0 %v2510
          %v2698 = vpop.xlane.xlu0 %2697
          %2699 = vadd.xlane.f32.xlu0 %v2511
          %v2700 = vpop.xlane.xlu0 %2699
          %2701 = vadd.xlane.f32.xlu0 %v2512
          %v2702 = vpop.xlane.xlu0 %2701
          %2703 = vadd.xlane.f32.xlu0 %v2513
          %v2704 = vpop.xlane.xlu0 %2703
          %2705 = vadd.xlane.f32.xlu0 %v2514
          %v2706 = vpop.xlane.xlu0 %2705
          %2707 = vadd.xlane.f32.xlu0 %v2515
          %v2708 = vpop.xlane.xlu0 %2707
          %2709 = vadd.xlane.f32.xlu0 %v2516
          %v2710 = vpop.xlane.xlu0 %2709
          %2711 = vadd.xlane.f32.xlu0 %v2517
          %v2712 = vpop.xlane.xlu0 %2711
          %2713 = vadd.xlane.f32.xlu0 %v2518
          %v2714 = vpop.xlane.xlu0 %2713
          %2715 = vadd.xlane.f32.xlu0 %v2519
          %v2716 = vpop.xlane.xlu0 %2715
          %2717 = vadd.xlane.f32.xlu0 %v2520
          %v2718 = vpop.xlane.xlu0 %2717
          %2719 = vadd.xlane.f32.xlu0 %v2521
          %v2720 = vpop.xlane.xlu0 %2719
          %2721 = vadd.xlane.f32.xlu0 %v2522
          %v2722 = vpop.xlane.xlu0 %2721
          %2723 = vadd.xlane.f32.xlu0 %v2523
          %v2724 = vpop.xlane.xlu0 %2723
          %2725 = vadd.xlane.f32.xlu0 %v2524
          %v2726 = vpop.xlane.xlu0 %2725
          %2727 = vadd.xlane.f32.xlu0 %v2525
          %v2728 = vpop.xlane.xlu0 %2727
          %2729 = vadd.xlane.f32.xlu0 %v2526
          %v2730 = vpop.xlane.xlu0 %2729
          %2731 = vadd.xlane.f32.xlu0 %v2527
          %v2732 = vpop.xlane.xlu0 %2731
          %2733 = vadd.xlane.f32.xlu0 %v2528
          %v2734 = vpop.xlane.xlu0 %2733
          %2735 = vadd.xlane.f32.xlu0 %v2529
          %v2736 = vpop.xlane.xlu0 %2735
          %2737 = vadd.xlane.f32.xlu0 %v2530
          %v2738 = vpop.xlane.xlu0 %2737
          %2739 = vadd.xlane.f32.xlu0 %v2531
          %v2740 = vpop.xlane.xlu0 %2739
          %2741 = vadd.xlane.f32.xlu0 %v2532
          %v2742 = vpop.xlane.xlu0 %2741
          %2743 = vadd.xlane.f32.xlu0 %v2533
          %v2744 = vpop.xlane.xlu0 %2743
          %2745 = vadd.xlane.f32.xlu0 %v2534
          %v2746 = vpop.xlane.xlu0 %2745
          %2747 = vadd.xlane.f32.xlu0 %v2535
          %v2748 = vpop.xlane.xlu0 %2747
          %2749 = vadd.xlane.f32.xlu0 %v2536
          %v2750 = vpop.xlane.xlu0 %2749
          %2751 = vadd.xlane.f32.xlu0 %v2537
          %v2752 = vpop.xlane.xlu0 %2751
          %2753 = vadd.xlane.f32.xlu0 %v2538
          %v2754 = vpop.xlane.xlu0 %2753
          %2755 = vadd.xlane.f32.xlu0 %v2539
          %v2756 = vpop.xlane.xlu0 %2755
          %2757 = vadd.xlane.f32.xlu0 %v2540
          %v2758 = vpop.xlane.xlu0 %2757
          %2759 = vadd.xlane.f32.xlu0 %v2541
          %v2760 = vpop.xlane.xlu0 %2759
          %2761 = vadd.xlane.f32.xlu0 %v2542
          %v2762 = vpop.xlane.xlu0 %2761
          %2763 = vadd.xlane.f32.xlu0 %v2543
          %v2764 = vpop.xlane.xlu0 %2763
          %2765 = vadd.xlane.f32.xlu0 %v2544
          %v2766 = vpop.xlane.xlu0 %2765
          %2767 = vadd.xlane.f32.xlu0 %v2545
          %v2768 = vpop.xlane.xlu0 %2767
          %2769 = vadd.xlane.f32.xlu0 %v2546
          %v2770 = vpop.xlane.xlu0 %2769
          %2771 = vadd.xlane.f32.xlu0 %v2547
          %v2772 = vpop.xlane.xlu0 %2771
          %2773 = vadd.xlane.f32.xlu0 %v2548
          %v2774 = vpop.xlane.xlu0 %2773
          %2775 = vadd.xlane.f32.xlu0 %v2549
          %v2776 = vpop.xlane.xlu0 %2775
          %2777 = vadd.xlane.f32.xlu0 %v2550
          %v2778 = vpop.xlane.xlu0 %2777
          %2779 = vadd.xlane.f32.xlu0 %v2551
          %v2780 = vpop.xlane.xlu0 %2779
          %2781 = vadd.xlane.f32.xlu0 %v2552
          %v2782 = vpop.xlane.xlu0 %2781
          %2783 = vadd.xlane.f32.xlu0 %v2553
          %v2784 = vpop.xlane.xlu0 %2783
          %2785 = vadd.xlane.f32.xlu0 %v2554
          %v2786 = vpop.xlane.xlu0 %2785
          %2787 = vadd.xlane.f32.xlu0 %v2555
          %v2788 = vpop.xlane.xlu0 %2787
          %2789 = vadd.xlane.f32.xlu0 %v2556
          %v2790 = vpop.xlane.xlu0 %2789
          %2791 = vadd.xlane.f32.xlu0 %v2557
          %v2792 = vpop.xlane.xlu0 %2791
          %2793 = vadd.xlane.f32.xlu0 %v2558
          %v2794 = vpop.xlane.xlu0 %2793
          %2795 = vadd.xlane.f32.xlu0 %v2559
          %v2796 = vpop.xlane.xlu0 %2795
          %2797 = vadd.xlane.f32.xlu0 %v2560
          %v2798 = vpop.xlane.xlu0 %2797
          %2799 = vadd.xlane.f32.xlu0 %v2561
          %v2800 = vpop.xlane.xlu0 %2799
          %2801 = vadd.xlane.f32.xlu0 %v2562
          %v2802 = vpop.xlane.xlu0 %2801
          %2803 = vadd.xlane.f32.xlu0 %v2563
          %v2804 = vpop.xlane.xlu0 %2803
          %2805 = vadd.xlane.f32.xlu0 %v2564
          %v2806 = vpop.xlane.xlu0 %2805
          %2807 = vadd.xlane.f32.xlu0 %v2565
          %v2808 = vpop.xlane.xlu0 %2807
          %2809 = vadd.xlane.f32.xlu0 %v2566
          %v2810 = vpop.xlane.xlu0 %2809
          %2811 = vadd.xlane.f32.xlu0 %v2567
          %v2812 = vpop.xlane.xlu0 %2811
          %2813 = vadd.xlane.f32.xlu0 %v2568
          %v2814 = vpop.xlane.xlu0 %2813
          %2815 = vadd.xlane.f32.xlu0 %v2569
          %v2816 = vpop.xlane.xlu0 %2815
          %2817 = vadd.xlane.f32.xlu0 %v2570
          %v2818 = vpop.xlane.xlu0 %2817
          %2819 = vadd.xlane.f32.xlu0 %v2571
          %v2820 = vpop.xlane.xlu0 %2819
          %2821 = vadd.xlane.f32.xlu0 %v2572
          %v2822 = vpop.xlane.xlu0 %2821
          %2823 = vadd.xlane.f32.xlu0 %v2573
          %v2824 = vpop.xlane.xlu0 %2823
          %2825 = vadd.xlane.f32.xlu0 %v2574
          %v2826 = vpop.xlane.xlu0 %2825
          %2827 = vadd.xlane.f32.xlu0 %v2575
          %v2828 = vpop.xlane.xlu0 %2827
          %2829 = vadd.xlane.f32.xlu0 %v2576
          %v2830 = vpop.xlane.xlu0 %2829
          %2831 = vadd.xlane.f32.xlu0 %v2577
          %v2832 = vpop.xlane.xlu0 %2831
          %2833 = vadd.xlane.f32.xlu0 %v2578
          %v2834 = vpop.xlane.xlu0 %2833
          %v2964 = vunpack.c.l.s4 269488144
          %v2965 = vunpack.c.0.s8 %v2964
          %v2966 = vlaneseq
          %v2967 = vshrl.u32 %v2966, 7
          %v2968 = vsub.s32 %v2965, %v2967
          %v2969 = vrot.slane %v2580, %v2968
          %v2971 = vunpack.c.l.s4 842150450
          %v2972 = vunpack.c.0.s8 %v2971
          %v2973 = vlaneseq
          %v2974 = vshrl.u32 %v2973, 7
          %v2975 = vsub.s32 %v2972, %v2974
          %v2976 = vrot.slane %v2580, %v2975
          %v2978 = vunpack.c.l.s4 1414812756
          %v2979 = vunpack.c.0.s8 %v2978
          %v2980 = vlaneseq
          %v2981 = vshrl.u32 %v2980, 7
          %v2982 = vsub.s32 %v2979, %v2981
          %v2983 = vrot.slane %v2580, %v2982
          %v2985 = vunpack.c.l.s4 1987475062
          %v2986 = vunpack.c.0.s8 %v2985
          %v2987 = vlaneseq
          %v2988 = vshrl.u32 %v2987, 7
          %v2989 = vsub.s32 %v2986, %v2988
          %v2990 = vrot.slane %v2580, %v2989
          %v2992 = vunpack.c.l.s4 269488144
          %v2993 = vunpack.c.0.s8 %v2992
          %v2994 = vlaneseq
          %v2995 = vshrl.u32 %v2994, 7
          %v2996 = vsub.s32 %v2993, %v2995
          %v2997 = vrot.slane %v2582, %v2996
          %v2999 = vunpack.c.l.s4 842150450
          %v3000 = vunpack.c.0.s8 %v2999
          %v3001 = vlaneseq
          %v3002 = vshrl.u32 %v3001, 7
          %v3003 = vsub.s32 %v3000, %v3002
          %v3004 = vrot.slane %v2582, %v3003
          %v3006 = vunpack.c.l.s4 1414812756
          %v3007 = vunpack.c.0.s8 %v3006
          %v3008 = vlaneseq
          %v3009 = vshrl.u32 %v3008, 7
          %v3010 = vsub.s32 %v3007, %v3009
          %v3011 = vrot.slane %v2582, %v3010
          %v3013 = vunpack.c.l.s4 1987475062
          %v3014 = vunpack.c.0.s8 %v3013
          %v3015 = vlaneseq
          %v3016 = vshrl.u32 %v3015, 7
          %v3017 = vsub.s32 %v3014, %v3016
          %v3018 = vrot.slane %v2582, %v3017
          %v3020 = vunpack.c.l.s4 269488144
          %v3021 = vunpack.c.0.s8 %v3020
          %v3022 = vlaneseq
          %v3023 = vshrl.u32 %v3022, 7
          %v3024 = vsub.s32 %v3021, %v3023
          %v3025 = vrot.slane %v2584, %v3024
          %v3027 = vunpack.c.l.s4 842150450
          %v3028 = vunpack.c.0.s8 %v3027
          %v3029 = vlaneseq
          %v3030 = vshrl.u32 %v3029, 7
          %v3031 = vsub.s32 %v3028, %v3030
          %v3032 = vrot.slane %v2584, %v3031
          %v3034 = vunpack.c.l.s4 1414812756
          %v3035 = vunpack.c.0.s8 %v3034
          %v3036 = vlaneseq
          %v3037 = vshrl.u32 %v3036, 7
          %v3038 = vsub.s32 %v3035, %v3037
          %v3039 = vrot.slane %v2584, %v3038
          %v3041 = vunpack.c.l.s4 1987475062
          %v3042 = vunpack.c.0.s8 %v3041
          %v3043 = vlaneseq
          %v3044 = vshrl.u32 %v3043, 7
          %v3045 = vsub.s32 %v3042, %v3044
          %v3046 = vrot.slane %v2584, %v3045
          %v3048 = vunpack.c.l.s4 269488144
          %v3049 = vunpack.c.0.s8 %v3048
          %v3050 = vlaneseq
          %v3051 = vshrl.u32 %v3050, 7
          %v3052 = vsub.s32 %v3049, %v3051
          %v3053 = vrot.slane %v2586, %v3052
          %v3055 = vunpack.c.l.s4 842150450
          %v3056 = vunpack.c.0.s8 %v3055
          %v3057 = vlaneseq
          %v3058 = vshrl.u32 %v3057, 7
          %v3059 = vsub.s32 %v3056, %v3058
          %v3060 = vrot.slane %v2586, %v3059
          %v3062 = vunpack.c.l.s4 1414812756
          %v3063 = vunpack.c.0.s8 %v3062
          %v3064 = vlaneseq
          %v3065 = vshrl.u32 %v3064, 7
          %v3066 = vsub.s32 %v3063, %v3065
          %v3067 = vrot.slane %v2586, %v3066
          %v3069 = vunpack.c.l.s4 1987475062
          %v3070 = vunpack.c.0.s8 %v3069
          %v3071 = vlaneseq
          %v3072 = vshrl.u32 %v3071, 7
          %v3073 = vsub.s32 %v3070, %v3072
          %v3074 = vrot.slane %v2586, %v3073
          %v3076 = vunpack.c.l.s4 269488144
          %v3077 = vunpack.c.0.s8 %v3076
          %v3078 = vlaneseq
          %v3079 = vshrl.u32 %v3078, 7
          %v3080 = vsub.s32 %v3077, %v3079
          %v3081 = vrot.slane %v2588, %v3080
          %v3083 = vunpack.c.l.s4 842150450
          %v3084 = vunpack.c.0.s8 %v3083
          %v3085 = vlaneseq
          %v3086 = vshrl.u32 %v3085, 7
          %v3087 = vsub.s32 %v3084, %v3086
          %v3088 = vrot.slane %v2588, %v3087
          %v3090 = vunpack.c.l.s4 1414812756
          %v3091 = vunpack.c.0.s8 %v3090
          %v3092 = vlaneseq
          %v3093 = vshrl.u32 %v3092, 7
          %v3094 = vsub.s32 %v3091, %v3093
          %v3095 = vrot.slane %v2588, %v3094
          %v3097 = vunpack.c.l.s4 1987475062
          %v3098 = vunpack.c.0.s8 %v3097
          %v3099 = vlaneseq
          %v3100 = vshrl.u32 %v3099, 7
          %v3101 = vsub.s32 %v3098, %v3100
          %v3102 = vrot.slane %v2588, %v3101
          %v3104 = vunpack.c.l.s4 269488144
          %v3105 = vunpack.c.0.s8 %v3104
          %v3106 = vlaneseq
          %v3107 = vshrl.u32 %v3106, 7
          %v3108 = vsub.s32 %v3105, %v3107
          %v3109 = vrot.slane %v2590, %v3108
          %v3111 = vunpack.c.l.s4 842150450
          %v3112 = vunpack.c.0.s8 %v3111
          %v3113 = vlaneseq
          %v3114 = vshrl.u32 %v3113, 7
          %v3115 = vsub.s32 %v3112, %v3114
          %v3116 = vrot.slane %v2590, %v3115
          %v3118 = vunpack.c.l.s4 1414812756
          %v3119 = vunpack.c.0.s8 %v3118
          %v3120 = vlaneseq
          %v3121 = vshrl.u32 %v3120, 7
          %v3122 = vsub.s32 %v3119, %v3121
          %v3123 = vrot.slane %v2590, %v3122
          %v3125 = vunpack.c.l.s4 1987475062
          %v3126 = vunpack.c.0.s8 %v3125
          %v3127 = vlaneseq
          %v3128 = vshrl.u32 %v3127, 7
          %v3129 = vsub.s32 %v3126, %v3128
          %v3130 = vrot.slane %v2590, %v3129
          %v3132 = vunpack.c.l.s4 269488144
          %v3133 = vunpack.c.0.s8 %v3132
          %v3134 = vlaneseq
          %v3135 = vshrl.u32 %v3134, 7
          %v3136 = vsub.s32 %v3133, %v3135
          %v3137 = vrot.slane %v2592, %v3136
          %v3139 = vunpack.c.l.s4 842150450
          %v3140 = vunpack.c.0.s8 %v3139
          %v3141 = vlaneseq
          %v3142 = vshrl.u32 %v3141, 7
          %v3143 = vsub.s32 %v3140, %v3142
          %v3144 = vrot.slane %v2592, %v3143
          %v3146 = vunpack.c.l.s4 1414812756
          %v3147 = vunpack.c.0.s8 %v3146
          %v3148 = vlaneseq
          %v3149 = vshrl.u32 %v3148, 7
          %v3150 = vsub.s32 %v3147, %v3149
          %v3151 = vrot.slane %v2592, %v3150
          %v3153 = vunpack.c.l.s4 1987475062
          %v3154 = vunpack.c.0.s8 %v3153
          %v3155 = vlaneseq
          %v3156 = vshrl.u32 %v3155, 7
          %v3157 = vsub.s32 %v3154, %v3156
          %v3158 = vrot.slane %v2592, %v3157
          %v3160 = vunpack.c.l.s4 269488144
          %v3161 = vunpack.c.0.s8 %v3160
          %v3162 = vlaneseq
          %v3163 = vshrl.u32 %v3162, 7
          %v3164 = vsub.s32 %v3161, %v3163
          %v3165 = vrot.slane %v2594, %v3164
          %v3167 = vunpack.c.l.s4 842150450
          %v3168 = vunpack.c.0.s8 %v3167
          %v3169 = vlaneseq
          %v3170 = vshrl.u32 %v3169, 7
          %v3171 = vsub.s32 %v3168, %v3170
          %v3172 = vrot.slane %v2594, %v3171
          %v3174 = vunpack.c.l.s4 1414812756
          %v3175 = vunpack.c.0.s8 %v3174
          %v3176 = vlaneseq
          %v3177 = vshrl.u32 %v3176, 7
          %v3178 = vsub.s32 %v3175, %v3177
          %v3179 = vrot.slane %v2594, %v3178
          %v3181 = vunpack.c.l.s4 1987475062
          %v3182 = vunpack.c.0.s8 %v3181
          %v3183 = vlaneseq
          %v3184 = vshrl.u32 %v3183, 7
          %v3185 = vsub.s32 %v3182, %v3184
          %v3186 = vrot.slane %v2594, %v3185
          %v3188 = vunpack.c.l.s4 269488144
          %v3189 = vunpack.c.0.s8 %v3188
          %v3190 = vlaneseq
          %v3191 = vshrl.u32 %v3190, 7
          %v3192 = vsub.s32 %v3189, %v3191
          %v3193 = vrot.slane %v2596, %v3192
          %v3195 = vunpack.c.l.s4 842150450
          %v3196 = vunpack.c.0.s8 %v3195
          %v3197 = vlaneseq
          %v3198 = vshrl.u32 %v3197, 7
          %v3199 = vsub.s32 %v3196, %v3198
          %v3200 = vrot.slane %v2596, %v3199
          %v3202 = vunpack.c.l.s4 1414812756
          %v3203 = vunpack.c.0.s8 %v3202
          %v3204 = vlaneseq
          %v3205 = vshrl.u32 %v3204, 7
          %v3206 = vsub.s32 %v3203, %v3205
          %v3207 = vrot.slane %v2596, %v3206
          %v3209 = vunpack.c.l.s4 1987475062
          %v3210 = vunpack.c.0.s8 %v3209
          %v3211 = vlaneseq
          %v3212 = vshrl.u32 %v3211, 7
          %v3213 = vsub.s32 %v3210, %v3212
          %v3214 = vrot.slane %v2596, %v3213
          %v3216 = vunpack.c.l.s4 269488144
          %v3217 = vunpack.c.0.s8 %v3216
          %v3218 = vlaneseq
          %v3219 = vshrl.u32 %v3218, 7
          %v3220 = vsub.s32 %v3217, %v3219
          %v3221 = vrot.slane %v2598, %v3220
          %v3223 = vunpack.c.l.s4 842150450
          %v3224 = vunpack.c.0.s8 %v3223
          %v3225 = vlaneseq
          %v3226 = vshrl.u32 %v3225, 7
          %v3227 = vsub.s32 %v3224, %v3226
          %v3228 = vrot.slane %v2598, %v3227
          %v3230 = vunpack.c.l.s4 1414812756
          %v3231 = vunpack.c.0.s8 %v3230
          %v3232 = vlaneseq
          %v3233 = vshrl.u32 %v3232, 7
          %v3234 = vsub.s32 %v3231, %v3233
          %v3235 = vrot.slane %v2598, %v3234
          %v3237 = vunpack.c.l.s4 1987475062
          %v3238 = vunpack.c.0.s8 %v3237
          %v3239 = vlaneseq
          %v3240 = vshrl.u32 %v3239, 7
          %v3241 = vsub.s32 %v3238, %v3240
          %v3242 = vrot.slane %v2598, %v3241
          %v3244 = vunpack.c.l.s4 269488144
          %v3245 = vunpack.c.0.s8 %v3244
          %v3246 = vlaneseq
          %v3247 = vshrl.u32 %v3246, 7
          %v3248 = vsub.s32 %v3245, %v3247
          %v3249 = vrot.slane %v2600, %v3248
          %v3251 = vunpack.c.l.s4 842150450
          %v3252 = vunpack.c.0.s8 %v3251
          %v3253 = vlaneseq
          %v3254 = vshrl.u32 %v3253, 7
          %v3255 = vsub.s32 %v3252, %v3254
          %v3256 = vrot.slane %v2600, %v3255
          %v3258 = vunpack.c.l.s4 1414812756
          %v3259 = vunpack.c.0.s8 %v3258
          %v3260 = vlaneseq
          %v3261 = vshrl.u32 %v3260, 7
          %v3262 = vsub.s32 %v3259, %v3261
          %v3263 = vrot.slane %v2600, %v3262
          %v3265 = vunpack.c.l.s4 1987475062
          %v3266 = vunpack.c.0.s8 %v3265
          %v3267 = vlaneseq
          %v3268 = vshrl.u32 %v3267, 7
          %v3269 = vsub.s32 %v3266, %v3268
          %v3270 = vrot.slane %v2600, %v3269
          %v3272 = vunpack.c.l.s4 269488144
          %v3273 = vunpack.c.0.s8 %v3272
          %v3274 = vlaneseq
          %v3275 = vshrl.u32 %v3274, 7
          %v3276 = vsub.s32 %v3273, %v3275
          %v3277 = vrot.slane %v2602, %v3276
          %v3279 = vunpack.c.l.s4 842150450
          %v3280 = vunpack.c.0.s8 %v3279
          %v3281 = vlaneseq
          %v3282 = vshrl.u32 %v3281, 7
          %v3283 = vsub.s32 %v3280, %v3282
          %v3284 = vrot.slane %v2602, %v3283
          %v3286 = vunpack.c.l.s4 1414812756
          %v3287 = vunpack.c.0.s8 %v3286
          %v3288 = vlaneseq
          %v3289 = vshrl.u32 %v3288, 7
          %v3290 = vsub.s32 %v3287, %v3289
          %v3291 = vrot.slane %v2602, %v3290
          %v3293 = vunpack.c.l.s4 1987475062
          %v3294 = vunpack.c.0.s8 %v3293
          %v3295 = vlaneseq
          %v3296 = vshrl.u32 %v3295, 7
          %v3297 = vsub.s32 %v3294, %v3296
          %v3298 = vrot.slane %v2602, %v3297
          %v3300 = vunpack.c.l.s4 269488144
          %v3301 = vunpack.c.0.s8 %v3300
          %v3302 = vlaneseq
          %v3303 = vshrl.u32 %v3302, 7
          %v3304 = vsub.s32 %v3301, %v3303
          %v3305 = vrot.slane %v2604, %v3304
          %v3307 = vunpack.c.l.s4 842150450
          %v3308 = vunpack.c.0.s8 %v3307
          %v3309 = vlaneseq
          %v3310 = vshrl.u32 %v3309, 7
          %v3311 = vsub.s32 %v3308, %v3310
          %v3312 = vrot.slane %v2604, %v3311
          %v3314 = vunpack.c.l.s4 1414812756
          %v3315 = vunpack.c.0.s8 %v3314
          %v3316 = vlaneseq
          %v3317 = vshrl.u32 %v3316, 7
          %v3318 = vsub.s32 %v3315, %v3317
          %v3319 = vrot.slane %v2604, %v3318
          %v3321 = vunpack.c.l.s4 1987475062
          %v3322 = vunpack.c.0.s8 %v3321
          %v3323 = vlaneseq
          %v3324 = vshrl.u32 %v3323, 7
          %v3325 = vsub.s32 %v3322, %v3324
          %v3326 = vrot.slane %v2604, %v3325
          %v3328 = vunpack.c.l.s4 269488144
          %v3329 = vunpack.c.0.s8 %v3328
          %v3330 = vlaneseq
          %v3331 = vshrl.u32 %v3330, 7
          %v3332 = vsub.s32 %v3329, %v3331
          %v3333 = vrot.slane %v2606, %v3332
          %v3335 = vunpack.c.l.s4 842150450
          %v3336 = vunpack.c.0.s8 %v3335
          %v3337 = vlaneseq
          %v3338 = vshrl.u32 %v3337, 7
          %v3339 = vsub.s32 %v3336, %v3338
          %v3340 = vrot.slane %v2606, %v3339
          %v3342 = vunpack.c.l.s4 1414812756
          %v3343 = vunpack.c.0.s8 %v3342
          %v3344 = vlaneseq
          %v3345 = vshrl.u32 %v3344, 7
          %v3346 = vsub.s32 %v3343, %v3345
          %v3347 = vrot.slane %v2606, %v3346
          %v3349 = vunpack.c.l.s4 1987475062
          %v3350 = vunpack.c.0.s8 %v3349
          %v3351 = vlaneseq
          %v3352 = vshrl.u32 %v3351, 7
          %v3353 = vsub.s32 %v3350, %v3352
          %v3354 = vrot.slane %v2606, %v3353
          %v3356 = vunpack.c.l.s4 269488144
          %v3357 = vunpack.c.0.s8 %v3356
          %v3358 = vlaneseq
          %v3359 = vshrl.u32 %v3358, 7
          %v3360 = vsub.s32 %v3357, %v3359
          %v3361 = vrot.slane %v2608, %v3360
          %v3363 = vunpack.c.l.s4 842150450
          %v3364 = vunpack.c.0.s8 %v3363
          %v3365 = vlaneseq
          %v3366 = vshrl.u32 %v3365, 7
          %v3367 = vsub.s32 %v3364, %v3366
          %v3368 = vrot.slane %v2608, %v3367
          %v3370 = vunpack.c.l.s4 1414812756
          %v3371 = vunpack.c.0.s8 %v3370
          %v3372 = vlaneseq
          %v3373 = vshrl.u32 %v3372, 7
          %v3374 = vsub.s32 %v3371, %v3373
          %v3375 = vrot.slane %v2608, %v3374
          %v3377 = vunpack.c.l.s4 1987475062
          %v3378 = vunpack.c.0.s8 %v3377
          %v3379 = vlaneseq
          %v3380 = vshrl.u32 %v3379, 7
          %v3381 = vsub.s32 %v3378, %v3380
          %v3382 = vrot.slane %v2608, %v3381
          %v3384 = vunpack.c.l.s4 269488144
          %v3385 = vunpack.c.0.s8 %v3384
          %v3386 = vlaneseq
          %v3387 = vshrl.u32 %v3386, 7
          %v3388 = vsub.s32 %v3385, %v3387
          %v3389 = vrot.slane %v2610, %v3388
          %v3391 = vunpack.c.l.s4 842150450
          %v3392 = vunpack.c.0.s8 %v3391
          %v3393 = vlaneseq
          %v3394 = vshrl.u32 %v3393, 7
          %v3395 = vsub.s32 %v3392, %v3394
          %v3396 = vrot.slane %v2610, %v3395
          %v3398 = vunpack.c.l.s4 1414812756
          %v3399 = vunpack.c.0.s8 %v3398
          %v3400 = vlaneseq
          %v3401 = vshrl.u32 %v3400, 7
          %v3402 = vsub.s32 %v3399, %v3401
          %v3403 = vrot.slane %v2610, %v3402
          %v3405 = vunpack.c.l.s4 1987475062
          %v3406 = vunpack.c.0.s8 %v3405
          %v3407 = vlaneseq
          %v3408 = vshrl.u32 %v3407, 7
          %v3409 = vsub.s32 %v3406, %v3408
          %v3410 = vrot.slane %v2610, %v3409
          %v3412 = vunpack.c.l.s4 269488144
          %v3413 = vunpack.c.0.s8 %v3412
          %v3414 = vlaneseq
          %v3415 = vshrl.u32 %v3414, 7
          %v3416 = vsub.s32 %v3413, %v3415
          %v3417 = vrot.slane %v2612, %v3416
          %v3419 = vunpack.c.l.s4 842150450
          %v3420 = vunpack.c.0.s8 %v3419
          %v3421 = vlaneseq
          %v3422 = vshrl.u32 %v3421, 7
          %v3423 = vsub.s32 %v3420, %v3422
          %v3424 = vrot.slane %v2612, %v3423
          %v3426 = vunpack.c.l.s4 1414812756
          %v3427 = vunpack.c.0.s8 %v3426
          %v3428 = vlaneseq
          %v3429 = vshrl.u32 %v3428, 7
          %v3430 = vsub.s32 %v3427, %v3429
          %v3431 = vrot.slane %v2612, %v3430
          %v3433 = vunpack.c.l.s4 1987475062
          %v3434 = vunpack.c.0.s8 %v3433
          %v3435 = vlaneseq
          %v3436 = vshrl.u32 %v3435, 7
          %v3437 = vsub.s32 %v3434, %v3436
          %v3438 = vrot.slane %v2612, %v3437
          %v3440 = vunpack.c.l.s4 269488144
          %v3441 = vunpack.c.0.s8 %v3440
          %v3442 = vlaneseq
          %v3443 = vshrl.u32 %v3442, 7
          %v3444 = vsub.s32 %v3441, %v3443
          %v3445 = vrot.slane %v2614, %v3444
          %v3447 = vunpack.c.l.s4 842150450
          %v3448 = vunpack.c.0.s8 %v3447
          %v3449 = vlaneseq
          %v3450 = vshrl.u32 %v3449, 7
          %v3451 = vsub.s32 %v3448, %v3450
          %v3452 = vrot.slane %v2614, %v3451
          %v3454 = vunpack.c.l.s4 1414812756
          %v3455 = vunpack.c.0.s8 %v3454
          %v3456 = vlaneseq
          %v3457 = vshrl.u32 %v3456, 7
          %v3458 = vsub.s32 %v3455, %v3457
          %v3459 = vrot.slane %v2614, %v3458
          %v3461 = vunpack.c.l.s4 1987475062
          %v3462 = vunpack.c.0.s8 %v3461
          %v3463 = vlaneseq
          %v3464 = vshrl.u32 %v3463, 7
          %v3465 = vsub.s32 %v3462, %v3464
          %v3466 = vrot.slane %v2614, %v3465
          %v3468 = vunpack.c.l.s4 269488144
          %v3469 = vunpack.c.0.s8 %v3468
          %v3470 = vlaneseq
          %v3471 = vshrl.u32 %v3470, 7
          %v3472 = vsub.s32 %v3469, %v3471
          %v3473 = vrot.slane %v2616, %v3472
          %v3475 = vunpack.c.l.s4 842150450
          %v3476 = vunpack.c.0.s8 %v3475
          %v3477 = vlaneseq
          %v3478 = vshrl.u32 %v3477, 7
          %v3479 = vsub.s32 %v3476, %v3478
          %v3480 = vrot.slane %v2616, %v3479
          %v3482 = vunpack.c.l.s4 1414812756
          %v3483 = vunpack.c.0.s8 %v3482
          %v3484 = vlaneseq
          %v3485 = vshrl.u32 %v3484, 7
          %v3486 = vsub.s32 %v3483, %v3485
          %v3487 = vrot.slane %v2616, %v3486
          %v3489 = vunpack.c.l.s4 1987475062
          %v3490 = vunpack.c.0.s8 %v3489
          %v3491 = vlaneseq
          %v3492 = vshrl.u32 %v3491, 7
          %v3493 = vsub.s32 %v3490, %v3492
          %v3494 = vrot.slane %v2616, %v3493
          %v3496 = vunpack.c.l.s4 269488144
          %v3497 = vunpack.c.0.s8 %v3496
          %v3498 = vlaneseq
          %v3499 = vshrl.u32 %v3498, 7
          %v3500 = vsub.s32 %v3497, %v3499
          %v3501 = vrot.slane %v2618, %v3500
          %v3503 = vunpack.c.l.s4 842150450
          %v3504 = vunpack.c.0.s8 %v3503
          %v3505 = vlaneseq
          %v3506 = vshrl.u32 %v3505, 7
          %v3507 = vsub.s32 %v3504, %v3506
          %v3508 = vrot.slane %v2618, %v3507
          %v3510 = vunpack.c.l.s4 1414812756
          %v3511 = vunpack.c.0.s8 %v3510
          %v3512 = vlaneseq
          %v3513 = vshrl.u32 %v3512, 7
          %v3514 = vsub.s32 %v3511, %v3513
          %v3515 = vrot.slane %v2618, %v3514
          %v3517 = vunpack.c.l.s4 1987475062
          %v3518 = vunpack.c.0.s8 %v3517
          %v3519 = vlaneseq
          %v3520 = vshrl.u32 %v3519, 7
          %v3521 = vsub.s32 %v3518, %v3520
          %v3522 = vrot.slane %v2618, %v3521
          %v3524 = vunpack.c.l.s4 269488144
          %v3525 = vunpack.c.0.s8 %v3524
          %v3526 = vlaneseq
          %v3527 = vshrl.u32 %v3526, 7
          %v3528 = vsub.s32 %v3525, %v3527
          %v3529 = vrot.slane %v2620, %v3528
          %v3531 = vunpack.c.l.s4 842150450
          %v3532 = vunpack.c.0.s8 %v3531
          %v3533 = vlaneseq
          %v3534 = vshrl.u32 %v3533, 7
          %v3535 = vsub.s32 %v3532, %v3534
          %v3536 = vrot.slane %v2620, %v3535
          %v3538 = vunpack.c.l.s4 1414812756
          %v3539 = vunpack.c.0.s8 %v3538
          %v3540 = vlaneseq
          %v3541 = vshrl.u32 %v3540, 7
          %v3542 = vsub.s32 %v3539, %v3541
          %v3543 = vrot.slane %v2620, %v3542
          %v3545 = vunpack.c.l.s4 1987475062
          %v3546 = vunpack.c.0.s8 %v3545
          %v3547 = vlaneseq
          %v3548 = vshrl.u32 %v3547, 7
          %v3549 = vsub.s32 %v3546, %v3548
          %v3550 = vrot.slane %v2620, %v3549
          %v3552 = vunpack.c.l.s4 269488144
          %v3553 = vunpack.c.0.s8 %v3552
          %v3554 = vlaneseq
          %v3555 = vshrl.u32 %v3554, 7
          %v3556 = vsub.s32 %v3553, %v3555
          %v3557 = vrot.slane %v2622, %v3556
          %v3559 = vunpack.c.l.s4 842150450
          %v3560 = vunpack.c.0.s8 %v3559
          %v3561 = vlaneseq
          %v3562 = vshrl.u32 %v3561, 7
          %v3563 = vsub.s32 %v3560, %v3562
          %v3564 = vrot.slane %v2622, %v3563
          %v3566 = vunpack.c.l.s4 1414812756
          %v3567 = vunpack.c.0.s8 %v3566
          %v3568 = vlaneseq
          %v3569 = vshrl.u32 %v3568, 7
          %v3570 = vsub.s32 %v3567, %v3569
          %v3571 = vrot.slane %v2622, %v3570
          %v3573 = vunpack.c.l.s4 1987475062
          %v3574 = vunpack.c.0.s8 %v3573
          %v3575 = vlaneseq
          %v3576 = vshrl.u32 %v3575, 7
          %v3577 = vsub.s32 %v3574, %v3576
          %v3578 = vrot.slane %v2622, %v3577
          %v3580 = vunpack.c.l.s4 269488144
          %v3581 = vunpack.c.0.s8 %v3580
          %v3582 = vlaneseq
          %v3583 = vshrl.u32 %v3582, 7
          %v3584 = vsub.s32 %v3581, %v3583
          %v3585 = vrot.slane %v2624, %v3584
          %v3587 = vunpack.c.l.s4 842150450
          %v3588 = vunpack.c.0.s8 %v3587
          %v3589 = vlaneseq
          %v3590 = vshrl.u32 %v3589, 7
          %v3591 = vsub.s32 %v3588, %v3590
          %v3592 = vrot.slane %v2624, %v3591
          %v3594 = vunpack.c.l.s4 1414812756
          %v3595 = vunpack.c.0.s8 %v3594
          %v3596 = vlaneseq
          %v3597 = vshrl.u32 %v3596, 7
          %v3598 = vsub.s32 %v3595, %v3597
          %v3599 = vrot.slane %v2624, %v3598
          %v3601 = vunpack.c.l.s4 1987475062
          %v3602 = vunpack.c.0.s8 %v3601
          %v3603 = vlaneseq
          %v3604 = vshrl.u32 %v3603, 7
          %v3605 = vsub.s32 %v3602, %v3604
          %v3606 = vrot.slane %v2624, %v3605
          %v3608 = vunpack.c.l.s4 269488144
          %v3609 = vunpack.c.0.s8 %v3608
          %v3610 = vlaneseq
          %v3611 = vshrl.u32 %v3610, 7
          %v3612 = vsub.s32 %v3609, %v3611
          %v3613 = vrot.slane %v2626, %v3612
          %v3615 = vunpack.c.l.s4 842150450
          %v3616 = vunpack.c.0.s8 %v3615
          %v3617 = vlaneseq
          %v3618 = vshrl.u32 %v3617, 7
          %v3619 = vsub.s32 %v3616, %v3618
          %v3620 = vrot.slane %v2626, %v3619
          %v3622 = vunpack.c.l.s4 1414812756
          %v3623 = vunpack.c.0.s8 %v3622
          %v3624 = vlaneseq
          %v3625 = vshrl.u32 %v3624, 7
          %v3626 = vsub.s32 %v3623, %v3625
          %v3627 = vrot.slane %v2626, %v3626
          %v3629 = vunpack.c.l.s4 1987475062
          %v3630 = vunpack.c.0.s8 %v3629
          %v3631 = vlaneseq
          %v3632 = vshrl.u32 %v3631, 7
          %v3633 = vsub.s32 %v3630, %v3632
          %v3634 = vrot.slane %v2626, %v3633
          %v3636 = vunpack.c.l.s4 269488144
          %v3637 = vunpack.c.0.s8 %v3636
          %v3638 = vlaneseq
          %v3639 = vshrl.u32 %v3638, 7
          %v3640 = vsub.s32 %v3637, %v3639
          %v3641 = vrot.slane %v2628, %v3640
          %v3643 = vunpack.c.l.s4 842150450
          %v3644 = vunpack.c.0.s8 %v3643
          %v3645 = vlaneseq
          %v3646 = vshrl.u32 %v3645, 7
          %v3647 = vsub.s32 %v3644, %v3646
          %v3648 = vrot.slane %v2628, %v3647
          %v3650 = vunpack.c.l.s4 1414812756
          %v3651 = vunpack.c.0.s8 %v3650
          %v3652 = vlaneseq
          %v3653 = vshrl.u32 %v3652, 7
          %v3654 = vsub.s32 %v3651, %v3653
          %v3655 = vrot.slane %v2628, %v3654
          %v3657 = vunpack.c.l.s4 1987475062
          %v3658 = vunpack.c.0.s8 %v3657
          %v3659 = vlaneseq
          %v3660 = vshrl.u32 %v3659, 7
          %v3661 = vsub.s32 %v3658, %v3660
          %v3662 = vrot.slane %v2628, %v3661
          %v3664 = vunpack.c.l.s4 269488144
          %v3665 = vunpack.c.0.s8 %v3664
          %v3666 = vlaneseq
          %v3667 = vshrl.u32 %v3666, 7
          %v3668 = vsub.s32 %v3665, %v3667
          %v3669 = vrot.slane %v2630, %v3668
          %v3671 = vunpack.c.l.s4 842150450
          %v3672 = vunpack.c.0.s8 %v3671
          %v3673 = vlaneseq
          %v3674 = vshrl.u32 %v3673, 7
          %v3675 = vsub.s32 %v3672, %v3674
          %v3676 = vrot.slane %v2630, %v3675
          %v3678 = vunpack.c.l.s4 1414812756
          %v3679 = vunpack.c.0.s8 %v3678
          %v3680 = vlaneseq
          %v3681 = vshrl.u32 %v3680, 7
          %v3682 = vsub.s32 %v3679, %v3681
          %v3683 = vrot.slane %v2630, %v3682
          %v3685 = vunpack.c.l.s4 1987475062
          %v3686 = vunpack.c.0.s8 %v3685
          %v3687 = vlaneseq
          %v3688 = vshrl.u32 %v3687, 7
          %v3689 = vsub.s32 %v3686, %v3688
          %v3690 = vrot.slane %v2630, %v3689
          %v3692 = vunpack.c.l.s4 269488144
          %v3693 = vunpack.c.0.s8 %v3692
          %v3694 = vlaneseq
          %v3695 = vshrl.u32 %v3694, 7
          %v3696 = vsub.s32 %v3693, %v3695
          %v3697 = vrot.slane %v2632, %v3696
          %v3699 = vunpack.c.l.s4 842150450
          %v3700 = vunpack.c.0.s8 %v3699
          %v3701 = vlaneseq
          %v3702 = vshrl.u32 %v3701, 7
          %v3703 = vsub.s32 %v3700, %v3702
          %v3704 = vrot.slane %v2632, %v3703
          %v3706 = vunpack.c.l.s4 1414812756
          %v3707 = vunpack.c.0.s8 %v3706
          %v3708 = vlaneseq
          %v3709 = vshrl.u32 %v3708, 7
          %v3710 = vsub.s32 %v3707, %v3709
          %v3711 = vrot.slane %v2632, %v3710
          %v3713 = vunpack.c.l.s4 1987475062
          %v3714 = vunpack.c.0.s8 %v3713
          %v3715 = vlaneseq
          %v3716 = vshrl.u32 %v3715, 7
          %v3717 = vsub.s32 %v3714, %v3716
          %v3718 = vrot.slane %v2632, %v3717
          %v3720 = vunpack.c.l.s4 269488144
          %v3721 = vunpack.c.0.s8 %v3720
          %v3722 = vlaneseq
          %v3723 = vshrl.u32 %v3722, 7
          %v3724 = vsub.s32 %v3721, %v3723
          %v3725 = vrot.slane %v2634, %v3724
          %v3727 = vunpack.c.l.s4 842150450
          %v3728 = vunpack.c.0.s8 %v3727
          %v3729 = vlaneseq
          %v3730 = vshrl.u32 %v3729, 7
          %v3731 = vsub.s32 %v3728, %v3730
          %v3732 = vrot.slane %v2634, %v3731
          %v3734 = vunpack.c.l.s4 1414812756
          %v3735 = vunpack.c.0.s8 %v3734
          %v3736 = vlaneseq
          %v3737 = vshrl.u32 %v3736, 7
          %v3738 = vsub.s32 %v3735, %v3737
          %v3739 = vrot.slane %v2634, %v3738
          %v3741 = vunpack.c.l.s4 1987475062
          %v3742 = vunpack.c.0.s8 %v3741
          %v3743 = vlaneseq
          %v3744 = vshrl.u32 %v3743, 7
          %v3745 = vsub.s32 %v3742, %v3744
          %v3746 = vrot.slane %v2634, %v3745
          %v3748 = vunpack.c.l.s4 269488144
          %v3749 = vunpack.c.0.s8 %v3748
          %v3750 = vlaneseq
          %v3751 = vshrl.u32 %v3750, 7
          %v3752 = vsub.s32 %v3749, %v3751
          %v3753 = vrot.slane %v2636, %v3752
          %v3755 = vunpack.c.l.s4 842150450
          %v3756 = vunpack.c.0.s8 %v3755
          %v3757 = vlaneseq
          %v3758 = vshrl.u32 %v3757, 7
          %v3759 = vsub.s32 %v3756, %v3758
          %v3760 = vrot.slane %v2636, %v3759
          %v3762 = vunpack.c.l.s4 1414812756
          %v3763 = vunpack.c.0.s8 %v3762
          %v3764 = vlaneseq
          %v3765 = vshrl.u32 %v3764, 7
          %v3766 = vsub.s32 %v3763, %v3765
          %v3767 = vrot.slane %v2636, %v3766
          %v3769 = vunpack.c.l.s4 1987475062
          %v3770 = vunpack.c.0.s8 %v3769
          %v3771 = vlaneseq
          %v3772 = vshrl.u32 %v3771, 7
          %v3773 = vsub.s32 %v3770, %v3772
          %v3774 = vrot.slane %v2636, %v3773
          %v3776 = vunpack.c.l.s4 269488144
          %v3777 = vunpack.c.0.s8 %v3776
          %v3778 = vlaneseq
          %v3779 = vshrl.u32 %v3778, 7
          %v3780 = vsub.s32 %v3777, %v3779
          %v3781 = vrot.slane %v2638, %v3780
          %v3783 = vunpack.c.l.s4 842150450
          %v3784 = vunpack.c.0.s8 %v3783
          %v3785 = vlaneseq
          %v3786 = vshrl.u32 %v3785, 7
          %v3787 = vsub.s32 %v3784, %v3786
          %v3788 = vrot.slane %v2638, %v3787
          %v3790 = vunpack.c.l.s4 1414812756
          %v3791 = vunpack.c.0.s8 %v3790
          %v3792 = vlaneseq
          %v3793 = vshrl.u32 %v3792, 7
          %v3794 = vsub.s32 %v3791, %v3793
          %v3795 = vrot.slane %v2638, %v3794
          %v3797 = vunpack.c.l.s4 1987475062
          %v3798 = vunpack.c.0.s8 %v3797
          %v3799 = vlaneseq
          %v3800 = vshrl.u32 %v3799, 7
          %v3801 = vsub.s32 %v3798, %v3800
          %v3802 = vrot.slane %v2638, %v3801
          %v3804 = vunpack.c.l.s4 269488144
          %v3805 = vunpack.c.0.s8 %v3804
          %v3806 = vlaneseq
          %v3807 = vshrl.u32 %v3806, 7
          %v3808 = vsub.s32 %v3805, %v3807
          %v3809 = vrot.slane %v2640, %v3808
          %v3811 = vunpack.c.l.s4 842150450
          %v3812 = vunpack.c.0.s8 %v3811
          %v3813 = vlaneseq
          %v3814 = vshrl.u32 %v3813, 7
          %v3815 = vsub.s32 %v3812, %v3814
          %v3816 = vrot.slane %v2640, %v3815
          %v3818 = vunpack.c.l.s4 1414812756
          %v3819 = vunpack.c.0.s8 %v3818
          %v3820 = vlaneseq
          %v3821 = vshrl.u32 %v3820, 7
          %v3822 = vsub.s32 %v3819, %v3821
          %v3823 = vrot.slane %v2640, %v3822
          %v3825 = vunpack.c.l.s4 1987475062
          %v3826 = vunpack.c.0.s8 %v3825
          %v3827 = vlaneseq
          %v3828 = vshrl.u32 %v3827, 7
          %v3829 = vsub.s32 %v3826, %v3828
          %v3830 = vrot.slane %v2640, %v3829
          %v3832 = vunpack.c.l.s4 269488144
          %v3833 = vunpack.c.0.s8 %v3832
          %v3834 = vlaneseq
          %v3835 = vshrl.u32 %v3834, 7
          %v3836 = vsub.s32 %v3833, %v3835
          %v3837 = vrot.slane %v2642, %v3836
          %v3839 = vunpack.c.l.s4 842150450
          %v3840 = vunpack.c.0.s8 %v3839
          %v3841 = vlaneseq
          %v3842 = vshrl.u32 %v3841, 7
          %v3843 = vsub.s32 %v3840, %v3842
          %v3844 = vrot.slane %v2642, %v3843
          %v3846 = vunpack.c.l.s4 1414812756
          %v3847 = vunpack.c.0.s8 %v3846
          %v3848 = vlaneseq
          %v3849 = vshrl.u32 %v3848, 7
          %v3850 = vsub.s32 %v3847, %v3849
          %v3851 = vrot.slane %v2642, %v3850
          %v3853 = vunpack.c.l.s4 1987475062
          %v3854 = vunpack.c.0.s8 %v3853
          %v3855 = vlaneseq
          %v3856 = vshrl.u32 %v3855, 7
          %v3857 = vsub.s32 %v3854, %v3856
          %v3858 = vrot.slane %v2642, %v3857
          %v3860 = vunpack.c.l.s4 269488144
          %v3861 = vunpack.c.0.s8 %v3860
          %v3862 = vlaneseq
          %v3863 = vshrl.u32 %v3862, 7
          %v3864 = vsub.s32 %v3861, %v3863
          %v3865 = vrot.slane %v2644, %v3864
          %v3867 = vunpack.c.l.s4 842150450
          %v3868 = vunpack.c.0.s8 %v3867
          %v3869 = vlaneseq
          %v3870 = vshrl.u32 %v3869, 7
          %v3871 = vsub.s32 %v3868, %v3870
          %v3872 = vrot.slane %v2644, %v3871
          %v3874 = vunpack.c.l.s4 1414812756
          %v3875 = vunpack.c.0.s8 %v3874
          %v3876 = vlaneseq
          %v3877 = vshrl.u32 %v3876, 7
          %v3878 = vsub.s32 %v3875, %v3877
          %v3879 = vrot.slane %v2644, %v3878
          %v3881 = vunpack.c.l.s4 1987475062
          %v3882 = vunpack.c.0.s8 %v3881
          %v3883 = vlaneseq
          %v3884 = vshrl.u32 %v3883, 7
          %v3885 = vsub.s32 %v3882, %v3884
          %v3886 = vrot.slane %v2644, %v3885
          %v3888 = vunpack.c.l.s4 269488144
          %v3889 = vunpack.c.0.s8 %v3888
          %v3890 = vlaneseq
          %v3891 = vshrl.u32 %v3890, 7
          %v3892 = vsub.s32 %v3889, %v3891
          %v3893 = vrot.slane %v2646, %v3892
          %v3895 = vunpack.c.l.s4 842150450
          %v3896 = vunpack.c.0.s8 %v3895
          %v3897 = vlaneseq
          %v3898 = vshrl.u32 %v3897, 7
          %v3899 = vsub.s32 %v3896, %v3898
          %v3900 = vrot.slane %v2646, %v3899
          %v3902 = vunpack.c.l.s4 1414812756
          %v3903 = vunpack.c.0.s8 %v3902
          %v3904 = vlaneseq
          %v3905 = vshrl.u32 %v3904, 7
          %v3906 = vsub.s32 %v3903, %v3905
          %v3907 = vrot.slane %v2646, %v3906
          %v3909 = vunpack.c.l.s4 1987475062
          %v3910 = vunpack.c.0.s8 %v3909
          %v3911 = vlaneseq
          %v3912 = vshrl.u32 %v3911, 7
          %v3913 = vsub.s32 %v3910, %v3912
          %v3914 = vrot.slane %v2646, %v3913
          %v3916 = vunpack.c.l.s4 269488144
          %v3917 = vunpack.c.0.s8 %v3916
          %v3918 = vlaneseq
          %v3919 = vshrl.u32 %v3918, 7
          %v3920 = vsub.s32 %v3917, %v3919
          %v3921 = vrot.slane %v2648, %v3920
          %v3923 = vunpack.c.l.s4 842150450
          %v3924 = vunpack.c.0.s8 %v3923
          %v3925 = vlaneseq
          %v3926 = vshrl.u32 %v3925, 7
          %v3927 = vsub.s32 %v3924, %v3926
          %v3928 = vrot.slane %v2648, %v3927
          %v3930 = vunpack.c.l.s4 1414812756
          %v3931 = vunpack.c.0.s8 %v3930
          %v3932 = vlaneseq
          %v3933 = vshrl.u32 %v3932, 7
          %v3934 = vsub.s32 %v3931, %v3933
          %v3935 = vrot.slane %v2648, %v3934
          %v3937 = vunpack.c.l.s4 1987475062
          %v3938 = vunpack.c.0.s8 %v3937
          %v3939 = vlaneseq
          %v3940 = vshrl.u32 %v3939, 7
          %v3941 = vsub.s32 %v3938, %v3940
          %v3942 = vrot.slane %v2648, %v3941
          %v3944 = vunpack.c.l.s4 269488144
          %v3945 = vunpack.c.0.s8 %v3944
          %v3946 = vlaneseq
          %v3947 = vshrl.u32 %v3946, 7
          %v3948 = vsub.s32 %v3945, %v3947
          %v3949 = vrot.slane %v2650, %v3948
          %v3951 = vunpack.c.l.s4 842150450
          %v3952 = vunpack.c.0.s8 %v3951
          %v3953 = vlaneseq
          %v3954 = vshrl.u32 %v3953, 7
          %v3955 = vsub.s32 %v3952, %v3954
          %v3956 = vrot.slane %v2650, %v3955
          %v3958 = vunpack.c.l.s4 1414812756
          %v3959 = vunpack.c.0.s8 %v3958
          %v3960 = vlaneseq
          %v3961 = vshrl.u32 %v3960, 7
          %v3962 = vsub.s32 %v3959, %v3961
          %v3963 = vrot.slane %v2650, %v3962
          %v3965 = vunpack.c.l.s4 1987475062
          %v3966 = vunpack.c.0.s8 %v3965
          %v3967 = vlaneseq
          %v3968 = vshrl.u32 %v3967, 7
          %v3969 = vsub.s32 %v3966, %v3968
          %v3970 = vrot.slane %v2650, %v3969
          %v3972 = vunpack.c.l.s4 269488144
          %v3973 = vunpack.c.0.s8 %v3972
          %v3974 = vlaneseq
          %v3975 = vshrl.u32 %v3974, 7
          %v3976 = vsub.s32 %v3973, %v3975
          %v3977 = vrot.slane %v2652, %v3976
          %v3979 = vunpack.c.l.s4 842150450
          %v3980 = vunpack.c.0.s8 %v3979
          %v3981 = vlaneseq
          %v3982 = vshrl.u32 %v3981, 7
          %v3983 = vsub.s32 %v3980, %v3982
          %v3984 = vrot.slane %v2652, %v3983
          %v3986 = vunpack.c.l.s4 1414812756
          %v3987 = vunpack.c.0.s8 %v3986
          %v3988 = vlaneseq
          %v3989 = vshrl.u32 %v3988, 7
          %v3990 = vsub.s32 %v3987, %v3989
          %v3991 = vrot.slane %v2652, %v3990
          %v3993 = vunpack.c.l.s4 1987475062
          %v3994 = vunpack.c.0.s8 %v3993
          %v3995 = vlaneseq
          %v3996 = vshrl.u32 %v3995, 7
          %v3997 = vsub.s32 %v3994, %v3996
          %v3998 = vrot.slane %v2652, %v3997
          %v4000 = vunpack.c.l.s4 269488144
          %v4001 = vunpack.c.0.s8 %v4000
          %v4002 = vlaneseq
          %v4003 = vshrl.u32 %v4002, 7
          %v4004 = vsub.s32 %v4001, %v4003
          %v4005 = vrot.slane %v2654, %v4004
          %v4007 = vunpack.c.l.s4 842150450
          %v4008 = vunpack.c.0.s8 %v4007
          %v4009 = vlaneseq
          %v4010 = vshrl.u32 %v4009, 7
          %v4011 = vsub.s32 %v4008, %v4010
          %v4012 = vrot.slane %v2654, %v4011
          %v4014 = vunpack.c.l.s4 1414812756
          %v4015 = vunpack.c.0.s8 %v4014
          %v4016 = vlaneseq
          %v4017 = vshrl.u32 %v4016, 7
          %v4018 = vsub.s32 %v4015, %v4017
          %v4019 = vrot.slane %v2654, %v4018
          %v4021 = vunpack.c.l.s4 1987475062
          %v4022 = vunpack.c.0.s8 %v4021
          %v4023 = vlaneseq
          %v4024 = vshrl.u32 %v4023, 7
          %v4025 = vsub.s32 %v4022, %v4024
          %v4026 = vrot.slane %v2654, %v4025
          %v4028 = vunpack.c.l.s4 269488144
          %v4029 = vunpack.c.0.s8 %v4028
          %v4030 = vlaneseq
          %v4031 = vshrl.u32 %v4030, 7
          %v4032 = vsub.s32 %v4029, %v4031
          %v4033 = vrot.slane %v2656, %v4032
          %v4035 = vunpack.c.l.s4 842150450
          %v4036 = vunpack.c.0.s8 %v4035
          %v4037 = vlaneseq
          %v4038 = vshrl.u32 %v4037, 7
          %v4039 = vsub.s32 %v4036, %v4038
          %v4040 = vrot.slane %v2656, %v4039
          %v4042 = vunpack.c.l.s4 1414812756
          %v4043 = vunpack.c.0.s8 %v4042
          %v4044 = vlaneseq
          %v4045 = vshrl.u32 %v4044, 7
          %v4046 = vsub.s32 %v4043, %v4045
          %v4047 = vrot.slane %v2656, %v4046
          %v4049 = vunpack.c.l.s4 1987475062
          %v4050 = vunpack.c.0.s8 %v4049
          %v4051 = vlaneseq
          %v4052 = vshrl.u32 %v4051, 7
          %v4053 = vsub.s32 %v4050, %v4052
          %v4054 = vrot.slane %v2656, %v4053
          %v4056 = vunpack.c.l.s4 269488144
          %v4057 = vunpack.c.0.s8 %v4056
          %v4058 = vlaneseq
          %v4059 = vshrl.u32 %v4058, 7
          %v4060 = vsub.s32 %v4057, %v4059
          %v4061 = vrot.slane %v2658, %v4060
          %v4063 = vunpack.c.l.s4 842150450
          %v4064 = vunpack.c.0.s8 %v4063
          %v4065 = vlaneseq
          %v4066 = vshrl.u32 %v4065, 7
          %v4067 = vsub.s32 %v4064, %v4066
          %v4068 = vrot.slane %v2658, %v4067
          %v4070 = vunpack.c.l.s4 1414812756
          %v4071 = vunpack.c.0.s8 %v4070
          %v4072 = vlaneseq
          %v4073 = vshrl.u32 %v4072, 7
          %v4074 = vsub.s32 %v4071, %v4073
          %v4075 = vrot.slane %v2658, %v4074
          %v4077 = vunpack.c.l.s4 1987475062
          %v4078 = vunpack.c.0.s8 %v4077
          %v4079 = vlaneseq
          %v4080 = vshrl.u32 %v4079, 7
          %v4081 = vsub.s32 %v4078, %v4080
          %v4082 = vrot.slane %v2658, %v4081
          %v4084 = vunpack.c.l.s4 269488144
          %v4085 = vunpack.c.0.s8 %v4084
          %v4086 = vlaneseq
          %v4087 = vshrl.u32 %v4086, 7
          %v4088 = vsub.s32 %v4085, %v4087
          %v4089 = vrot.slane %v2660, %v4088
          %v4091 = vunpack.c.l.s4 842150450
          %v4092 = vunpack.c.0.s8 %v4091
          %v4093 = vlaneseq
          %v4094 = vshrl.u32 %v4093, 7
          %v4095 = vsub.s32 %v4092, %v4094
          %v4096 = vrot.slane %v2660, %v4095
          %v4098 = vunpack.c.l.s4 1414812756
          %v4099 = vunpack.c.0.s8 %v4098
          %v4100 = vlaneseq
          %v4101 = vshrl.u32 %v4100, 7
          %v4102 = vsub.s32 %v4099, %v4101
          %v4103 = vrot.slane %v2660, %v4102
          %v4105 = vunpack.c.l.s4 1987475062
          %v4106 = vunpack.c.0.s8 %v4105
          %v4107 = vlaneseq
          %v4108 = vshrl.u32 %v4107, 7
          %v4109 = vsub.s32 %v4106, %v4108
          %v4110 = vrot.slane %v2660, %v4109
          %v4112 = vunpack.c.l.s4 269488144
          %v4113 = vunpack.c.0.s8 %v4112
          %v4114 = vlaneseq
          %v4115 = vshrl.u32 %v4114, 7
          %v4116 = vsub.s32 %v4113, %v4115
          %v4117 = vrot.slane %v2662, %v4116
          %v4119 = vunpack.c.l.s4 842150450
          %v4120 = vunpack.c.0.s8 %v4119
          %v4121 = vlaneseq
          %v4122 = vshrl.u32 %v4121, 7
          %v4123 = vsub.s32 %v4120, %v4122
          %v4124 = vrot.slane %v2662, %v4123
          %v4126 = vunpack.c.l.s4 1414812756
          %v4127 = vunpack.c.0.s8 %v4126
          %v4128 = vlaneseq
          %v4129 = vshrl.u32 %v4128, 7
          %v4130 = vsub.s32 %v4127, %v4129
          %v4131 = vrot.slane %v2662, %v4130
          %v4133 = vunpack.c.l.s4 1987475062
          %v4134 = vunpack.c.0.s8 %v4133
          %v4135 = vlaneseq
          %v4136 = vshrl.u32 %v4135, 7
          %v4137 = vsub.s32 %v4134, %v4136
          %v4138 = vrot.slane %v2662, %v4137
          %v4140 = vunpack.c.l.s4 269488144
          %v4141 = vunpack.c.0.s8 %v4140
          %v4142 = vlaneseq
          %v4143 = vshrl.u32 %v4142, 7
          %v4144 = vsub.s32 %v4141, %v4143
          %v4145 = vrot.slane %v2664, %v4144
          %v4147 = vunpack.c.l.s4 842150450
          %v4148 = vunpack.c.0.s8 %v4147
          %v4149 = vlaneseq
          %v4150 = vshrl.u32 %v4149, 7
          %v4151 = vsub.s32 %v4148, %v4150
          %v4152 = vrot.slane %v2664, %v4151
          %v4154 = vunpack.c.l.s4 1414812756
          %v4155 = vunpack.c.0.s8 %v4154
          %v4156 = vlaneseq
          %v4157 = vshrl.u32 %v4156, 7
          %v4158 = vsub.s32 %v4155, %v4157
          %v4159 = vrot.slane %v2664, %v4158
          %v4161 = vunpack.c.l.s4 1987475062
          %v4162 = vunpack.c.0.s8 %v4161
          %v4163 = vlaneseq
          %v4164 = vshrl.u32 %v4163, 7
          %v4165 = vsub.s32 %v4162, %v4164
          %v4166 = vrot.slane %v2664, %v4165
          %v4168 = vunpack.c.l.s4 269488144
          %v4169 = vunpack.c.0.s8 %v4168
          %v4170 = vlaneseq
          %v4171 = vshrl.u32 %v4170, 7
          %v4172 = vsub.s32 %v4169, %v4171
          %v4173 = vrot.slane %v2666, %v4172
          %v4175 = vunpack.c.l.s4 842150450
          %v4176 = vunpack.c.0.s8 %v4175
          %v4177 = vlaneseq
          %v4178 = vshrl.u32 %v4177, 7
          %v4179 = vsub.s32 %v4176, %v4178
          %v4180 = vrot.slane %v2666, %v4179
          %v4182 = vunpack.c.l.s4 1414812756
          %v4183 = vunpack.c.0.s8 %v4182
          %v4184 = vlaneseq
          %v4185 = vshrl.u32 %v4184, 7
          %v4186 = vsub.s32 %v4183, %v4185
          %v4187 = vrot.slane %v2666, %v4186
          %v4189 = vunpack.c.l.s4 1987475062
          %v4190 = vunpack.c.0.s8 %v4189
          %v4191 = vlaneseq
          %v4192 = vshrl.u32 %v4191, 7
          %v4193 = vsub.s32 %v4190, %v4192
          %v4194 = vrot.slane %v2666, %v4193
          %v4196 = vunpack.c.l.s4 269488144
          %v4197 = vunpack.c.0.s8 %v4196
          %v4198 = vlaneseq
          %v4199 = vshrl.u32 %v4198, 7
          %v4200 = vsub.s32 %v4197, %v4199
          %v4201 = vrot.slane %v2668, %v4200
          %v4203 = vunpack.c.l.s4 842150450
          %v4204 = vunpack.c.0.s8 %v4203
          %v4205 = vlaneseq
          %v4206 = vshrl.u32 %v4205, 7
          %v4207 = vsub.s32 %v4204, %v4206
          %v4208 = vrot.slane %v2668, %v4207
          %v4210 = vunpack.c.l.s4 1414812756
          %v4211 = vunpack.c.0.s8 %v4210
          %v4212 = vlaneseq
          %v4213 = vshrl.u32 %v4212, 7
          %v4214 = vsub.s32 %v4211, %v4213
          %v4215 = vrot.slane %v2668, %v4214
          %v4217 = vunpack.c.l.s4 1987475062
          %v4218 = vunpack.c.0.s8 %v4217
          %v4219 = vlaneseq
          %v4220 = vshrl.u32 %v4219, 7
          %v4221 = vsub.s32 %v4218, %v4220
          %v4222 = vrot.slane %v2668, %v4221
          %v4224 = vunpack.c.l.s4 269488144
          %v4225 = vunpack.c.0.s8 %v4224
          %v4226 = vlaneseq
          %v4227 = vshrl.u32 %v4226, 7
          %v4228 = vsub.s32 %v4225, %v4227
          %v4229 = vrot.slane %v2670, %v4228
          %v4231 = vunpack.c.l.s4 842150450
          %v4232 = vunpack.c.0.s8 %v4231
          %v4233 = vlaneseq
          %v4234 = vshrl.u32 %v4233, 7
          %v4235 = vsub.s32 %v4232, %v4234
          %v4236 = vrot.slane %v2670, %v4235
          %v4238 = vunpack.c.l.s4 1414812756
          %v4239 = vunpack.c.0.s8 %v4238
          %v4240 = vlaneseq
          %v4241 = vshrl.u32 %v4240, 7
          %v4242 = vsub.s32 %v4239, %v4241
          %v4243 = vrot.slane %v2670, %v4242
          %v4245 = vunpack.c.l.s4 1987475062
          %v4246 = vunpack.c.0.s8 %v4245
          %v4247 = vlaneseq
          %v4248 = vshrl.u32 %v4247, 7
          %v4249 = vsub.s32 %v4246, %v4248
          %v4250 = vrot.slane %v2670, %v4249
          %v4252 = vunpack.c.l.s4 269488144
          %v4253 = vunpack.c.0.s8 %v4252
          %v4254 = vlaneseq
          %v4255 = vshrl.u32 %v4254, 7
          %v4256 = vsub.s32 %v4253, %v4255
          %v4257 = vrot.slane %v2672, %v4256
          %v4259 = vunpack.c.l.s4 842150450
          %v4260 = vunpack.c.0.s8 %v4259
          %v4261 = vlaneseq
          %v4262 = vshrl.u32 %v4261, 7
          %v4263 = vsub.s32 %v4260, %v4262
          %v4264 = vrot.slane %v2672, %v4263
          %v4266 = vunpack.c.l.s4 1414812756
          %v4267 = vunpack.c.0.s8 %v4266
          %v4268 = vlaneseq
          %v4269 = vshrl.u32 %v4268, 7
          %v4270 = vsub.s32 %v4267, %v4269
          %v4271 = vrot.slane %v2672, %v4270
          %v4273 = vunpack.c.l.s4 1987475062
          %v4274 = vunpack.c.0.s8 %v4273
          %v4275 = vlaneseq
          %v4276 = vshrl.u32 %v4275, 7
          %v4277 = vsub.s32 %v4274, %v4276
          %v4278 = vrot.slane %v2672, %v4277
          %v4280 = vunpack.c.l.s4 269488144
          %v4281 = vunpack.c.0.s8 %v4280
          %v4282 = vlaneseq
          %v4283 = vshrl.u32 %v4282, 7
          %v4284 = vsub.s32 %v4281, %v4283
          %v4285 = vrot.slane %v2674, %v4284
          %v4287 = vunpack.c.l.s4 842150450
          %v4288 = vunpack.c.0.s8 %v4287
          %v4289 = vlaneseq
          %v4290 = vshrl.u32 %v4289, 7
          %v4291 = vsub.s32 %v4288, %v4290
          %v4292 = vrot.slane %v2674, %v4291
          %v4294 = vunpack.c.l.s4 1414812756
          %v4295 = vunpack.c.0.s8 %v4294
          %v4296 = vlaneseq
          %v4297 = vshrl.u32 %v4296, 7
          %v4298 = vsub.s32 %v4295, %v4297
          %v4299 = vrot.slane %v2674, %v4298
          %v4301 = vunpack.c.l.s4 1987475062
          %v4302 = vunpack.c.0.s8 %v4301
          %v4303 = vlaneseq
          %v4304 = vshrl.u32 %v4303, 7
          %v4305 = vsub.s32 %v4302, %v4304
          %v4306 = vrot.slane %v2674, %v4305
          %v4308 = vunpack.c.l.s4 269488144
          %v4309 = vunpack.c.0.s8 %v4308
          %v4310 = vlaneseq
          %v4311 = vshrl.u32 %v4310, 7
          %v4312 = vsub.s32 %v4309, %v4311
          %v4313 = vrot.slane %v2676, %v4312
          %v4315 = vunpack.c.l.s4 842150450
          %v4316 = vunpack.c.0.s8 %v4315
          %v4317 = vlaneseq
          %v4318 = vshrl.u32 %v4317, 7
          %v4319 = vsub.s32 %v4316, %v4318
          %v4320 = vrot.slane %v2676, %v4319
          %v4322 = vunpack.c.l.s4 1414812756
          %v4323 = vunpack.c.0.s8 %v4322
          %v4324 = vlaneseq
          %v4325 = vshrl.u32 %v4324, 7
          %v4326 = vsub.s32 %v4323, %v4325
          %v4327 = vrot.slane %v2676, %v4326
          %v4329 = vunpack.c.l.s4 1987475062
          %v4330 = vunpack.c.0.s8 %v4329
          %v4331 = vlaneseq
          %v4332 = vshrl.u32 %v4331, 7
          %v4333 = vsub.s32 %v4330, %v4332
          %v4334 = vrot.slane %v2676, %v4333
          %v4336 = vunpack.c.l.s4 269488144
          %v4337 = vunpack.c.0.s8 %v4336
          %v4338 = vlaneseq
          %v4339 = vshrl.u32 %v4338, 7
          %v4340 = vsub.s32 %v4337, %v4339
          %v4341 = vrot.slane %v2678, %v4340
          %v4343 = vunpack.c.l.s4 842150450
          %v4344 = vunpack.c.0.s8 %v4343
          %v4345 = vlaneseq
          %v4346 = vshrl.u32 %v4345, 7
          %v4347 = vsub.s32 %v4344, %v4346
          %v4348 = vrot.slane %v2678, %v4347
          %v4350 = vunpack.c.l.s4 1414812756
          %v4351 = vunpack.c.0.s8 %v4350
          %v4352 = vlaneseq
          %v4353 = vshrl.u32 %v4352, 7
          %v4354 = vsub.s32 %v4351, %v4353
          %v4355 = vrot.slane %v2678, %v4354
          %v4357 = vunpack.c.l.s4 1987475062
          %v4358 = vunpack.c.0.s8 %v4357
          %v4359 = vlaneseq
          %v4360 = vshrl.u32 %v4359, 7
          %v4361 = vsub.s32 %v4358, %v4360
          %v4362 = vrot.slane %v2678, %v4361
          %v4364 = vunpack.c.l.s4 269488144
          %v4365 = vunpack.c.0.s8 %v4364
          %v4366 = vlaneseq
          %v4367 = vshrl.u32 %v4366, 7
          %v4368 = vsub.s32 %v4365, %v4367
          %v4369 = vrot.slane %v2680, %v4368
          %v4371 = vunpack.c.l.s4 842150450
          %v4372 = vunpack.c.0.s8 %v4371
          %v4373 = vlaneseq
          %v4374 = vshrl.u32 %v4373, 7
          %v4375 = vsub.s32 %v4372, %v4374
          %v4376 = vrot.slane %v2680, %v4375
          %v4378 = vunpack.c.l.s4 1414812756
          %v4379 = vunpack.c.0.s8 %v4378
          %v4380 = vlaneseq
          %v4381 = vshrl.u32 %v4380, 7
          %v4382 = vsub.s32 %v4379, %v4381
          %v4383 = vrot.slane %v2680, %v4382
          %v4385 = vunpack.c.l.s4 1987475062
          %v4386 = vunpack.c.0.s8 %v4385
          %v4387 = vlaneseq
          %v4388 = vshrl.u32 %v4387, 7
          %v4389 = vsub.s32 %v4386, %v4388
          %v4390 = vrot.slane %v2680, %v4389
          %v4392 = vunpack.c.l.s4 269488144
          %v4393 = vunpack.c.0.s8 %v4392
          %v4394 = vlaneseq
          %v4395 = vshrl.u32 %v4394, 7
          %v4396 = vsub.s32 %v4393, %v4395
          %v4397 = vrot.slane %v2682, %v4396
          %v4399 = vunpack.c.l.s4 842150450
          %v4400 = vunpack.c.0.s8 %v4399
          %v4401 = vlaneseq
          %v4402 = vshrl.u32 %v4401, 7
          %v4403 = vsub.s32 %v4400, %v4402
          %v4404 = vrot.slane %v2682, %v4403
          %v4406 = vunpack.c.l.s4 1414812756
          %v4407 = vunpack.c.0.s8 %v4406
          %v4408 = vlaneseq
          %v4409 = vshrl.u32 %v4408, 7
          %v4410 = vsub.s32 %v4407, %v4409
          %v4411 = vrot.slane %v2682, %v4410
          %v4413 = vunpack.c.l.s4 1987475062
          %v4414 = vunpack.c.0.s8 %v4413
          %v4415 = vlaneseq
          %v4416 = vshrl.u32 %v4415, 7
          %v4417 = vsub.s32 %v4414, %v4416
          %v4418 = vrot.slane %v2682, %v4417
          %v4420 = vunpack.c.l.s4 269488144
          %v4421 = vunpack.c.0.s8 %v4420
          %v4422 = vlaneseq
          %v4423 = vshrl.u32 %v4422, 7
          %v4424 = vsub.s32 %v4421, %v4423
          %v4425 = vrot.slane %v2684, %v4424
          %v4427 = vunpack.c.l.s4 842150450
          %v4428 = vunpack.c.0.s8 %v4427
          %v4429 = vlaneseq
          %v4430 = vshrl.u32 %v4429, 7
          %v4431 = vsub.s32 %v4428, %v4430
          %v4432 = vrot.slane %v2684, %v4431
          %v4434 = vunpack.c.l.s4 1414812756
          %v4435 = vunpack.c.0.s8 %v4434
          %v4436 = vlaneseq
          %v4437 = vshrl.u32 %v4436, 7
          %v4438 = vsub.s32 %v4435, %v4437
          %v4439 = vrot.slane %v2684, %v4438
          %v4441 = vunpack.c.l.s4 1987475062
          %v4442 = vunpack.c.0.s8 %v4441
          %v4443 = vlaneseq
          %v4444 = vshrl.u32 %v4443, 7
          %v4445 = vsub.s32 %v4442, %v4444
          %v4446 = vrot.slane %v2684, %v4445
          %v4448 = vunpack.c.l.s4 269488144
          %v4449 = vunpack.c.0.s8 %v4448
          %v4450 = vlaneseq
          %v4451 = vshrl.u32 %v4450, 7
          %v4452 = vsub.s32 %v4449, %v4451
          %v4453 = vrot.slane %v2686, %v4452
          %v4455 = vunpack.c.l.s4 842150450
          %v4456 = vunpack.c.0.s8 %v4455
          %v4457 = vlaneseq
          %v4458 = vshrl.u32 %v4457, 7
          %v4459 = vsub.s32 %v4456, %v4458
          %v4460 = vrot.slane %v2686, %v4459
          %v4462 = vunpack.c.l.s4 1414812756
          %v4463 = vunpack.c.0.s8 %v4462
          %v4464 = vlaneseq
          %v4465 = vshrl.u32 %v4464, 7
          %v4466 = vsub.s32 %v4463, %v4465
          %v4467 = vrot.slane %v2686, %v4466
          %v4469 = vunpack.c.l.s4 1987475062
          %v4470 = vunpack.c.0.s8 %v4469
          %v4471 = vlaneseq
          %v4472 = vshrl.u32 %v4471, 7
          %v4473 = vsub.s32 %v4470, %v4472
          %v4474 = vrot.slane %v2686, %v4473
          %v4476 = vunpack.c.l.s4 269488144
          %v4477 = vunpack.c.0.s8 %v4476
          %v4478 = vlaneseq
          %v4479 = vshrl.u32 %v4478, 7
          %v4480 = vsub.s32 %v4477, %v4479
          %v4481 = vrot.slane %v2688, %v4480
          %v4483 = vunpack.c.l.s4 842150450
          %v4484 = vunpack.c.0.s8 %v4483
          %v4485 = vlaneseq
          %v4486 = vshrl.u32 %v4485, 7
          %v4487 = vsub.s32 %v4484, %v4486
          %v4488 = vrot.slane %v2688, %v4487
          %v4490 = vunpack.c.l.s4 1414812756
          %v4491 = vunpack.c.0.s8 %v4490
          %v4492 = vlaneseq
          %v4493 = vshrl.u32 %v4492, 7
          %v4494 = vsub.s32 %v4491, %v4493
          %v4495 = vrot.slane %v2688, %v4494
          %v4497 = vunpack.c.l.s4 1987475062
          %v4498 = vunpack.c.0.s8 %v4497
          %v4499 = vlaneseq
          %v4500 = vshrl.u32 %v4499, 7
          %v4501 = vsub.s32 %v4498, %v4500
          %v4502 = vrot.slane %v2688, %v4501
          %v4504 = vunpack.c.l.s4 269488144
          %v4505 = vunpack.c.0.s8 %v4504
          %v4506 = vlaneseq
          %v4507 = vshrl.u32 %v4506, 7
          %v4508 = vsub.s32 %v4505, %v4507
          %v4509 = vrot.slane %v2690, %v4508
          %v4511 = vunpack.c.l.s4 842150450
          %v4512 = vunpack.c.0.s8 %v4511
          %v4513 = vlaneseq
          %v4514 = vshrl.u32 %v4513, 7
          %v4515 = vsub.s32 %v4512, %v4514
          %v4516 = vrot.slane %v2690, %v4515
          %v4518 = vunpack.c.l.s4 1414812756
          %v4519 = vunpack.c.0.s8 %v4518
          %v4520 = vlaneseq
          %v4521 = vshrl.u32 %v4520, 7
          %v4522 = vsub.s32 %v4519, %v4521
          %v4523 = vrot.slane %v2690, %v4522
          %v4525 = vunpack.c.l.s4 1987475062
          %v4526 = vunpack.c.0.s8 %v4525
          %v4527 = vlaneseq
          %v4528 = vshrl.u32 %v4527, 7
          %v4529 = vsub.s32 %v4526, %v4528
          %v4530 = vrot.slane %v2690, %v4529
          %v4532 = vunpack.c.l.s4 269488144
          %v4533 = vunpack.c.0.s8 %v4532
          %v4534 = vlaneseq
          %v4535 = vshrl.u32 %v4534, 7
          %v4536 = vsub.s32 %v4533, %v4535
          %v4537 = vrot.slane %v2692, %v4536
          %v4539 = vunpack.c.l.s4 842150450
          %v4540 = vunpack.c.0.s8 %v4539
          %v4541 = vlaneseq
          %v4542 = vshrl.u32 %v4541, 7
          %v4543 = vsub.s32 %v4540, %v4542
          %v4544 = vrot.slane %v2692, %v4543
          %v4546 = vunpack.c.l.s4 1414812756
          %v4547 = vunpack.c.0.s8 %v4546
          %v4548 = vlaneseq
          %v4549 = vshrl.u32 %v4548, 7
          %v4550 = vsub.s32 %v4547, %v4549
          %v4551 = vrot.slane %v2692, %v4550
          %v4553 = vunpack.c.l.s4 1987475062
          %v4554 = vunpack.c.0.s8 %v4553
          %v4555 = vlaneseq
          %v4556 = vshrl.u32 %v4555, 7
          %v4557 = vsub.s32 %v4554, %v4556
          %v4558 = vrot.slane %v2692, %v4557
          %v4560 = vunpack.c.l.s4 269488144
          %v4561 = vunpack.c.0.s8 %v4560
          %v4562 = vlaneseq
          %v4563 = vshrl.u32 %v4562, 7
          %v4564 = vsub.s32 %v4561, %v4563
          %v4565 = vrot.slane %v2694, %v4564
          %v4567 = vunpack.c.l.s4 842150450
          %v4568 = vunpack.c.0.s8 %v4567
          %v4569 = vlaneseq
          %v4570 = vshrl.u32 %v4569, 7
          %v4571 = vsub.s32 %v4568, %v4570
          %v4572 = vrot.slane %v2694, %v4571
          %v4574 = vunpack.c.l.s4 1414812756
          %v4575 = vunpack.c.0.s8 %v4574
          %v4576 = vlaneseq
          %v4577 = vshrl.u32 %v4576, 7
          %v4578 = vsub.s32 %v4575, %v4577
          %v4579 = vrot.slane %v2694, %v4578
          %v4581 = vunpack.c.l.s4 1987475062
          %v4582 = vunpack.c.0.s8 %v4581
          %v4583 = vlaneseq
          %v4584 = vshrl.u32 %v4583, 7
          %v4585 = vsub.s32 %v4582, %v4584
          %v4586 = vrot.slane %v2694, %v4585
          %v4588 = vunpack.c.l.s4 269488144
          %v4589 = vunpack.c.0.s8 %v4588
          %v4590 = vlaneseq
          %v4591 = vshrl.u32 %v4590, 7
          %v4592 = vsub.s32 %v4589, %v4591
          %v4593 = vrot.slane %v2696, %v4592
          %v4595 = vunpack.c.l.s4 842150450
          %v4596 = vunpack.c.0.s8 %v4595
          %v4597 = vlaneseq
          %v4598 = vshrl.u32 %v4597, 7
          %v4599 = vsub.s32 %v4596, %v4598
          %v4600 = vrot.slane %v2696, %v4599
          %v4602 = vunpack.c.l.s4 1414812756
          %v4603 = vunpack.c.0.s8 %v4602
          %v4604 = vlaneseq
          %v4605 = vshrl.u32 %v4604, 7
          %v4606 = vsub.s32 %v4603, %v4605
          %v4607 = vrot.slane %v2696, %v4606
          %v4609 = vunpack.c.l.s4 1987475062
          %v4610 = vunpack.c.0.s8 %v4609
          %v4611 = vlaneseq
          %v4612 = vshrl.u32 %v4611, 7
          %v4613 = vsub.s32 %v4610, %v4612
          %v4614 = vrot.slane %v2696, %v4613
          %v4616 = vunpack.c.l.s4 269488144
          %v4617 = vunpack.c.0.s8 %v4616
          %v4618 = vlaneseq
          %v4619 = vshrl.u32 %v4618, 7
          %v4620 = vsub.s32 %v4617, %v4619
          %v4621 = vrot.slane %v2698, %v4620
          %v4623 = vunpack.c.l.s4 842150450
          %v4624 = vunpack.c.0.s8 %v4623
          %v4625 = vlaneseq
          %v4626 = vshrl.u32 %v4625, 7
          %v4627 = vsub.s32 %v4624, %v4626
          %v4628 = vrot.slane %v2698, %v4627
          %v4630 = vunpack.c.l.s4 1414812756
          %v4631 = vunpack.c.0.s8 %v4630
          %v4632 = vlaneseq
          %v4633 = vshrl.u32 %v4632, 7
          %v4634 = vsub.s32 %v4631, %v4633
          %v4635 = vrot.slane %v2698, %v4634
          %v4637 = vunpack.c.l.s4 1987475062
          %v4638 = vunpack.c.0.s8 %v4637
          %v4639 = vlaneseq
          %v4640 = vshrl.u32 %v4639, 7
          %v4641 = vsub.s32 %v4638, %v4640
          %v4642 = vrot.slane %v2698, %v4641
          %v4644 = vunpack.c.l.s4 269488144
          %v4645 = vunpack.c.0.s8 %v4644
          %v4646 = vlaneseq
          %v4647 = vshrl.u32 %v4646, 7
          %v4648 = vsub.s32 %v4645, %v4647
          %v4649 = vrot.slane %v2700, %v4648
          %v4651 = vunpack.c.l.s4 842150450
          %v4652 = vunpack.c.0.s8 %v4651
          %v4653 = vlaneseq
          %v4654 = vshrl.u32 %v4653, 7
          %v4655 = vsub.s32 %v4652, %v4654
          %v4656 = vrot.slane %v2700, %v4655
          %v4658 = vunpack.c.l.s4 1414812756
          %v4659 = vunpack.c.0.s8 %v4658
          %v4660 = vlaneseq
          %v4661 = vshrl.u32 %v4660, 7
          %v4662 = vsub.s32 %v4659, %v4661
          %v4663 = vrot.slane %v2700, %v4662
          %v4665 = vunpack.c.l.s4 1987475062
          %v4666 = vunpack.c.0.s8 %v4665
          %v4667 = vlaneseq
          %v4668 = vshrl.u32 %v4667, 7
          %v4669 = vsub.s32 %v4666, %v4668
          %v4670 = vrot.slane %v2700, %v4669
          %v4672 = vunpack.c.l.s4 269488144
          %v4673 = vunpack.c.0.s8 %v4672
          %v4674 = vlaneseq
          %v4675 = vshrl.u32 %v4674, 7
          %v4676 = vsub.s32 %v4673, %v4675
          %v4677 = vrot.slane %v2702, %v4676
          %v4679 = vunpack.c.l.s4 842150450
          %v4680 = vunpack.c.0.s8 %v4679
          %v4681 = vlaneseq
          %v4682 = vshrl.u32 %v4681, 7
          %v4683 = vsub.s32 %v4680, %v4682
          %v4684 = vrot.slane %v2702, %v4683
          %v4686 = vunpack.c.l.s4 1414812756
          %v4687 = vunpack.c.0.s8 %v4686
          %v4688 = vlaneseq
          %v4689 = vshrl.u32 %v4688, 7
          %v4690 = vsub.s32 %v4687, %v4689
          %v4691 = vrot.slane %v2702, %v4690
          %v4693 = vunpack.c.l.s4 1987475062
          %v4694 = vunpack.c.0.s8 %v4693
          %v4695 = vlaneseq
          %v4696 = vshrl.u32 %v4695, 7
          %v4697 = vsub.s32 %v4694, %v4696
          %v4698 = vrot.slane %v2702, %v4697
          %v4700 = vunpack.c.l.s4 269488144
          %v4701 = vunpack.c.0.s8 %v4700
          %v4702 = vlaneseq
          %v4703 = vshrl.u32 %v4702, 7
          %v4704 = vsub.s32 %v4701, %v4703
          %v4705 = vrot.slane %v2704, %v4704
          %v4707 = vunpack.c.l.s4 842150450
          %v4708 = vunpack.c.0.s8 %v4707
          %v4709 = vlaneseq
          %v4710 = vshrl.u32 %v4709, 7
          %v4711 = vsub.s32 %v4708, %v4710
          %v4712 = vrot.slane %v2704, %v4711
          %v4714 = vunpack.c.l.s4 1414812756
          %v4715 = vunpack.c.0.s8 %v4714
          %v4716 = vlaneseq
          %v4717 = vshrl.u32 %v4716, 7
          %v4718 = vsub.s32 %v4715, %v4717
          %v4719 = vrot.slane %v2704, %v4718
          %v4721 = vunpack.c.l.s4 1987475062
          %v4722 = vunpack.c.0.s8 %v4721
          %v4723 = vlaneseq
          %v4724 = vshrl.u32 %v4723, 7
          %v4725 = vsub.s32 %v4722, %v4724
          %v4726 = vrot.slane %v2704, %v4725
          %v4728 = vunpack.c.l.s4 269488144
          %v4729 = vunpack.c.0.s8 %v4728
          %v4730 = vlaneseq
          %v4731 = vshrl.u32 %v4730, 7
          %v4732 = vsub.s32 %v4729, %v4731
          %v4733 = vrot.slane %v2706, %v4732
          %v4735 = vunpack.c.l.s4 842150450
          %v4736 = vunpack.c.0.s8 %v4735
          %v4737 = vlaneseq
          %v4738 = vshrl.u32 %v4737, 7
          %v4739 = vsub.s32 %v4736, %v4738
          %v4740 = vrot.slane %v2706, %v4739
          %v4742 = vunpack.c.l.s4 1414812756
          %v4743 = vunpack.c.0.s8 %v4742
          %v4744 = vlaneseq
          %v4745 = vshrl.u32 %v4744, 7
          %v4746 = vsub.s32 %v4743, %v4745
          %v4747 = vrot.slane %v2706, %v4746
          %v4749 = vunpack.c.l.s4 1987475062
          %v4750 = vunpack.c.0.s8 %v4749
          %v4751 = vlaneseq
          %v4752 = vshrl.u32 %v4751, 7
          %v4753 = vsub.s32 %v4750, %v4752
          %v4754 = vrot.slane %v2706, %v4753
          %v4756 = vunpack.c.l.s4 269488144
          %v4757 = vunpack.c.0.s8 %v4756
          %v4758 = vlaneseq
          %v4759 = vshrl.u32 %v4758, 7
          %v4760 = vsub.s32 %v4757, %v4759
          %v4761 = vrot.slane %v2708, %v4760
          %v4763 = vunpack.c.l.s4 842150450
          %v4764 = vunpack.c.0.s8 %v4763
          %v4765 = vlaneseq
          %v4766 = vshrl.u32 %v4765, 7
          %v4767 = vsub.s32 %v4764, %v4766
          %v4768 = vrot.slane %v2708, %v4767
          %v4770 = vunpack.c.l.s4 1414812756
          %v4771 = vunpack.c.0.s8 %v4770
          %v4772 = vlaneseq
          %v4773 = vshrl.u32 %v4772, 7
          %v4774 = vsub.s32 %v4771, %v4773
          %v4775 = vrot.slane %v2708, %v4774
          %v4777 = vunpack.c.l.s4 1987475062
          %v4778 = vunpack.c.0.s8 %v4777
          %v4779 = vlaneseq
          %v4780 = vshrl.u32 %v4779, 7
          %v4781 = vsub.s32 %v4778, %v4780
          %v4782 = vrot.slane %v2708, %v4781
          %v4784 = vunpack.c.l.s4 269488144
          %v4785 = vunpack.c.0.s8 %v4784
          %v4786 = vlaneseq
          %v4787 = vshrl.u32 %v4786, 7
          %v4788 = vsub.s32 %v4785, %v4787
          %v4789 = vrot.slane %v2710, %v4788
          %v4791 = vunpack.c.l.s4 842150450
          %v4792 = vunpack.c.0.s8 %v4791
          %v4793 = vlaneseq
          %v4794 = vshrl.u32 %v4793, 7
          %v4795 = vsub.s32 %v4792, %v4794
          %v4796 = vrot.slane %v2710, %v4795
          %v4798 = vunpack.c.l.s4 1414812756
          %v4799 = vunpack.c.0.s8 %v4798
          %v4800 = vlaneseq
          %v4801 = vshrl.u32 %v4800, 7
          %v4802 = vsub.s32 %v4799, %v4801
          %v4803 = vrot.slane %v2710, %v4802
          %v4805 = vunpack.c.l.s4 1987475062
          %v4806 = vunpack.c.0.s8 %v4805
          %v4807 = vlaneseq
          %v4808 = vshrl.u32 %v4807, 7
          %v4809 = vsub.s32 %v4806, %v4808
          %v4810 = vrot.slane %v2710, %v4809
          %v4812 = vunpack.c.l.s4 269488144
          %v4813 = vunpack.c.0.s8 %v4812
          %v4814 = vlaneseq
          %v4815 = vshrl.u32 %v4814, 7
          %v4816 = vsub.s32 %v4813, %v4815
          %v4817 = vrot.slane %v2712, %v4816
          %v4819 = vunpack.c.l.s4 842150450
          %v4820 = vunpack.c.0.s8 %v4819
          %v4821 = vlaneseq
          %v4822 = vshrl.u32 %v4821, 7
          %v4823 = vsub.s32 %v4820, %v4822
          %v4824 = vrot.slane %v2712, %v4823
          %v4826 = vunpack.c.l.s4 1414812756
          %v4827 = vunpack.c.0.s8 %v4826
          %v4828 = vlaneseq
          %v4829 = vshrl.u32 %v4828, 7
          %v4830 = vsub.s32 %v4827, %v4829
          %v4831 = vrot.slane %v2712, %v4830
          %v4833 = vunpack.c.l.s4 1987475062
          %v4834 = vunpack.c.0.s8 %v4833
          %v4835 = vlaneseq
          %v4836 = vshrl.u32 %v4835, 7
          %v4837 = vsub.s32 %v4834, %v4836
          %v4838 = vrot.slane %v2712, %v4837
          %v4840 = vunpack.c.l.s4 269488144
          %v4841 = vunpack.c.0.s8 %v4840
          %v4842 = vlaneseq
          %v4843 = vshrl.u32 %v4842, 7
          %v4844 = vsub.s32 %v4841, %v4843
          %v4845 = vrot.slane %v2714, %v4844
          %v4847 = vunpack.c.l.s4 842150450
          %v4848 = vunpack.c.0.s8 %v4847
          %v4849 = vlaneseq
          %v4850 = vshrl.u32 %v4849, 7
          %v4851 = vsub.s32 %v4848, %v4850
          %v4852 = vrot.slane %v2714, %v4851
          %v4854 = vunpack.c.l.s4 1414812756
          %v4855 = vunpack.c.0.s8 %v4854
          %v4856 = vlaneseq
          %v4857 = vshrl.u32 %v4856, 7
          %v4858 = vsub.s32 %v4855, %v4857
          %v4859 = vrot.slane %v2714, %v4858
          %v4861 = vunpack.c.l.s4 1987475062
          %v4862 = vunpack.c.0.s8 %v4861
          %v4863 = vlaneseq
          %v4864 = vshrl.u32 %v4863, 7
          %v4865 = vsub.s32 %v4862, %v4864
          %v4866 = vrot.slane %v2714, %v4865
          %v4868 = vunpack.c.l.s4 269488144
          %v4869 = vunpack.c.0.s8 %v4868
          %v4870 = vlaneseq
          %v4871 = vshrl.u32 %v4870, 7
          %v4872 = vsub.s32 %v4869, %v4871
          %v4873 = vrot.slane %v2716, %v4872
          %v4875 = vunpack.c.l.s4 842150450
          %v4876 = vunpack.c.0.s8 %v4875
          %v4877 = vlaneseq
          %v4878 = vshrl.u32 %v4877, 7
          %v4879 = vsub.s32 %v4876, %v4878
          %v4880 = vrot.slane %v2716, %v4879
          %v4882 = vunpack.c.l.s4 1414812756
          %v4883 = vunpack.c.0.s8 %v4882
          %v4884 = vlaneseq
          %v4885 = vshrl.u32 %v4884, 7
          %v4886 = vsub.s32 %v4883, %v4885
          %v4887 = vrot.slane %v2716, %v4886
          %v4889 = vunpack.c.l.s4 1987475062
          %v4890 = vunpack.c.0.s8 %v4889
          %v4891 = vlaneseq
          %v4892 = vshrl.u32 %v4891, 7
          %v4893 = vsub.s32 %v4890, %v4892
          %v4894 = vrot.slane %v2716, %v4893
          %v4896 = vunpack.c.l.s4 269488144
          %v4897 = vunpack.c.0.s8 %v4896
          %v4898 = vlaneseq
          %v4899 = vshrl.u32 %v4898, 7
          %v4900 = vsub.s32 %v4897, %v4899
          %v4901 = vrot.slane %v2718, %v4900
          %v4903 = vunpack.c.l.s4 842150450
          %v4904 = vunpack.c.0.s8 %v4903
          %v4905 = vlaneseq
          %v4906 = vshrl.u32 %v4905, 7
          %v4907 = vsub.s32 %v4904, %v4906
          %v4908 = vrot.slane %v2718, %v4907
          %v4910 = vunpack.c.l.s4 1414812756
          %v4911 = vunpack.c.0.s8 %v4910
          %v4912 = vlaneseq
          %v4913 = vshrl.u32 %v4912, 7
          %v4914 = vsub.s32 %v4911, %v4913
          %v4915 = vrot.slane %v2718, %v4914
          %v4917 = vunpack.c.l.s4 1987475062
          %v4918 = vunpack.c.0.s8 %v4917
          %v4919 = vlaneseq
          %v4920 = vshrl.u32 %v4919, 7
          %v4921 = vsub.s32 %v4918, %v4920
          %v4922 = vrot.slane %v2718, %v4921
          %v4924 = vunpack.c.l.s4 269488144
          %v4925 = vunpack.c.0.s8 %v4924
          %v4926 = vlaneseq
          %v4927 = vshrl.u32 %v4926, 7
          %v4928 = vsub.s32 %v4925, %v4927
          %v4929 = vrot.slane %v2720, %v4928
          %v4931 = vunpack.c.l.s4 842150450
          %v4932 = vunpack.c.0.s8 %v4931
          %v4933 = vlaneseq
          %v4934 = vshrl.u32 %v4933, 7
          %v4935 = vsub.s32 %v4932, %v4934
          %v4936 = vrot.slane %v2720, %v4935
          %v4938 = vunpack.c.l.s4 1414812756
          %v4939 = vunpack.c.0.s8 %v4938
          %v4940 = vlaneseq
          %v4941 = vshrl.u32 %v4940, 7
          %v4942 = vsub.s32 %v4939, %v4941
          %v4943 = vrot.slane %v2720, %v4942
          %v4945 = vunpack.c.l.s4 1987475062
          %v4946 = vunpack.c.0.s8 %v4945
          %v4947 = vlaneseq
          %v4948 = vshrl.u32 %v4947, 7
          %v4949 = vsub.s32 %v4946, %v4948
          %v4950 = vrot.slane %v2720, %v4949
          %v4952 = vunpack.c.l.s4 269488144
          %v4953 = vunpack.c.0.s8 %v4952
          %v4954 = vlaneseq
          %v4955 = vshrl.u32 %v4954, 7
          %v4956 = vsub.s32 %v4953, %v4955
          %v4957 = vrot.slane %v2722, %v4956
          %v4959 = vunpack.c.l.s4 842150450
          %v4960 = vunpack.c.0.s8 %v4959
          %v4961 = vlaneseq
          %v4962 = vshrl.u32 %v4961, 7
          %v4963 = vsub.s32 %v4960, %v4962
          %v4964 = vrot.slane %v2722, %v4963
          %v4966 = vunpack.c.l.s4 1414812756
          %v4967 = vunpack.c.0.s8 %v4966
          %v4968 = vlaneseq
          %v4969 = vshrl.u32 %v4968, 7
          %v4970 = vsub.s32 %v4967, %v4969
          %v4971 = vrot.slane %v2722, %v4970
          %v4973 = vunpack.c.l.s4 1987475062
          %v4974 = vunpack.c.0.s8 %v4973
          %v4975 = vlaneseq
          %v4976 = vshrl.u32 %v4975, 7
          %v4977 = vsub.s32 %v4974, %v4976
          %v4978 = vrot.slane %v2722, %v4977
          %v4980 = vunpack.c.l.s4 269488144
          %v4981 = vunpack.c.0.s8 %v4980
          %v4982 = vlaneseq
          %v4983 = vshrl.u32 %v4982, 7
          %v4984 = vsub.s32 %v4981, %v4983
          %v4985 = vrot.slane %v2724, %v4984
          %v4987 = vunpack.c.l.s4 842150450
          %v4988 = vunpack.c.0.s8 %v4987
          %v4989 = vlaneseq
          %v4990 = vshrl.u32 %v4989, 7
          %v4991 = vsub.s32 %v4988, %v4990
          %v4992 = vrot.slane %v2724, %v4991
          %v4994 = vunpack.c.l.s4 1414812756
          %v4995 = vunpack.c.0.s8 %v4994
          %v4996 = vlaneseq
          %v4997 = vshrl.u32 %v4996, 7
          %v4998 = vsub.s32 %v4995, %v4997
          %v4999 = vrot.slane %v2724, %v4998
          %v5001 = vunpack.c.l.s4 1987475062
          %v5002 = vunpack.c.0.s8 %v5001
          %v5003 = vlaneseq
          %v5004 = vshrl.u32 %v5003, 7
          %v5005 = vsub.s32 %v5002, %v5004
          %v5006 = vrot.slane %v2724, %v5005
          %v5008 = vunpack.c.l.s4 269488144
          %v5009 = vunpack.c.0.s8 %v5008
          %v5010 = vlaneseq
          %v5011 = vshrl.u32 %v5010, 7
          %v5012 = vsub.s32 %v5009, %v5011
          %v5013 = vrot.slane %v2726, %v5012
          %v5015 = vunpack.c.l.s4 842150450
          %v5016 = vunpack.c.0.s8 %v5015
          %v5017 = vlaneseq
          %v5018 = vshrl.u32 %v5017, 7
          %v5019 = vsub.s32 %v5016, %v5018
          %v5020 = vrot.slane %v2726, %v5019
          %v5022 = vunpack.c.l.s4 1414812756
          %v5023 = vunpack.c.0.s8 %v5022
          %v5024 = vlaneseq
          %v5025 = vshrl.u32 %v5024, 7
          %v5026 = vsub.s32 %v5023, %v5025
          %v5027 = vrot.slane %v2726, %v5026
          %v5029 = vunpack.c.l.s4 1987475062
          %v5030 = vunpack.c.0.s8 %v5029
          %v5031 = vlaneseq
          %v5032 = vshrl.u32 %v5031, 7
          %v5033 = vsub.s32 %v5030, %v5032
          %v5034 = vrot.slane %v2726, %v5033
          %v5036 = vunpack.c.l.s4 269488144
          %v5037 = vunpack.c.0.s8 %v5036
          %v5038 = vlaneseq
          %v5039 = vshrl.u32 %v5038, 7
          %v5040 = vsub.s32 %v5037, %v5039
          %v5041 = vrot.slane %v2728, %v5040
          %v5043 = vunpack.c.l.s4 842150450
          %v5044 = vunpack.c.0.s8 %v5043
          %v5045 = vlaneseq
          %v5046 = vshrl.u32 %v5045, 7
          %v5047 = vsub.s32 %v5044, %v5046
          %v5048 = vrot.slane %v2728, %v5047
          %v5050 = vunpack.c.l.s4 1414812756
          %v5051 = vunpack.c.0.s8 %v5050
          %v5052 = vlaneseq
          %v5053 = vshrl.u32 %v5052, 7
          %v5054 = vsub.s32 %v5051, %v5053
          %v5055 = vrot.slane %v2728, %v5054
          %v5057 = vunpack.c.l.s4 1987475062
          %v5058 = vunpack.c.0.s8 %v5057
          %v5059 = vlaneseq
          %v5060 = vshrl.u32 %v5059, 7
          %v5061 = vsub.s32 %v5058, %v5060
          %v5062 = vrot.slane %v2728, %v5061
          %v5064 = vunpack.c.l.s4 269488144
          %v5065 = vunpack.c.0.s8 %v5064
          %v5066 = vlaneseq
          %v5067 = vshrl.u32 %v5066, 7
          %v5068 = vsub.s32 %v5065, %v5067
          %v5069 = vrot.slane %v2730, %v5068
          %v5071 = vunpack.c.l.s4 842150450
          %v5072 = vunpack.c.0.s8 %v5071
          %v5073 = vlaneseq
          %v5074 = vshrl.u32 %v5073, 7
          %v5075 = vsub.s32 %v5072, %v5074
          %v5076 = vrot.slane %v2730, %v5075
          %v5078 = vunpack.c.l.s4 1414812756
          %v5079 = vunpack.c.0.s8 %v5078
          %v5080 = vlaneseq
          %v5081 = vshrl.u32 %v5080, 7
          %v5082 = vsub.s32 %v5079, %v5081
          %v5083 = vrot.slane %v2730, %v5082
          %v5085 = vunpack.c.l.s4 1987475062
          %v5086 = vunpack.c.0.s8 %v5085
          %v5087 = vlaneseq
          %v5088 = vshrl.u32 %v5087, 7
          %v5089 = vsub.s32 %v5086, %v5088
          %v5090 = vrot.slane %v2730, %v5089
          %v5092 = vunpack.c.l.s4 269488144
          %v5093 = vunpack.c.0.s8 %v5092
          %v5094 = vlaneseq
          %v5095 = vshrl.u32 %v5094, 7
          %v5096 = vsub.s32 %v5093, %v5095
          %v5097 = vrot.slane %v2732, %v5096
          %v5099 = vunpack.c.l.s4 842150450
          %v5100 = vunpack.c.0.s8 %v5099
          %v5101 = vlaneseq
          %v5102 = vshrl.u32 %v5101, 7
          %v5103 = vsub.s32 %v5100, %v5102
          %v5104 = vrot.slane %v2732, %v5103
          %v5106 = vunpack.c.l.s4 1414812756
          %v5107 = vunpack.c.0.s8 %v5106
          %v5108 = vlaneseq
          %v5109 = vshrl.u32 %v5108, 7
          %v5110 = vsub.s32 %v5107, %v5109
          %v5111 = vrot.slane %v2732, %v5110
          %v5113 = vunpack.c.l.s4 1987475062
          %v5114 = vunpack.c.0.s8 %v5113
          %v5115 = vlaneseq
          %v5116 = vshrl.u32 %v5115, 7
          %v5117 = vsub.s32 %v5114, %v5116
          %v5118 = vrot.slane %v2732, %v5117
          %v5120 = vunpack.c.l.s4 269488144
          %v5121 = vunpack.c.0.s8 %v5120
          %v5122 = vlaneseq
          %v5123 = vshrl.u32 %v5122, 7
          %v5124 = vsub.s32 %v5121, %v5123
          %v5125 = vrot.slane %v2734, %v5124
          %v5127 = vunpack.c.l.s4 842150450
          %v5128 = vunpack.c.0.s8 %v5127
          %v5129 = vlaneseq
          %v5130 = vshrl.u32 %v5129, 7
          %v5131 = vsub.s32 %v5128, %v5130
          %v5132 = vrot.slane %v2734, %v5131
          %v5134 = vunpack.c.l.s4 1414812756
          %v5135 = vunpack.c.0.s8 %v5134
          %v5136 = vlaneseq
          %v5137 = vshrl.u32 %v5136, 7
          %v5138 = vsub.s32 %v5135, %v5137
          %v5139 = vrot.slane %v2734, %v5138
          %v5141 = vunpack.c.l.s4 1987475062
          %v5142 = vunpack.c.0.s8 %v5141
          %v5143 = vlaneseq
          %v5144 = vshrl.u32 %v5143, 7
          %v5145 = vsub.s32 %v5142, %v5144
          %v5146 = vrot.slane %v2734, %v5145
          %v5148 = vunpack.c.l.s4 269488144
          %v5149 = vunpack.c.0.s8 %v5148
          %v5150 = vlaneseq
          %v5151 = vshrl.u32 %v5150, 7
          %v5152 = vsub.s32 %v5149, %v5151
          %v5153 = vrot.slane %v2736, %v5152
          %v5155 = vunpack.c.l.s4 842150450
          %v5156 = vunpack.c.0.s8 %v5155
          %v5157 = vlaneseq
          %v5158 = vshrl.u32 %v5157, 7
          %v5159 = vsub.s32 %v5156, %v5158
          %v5160 = vrot.slane %v2736, %v5159
          %v5162 = vunpack.c.l.s4 1414812756
          %v5163 = vunpack.c.0.s8 %v5162
          %v5164 = vlaneseq
          %v5165 = vshrl.u32 %v5164, 7
          %v5166 = vsub.s32 %v5163, %v5165
          %v5167 = vrot.slane %v2736, %v5166
          %v5169 = vunpack.c.l.s4 1987475062
          %v5170 = vunpack.c.0.s8 %v5169
          %v5171 = vlaneseq
          %v5172 = vshrl.u32 %v5171, 7
          %v5173 = vsub.s32 %v5170, %v5172
          %v5174 = vrot.slane %v2736, %v5173
          %v5176 = vunpack.c.l.s4 269488144
          %v5177 = vunpack.c.0.s8 %v5176
          %v5178 = vlaneseq
          %v5179 = vshrl.u32 %v5178, 7
          %v5180 = vsub.s32 %v5177, %v5179
          %v5181 = vrot.slane %v2738, %v5180
          %v5183 = vunpack.c.l.s4 842150450
          %v5184 = vunpack.c.0.s8 %v5183
          %v5185 = vlaneseq
          %v5186 = vshrl.u32 %v5185, 7
          %v5187 = vsub.s32 %v5184, %v5186
          %v5188 = vrot.slane %v2738, %v5187
          %v5190 = vunpack.c.l.s4 1414812756
          %v5191 = vunpack.c.0.s8 %v5190
          %v5192 = vlaneseq
          %v5193 = vshrl.u32 %v5192, 7
          %v5194 = vsub.s32 %v5191, %v5193
          %v5195 = vrot.slane %v2738, %v5194
          %v5197 = vunpack.c.l.s4 1987475062
          %v5198 = vunpack.c.0.s8 %v5197
          %v5199 = vlaneseq
          %v5200 = vshrl.u32 %v5199, 7
          %v5201 = vsub.s32 %v5198, %v5200
          %v5202 = vrot.slane %v2738, %v5201
          %v5204 = vunpack.c.l.s4 269488144
          %v5205 = vunpack.c.0.s8 %v5204
          %v5206 = vlaneseq
          %v5207 = vshrl.u32 %v5206, 7
          %v5208 = vsub.s32 %v5205, %v5207
          %v5209 = vrot.slane %v2740, %v5208
          %v5211 = vunpack.c.l.s4 842150450
          %v5212 = vunpack.c.0.s8 %v5211
          %v5213 = vlaneseq
          %v5214 = vshrl.u32 %v5213, 7
          %v5215 = vsub.s32 %v5212, %v5214
          %v5216 = vrot.slane %v2740, %v5215
          %v5218 = vunpack.c.l.s4 1414812756
          %v5219 = vunpack.c.0.s8 %v5218
          %v5220 = vlaneseq
          %v5221 = vshrl.u32 %v5220, 7
          %v5222 = vsub.s32 %v5219, %v5221
          %v5223 = vrot.slane %v2740, %v5222
          %v5225 = vunpack.c.l.s4 1987475062
          %v5226 = vunpack.c.0.s8 %v5225
          %v5227 = vlaneseq
          %v5228 = vshrl.u32 %v5227, 7
          %v5229 = vsub.s32 %v5226, %v5228
          %v5230 = vrot.slane %v2740, %v5229
          %v5232 = vunpack.c.l.s4 269488144
          %v5233 = vunpack.c.0.s8 %v5232
          %v5234 = vlaneseq
          %v5235 = vshrl.u32 %v5234, 7
          %v5236 = vsub.s32 %v5233, %v5235
          %v5237 = vrot.slane %v2742, %v5236
          %v5239 = vunpack.c.l.s4 842150450
          %v5240 = vunpack.c.0.s8 %v5239
          %v5241 = vlaneseq
          %v5242 = vshrl.u32 %v5241, 7
          %v5243 = vsub.s32 %v5240, %v5242
          %v5244 = vrot.slane %v2742, %v5243
          %v5246 = vunpack.c.l.s4 1414812756
          %v5247 = vunpack.c.0.s8 %v5246
          %v5248 = vlaneseq
          %v5249 = vshrl.u32 %v5248, 7
          %v5250 = vsub.s32 %v5247, %v5249
          %v5251 = vrot.slane %v2742, %v5250
          %v5253 = vunpack.c.l.s4 1987475062
          %v5254 = vunpack.c.0.s8 %v5253
          %v5255 = vlaneseq
          %v5256 = vshrl.u32 %v5255, 7
          %v5257 = vsub.s32 %v5254, %v5256
          %v5258 = vrot.slane %v2742, %v5257
          %v5260 = vunpack.c.l.s4 269488144
          %v5261 = vunpack.c.0.s8 %v5260
          %v5262 = vlaneseq
          %v5263 = vshrl.u32 %v5262, 7
          %v5264 = vsub.s32 %v5261, %v5263
          %v5265 = vrot.slane %v2744, %v5264
          %v5267 = vunpack.c.l.s4 842150450
          %v5268 = vunpack.c.0.s8 %v5267
          %v5269 = vlaneseq
          %v5270 = vshrl.u32 %v5269, 7
          %v5271 = vsub.s32 %v5268, %v5270
          %v5272 = vrot.slane %v2744, %v5271
          %v5274 = vunpack.c.l.s4 1414812756
          %v5275 = vunpack.c.0.s8 %v5274
          %v5276 = vlaneseq
          %v5277 = vshrl.u32 %v5276, 7
          %v5278 = vsub.s32 %v5275, %v5277
          %v5279 = vrot.slane %v2744, %v5278
          %v5281 = vunpack.c.l.s4 1987475062
          %v5282 = vunpack.c.0.s8 %v5281
          %v5283 = vlaneseq
          %v5284 = vshrl.u32 %v5283, 7
          %v5285 = vsub.s32 %v5282, %v5284
          %v5286 = vrot.slane %v2744, %v5285
          %v5288 = vunpack.c.l.s4 269488144
          %v5289 = vunpack.c.0.s8 %v5288
          %v5290 = vlaneseq
          %v5291 = vshrl.u32 %v5290, 7
          %v5292 = vsub.s32 %v5289, %v5291
          %v5293 = vrot.slane %v2746, %v5292
          %v5295 = vunpack.c.l.s4 842150450
          %v5296 = vunpack.c.0.s8 %v5295
          %v5297 = vlaneseq
          %v5298 = vshrl.u32 %v5297, 7
          %v5299 = vsub.s32 %v5296, %v5298
          %v5300 = vrot.slane %v2746, %v5299
          %v5302 = vunpack.c.l.s4 1414812756
          %v5303 = vunpack.c.0.s8 %v5302
          %v5304 = vlaneseq
          %v5305 = vshrl.u32 %v5304, 7
          %v5306 = vsub.s32 %v5303, %v5305
          %v5307 = vrot.slane %v2746, %v5306
          %v5309 = vunpack.c.l.s4 1987475062
          %v5310 = vunpack.c.0.s8 %v5309
          %v5311 = vlaneseq
          %v5312 = vshrl.u32 %v5311, 7
          %v5313 = vsub.s32 %v5310, %v5312
          %v5314 = vrot.slane %v2746, %v5313
          %v5316 = vunpack.c.l.s4 269488144
          %v5317 = vunpack.c.0.s8 %v5316
          %v5318 = vlaneseq
          %v5319 = vshrl.u32 %v5318, 7
          %v5320 = vsub.s32 %v5317, %v5319
          %v5321 = vrot.slane %v2748, %v5320
          %v5323 = vunpack.c.l.s4 842150450
          %v5324 = vunpack.c.0.s8 %v5323
          %v5325 = vlaneseq
          %v5326 = vshrl.u32 %v5325, 7
          %v5327 = vsub.s32 %v5324, %v5326
          %v5328 = vrot.slane %v2748, %v5327
          %v5330 = vunpack.c.l.s4 1414812756
          %v5331 = vunpack.c.0.s8 %v5330
          %v5332 = vlaneseq
          %v5333 = vshrl.u32 %v5332, 7
          %v5334 = vsub.s32 %v5331, %v5333
          %v5335 = vrot.slane %v2748, %v5334
          %v5337 = vunpack.c.l.s4 1987475062
          %v5338 = vunpack.c.0.s8 %v5337
          %v5339 = vlaneseq
          %v5340 = vshrl.u32 %v5339, 7
          %v5341 = vsub.s32 %v5338, %v5340
          %v5342 = vrot.slane %v2748, %v5341
          %v5344 = vunpack.c.l.s4 269488144
          %v5345 = vunpack.c.0.s8 %v5344
          %v5346 = vlaneseq
          %v5347 = vshrl.u32 %v5346, 7
          %v5348 = vsub.s32 %v5345, %v5347
          %v5349 = vrot.slane %v2750, %v5348
          %v5351 = vunpack.c.l.s4 842150450
          %v5352 = vunpack.c.0.s8 %v5351
          %v5353 = vlaneseq
          %v5354 = vshrl.u32 %v5353, 7
          %v5355 = vsub.s32 %v5352, %v5354
          %v5356 = vrot.slane %v2750, %v5355
          %v5358 = vunpack.c.l.s4 1414812756
          %v5359 = vunpack.c.0.s8 %v5358
          %v5360 = vlaneseq
          %v5361 = vshrl.u32 %v5360, 7
          %v5362 = vsub.s32 %v5359, %v5361
          %v5363 = vrot.slane %v2750, %v5362
          %v5365 = vunpack.c.l.s4 1987475062
          %v5366 = vunpack.c.0.s8 %v5365
          %v5367 = vlaneseq
          %v5368 = vshrl.u32 %v5367, 7
          %v5369 = vsub.s32 %v5366, %v5368
          %v5370 = vrot.slane %v2750, %v5369
          %v5372 = vunpack.c.l.s4 269488144
          %v5373 = vunpack.c.0.s8 %v5372
          %v5374 = vlaneseq
          %v5375 = vshrl.u32 %v5374, 7
          %v5376 = vsub.s32 %v5373, %v5375
          %v5377 = vrot.slane %v2752, %v5376
          %v5379 = vunpack.c.l.s4 842150450
          %v5380 = vunpack.c.0.s8 %v5379
          %v5381 = vlaneseq
          %v5382 = vshrl.u32 %v5381, 7
          %v5383 = vsub.s32 %v5380, %v5382
          %v5384 = vrot.slane %v2752, %v5383
          %v5386 = vunpack.c.l.s4 1414812756
          %v5387 = vunpack.c.0.s8 %v5386
          %v5388 = vlaneseq
          %v5389 = vshrl.u32 %v5388, 7
          %v5390 = vsub.s32 %v5387, %v5389
          %v5391 = vrot.slane %v2752, %v5390
          %v5393 = vunpack.c.l.s4 1987475062
          %v5394 = vunpack.c.0.s8 %v5393
          %v5395 = vlaneseq
          %v5396 = vshrl.u32 %v5395, 7
          %v5397 = vsub.s32 %v5394, %v5396
          %v5398 = vrot.slane %v2752, %v5397
          %v5400 = vunpack.c.l.s4 269488144
          %v5401 = vunpack.c.0.s8 %v5400
          %v5402 = vlaneseq
          %v5403 = vshrl.u32 %v5402, 7
          %v5404 = vsub.s32 %v5401, %v5403
          %v5405 = vrot.slane %v2754, %v5404
          %v5407 = vunpack.c.l.s4 842150450
          %v5408 = vunpack.c.0.s8 %v5407
          %v5409 = vlaneseq
          %v5410 = vshrl.u32 %v5409, 7
          %v5411 = vsub.s32 %v5408, %v5410
          %v5412 = vrot.slane %v2754, %v5411
          %v5414 = vunpack.c.l.s4 1414812756
          %v5415 = vunpack.c.0.s8 %v5414
          %v5416 = vlaneseq
          %v5417 = vshrl.u32 %v5416, 7
          %v5418 = vsub.s32 %v5415, %v5417
          %v5419 = vrot.slane %v2754, %v5418
          %v5421 = vunpack.c.l.s4 1987475062
          %v5422 = vunpack.c.0.s8 %v5421
          %v5423 = vlaneseq
          %v5424 = vshrl.u32 %v5423, 7
          %v5425 = vsub.s32 %v5422, %v5424
          %v5426 = vrot.slane %v2754, %v5425
          %v5428 = vunpack.c.l.s4 269488144
          %v5429 = vunpack.c.0.s8 %v5428
          %v5430 = vlaneseq
          %v5431 = vshrl.u32 %v5430, 7
          %v5432 = vsub.s32 %v5429, %v5431
          %v5433 = vrot.slane %v2756, %v5432
          %v5435 = vunpack.c.l.s4 842150450
          %v5436 = vunpack.c.0.s8 %v5435
          %v5437 = vlaneseq
          %v5438 = vshrl.u32 %v5437, 7
          %v5439 = vsub.s32 %v5436, %v5438
          %v5440 = vrot.slane %v2756, %v5439
          %v5442 = vunpack.c.l.s4 1414812756
          %v5443 = vunpack.c.0.s8 %v5442
          %v5444 = vlaneseq
          %v5445 = vshrl.u32 %v5444, 7
          %v5446 = vsub.s32 %v5443, %v5445
          %v5447 = vrot.slane %v2756, %v5446
          %v5449 = vunpack.c.l.s4 1987475062
          %v5450 = vunpack.c.0.s8 %v5449
          %v5451 = vlaneseq
          %v5452 = vshrl.u32 %v5451, 7
          %v5453 = vsub.s32 %v5450, %v5452
          %v5454 = vrot.slane %v2756, %v5453
          %v5456 = vunpack.c.l.s4 269488144
          %v5457 = vunpack.c.0.s8 %v5456
          %v5458 = vlaneseq
          %v5459 = vshrl.u32 %v5458, 7
          %v5460 = vsub.s32 %v5457, %v5459
          %v5461 = vrot.slane %v2758, %v5460
          %v5463 = vunpack.c.l.s4 842150450
          %v5464 = vunpack.c.0.s8 %v5463
          %v5465 = vlaneseq
          %v5466 = vshrl.u32 %v5465, 7
          %v5467 = vsub.s32 %v5464, %v5466
          %v5468 = vrot.slane %v2758, %v5467
          %v5470 = vunpack.c.l.s4 1414812756
          %v5471 = vunpack.c.0.s8 %v5470
          %v5472 = vlaneseq
          %v5473 = vshrl.u32 %v5472, 7
          %v5474 = vsub.s32 %v5471, %v5473
          %v5475 = vrot.slane %v2758, %v5474
          %v5477 = vunpack.c.l.s4 1987475062
          %v5478 = vunpack.c.0.s8 %v5477
          %v5479 = vlaneseq
          %v5480 = vshrl.u32 %v5479, 7
          %v5481 = vsub.s32 %v5478, %v5480
          %v5482 = vrot.slane %v2758, %v5481
          %v5484 = vunpack.c.l.s4 269488144
          %v5485 = vunpack.c.0.s8 %v5484
          %v5486 = vlaneseq
          %v5487 = vshrl.u32 %v5486, 7
          %v5488 = vsub.s32 %v5485, %v5487
          %v5489 = vrot.slane %v2760, %v5488
          %v5491 = vunpack.c.l.s4 842150450
          %v5492 = vunpack.c.0.s8 %v5491
          %v5493 = vlaneseq
          %v5494 = vshrl.u32 %v5493, 7
          %v5495 = vsub.s32 %v5492, %v5494
          %v5496 = vrot.slane %v2760, %v5495
          %v5498 = vunpack.c.l.s4 1414812756
          %v5499 = vunpack.c.0.s8 %v5498
          %v5500 = vlaneseq
          %v5501 = vshrl.u32 %v5500, 7
          %v5502 = vsub.s32 %v5499, %v5501
          %v5503 = vrot.slane %v2760, %v5502
          %v5505 = vunpack.c.l.s4 1987475062
          %v5506 = vunpack.c.0.s8 %v5505
          %v5507 = vlaneseq
          %v5508 = vshrl.u32 %v5507, 7
          %v5509 = vsub.s32 %v5506, %v5508
          %v5510 = vrot.slane %v2760, %v5509
          %v5512 = vunpack.c.l.s4 269488144
          %v5513 = vunpack.c.0.s8 %v5512
          %v5514 = vlaneseq
          %v5515 = vshrl.u32 %v5514, 7
          %v5516 = vsub.s32 %v5513, %v5515
          %v5517 = vrot.slane %v2762, %v5516
          %v5519 = vunpack.c.l.s4 842150450
          %v5520 = vunpack.c.0.s8 %v5519
          %v5521 = vlaneseq
          %v5522 = vshrl.u32 %v5521, 7
          %v5523 = vsub.s32 %v5520, %v5522
          %v5524 = vrot.slane %v2762, %v5523
          %v5526 = vunpack.c.l.s4 1414812756
          %v5527 = vunpack.c.0.s8 %v5526
          %v5528 = vlaneseq
          %v5529 = vshrl.u32 %v5528, 7
          %v5530 = vsub.s32 %v5527, %v5529
          %v5531 = vrot.slane %v2762, %v5530
          %v5533 = vunpack.c.l.s4 1987475062
          %v5534 = vunpack.c.0.s8 %v5533
          %v5535 = vlaneseq
          %v5536 = vshrl.u32 %v5535, 7
          %v5537 = vsub.s32 %v5534, %v5536
          %v5538 = vrot.slane %v2762, %v5537
          %v5540 = vunpack.c.l.s4 269488144
          %v5541 = vunpack.c.0.s8 %v5540
          %v5542 = vlaneseq
          %v5543 = vshrl.u32 %v5542, 7
          %v5544 = vsub.s32 %v5541, %v5543
          %v5545 = vrot.slane %v2764, %v5544
          %v5547 = vunpack.c.l.s4 842150450
          %v5548 = vunpack.c.0.s8 %v5547
          %v5549 = vlaneseq
          %v5550 = vshrl.u32 %v5549, 7
          %v5551 = vsub.s32 %v5548, %v5550
          %v5552 = vrot.slane %v2764, %v5551
          %v5554 = vunpack.c.l.s4 1414812756
          %v5555 = vunpack.c.0.s8 %v5554
          %v5556 = vlaneseq
          %v5557 = vshrl.u32 %v5556, 7
          %v5558 = vsub.s32 %v5555, %v5557
          %v5559 = vrot.slane %v2764, %v5558
          %v5561 = vunpack.c.l.s4 1987475062
          %v5562 = vunpack.c.0.s8 %v5561
          %v5563 = vlaneseq
          %v5564 = vshrl.u32 %v5563, 7
          %v5565 = vsub.s32 %v5562, %v5564
          %v5566 = vrot.slane %v2764, %v5565
          %v5568 = vunpack.c.l.s4 269488144
          %v5569 = vunpack.c.0.s8 %v5568
          %v5570 = vlaneseq
          %v5571 = vshrl.u32 %v5570, 7
          %v5572 = vsub.s32 %v5569, %v5571
          %v5573 = vrot.slane %v2766, %v5572
          %v5575 = vunpack.c.l.s4 842150450
          %v5576 = vunpack.c.0.s8 %v5575
          %v5577 = vlaneseq
          %v5578 = vshrl.u32 %v5577, 7
          %v5579 = vsub.s32 %v5576, %v5578
          %v5580 = vrot.slane %v2766, %v5579
          %v5582 = vunpack.c.l.s4 1414812756
          %v5583 = vunpack.c.0.s8 %v5582
          %v5584 = vlaneseq
          %v5585 = vshrl.u32 %v5584, 7
          %v5586 = vsub.s32 %v5583, %v5585
          %v5587 = vrot.slane %v2766, %v5586
          %v5589 = vunpack.c.l.s4 1987475062
          %v5590 = vunpack.c.0.s8 %v5589
          %v5591 = vlaneseq
          %v5592 = vshrl.u32 %v5591, 7
          %v5593 = vsub.s32 %v5590, %v5592
          %v5594 = vrot.slane %v2766, %v5593
          %v5596 = vunpack.c.l.s4 269488144
          %v5597 = vunpack.c.0.s8 %v5596
          %v5598 = vlaneseq
          %v5599 = vshrl.u32 %v5598, 7
          %v5600 = vsub.s32 %v5597, %v5599
          %v5601 = vrot.slane %v2768, %v5600
          %v5603 = vunpack.c.l.s4 842150450
          %v5604 = vunpack.c.0.s8 %v5603
          %v5605 = vlaneseq
          %v5606 = vshrl.u32 %v5605, 7
          %v5607 = vsub.s32 %v5604, %v5606
          %v5608 = vrot.slane %v2768, %v5607
          %v5610 = vunpack.c.l.s4 1414812756
          %v5611 = vunpack.c.0.s8 %v5610
          %v5612 = vlaneseq
          %v5613 = vshrl.u32 %v5612, 7
          %v5614 = vsub.s32 %v5611, %v5613
          %v5615 = vrot.slane %v2768, %v5614
          %v5617 = vunpack.c.l.s4 1987475062
          %v5618 = vunpack.c.0.s8 %v5617
          %v5619 = vlaneseq
          %v5620 = vshrl.u32 %v5619, 7
          %v5621 = vsub.s32 %v5618, %v5620
          %v5622 = vrot.slane %v2768, %v5621
          %v5624 = vunpack.c.l.s4 269488144
          %v5625 = vunpack.c.0.s8 %v5624
          %v5626 = vlaneseq
          %v5627 = vshrl.u32 %v5626, 7
          %v5628 = vsub.s32 %v5625, %v5627
          %v5629 = vrot.slane %v2770, %v5628
          %v5631 = vunpack.c.l.s4 842150450
          %v5632 = vunpack.c.0.s8 %v5631
          %v5633 = vlaneseq
          %v5634 = vshrl.u32 %v5633, 7
          %v5635 = vsub.s32 %v5632, %v5634
          %v5636 = vrot.slane %v2770, %v5635
          %v5638 = vunpack.c.l.s4 1414812756
          %v5639 = vunpack.c.0.s8 %v5638
          %v5640 = vlaneseq
          %v5641 = vshrl.u32 %v5640, 7
          %v5642 = vsub.s32 %v5639, %v5641
          %v5643 = vrot.slane %v2770, %v5642
          %v5645 = vunpack.c.l.s4 1987475062
          %v5646 = vunpack.c.0.s8 %v5645
          %v5647 = vlaneseq
          %v5648 = vshrl.u32 %v5647, 7
          %v5649 = vsub.s32 %v5646, %v5648
          %v5650 = vrot.slane %v2770, %v5649
          %v5652 = vunpack.c.l.s4 269488144
          %v5653 = vunpack.c.0.s8 %v5652
          %v5654 = vlaneseq
          %v5655 = vshrl.u32 %v5654, 7
          %v5656 = vsub.s32 %v5653, %v5655
          %v5657 = vrot.slane %v2772, %v5656
          %v5659 = vunpack.c.l.s4 842150450
          %v5660 = vunpack.c.0.s8 %v5659
          %v5661 = vlaneseq
          %v5662 = vshrl.u32 %v5661, 7
          %v5663 = vsub.s32 %v5660, %v5662
          %v5664 = vrot.slane %v2772, %v5663
          %v5666 = vunpack.c.l.s4 1414812756
          %v5667 = vunpack.c.0.s8 %v5666
          %v5668 = vlaneseq
          %v5669 = vshrl.u32 %v5668, 7
          %v5670 = vsub.s32 %v5667, %v5669
          %v5671 = vrot.slane %v2772, %v5670
          %v5673 = vunpack.c.l.s4 1987475062
          %v5674 = vunpack.c.0.s8 %v5673
          %v5675 = vlaneseq
          %v5676 = vshrl.u32 %v5675, 7
          %v5677 = vsub.s32 %v5674, %v5676
          %v5678 = vrot.slane %v2772, %v5677
          %v5680 = vunpack.c.l.s4 269488144
          %v5681 = vunpack.c.0.s8 %v5680
          %v5682 = vlaneseq
          %v5683 = vshrl.u32 %v5682, 7
          %v5684 = vsub.s32 %v5681, %v5683
          %v5685 = vrot.slane %v2774, %v5684
          %v5687 = vunpack.c.l.s4 842150450
          %v5688 = vunpack.c.0.s8 %v5687
          %v5689 = vlaneseq
          %v5690 = vshrl.u32 %v5689, 7
          %v5691 = vsub.s32 %v5688, %v5690
          %v5692 = vrot.slane %v2774, %v5691
          %v5694 = vunpack.c.l.s4 1414812756
          %v5695 = vunpack.c.0.s8 %v5694
          %v5696 = vlaneseq
          %v5697 = vshrl.u32 %v5696, 7
          %v5698 = vsub.s32 %v5695, %v5697
          %v5699 = vrot.slane %v2774, %v5698
          %v5701 = vunpack.c.l.s4 1987475062
          %v5702 = vunpack.c.0.s8 %v5701
          %v5703 = vlaneseq
          %v5704 = vshrl.u32 %v5703, 7
          %v5705 = vsub.s32 %v5702, %v5704
          %v5706 = vrot.slane %v2774, %v5705
          %v5708 = vunpack.c.l.s4 269488144
          %v5709 = vunpack.c.0.s8 %v5708
          %v5710 = vlaneseq
          %v5711 = vshrl.u32 %v5710, 7
          %v5712 = vsub.s32 %v5709, %v5711
          %v5713 = vrot.slane %v2776, %v5712
          %v5715 = vunpack.c.l.s4 842150450
          %v5716 = vunpack.c.0.s8 %v5715
          %v5717 = vlaneseq
          %v5718 = vshrl.u32 %v5717, 7
          %v5719 = vsub.s32 %v5716, %v5718
          %v5720 = vrot.slane %v2776, %v5719
          %v5722 = vunpack.c.l.s4 1414812756
          %v5723 = vunpack.c.0.s8 %v5722
          %v5724 = vlaneseq
          %v5725 = vshrl.u32 %v5724, 7
          %v5726 = vsub.s32 %v5723, %v5725
          %v5727 = vrot.slane %v2776, %v5726
          %v5729 = vunpack.c.l.s4 1987475062
          %v5730 = vunpack.c.0.s8 %v5729
          %v5731 = vlaneseq
          %v5732 = vshrl.u32 %v5731, 7
          %v5733 = vsub.s32 %v5730, %v5732
          %v5734 = vrot.slane %v2776, %v5733
          %v5736 = vunpack.c.l.s4 269488144
          %v5737 = vunpack.c.0.s8 %v5736
          %v5738 = vlaneseq
          %v5739 = vshrl.u32 %v5738, 7
          %v5740 = vsub.s32 %v5737, %v5739
          %v5741 = vrot.slane %v2778, %v5740
          %v5743 = vunpack.c.l.s4 842150450
          %v5744 = vunpack.c.0.s8 %v5743
          %v5745 = vlaneseq
          %v5746 = vshrl.u32 %v5745, 7
          %v5747 = vsub.s32 %v5744, %v5746
          %v5748 = vrot.slane %v2778, %v5747
          %v5750 = vunpack.c.l.s4 1414812756
          %v5751 = vunpack.c.0.s8 %v5750
          %v5752 = vlaneseq
          %v5753 = vshrl.u32 %v5752, 7
          %v5754 = vsub.s32 %v5751, %v5753
          %v5755 = vrot.slane %v2778, %v5754
          %v5757 = vunpack.c.l.s4 1987475062
          %v5758 = vunpack.c.0.s8 %v5757
          %v5759 = vlaneseq
          %v5760 = vshrl.u32 %v5759, 7
          %v5761 = vsub.s32 %v5758, %v5760
          %v5762 = vrot.slane %v2778, %v5761
          %v5764 = vunpack.c.l.s4 269488144
          %v5765 = vunpack.c.0.s8 %v5764
          %v5766 = vlaneseq
          %v5767 = vshrl.u32 %v5766, 7
          %v5768 = vsub.s32 %v5765, %v5767
          %v5769 = vrot.slane %v2780, %v5768
          %v5771 = vunpack.c.l.s4 842150450
          %v5772 = vunpack.c.0.s8 %v5771
          %v5773 = vlaneseq
          %v5774 = vshrl.u32 %v5773, 7
          %v5775 = vsub.s32 %v5772, %v5774
          %v5776 = vrot.slane %v2780, %v5775
          %v5778 = vunpack.c.l.s4 1414812756
          %v5779 = vunpack.c.0.s8 %v5778
          %v5780 = vlaneseq
          %v5781 = vshrl.u32 %v5780, 7
          %v5782 = vsub.s32 %v5779, %v5781
          %v5783 = vrot.slane %v2780, %v5782
          %v5785 = vunpack.c.l.s4 1987475062
          %v5786 = vunpack.c.0.s8 %v5785
          %v5787 = vlaneseq
          %v5788 = vshrl.u32 %v5787, 7
          %v5789 = vsub.s32 %v5786, %v5788
          %v5790 = vrot.slane %v2780, %v5789
          %v5792 = vunpack.c.l.s4 269488144
          %v5793 = vunpack.c.0.s8 %v5792
          %v5794 = vlaneseq
          %v5795 = vshrl.u32 %v5794, 7
          %v5796 = vsub.s32 %v5793, %v5795
          %v5797 = vrot.slane %v2782, %v5796
          %v5799 = vunpack.c.l.s4 842150450
          %v5800 = vunpack.c.0.s8 %v5799
          %v5801 = vlaneseq
          %v5802 = vshrl.u32 %v5801, 7
          %v5803 = vsub.s32 %v5800, %v5802
          %v5804 = vrot.slane %v2782, %v5803
          %v5806 = vunpack.c.l.s4 1414812756
          %v5807 = vunpack.c.0.s8 %v5806
          %v5808 = vlaneseq
          %v5809 = vshrl.u32 %v5808, 7
          %v5810 = vsub.s32 %v5807, %v5809
          %v5811 = vrot.slane %v2782, %v5810
          %v5813 = vunpack.c.l.s4 1987475062
          %v5814 = vunpack.c.0.s8 %v5813
          %v5815 = vlaneseq
          %v5816 = vshrl.u32 %v5815, 7
          %v5817 = vsub.s32 %v5814, %v5816
          %v5818 = vrot.slane %v2782, %v5817
          %v5820 = vunpack.c.l.s4 269488144
          %v5821 = vunpack.c.0.s8 %v5820
          %v5822 = vlaneseq
          %v5823 = vshrl.u32 %v5822, 7
          %v5824 = vsub.s32 %v5821, %v5823
          %v5825 = vrot.slane %v2784, %v5824
          %v5827 = vunpack.c.l.s4 842150450
          %v5828 = vunpack.c.0.s8 %v5827
          %v5829 = vlaneseq
          %v5830 = vshrl.u32 %v5829, 7
          %v5831 = vsub.s32 %v5828, %v5830
          %v5832 = vrot.slane %v2784, %v5831
          %v5834 = vunpack.c.l.s4 1414812756
          %v5835 = vunpack.c.0.s8 %v5834
          %v5836 = vlaneseq
          %v5837 = vshrl.u32 %v5836, 7
          %v5838 = vsub.s32 %v5835, %v5837
          %v5839 = vrot.slane %v2784, %v5838
          %v5841 = vunpack.c.l.s4 1987475062
          %v5842 = vunpack.c.0.s8 %v5841
          %v5843 = vlaneseq
          %v5844 = vshrl.u32 %v5843, 7
          %v5845 = vsub.s32 %v5842, %v5844
          %v5846 = vrot.slane %v2784, %v5845
          %v5848 = vunpack.c.l.s4 269488144
          %v5849 = vunpack.c.0.s8 %v5848
          %v5850 = vlaneseq
          %v5851 = vshrl.u32 %v5850, 7
          %v5852 = vsub.s32 %v5849, %v5851
          %v5853 = vrot.slane %v2786, %v5852
          %v5855 = vunpack.c.l.s4 842150450
          %v5856 = vunpack.c.0.s8 %v5855
          %v5857 = vlaneseq
          %v5858 = vshrl.u32 %v5857, 7
          %v5859 = vsub.s32 %v5856, %v5858
          %v5860 = vrot.slane %v2786, %v5859
          %v5862 = vunpack.c.l.s4 1414812756
          %v5863 = vunpack.c.0.s8 %v5862
          %v5864 = vlaneseq
          %v5865 = vshrl.u32 %v5864, 7
          %v5866 = vsub.s32 %v5863, %v5865
          %v5867 = vrot.slane %v2786, %v5866
          %v5869 = vunpack.c.l.s4 1987475062
          %v5870 = vunpack.c.0.s8 %v5869
          %v5871 = vlaneseq
          %v5872 = vshrl.u32 %v5871, 7
          %v5873 = vsub.s32 %v5870, %v5872
          %v5874 = vrot.slane %v2786, %v5873
          %v5876 = vunpack.c.l.s4 269488144
          %v5877 = vunpack.c.0.s8 %v5876
          %v5878 = vlaneseq
          %v5879 = vshrl.u32 %v5878, 7
          %v5880 = vsub.s32 %v5877, %v5879
          %v5881 = vrot.slane %v2788, %v5880
          %v5883 = vunpack.c.l.s4 842150450
          %v5884 = vunpack.c.0.s8 %v5883
          %v5885 = vlaneseq
          %v5886 = vshrl.u32 %v5885, 7
          %v5887 = vsub.s32 %v5884, %v5886
          %v5888 = vrot.slane %v2788, %v5887
          %v5890 = vunpack.c.l.s4 1414812756
          %v5891 = vunpack.c.0.s8 %v5890
          %v5892 = vlaneseq
          %v5893 = vshrl.u32 %v5892, 7
          %v5894 = vsub.s32 %v5891, %v5893
          %v5895 = vrot.slane %v2788, %v5894
          %v5897 = vunpack.c.l.s4 1987475062
          %v5898 = vunpack.c.0.s8 %v5897
          %v5899 = vlaneseq
          %v5900 = vshrl.u32 %v5899, 7
          %v5901 = vsub.s32 %v5898, %v5900
          %v5902 = vrot.slane %v2788, %v5901
          %v5904 = vunpack.c.l.s4 269488144
          %v5905 = vunpack.c.0.s8 %v5904
          %v5906 = vlaneseq
          %v5907 = vshrl.u32 %v5906, 7
          %v5908 = vsub.s32 %v5905, %v5907
          %v5909 = vrot.slane %v2790, %v5908
          %v5911 = vunpack.c.l.s4 842150450
          %v5912 = vunpack.c.0.s8 %v5911
          %v5913 = vlaneseq
          %v5914 = vshrl.u32 %v5913, 7
          %v5915 = vsub.s32 %v5912, %v5914
          %v5916 = vrot.slane %v2790, %v5915
          %v5918 = vunpack.c.l.s4 1414812756
          %v5919 = vunpack.c.0.s8 %v5918
          %v5920 = vlaneseq
          %v5921 = vshrl.u32 %v5920, 7
          %v5922 = vsub.s32 %v5919, %v5921
          %v5923 = vrot.slane %v2790, %v5922
          %v5925 = vunpack.c.l.s4 1987475062
          %v5926 = vunpack.c.0.s8 %v5925
          %v5927 = vlaneseq
          %v5928 = vshrl.u32 %v5927, 7
          %v5929 = vsub.s32 %v5926, %v5928
          %v5930 = vrot.slane %v2790, %v5929
          %v5932 = vunpack.c.l.s4 269488144
          %v5933 = vunpack.c.0.s8 %v5932
          %v5934 = vlaneseq
          %v5935 = vshrl.u32 %v5934, 7
          %v5936 = vsub.s32 %v5933, %v5935
          %v5937 = vrot.slane %v2792, %v5936
          %v5939 = vunpack.c.l.s4 842150450
          %v5940 = vunpack.c.0.s8 %v5939
          %v5941 = vlaneseq
          %v5942 = vshrl.u32 %v5941, 7
          %v5943 = vsub.s32 %v5940, %v5942
          %v5944 = vrot.slane %v2792, %v5943
          %v5946 = vunpack.c.l.s4 1414812756
          %v5947 = vunpack.c.0.s8 %v5946
          %v5948 = vlaneseq
          %v5949 = vshrl.u32 %v5948, 7
          %v5950 = vsub.s32 %v5947, %v5949
          %v5951 = vrot.slane %v2792, %v5950
          %v5953 = vunpack.c.l.s4 1987475062
          %v5954 = vunpack.c.0.s8 %v5953
          %v5955 = vlaneseq
          %v5956 = vshrl.u32 %v5955, 7
          %v5957 = vsub.s32 %v5954, %v5956
          %v5958 = vrot.slane %v2792, %v5957
          %v5960 = vunpack.c.l.s4 269488144
          %v5961 = vunpack.c.0.s8 %v5960
          %v5962 = vlaneseq
          %v5963 = vshrl.u32 %v5962, 7
          %v5964 = vsub.s32 %v5961, %v5963
          %v5965 = vrot.slane %v2794, %v5964
          %v5967 = vunpack.c.l.s4 842150450
          %v5968 = vunpack.c.0.s8 %v5967
          %v5969 = vlaneseq
          %v5970 = vshrl.u32 %v5969, 7
          %v5971 = vsub.s32 %v5968, %v5970
          %v5972 = vrot.slane %v2794, %v5971
          %v5974 = vunpack.c.l.s4 1414812756
          %v5975 = vunpack.c.0.s8 %v5974
          %v5976 = vlaneseq
          %v5977 = vshrl.u32 %v5976, 7
          %v5978 = vsub.s32 %v5975, %v5977
          %v5979 = vrot.slane %v2794, %v5978
          %v5981 = vunpack.c.l.s4 1987475062
          %v5982 = vunpack.c.0.s8 %v5981
          %v5983 = vlaneseq
          %v5984 = vshrl.u32 %v5983, 7
          %v5985 = vsub.s32 %v5982, %v5984
          %v5986 = vrot.slane %v2794, %v5985
          %v5988 = vunpack.c.l.s4 269488144
          %v5989 = vunpack.c.0.s8 %v5988
          %v5990 = vlaneseq
          %v5991 = vshrl.u32 %v5990, 7
          %v5992 = vsub.s32 %v5989, %v5991
          %v5993 = vrot.slane %v2796, %v5992
          %v5995 = vunpack.c.l.s4 842150450
          %v5996 = vunpack.c.0.s8 %v5995
          %v5997 = vlaneseq
          %v5998 = vshrl.u32 %v5997, 7
          %v5999 = vsub.s32 %v5996, %v5998
          %v6000 = vrot.slane %v2796, %v5999
          %v6002 = vunpack.c.l.s4 1414812756
          %v6003 = vunpack.c.0.s8 %v6002
          %v6004 = vlaneseq
          %v6005 = vshrl.u32 %v6004, 7
          %v6006 = vsub.s32 %v6003, %v6005
          %v6007 = vrot.slane %v2796, %v6006
          %v6009 = vunpack.c.l.s4 1987475062
          %v6010 = vunpack.c.0.s8 %v6009
          %v6011 = vlaneseq
          %v6012 = vshrl.u32 %v6011, 7
          %v6013 = vsub.s32 %v6010, %v6012
          %v6014 = vrot.slane %v2796, %v6013
          %v6016 = vunpack.c.l.s4 269488144
          %v6017 = vunpack.c.0.s8 %v6016
          %v6018 = vlaneseq
          %v6019 = vshrl.u32 %v6018, 7
          %v6020 = vsub.s32 %v6017, %v6019
          %v6021 = vrot.slane %v2798, %v6020
          %v6023 = vunpack.c.l.s4 842150450
          %v6024 = vunpack.c.0.s8 %v6023
          %v6025 = vlaneseq
          %v6026 = vshrl.u32 %v6025, 7
          %v6027 = vsub.s32 %v6024, %v6026
          %v6028 = vrot.slane %v2798, %v6027
          %v6030 = vunpack.c.l.s4 1414812756
          %v6031 = vunpack.c.0.s8 %v6030
          %v6032 = vlaneseq
          %v6033 = vshrl.u32 %v6032, 7
          %v6034 = vsub.s32 %v6031, %v6033
          %v6035 = vrot.slane %v2798, %v6034
          %v6037 = vunpack.c.l.s4 1987475062
          %v6038 = vunpack.c.0.s8 %v6037
          %v6039 = vlaneseq
          %v6040 = vshrl.u32 %v6039, 7
          %v6041 = vsub.s32 %v6038, %v6040
          %v6042 = vrot.slane %v2798, %v6041
          %v6044 = vunpack.c.l.s4 269488144
          %v6045 = vunpack.c.0.s8 %v6044
          %v6046 = vlaneseq
          %v6047 = vshrl.u32 %v6046, 7
          %v6048 = vsub.s32 %v6045, %v6047
          %v6049 = vrot.slane %v2800, %v6048
          %v6051 = vunpack.c.l.s4 842150450
          %v6052 = vunpack.c.0.s8 %v6051
          %v6053 = vlaneseq
          %v6054 = vshrl.u32 %v6053, 7
          %v6055 = vsub.s32 %v6052, %v6054
          %v6056 = vrot.slane %v2800, %v6055
          %v6058 = vunpack.c.l.s4 1414812756
          %v6059 = vunpack.c.0.s8 %v6058
          %v6060 = vlaneseq
          %v6061 = vshrl.u32 %v6060, 7
          %v6062 = vsub.s32 %v6059, %v6061
          %v6063 = vrot.slane %v2800, %v6062
          %v6065 = vunpack.c.l.s4 1987475062
          %v6066 = vunpack.c.0.s8 %v6065
          %v6067 = vlaneseq
          %v6068 = vshrl.u32 %v6067, 7
          %v6069 = vsub.s32 %v6066, %v6068
          %v6070 = vrot.slane %v2800, %v6069
          %v6072 = vunpack.c.l.s4 269488144
          %v6073 = vunpack.c.0.s8 %v6072
          %v6074 = vlaneseq
          %v6075 = vshrl.u32 %v6074, 7
          %v6076 = vsub.s32 %v6073, %v6075
          %v6077 = vrot.slane %v2802, %v6076
          %v6079 = vunpack.c.l.s4 842150450
          %v6080 = vunpack.c.0.s8 %v6079
          %v6081 = vlaneseq
          %v6082 = vshrl.u32 %v6081, 7
          %v6083 = vsub.s32 %v6080, %v6082
          %v6084 = vrot.slane %v2802, %v6083
          %v6086 = vunpack.c.l.s4 1414812756
          %v6087 = vunpack.c.0.s8 %v6086
          %v6088 = vlaneseq
          %v6089 = vshrl.u32 %v6088, 7
          %v6090 = vsub.s32 %v6087, %v6089
          %v6091 = vrot.slane %v2802, %v6090
          %v6093 = vunpack.c.l.s4 1987475062
          %v6094 = vunpack.c.0.s8 %v6093
          %v6095 = vlaneseq
          %v6096 = vshrl.u32 %v6095, 7
          %v6097 = vsub.s32 %v6094, %v6096
          %v6098 = vrot.slane %v2802, %v6097
          %v6100 = vunpack.c.l.s4 269488144
          %v6101 = vunpack.c.0.s8 %v6100
          %v6102 = vlaneseq
          %v6103 = vshrl.u32 %v6102, 7
          %v6104 = vsub.s32 %v6101, %v6103
          %v6105 = vrot.slane %v2804, %v6104
          %v6107 = vunpack.c.l.s4 842150450
          %v6108 = vunpack.c.0.s8 %v6107
          %v6109 = vlaneseq
          %v6110 = vshrl.u32 %v6109, 7
          %v6111 = vsub.s32 %v6108, %v6110
          %v6112 = vrot.slane %v2804, %v6111
          %v6114 = vunpack.c.l.s4 1414812756
          %v6115 = vunpack.c.0.s8 %v6114
          %v6116 = vlaneseq
          %v6117 = vshrl.u32 %v6116, 7
          %v6118 = vsub.s32 %v6115, %v6117
          %v6119 = vrot.slane %v2804, %v6118
          %v6121 = vunpack.c.l.s4 1987475062
          %v6122 = vunpack.c.0.s8 %v6121
          %v6123 = vlaneseq
          %v6124 = vshrl.u32 %v6123, 7
          %v6125 = vsub.s32 %v6122, %v6124
          %v6126 = vrot.slane %v2804, %v6125
          %v6128 = vunpack.c.l.s4 269488144
          %v6129 = vunpack.c.0.s8 %v6128
          %v6130 = vlaneseq
          %v6131 = vshrl.u32 %v6130, 7
          %v6132 = vsub.s32 %v6129, %v6131
          %v6133 = vrot.slane %v2806, %v6132
          %v6135 = vunpack.c.l.s4 842150450
          %v6136 = vunpack.c.0.s8 %v6135
          %v6137 = vlaneseq
          %v6138 = vshrl.u32 %v6137, 7
          %v6139 = vsub.s32 %v6136, %v6138
          %v6140 = vrot.slane %v2806, %v6139
          %v6142 = vunpack.c.l.s4 1414812756
          %v6143 = vunpack.c.0.s8 %v6142
          %v6144 = vlaneseq
          %v6145 = vshrl.u32 %v6144, 7
          %v6146 = vsub.s32 %v6143, %v6145
          %v6147 = vrot.slane %v2806, %v6146
          %v6149 = vunpack.c.l.s4 1987475062
          %v6150 = vunpack.c.0.s8 %v6149
          %v6151 = vlaneseq
          %v6152 = vshrl.u32 %v6151, 7
          %v6153 = vsub.s32 %v6150, %v6152
          %v6154 = vrot.slane %v2806, %v6153
          %v6156 = vunpack.c.l.s4 269488144
          %v6157 = vunpack.c.0.s8 %v6156
          %v6158 = vlaneseq
          %v6159 = vshrl.u32 %v6158, 7
          %v6160 = vsub.s32 %v6157, %v6159
          %v6161 = vrot.slane %v2808, %v6160
          %v6163 = vunpack.c.l.s4 842150450
          %v6164 = vunpack.c.0.s8 %v6163
          %v6165 = vlaneseq
          %v6166 = vshrl.u32 %v6165, 7
          %v6167 = vsub.s32 %v6164, %v6166
          %v6168 = vrot.slane %v2808, %v6167
          %v6170 = vunpack.c.l.s4 1414812756
          %v6171 = vunpack.c.0.s8 %v6170
          %v6172 = vlaneseq
          %v6173 = vshrl.u32 %v6172, 7
          %v6174 = vsub.s32 %v6171, %v6173
          %v6175 = vrot.slane %v2808, %v6174
          %v6177 = vunpack.c.l.s4 1987475062
          %v6178 = vunpack.c.0.s8 %v6177
          %v6179 = vlaneseq
          %v6180 = vshrl.u32 %v6179, 7
          %v6181 = vsub.s32 %v6178, %v6180
          %v6182 = vrot.slane %v2808, %v6181
          %v6184 = vunpack.c.l.s4 269488144
          %v6185 = vunpack.c.0.s8 %v6184
          %v6186 = vlaneseq
          %v6187 = vshrl.u32 %v6186, 7
          %v6188 = vsub.s32 %v6185, %v6187
          %v6189 = vrot.slane %v2810, %v6188
          %v6191 = vunpack.c.l.s4 842150450
          %v6192 = vunpack.c.0.s8 %v6191
          %v6193 = vlaneseq
          %v6194 = vshrl.u32 %v6193, 7
          %v6195 = vsub.s32 %v6192, %v6194
          %v6196 = vrot.slane %v2810, %v6195
          %v6198 = vunpack.c.l.s4 1414812756
          %v6199 = vunpack.c.0.s8 %v6198
          %v6200 = vlaneseq
          %v6201 = vshrl.u32 %v6200, 7
          %v6202 = vsub.s32 %v6199, %v6201
          %v6203 = vrot.slane %v2810, %v6202
          %v6205 = vunpack.c.l.s4 1987475062
          %v6206 = vunpack.c.0.s8 %v6205
          %v6207 = vlaneseq
          %v6208 = vshrl.u32 %v6207, 7
          %v6209 = vsub.s32 %v6206, %v6208
          %v6210 = vrot.slane %v2810, %v6209
          %v6212 = vunpack.c.l.s4 269488144
          %v6213 = vunpack.c.0.s8 %v6212
          %v6214 = vlaneseq
          %v6215 = vshrl.u32 %v6214, 7
          %v6216 = vsub.s32 %v6213, %v6215
          %v6217 = vrot.slane %v2812, %v6216
          %v6219 = vunpack.c.l.s4 842150450
          %v6220 = vunpack.c.0.s8 %v6219
          %v6221 = vlaneseq
          %v6222 = vshrl.u32 %v6221, 7
          %v6223 = vsub.s32 %v6220, %v6222
          %v6224 = vrot.slane %v2812, %v6223
          %v6226 = vunpack.c.l.s4 1414812756
          %v6227 = vunpack.c.0.s8 %v6226
          %v6228 = vlaneseq
          %v6229 = vshrl.u32 %v6228, 7
          %v6230 = vsub.s32 %v6227, %v6229
          %v6231 = vrot.slane %v2812, %v6230
          %v6233 = vunpack.c.l.s4 1987475062
          %v6234 = vunpack.c.0.s8 %v6233
          %v6235 = vlaneseq
          %v6236 = vshrl.u32 %v6235, 7
          %v6237 = vsub.s32 %v6234, %v6236
          %v6238 = vrot.slane %v2812, %v6237
          %v6240 = vunpack.c.l.s4 269488144
          %v6241 = vunpack.c.0.s8 %v6240
          %v6242 = vlaneseq
          %v6243 = vshrl.u32 %v6242, 7
          %v6244 = vsub.s32 %v6241, %v6243
          %v6245 = vrot.slane %v2814, %v6244
          %v6247 = vunpack.c.l.s4 842150450
          %v6248 = vunpack.c.0.s8 %v6247
          %v6249 = vlaneseq
          %v6250 = vshrl.u32 %v6249, 7
          %v6251 = vsub.s32 %v6248, %v6250
          %v6252 = vrot.slane %v2814, %v6251
          %v6254 = vunpack.c.l.s4 1414812756
          %v6255 = vunpack.c.0.s8 %v6254
          %v6256 = vlaneseq
          %v6257 = vshrl.u32 %v6256, 7
          %v6258 = vsub.s32 %v6255, %v6257
          %v6259 = vrot.slane %v2814, %v6258
          %v6261 = vunpack.c.l.s4 1987475062
          %v6262 = vunpack.c.0.s8 %v6261
          %v6263 = vlaneseq
          %v6264 = vshrl.u32 %v6263, 7
          %v6265 = vsub.s32 %v6262, %v6264
          %v6266 = vrot.slane %v2814, %v6265
          %v6268 = vunpack.c.l.s4 269488144
          %v6269 = vunpack.c.0.s8 %v6268
          %v6270 = vlaneseq
          %v6271 = vshrl.u32 %v6270, 7
          %v6272 = vsub.s32 %v6269, %v6271
          %v6273 = vrot.slane %v2816, %v6272
          %v6275 = vunpack.c.l.s4 842150450
          %v6276 = vunpack.c.0.s8 %v6275
          %v6277 = vlaneseq
          %v6278 = vshrl.u32 %v6277, 7
          %v6279 = vsub.s32 %v6276, %v6278
          %v6280 = vrot.slane %v2816, %v6279
          %v6282 = vunpack.c.l.s4 1414812756
          %v6283 = vunpack.c.0.s8 %v6282
          %v6284 = vlaneseq
          %v6285 = vshrl.u32 %v6284, 7
          %v6286 = vsub.s32 %v6283, %v6285
          %v6287 = vrot.slane %v2816, %v6286
          %v6289 = vunpack.c.l.s4 1987475062
          %v6290 = vunpack.c.0.s8 %v6289
          %v6291 = vlaneseq
          %v6292 = vshrl.u32 %v6291, 7
          %v6293 = vsub.s32 %v6290, %v6292
          %v6294 = vrot.slane %v2816, %v6293
          %v6296 = vunpack.c.l.s4 269488144
          %v6297 = vunpack.c.0.s8 %v6296
          %v6298 = vlaneseq
          %v6299 = vshrl.u32 %v6298, 7
          %v6300 = vsub.s32 %v6297, %v6299
          %v6301 = vrot.slane %v2818, %v6300
          %v6303 = vunpack.c.l.s4 842150450
          %v6304 = vunpack.c.0.s8 %v6303
          %v6305 = vlaneseq
          %v6306 = vshrl.u32 %v6305, 7
          %v6307 = vsub.s32 %v6304, %v6306
          %v6308 = vrot.slane %v2818, %v6307
          %v6310 = vunpack.c.l.s4 1414812756
          %v6311 = vunpack.c.0.s8 %v6310
          %v6312 = vlaneseq
          %v6313 = vshrl.u32 %v6312, 7
          %v6314 = vsub.s32 %v6311, %v6313
          %v6315 = vrot.slane %v2818, %v6314
          %v6317 = vunpack.c.l.s4 1987475062
          %v6318 = vunpack.c.0.s8 %v6317
          %v6319 = vlaneseq
          %v6320 = vshrl.u32 %v6319, 7
          %v6321 = vsub.s32 %v6318, %v6320
          %v6322 = vrot.slane %v2818, %v6321
          %v6324 = vunpack.c.l.s4 269488144
          %v6325 = vunpack.c.0.s8 %v6324
          %v6326 = vlaneseq
          %v6327 = vshrl.u32 %v6326, 7
          %v6328 = vsub.s32 %v6325, %v6327
          %v6329 = vrot.slane %v2820, %v6328
          %v6331 = vunpack.c.l.s4 842150450
          %v6332 = vunpack.c.0.s8 %v6331
          %v6333 = vlaneseq
          %v6334 = vshrl.u32 %v6333, 7
          %v6335 = vsub.s32 %v6332, %v6334
          %v6336 = vrot.slane %v2820, %v6335
          %v6338 = vunpack.c.l.s4 1414812756
          %v6339 = vunpack.c.0.s8 %v6338
          %v6340 = vlaneseq
          %v6341 = vshrl.u32 %v6340, 7
          %v6342 = vsub.s32 %v6339, %v6341
          %v6343 = vrot.slane %v2820, %v6342
          %v6345 = vunpack.c.l.s4 1987475062
          %v6346 = vunpack.c.0.s8 %v6345
          %v6347 = vlaneseq
          %v6348 = vshrl.u32 %v6347, 7
          %v6349 = vsub.s32 %v6346, %v6348
          %v6350 = vrot.slane %v2820, %v6349
          %v6352 = vunpack.c.l.s4 269488144
          %v6353 = vunpack.c.0.s8 %v6352
          %v6354 = vlaneseq
          %v6355 = vshrl.u32 %v6354, 7
          %v6356 = vsub.s32 %v6353, %v6355
          %v6357 = vrot.slane %v2822, %v6356
          %v6359 = vunpack.c.l.s4 842150450
          %v6360 = vunpack.c.0.s8 %v6359
          %v6361 = vlaneseq
          %v6362 = vshrl.u32 %v6361, 7
          %v6363 = vsub.s32 %v6360, %v6362
          %v6364 = vrot.slane %v2822, %v6363
          %v6366 = vunpack.c.l.s4 1414812756
          %v6367 = vunpack.c.0.s8 %v6366
          %v6368 = vlaneseq
          %v6369 = vshrl.u32 %v6368, 7
          %v6370 = vsub.s32 %v6367, %v6369
          %v6371 = vrot.slane %v2822, %v6370
          %v6373 = vunpack.c.l.s4 1987475062
          %v6374 = vunpack.c.0.s8 %v6373
          %v6375 = vlaneseq
          %v6376 = vshrl.u32 %v6375, 7
          %v6377 = vsub.s32 %v6374, %v6376
          %v6378 = vrot.slane %v2822, %v6377
          %v6380 = vunpack.c.l.s4 269488144
          %v6381 = vunpack.c.0.s8 %v6380
          %v6382 = vlaneseq
          %v6383 = vshrl.u32 %v6382, 7
          %v6384 = vsub.s32 %v6381, %v6383
          %v6385 = vrot.slane %v2824, %v6384
          %v6387 = vunpack.c.l.s4 842150450
          %v6388 = vunpack.c.0.s8 %v6387
          %v6389 = vlaneseq
          %v6390 = vshrl.u32 %v6389, 7
          %v6391 = vsub.s32 %v6388, %v6390
          %v6392 = vrot.slane %v2824, %v6391
          %v6394 = vunpack.c.l.s4 1414812756
          %v6395 = vunpack.c.0.s8 %v6394
          %v6396 = vlaneseq
          %v6397 = vshrl.u32 %v6396, 7
          %v6398 = vsub.s32 %v6395, %v6397
          %v6399 = vrot.slane %v2824, %v6398
          %v6401 = vunpack.c.l.s4 1987475062
          %v6402 = vunpack.c.0.s8 %v6401
          %v6403 = vlaneseq
          %v6404 = vshrl.u32 %v6403, 7
          %v6405 = vsub.s32 %v6402, %v6404
          %v6406 = vrot.slane %v2824, %v6405
          %v6408 = vunpack.c.l.s4 269488144
          %v6409 = vunpack.c.0.s8 %v6408
          %v6410 = vlaneseq
          %v6411 = vshrl.u32 %v6410, 7
          %v6412 = vsub.s32 %v6409, %v6411
          %v6413 = vrot.slane %v2826, %v6412
          %v6415 = vunpack.c.l.s4 842150450
          %v6416 = vunpack.c.0.s8 %v6415
          %v6417 = vlaneseq
          %v6418 = vshrl.u32 %v6417, 7
          %v6419 = vsub.s32 %v6416, %v6418
          %v6420 = vrot.slane %v2826, %v6419
          %v6422 = vunpack.c.l.s4 1414812756
          %v6423 = vunpack.c.0.s8 %v6422
          %v6424 = vlaneseq
          %v6425 = vshrl.u32 %v6424, 7
          %v6426 = vsub.s32 %v6423, %v6425
          %v6427 = vrot.slane %v2826, %v6426
          %v6429 = vunpack.c.l.s4 1987475062
          %v6430 = vunpack.c.0.s8 %v6429
          %v6431 = vlaneseq
          %v6432 = vshrl.u32 %v6431, 7
          %v6433 = vsub.s32 %v6430, %v6432
          %v6434 = vrot.slane %v2826, %v6433
          %v6436 = vunpack.c.l.s4 269488144
          %v6437 = vunpack.c.0.s8 %v6436
          %v6438 = vlaneseq
          %v6439 = vshrl.u32 %v6438, 7
          %v6440 = vsub.s32 %v6437, %v6439
          %v6441 = vrot.slane %v2828, %v6440
          %v6443 = vunpack.c.l.s4 842150450
          %v6444 = vunpack.c.0.s8 %v6443
          %v6445 = vlaneseq
          %v6446 = vshrl.u32 %v6445, 7
          %v6447 = vsub.s32 %v6444, %v6446
          %v6448 = vrot.slane %v2828, %v6447
          %v6450 = vunpack.c.l.s4 1414812756
          %v6451 = vunpack.c.0.s8 %v6450
          %v6452 = vlaneseq
          %v6453 = vshrl.u32 %v6452, 7
          %v6454 = vsub.s32 %v6451, %v6453
          %v6455 = vrot.slane %v2828, %v6454
          %v6457 = vunpack.c.l.s4 1987475062
          %v6458 = vunpack.c.0.s8 %v6457
          %v6459 = vlaneseq
          %v6460 = vshrl.u32 %v6459, 7
          %v6461 = vsub.s32 %v6458, %v6460
          %v6462 = vrot.slane %v2828, %v6461
          %v6464 = vunpack.c.l.s4 269488144
          %v6465 = vunpack.c.0.s8 %v6464
          %v6466 = vlaneseq
          %v6467 = vshrl.u32 %v6466, 7
          %v6468 = vsub.s32 %v6465, %v6467
          %v6469 = vrot.slane %v2830, %v6468
          %v6471 = vunpack.c.l.s4 842150450
          %v6472 = vunpack.c.0.s8 %v6471
          %v6473 = vlaneseq
          %v6474 = vshrl.u32 %v6473, 7
          %v6475 = vsub.s32 %v6472, %v6474
          %v6476 = vrot.slane %v2830, %v6475
          %v6478 = vunpack.c.l.s4 1414812756
          %v6479 = vunpack.c.0.s8 %v6478
          %v6480 = vlaneseq
          %v6481 = vshrl.u32 %v6480, 7
          %v6482 = vsub.s32 %v6479, %v6481
          %v6483 = vrot.slane %v2830, %v6482
          %v6485 = vunpack.c.l.s4 1987475062
          %v6486 = vunpack.c.0.s8 %v6485
          %v6487 = vlaneseq
          %v6488 = vshrl.u32 %v6487, 7
          %v6489 = vsub.s32 %v6486, %v6488
          %v6490 = vrot.slane %v2830, %v6489
          %v6492 = vunpack.c.l.s4 269488144
          %v6493 = vunpack.c.0.s8 %v6492
          %v6494 = vlaneseq
          %v6495 = vshrl.u32 %v6494, 7
          %v6496 = vsub.s32 %v6493, %v6495
          %v6497 = vrot.slane %v2832, %v6496
          %v6499 = vunpack.c.l.s4 842150450
          %v6500 = vunpack.c.0.s8 %v6499
          %v6501 = vlaneseq
          %v6502 = vshrl.u32 %v6501, 7
          %v6503 = vsub.s32 %v6500, %v6502
          %v6504 = vrot.slane %v2832, %v6503
          %v6506 = vunpack.c.l.s4 1414812756
          %v6507 = vunpack.c.0.s8 %v6506
          %v6508 = vlaneseq
          %v6509 = vshrl.u32 %v6508, 7
          %v6510 = vsub.s32 %v6507, %v6509
          %v6511 = vrot.slane %v2832, %v6510
          %v6513 = vunpack.c.l.s4 1987475062
          %v6514 = vunpack.c.0.s8 %v6513
          %v6515 = vlaneseq
          %v6516 = vshrl.u32 %v6515, 7
          %v6517 = vsub.s32 %v6514, %v6516
          %v6518 = vrot.slane %v2832, %v6517
          %v6520 = vunpack.c.l.s4 269488144
          %v6521 = vunpack.c.0.s8 %v6520
          %v6522 = vlaneseq
          %v6523 = vshrl.u32 %v6522, 7
          %v6524 = vsub.s32 %v6521, %v6523
          %v6525 = vrot.slane %v2834, %v6524
          %v6527 = vunpack.c.l.s4 842150450
          %v6528 = vunpack.c.0.s8 %v6527
          %v6529 = vlaneseq
          %v6530 = vshrl.u32 %v6529, 7
          %v6531 = vsub.s32 %v6528, %v6530
          %v6532 = vrot.slane %v2834, %v6531
          %v6534 = vunpack.c.l.s4 1414812756
          %v6535 = vunpack.c.0.s8 %v6534
          %v6536 = vlaneseq
          %v6537 = vshrl.u32 %v6536, 7
          %v6538 = vsub.s32 %v6535, %v6537
          %v6539 = vrot.slane %v2834, %v6538
          %v6541 = vunpack.c.l.s4 1987475062
          %v6542 = vunpack.c.0.s8 %v6541
          %v6543 = vlaneseq
          %v6544 = vshrl.u32 %v6543, 7
          %v6545 = vsub.s32 %v6542, %v6544
          %v6546 = vrot.slane %v2834, %v6545
          %v6547 = vcombine.low %v2969, %v2976
          %v6548 = vcombine.low %v2983, %v2990
          %v6550 = vunpack.c.l.s4 1983009808
          %v6551 = vunpack.c.0.s8 %v6550
          %v6552 = vlaneseq
          %v6553 = vshrl.u32 %v6552, 7
          %v6554 = vsub.s32 %v6551, %v6553
          %v6555 = vrot.slane %v6547, %v6554
          %v6557 = vunpack.c.l.s4 1983009808
          %v6558 = vunpack.c.0.s8 %v6557
          %v6559 = vlaneseq
          %v6560 = vshrl.u32 %v6559, 7
          %v6561 = vsub.s32 %v6558, %v6560
          %v6562 = vrot.slane %v6548, %v6561
          %v6563 = vcombine.low %v6555, %v6562
          %v6564 = vcombine.low %v2997, %v3004
          %v6565 = vcombine.low %v3011, %v3018
          %v6567 = vunpack.c.l.s4 1983009808
          %v6568 = vunpack.c.0.s8 %v6567
          %v6569 = vlaneseq
          %v6570 = vshrl.u32 %v6569, 7
          %v6571 = vsub.s32 %v6568, %v6570
          %v6572 = vrot.slane %v6564, %v6571
          %v6574 = vunpack.c.l.s4 1983009808
          %v6575 = vunpack.c.0.s8 %v6574
          %v6576 = vlaneseq
          %v6577 = vshrl.u32 %v6576, 7
          %v6578 = vsub.s32 %v6575, %v6577
          %v6579 = vrot.slane %v6565, %v6578
          %v6580 = vcombine.low %v6572, %v6579
          %v6581 = vcombine.low %v3025, %v3032
          %v6582 = vcombine.low %v3039, %v3046
          %v6584 = vunpack.c.l.s4 1983009808
          %v6585 = vunpack.c.0.s8 %v6584
          %v6586 = vlaneseq
          %v6587 = vshrl.u32 %v6586, 7
          %v6588 = vsub.s32 %v6585, %v6587
          %v6589 = vrot.slane %v6581, %v6588
          %v6591 = vunpack.c.l.s4 1983009808
          %v6592 = vunpack.c.0.s8 %v6591
          %v6593 = vlaneseq
          %v6594 = vshrl.u32 %v6593, 7
          %v6595 = vsub.s32 %v6592, %v6594
          %v6596 = vrot.slane %v6582, %v6595
          %v6597 = vcombine.low %v6589, %v6596
          %v6598 = vcombine.low %v3053, %v3060
          %v6599 = vcombine.low %v3067, %v3074
          %v6601 = vunpack.c.l.s4 1983009808
          %v6602 = vunpack.c.0.s8 %v6601
          %v6603 = vlaneseq
          %v6604 = vshrl.u32 %v6603, 7
          %v6605 = vsub.s32 %v6602, %v6604
          %v6606 = vrot.slane %v6598, %v6605
          %v6608 = vunpack.c.l.s4 1983009808
          %v6609 = vunpack.c.0.s8 %v6608
          %v6610 = vlaneseq
          %v6611 = vshrl.u32 %v6610, 7
          %v6612 = vsub.s32 %v6609, %v6611
          %v6613 = vrot.slane %v6599, %v6612
          %v6614 = vcombine.low %v6606, %v6613
          %v6615 = vcombine.low %v3081, %v3088
          %v6616 = vcombine.low %v3095, %v3102
          %v6618 = vunpack.c.l.s4 1983009808
          %v6619 = vunpack.c.0.s8 %v6618
          %v6620 = vlaneseq
          %v6621 = vshrl.u32 %v6620, 7
          %v6622 = vsub.s32 %v6619, %v6621
          %v6623 = vrot.slane %v6615, %v6622
          %v6625 = vunpack.c.l.s4 1983009808
          %v6626 = vunpack.c.0.s8 %v6625
          %v6627 = vlaneseq
          %v6628 = vshrl.u32 %v6627, 7
          %v6629 = vsub.s32 %v6626, %v6628
          %v6630 = vrot.slane %v6616, %v6629
          %v6631 = vcombine.low %v6623, %v6630
          %v6632 = vcombine.low %v3109, %v3116
          %v6633 = vcombine.low %v3123, %v3130
          %v6635 = vunpack.c.l.s4 1983009808
          %v6636 = vunpack.c.0.s8 %v6635
          %v6637 = vlaneseq
          %v6638 = vshrl.u32 %v6637, 7
          %v6639 = vsub.s32 %v6636, %v6638
          %v6640 = vrot.slane %v6632, %v6639
          %v6642 = vunpack.c.l.s4 1983009808
          %v6643 = vunpack.c.0.s8 %v6642
          %v6644 = vlaneseq
          %v6645 = vshrl.u32 %v6644, 7
          %v6646 = vsub.s32 %v6643, %v6645
          %v6647 = vrot.slane %v6633, %v6646
          %v6648 = vcombine.low %v6640, %v6647
          %v6649 = vcombine.low %v3137, %v3144
          %v6650 = vcombine.low %v3151, %v3158
          %v6652 = vunpack.c.l.s4 1983009808
          %v6653 = vunpack.c.0.s8 %v6652
          %v6654 = vlaneseq
          %v6655 = vshrl.u32 %v6654, 7
          %v6656 = vsub.s32 %v6653, %v6655
          %v6657 = vrot.slane %v6649, %v6656
          %v6659 = vunpack.c.l.s4 1983009808
          %v6660 = vunpack.c.0.s8 %v6659
          %v6661 = vlaneseq
          %v6662 = vshrl.u32 %v6661, 7
          %v6663 = vsub.s32 %v6660, %v6662
          %v6664 = vrot.slane %v6650, %v6663
          %v6665 = vcombine.low %v6657, %v6664
          %v6666 = vcombine.low %v3165, %v3172
          %v6667 = vcombine.low %v3179, %v3186
          %v6669 = vunpack.c.l.s4 1983009808
          %v6670 = vunpack.c.0.s8 %v6669
          %v6671 = vlaneseq
          %v6672 = vshrl.u32 %v6671, 7
          %v6673 = vsub.s32 %v6670, %v6672
          %v6674 = vrot.slane %v6666, %v6673
          %v6676 = vunpack.c.l.s4 1983009808
          %v6677 = vunpack.c.0.s8 %v6676
          %v6678 = vlaneseq
          %v6679 = vshrl.u32 %v6678, 7
          %v6680 = vsub.s32 %v6677, %v6679
          %v6681 = vrot.slane %v6667, %v6680
          %v6682 = vcombine.low %v6674, %v6681
          %v6683 = vcombine.low %v3193, %v3200
          %v6684 = vcombine.low %v3207, %v3214
          %v6686 = vunpack.c.l.s4 1983009808
          %v6687 = vunpack.c.0.s8 %v6686
          %v6688 = vlaneseq
          %v6689 = vshrl.u32 %v6688, 7
          %v6690 = vsub.s32 %v6687, %v6689
          %v6691 = vrot.slane %v6683, %v6690
          %v6693 = vunpack.c.l.s4 1983009808
          %v6694 = vunpack.c.0.s8 %v6693
          %v6695 = vlaneseq
          %v6696 = vshrl.u32 %v6695, 7
          %v6697 = vsub.s32 %v6694, %v6696
          %v6698 = vrot.slane %v6684, %v6697
          %v6699 = vcombine.low %v6691, %v6698
          %v6700 = vcombine.low %v3221, %v3228
          %v6701 = vcombine.low %v3235, %v3242
          %v6703 = vunpack.c.l.s4 1983009808
          %v6704 = vunpack.c.0.s8 %v6703
          %v6705 = vlaneseq
          %v6706 = vshrl.u32 %v6705, 7
          %v6707 = vsub.s32 %v6704, %v6706
          %v6708 = vrot.slane %v6700, %v6707
          %v6710 = vunpack.c.l.s4 1983009808
          %v6711 = vunpack.c.0.s8 %v6710
          %v6712 = vlaneseq
          %v6713 = vshrl.u32 %v6712, 7
          %v6714 = vsub.s32 %v6711, %v6713
          %v6715 = vrot.slane %v6701, %v6714
          %v6716 = vcombine.low %v6708, %v6715
          %v6717 = vcombine.low %v3249, %v3256
          %v6718 = vcombine.low %v3263, %v3270
          %v6720 = vunpack.c.l.s4 1983009808
          %v6721 = vunpack.c.0.s8 %v6720
          %v6722 = vlaneseq
          %v6723 = vshrl.u32 %v6722, 7
          %v6724 = vsub.s32 %v6721, %v6723
          %v6725 = vrot.slane %v6717, %v6724
          %v6727 = vunpack.c.l.s4 1983009808
          %v6728 = vunpack.c.0.s8 %v6727
          %v6729 = vlaneseq
          %v6730 = vshrl.u32 %v6729, 7
          %v6731 = vsub.s32 %v6728, %v6730
          %v6732 = vrot.slane %v6718, %v6731
          %v6733 = vcombine.low %v6725, %v6732
          %v6734 = vcombine.low %v3277, %v3284
          %v6735 = vcombine.low %v3291, %v3298
          %v6737 = vunpack.c.l.s4 1983009808
          %v6738 = vunpack.c.0.s8 %v6737
          %v6739 = vlaneseq
          %v6740 = vshrl.u32 %v6739, 7
          %v6741 = vsub.s32 %v6738, %v6740
          %v6742 = vrot.slane %v6734, %v6741
          %v6744 = vunpack.c.l.s4 1983009808
          %v6745 = vunpack.c.0.s8 %v6744
          %v6746 = vlaneseq
          %v6747 = vshrl.u32 %v6746, 7
          %v6748 = vsub.s32 %v6745, %v6747
          %v6749 = vrot.slane %v6735, %v6748
          %v6750 = vcombine.low %v6742, %v6749
          %v6751 = vcombine.low %v3305, %v3312
          %v6752 = vcombine.low %v3319, %v3326
          %v6754 = vunpack.c.l.s4 1983009808
          %v6755 = vunpack.c.0.s8 %v6754
          %v6756 = vlaneseq
          %v6757 = vshrl.u32 %v6756, 7
          %v6758 = vsub.s32 %v6755, %v6757
          %v6759 = vrot.slane %v6751, %v6758
          %v6761 = vunpack.c.l.s4 1983009808
          %v6762 = vunpack.c.0.s8 %v6761
          %v6763 = vlaneseq
          %v6764 = vshrl.u32 %v6763, 7
          %v6765 = vsub.s32 %v6762, %v6764
          %v6766 = vrot.slane %v6752, %v6765
          %v6767 = vcombine.low %v6759, %v6766
          %v6768 = vcombine.low %v3333, %v3340
          %v6769 = vcombine.low %v3347, %v3354
          %v6771 = vunpack.c.l.s4 1983009808
          %v6772 = vunpack.c.0.s8 %v6771
          %v6773 = vlaneseq
          %v6774 = vshrl.u32 %v6773, 7
          %v6775 = vsub.s32 %v6772, %v6774
          %v6776 = vrot.slane %v6768, %v6775
          %v6778 = vunpack.c.l.s4 1983009808
          %v6779 = vunpack.c.0.s8 %v6778
          %v6780 = vlaneseq
          %v6781 = vshrl.u32 %v6780, 7
          %v6782 = vsub.s32 %v6779, %v6781
          %v6783 = vrot.slane %v6769, %v6782
          %v6784 = vcombine.low %v6776, %v6783
          %v6785 = vcombine.low %v3361, %v3368
          %v6786 = vcombine.low %v3375, %v3382
          %v6788 = vunpack.c.l.s4 1983009808
          %v6789 = vunpack.c.0.s8 %v6788
          %v6790 = vlaneseq
          %v6791 = vshrl.u32 %v6790, 7
          %v6792 = vsub.s32 %v6789, %v6791
          %v6793 = vrot.slane %v6785, %v6792
          %v6795 = vunpack.c.l.s4 1983009808
          %v6796 = vunpack.c.0.s8 %v6795
          %v6797 = vlaneseq
          %v6798 = vshrl.u32 %v6797, 7
          %v6799 = vsub.s32 %v6796, %v6798
          %v6800 = vrot.slane %v6786, %v6799
          %v6801 = vcombine.low %v6793, %v6800
          %v6802 = vcombine.low %v3389, %v3396
          %v6803 = vcombine.low %v3403, %v3410
          %v6805 = vunpack.c.l.s4 1983009808
          %v6806 = vunpack.c.0.s8 %v6805
          %v6807 = vlaneseq
          %v6808 = vshrl.u32 %v6807, 7
          %v6809 = vsub.s32 %v6806, %v6808
          %v6810 = vrot.slane %v6802, %v6809
          %v6812 = vunpack.c.l.s4 1983009808
          %v6813 = vunpack.c.0.s8 %v6812
          %v6814 = vlaneseq
          %v6815 = vshrl.u32 %v6814, 7
          %v6816 = vsub.s32 %v6813, %v6815
          %v6817 = vrot.slane %v6803, %v6816
          %v6818 = vcombine.low %v6810, %v6817
          %v6819 = vcombine.low %v3417, %v3424
          %v6820 = vcombine.low %v3431, %v3438
          %v6822 = vunpack.c.l.s4 1983009808
          %v6823 = vunpack.c.0.s8 %v6822
          %v6824 = vlaneseq
          %v6825 = vshrl.u32 %v6824, 7
          %v6826 = vsub.s32 %v6823, %v6825
          %v6827 = vrot.slane %v6819, %v6826
          %v6829 = vunpack.c.l.s4 1983009808
          %v6830 = vunpack.c.0.s8 %v6829
          %v6831 = vlaneseq
          %v6832 = vshrl.u32 %v6831, 7
          %v6833 = vsub.s32 %v6830, %v6832
          %v6834 = vrot.slane %v6820, %v6833
          %v6835 = vcombine.low %v6827, %v6834
          %v6836 = vcombine.low %v3445, %v3452
          %v6837 = vcombine.low %v3459, %v3466
          %v6839 = vunpack.c.l.s4 1983009808
          %v6840 = vunpack.c.0.s8 %v6839
          %v6841 = vlaneseq
          %v6842 = vshrl.u32 %v6841, 7
          %v6843 = vsub.s32 %v6840, %v6842
          %v6844 = vrot.slane %v6836, %v6843
          %v6846 = vunpack.c.l.s4 1983009808
          %v6847 = vunpack.c.0.s8 %v6846
          %v6848 = vlaneseq
          %v6849 = vshrl.u32 %v6848, 7
          %v6850 = vsub.s32 %v6847, %v6849
          %v6851 = vrot.slane %v6837, %v6850
          %v6852 = vcombine.low %v6844, %v6851
          %v6853 = vcombine.low %v3473, %v3480
          %v6854 = vcombine.low %v3487, %v3494
          %v6856 = vunpack.c.l.s4 1983009808
          %v6857 = vunpack.c.0.s8 %v6856
          %v6858 = vlaneseq
          %v6859 = vshrl.u32 %v6858, 7
          %v6860 = vsub.s32 %v6857, %v6859
          %v6861 = vrot.slane %v6853, %v6860
          %v6863 = vunpack.c.l.s4 1983009808
          %v6864 = vunpack.c.0.s8 %v6863
          %v6865 = vlaneseq
          %v6866 = vshrl.u32 %v6865, 7
          %v6867 = vsub.s32 %v6864, %v6866
          %v6868 = vrot.slane %v6854, %v6867
          %v6869 = vcombine.low %v6861, %v6868
          %v6870 = vcombine.low %v3501, %v3508
          %v6871 = vcombine.low %v3515, %v3522
          %v6873 = vunpack.c.l.s4 1983009808
          %v6874 = vunpack.c.0.s8 %v6873
          %v6875 = vlaneseq
          %v6876 = vshrl.u32 %v6875, 7
          %v6877 = vsub.s32 %v6874, %v6876
          %v6878 = vrot.slane %v6870, %v6877
          %v6880 = vunpack.c.l.s4 1983009808
          %v6881 = vunpack.c.0.s8 %v6880
          %v6882 = vlaneseq
          %v6883 = vshrl.u32 %v6882, 7
          %v6884 = vsub.s32 %v6881, %v6883
          %v6885 = vrot.slane %v6871, %v6884
          %v6886 = vcombine.low %v6878, %v6885
          %v6887 = vcombine.low %v3529, %v3536
          %v6888 = vcombine.low %v3543, %v3550
          %v6890 = vunpack.c.l.s4 1983009808
          %v6891 = vunpack.c.0.s8 %v6890
          %v6892 = vlaneseq
          %v6893 = vshrl.u32 %v6892, 7
          %v6894 = vsub.s32 %v6891, %v6893
          %v6895 = vrot.slane %v6887, %v6894
          %v6897 = vunpack.c.l.s4 1983009808
          %v6898 = vunpack.c.0.s8 %v6897
          %v6899 = vlaneseq
          %v6900 = vshrl.u32 %v6899, 7
          %v6901 = vsub.s32 %v6898, %v6900
          %v6902 = vrot.slane %v6888, %v6901
          %v6903 = vcombine.low %v6895, %v6902
          %v6904 = vcombine.low %v3557, %v3564
          %v6905 = vcombine.low %v3571, %v3578
          %v6907 = vunpack.c.l.s4 1983009808
          %v6908 = vunpack.c.0.s8 %v6907
          %v6909 = vlaneseq
          %v6910 = vshrl.u32 %v6909, 7
          %v6911 = vsub.s32 %v6908, %v6910
          %v6912 = vrot.slane %v6904, %v6911
          %v6914 = vunpack.c.l.s4 1983009808
          %v6915 = vunpack.c.0.s8 %v6914
          %v6916 = vlaneseq
          %v6917 = vshrl.u32 %v6916, 7
          %v6918 = vsub.s32 %v6915, %v6917
          %v6919 = vrot.slane %v6905, %v6918
          %v6920 = vcombine.low %v6912, %v6919
          %v6921 = vcombine.low %v3585, %v3592
          %v6922 = vcombine.low %v3599, %v3606
          %v6924 = vunpack.c.l.s4 1983009808
          %v6925 = vunpack.c.0.s8 %v6924
          %v6926 = vlaneseq
          %v6927 = vshrl.u32 %v6926, 7
          %v6928 = vsub.s32 %v6925, %v6927
          %v6929 = vrot.slane %v6921, %v6928
          %v6931 = vunpack.c.l.s4 1983009808
          %v6932 = vunpack.c.0.s8 %v6931
          %v6933 = vlaneseq
          %v6934 = vshrl.u32 %v6933, 7
          %v6935 = vsub.s32 %v6932, %v6934
          %v6936 = vrot.slane %v6922, %v6935
          %v6937 = vcombine.low %v6929, %v6936
          %v6938 = vcombine.low %v3613, %v3620
          %v6939 = vcombine.low %v3627, %v3634
          %v6941 = vunpack.c.l.s4 1983009808
          %v6942 = vunpack.c.0.s8 %v6941
          %v6943 = vlaneseq
          %v6944 = vshrl.u32 %v6943, 7
          %v6945 = vsub.s32 %v6942, %v6944
          %v6946 = vrot.slane %v6938, %v6945
          %v6948 = vunpack.c.l.s4 1983009808
          %v6949 = vunpack.c.0.s8 %v6948
          %v6950 = vlaneseq
          %v6951 = vshrl.u32 %v6950, 7
          %v6952 = vsub.s32 %v6949, %v6951
          %v6953 = vrot.slane %v6939, %v6952
          %v6954 = vcombine.low %v6946, %v6953
          %v6955 = vcombine.low %v3641, %v3648
          %v6956 = vcombine.low %v3655, %v3662
          %v6958 = vunpack.c.l.s4 1983009808
          %v6959 = vunpack.c.0.s8 %v6958
          %v6960 = vlaneseq
          %v6961 = vshrl.u32 %v6960, 7
          %v6962 = vsub.s32 %v6959, %v6961
          %v6963 = vrot.slane %v6955, %v6962
          %v6965 = vunpack.c.l.s4 1983009808
          %v6966 = vunpack.c.0.s8 %v6965
          %v6967 = vlaneseq
          %v6968 = vshrl.u32 %v6967, 7
          %v6969 = vsub.s32 %v6966, %v6968
          %v6970 = vrot.slane %v6956, %v6969
          %v6971 = vcombine.low %v6963, %v6970
          %v6972 = vcombine.low %v3669, %v3676
          %v6973 = vcombine.low %v3683, %v3690
          %v6975 = vunpack.c.l.s4 1983009808
          %v6976 = vunpack.c.0.s8 %v6975
          %v6977 = vlaneseq
          %v6978 = vshrl.u32 %v6977, 7
          %v6979 = vsub.s32 %v6976, %v6978
          %v6980 = vrot.slane %v6972, %v6979
          %v6982 = vunpack.c.l.s4 1983009808
          %v6983 = vunpack.c.0.s8 %v6982
          %v6984 = vlaneseq
          %v6985 = vshrl.u32 %v6984, 7
          %v6986 = vsub.s32 %v6983, %v6985
          %v6987 = vrot.slane %v6973, %v6986
          %v6988 = vcombine.low %v6980, %v6987
          %v6989 = vcombine.low %v3697, %v3704
          %v6990 = vcombine.low %v3711, %v3718
          %v6992 = vunpack.c.l.s4 1983009808
          %v6993 = vunpack.c.0.s8 %v6992
          %v6994 = vlaneseq
          %v6995 = vshrl.u32 %v6994, 7
          %v6996 = vsub.s32 %v6993, %v6995
          %v6997 = vrot.slane %v6989, %v6996
          %v6999 = vunpack.c.l.s4 1983009808
          %v7000 = vunpack.c.0.s8 %v6999
          %v7001 = vlaneseq
          %v7002 = vshrl.u32 %v7001, 7
          %v7003 = vsub.s32 %v7000, %v7002
          %v7004 = vrot.slane %v6990, %v7003
          %v7005 = vcombine.low %v6997, %v7004
          %v7006 = vcombine.low %v3725, %v3732
          %v7007 = vcombine.low %v3739, %v3746
          %v7009 = vunpack.c.l.s4 1983009808
          %v7010 = vunpack.c.0.s8 %v7009
          %v7011 = vlaneseq
          %v7012 = vshrl.u32 %v7011, 7
          %v7013 = vsub.s32 %v7010, %v7012
          %v7014 = vrot.slane %v7006, %v7013
          %v7016 = vunpack.c.l.s4 1983009808
          %v7017 = vunpack.c.0.s8 %v7016
          %v7018 = vlaneseq
          %v7019 = vshrl.u32 %v7018, 7
          %v7020 = vsub.s32 %v7017, %v7019
          %v7021 = vrot.slane %v7007, %v7020
          %v7022 = vcombine.low %v7014, %v7021
          %v7023 = vcombine.low %v3753, %v3760
          %v7024 = vcombine.low %v3767, %v3774
          %v7026 = vunpack.c.l.s4 1983009808
          %v7027 = vunpack.c.0.s8 %v7026
          %v7028 = vlaneseq
          %v7029 = vshrl.u32 %v7028, 7
          %v7030 = vsub.s32 %v7027, %v7029
          %v7031 = vrot.slane %v7023, %v7030
          %v7033 = vunpack.c.l.s4 1983009808
          %v7034 = vunpack.c.0.s8 %v7033
          %v7035 = vlaneseq
          %v7036 = vshrl.u32 %v7035, 7
          %v7037 = vsub.s32 %v7034, %v7036
          %v7038 = vrot.slane %v7024, %v7037
          %v7039 = vcombine.low %v7031, %v7038
          %v7040 = vcombine.low %v3781, %v3788
          %v7041 = vcombine.low %v3795, %v3802
          %v7043 = vunpack.c.l.s4 1983009808
          %v7044 = vunpack.c.0.s8 %v7043
          %v7045 = vlaneseq
          %v7046 = vshrl.u32 %v7045, 7
          %v7047 = vsub.s32 %v7044, %v7046
          %v7048 = vrot.slane %v7040, %v7047
          %v7050 = vunpack.c.l.s4 1983009808
          %v7051 = vunpack.c.0.s8 %v7050
          %v7052 = vlaneseq
          %v7053 = vshrl.u32 %v7052, 7
          %v7054 = vsub.s32 %v7051, %v7053
          %v7055 = vrot.slane %v7041, %v7054
          %v7056 = vcombine.low %v7048, %v7055
          %v7057 = vcombine.low %v3809, %v3816
          %v7058 = vcombine.low %v3823, %v3830
          %v7060 = vunpack.c.l.s4 1983009808
          %v7061 = vunpack.c.0.s8 %v7060
          %v7062 = vlaneseq
          %v7063 = vshrl.u32 %v7062, 7
          %v7064 = vsub.s32 %v7061, %v7063
          %v7065 = vrot.slane %v7057, %v7064
          %v7067 = vunpack.c.l.s4 1983009808
          %v7068 = vunpack.c.0.s8 %v7067
          %v7069 = vlaneseq
          %v7070 = vshrl.u32 %v7069, 7
          %v7071 = vsub.s32 %v7068, %v7070
          %v7072 = vrot.slane %v7058, %v7071
          %v7073 = vcombine.low %v7065, %v7072
          %v7074 = vcombine.low %v3837, %v3844
          %v7075 = vcombine.low %v3851, %v3858
          %v7077 = vunpack.c.l.s4 1983009808
          %v7078 = vunpack.c.0.s8 %v7077
          %v7079 = vlaneseq
          %v7080 = vshrl.u32 %v7079, 7
          %v7081 = vsub.s32 %v7078, %v7080
          %v7082 = vrot.slane %v7074, %v7081
          %v7084 = vunpack.c.l.s4 1983009808
          %v7085 = vunpack.c.0.s8 %v7084
          %v7086 = vlaneseq
          %v7087 = vshrl.u32 %v7086, 7
          %v7088 = vsub.s32 %v7085, %v7087
          %v7089 = vrot.slane %v7075, %v7088
          %v7090 = vcombine.low %v7082, %v7089
          %v7091 = vcombine.low %v3865, %v3872
          %v7092 = vcombine.low %v3879, %v3886
          %v7094 = vunpack.c.l.s4 1983009808
          %v7095 = vunpack.c.0.s8 %v7094
          %v7096 = vlaneseq
          %v7097 = vshrl.u32 %v7096, 7
          %v7098 = vsub.s32 %v7095, %v7097
          %v7099 = vrot.slane %v7091, %v7098
          %v7101 = vunpack.c.l.s4 1983009808
          %v7102 = vunpack.c.0.s8 %v7101
          %v7103 = vlaneseq
          %v7104 = vshrl.u32 %v7103, 7
          %v7105 = vsub.s32 %v7102, %v7104
          %v7106 = vrot.slane %v7092, %v7105
          %v7107 = vcombine.low %v7099, %v7106
          %v7108 = vcombine.low %v3893, %v3900
          %v7109 = vcombine.low %v3907, %v3914
          %v7111 = vunpack.c.l.s4 1983009808
          %v7112 = vunpack.c.0.s8 %v7111
          %v7113 = vlaneseq
          %v7114 = vshrl.u32 %v7113, 7
          %v7115 = vsub.s32 %v7112, %v7114
          %v7116 = vrot.slane %v7108, %v7115
          %v7118 = vunpack.c.l.s4 1983009808
          %v7119 = vunpack.c.0.s8 %v7118
          %v7120 = vlaneseq
          %v7121 = vshrl.u32 %v7120, 7
          %v7122 = vsub.s32 %v7119, %v7121
          %v7123 = vrot.slane %v7109, %v7122
          %v7124 = vcombine.low %v7116, %v7123
          %v7125 = vcombine.low %v3921, %v3928
          %v7126 = vcombine.low %v3935, %v3942
          %v7128 = vunpack.c.l.s4 1983009808
          %v7129 = vunpack.c.0.s8 %v7128
          %v7130 = vlaneseq
          %v7131 = vshrl.u32 %v7130, 7
          %v7132 = vsub.s32 %v7129, %v7131
          %v7133 = vrot.slane %v7125, %v7132
          %v7135 = vunpack.c.l.s4 1983009808
          %v7136 = vunpack.c.0.s8 %v7135
          %v7137 = vlaneseq
          %v7138 = vshrl.u32 %v7137, 7
          %v7139 = vsub.s32 %v7136, %v7138
          %v7140 = vrot.slane %v7126, %v7139
          %v7141 = vcombine.low %v7133, %v7140
          %v7142 = vcombine.low %v3949, %v3956
          %v7143 = vcombine.low %v3963, %v3970
          %v7145 = vunpack.c.l.s4 1983009808
          %v7146 = vunpack.c.0.s8 %v7145
          %v7147 = vlaneseq
          %v7148 = vshrl.u32 %v7147, 7
          %v7149 = vsub.s32 %v7146, %v7148
          %v7150 = vrot.slane %v7142, %v7149
          %v7152 = vunpack.c.l.s4 1983009808
          %v7153 = vunpack.c.0.s8 %v7152
          %v7154 = vlaneseq
          %v7155 = vshrl.u32 %v7154, 7
          %v7156 = vsub.s32 %v7153, %v7155
          %v7157 = vrot.slane %v7143, %v7156
          %v7158 = vcombine.low %v7150, %v7157
          %v7159 = vcombine.low %v3977, %v3984
          %v7160 = vcombine.low %v3991, %v3998
          %v7162 = vunpack.c.l.s4 1983009808
          %v7163 = vunpack.c.0.s8 %v7162
          %v7164 = vlaneseq
          %v7165 = vshrl.u32 %v7164, 7
          %v7166 = vsub.s32 %v7163, %v7165
          %v7167 = vrot.slane %v7159, %v7166
          %v7169 = vunpack.c.l.s4 1983009808
          %v7170 = vunpack.c.0.s8 %v7169
          %v7171 = vlaneseq
          %v7172 = vshrl.u32 %v7171, 7
          %v7173 = vsub.s32 %v7170, %v7172
          %v7174 = vrot.slane %v7160, %v7173
          %v7175 = vcombine.low %v7167, %v7174
          %v7176 = vcombine.low %v4005, %v4012
          %v7177 = vcombine.low %v4019, %v4026
          %v7179 = vunpack.c.l.s4 1983009808
          %v7180 = vunpack.c.0.s8 %v7179
          %v7181 = vlaneseq
          %v7182 = vshrl.u32 %v7181, 7
          %v7183 = vsub.s32 %v7180, %v7182
          %v7184 = vrot.slane %v7176, %v7183
          %v7186 = vunpack.c.l.s4 1983009808
          %v7187 = vunpack.c.0.s8 %v7186
          %v7188 = vlaneseq
          %v7189 = vshrl.u32 %v7188, 7
          %v7190 = vsub.s32 %v7187, %v7189
          %v7191 = vrot.slane %v7177, %v7190
          %v7192 = vcombine.low %v7184, %v7191
          %v7193 = vcombine.low %v4033, %v4040
          %v7194 = vcombine.low %v4047, %v4054
          %v7196 = vunpack.c.l.s4 1983009808
          %v7197 = vunpack.c.0.s8 %v7196
          %v7198 = vlaneseq
          %v7199 = vshrl.u32 %v7198, 7
          %v7200 = vsub.s32 %v7197, %v7199
          %v7201 = vrot.slane %v7193, %v7200
          %v7203 = vunpack.c.l.s4 1983009808
          %v7204 = vunpack.c.0.s8 %v7203
          %v7205 = vlaneseq
          %v7206 = vshrl.u32 %v7205, 7
          %v7207 = vsub.s32 %v7204, %v7206
          %v7208 = vrot.slane %v7194, %v7207
          %v7209 = vcombine.low %v7201, %v7208
          %v7210 = vcombine.low %v4061, %v4068
          %v7211 = vcombine.low %v4075, %v4082
          %v7213 = vunpack.c.l.s4 1983009808
          %v7214 = vunpack.c.0.s8 %v7213
          %v7215 = vlaneseq
          %v7216 = vshrl.u32 %v7215, 7
          %v7217 = vsub.s32 %v7214, %v7216
          %v7218 = vrot.slane %v7210, %v7217
          %v7220 = vunpack.c.l.s4 1983009808
          %v7221 = vunpack.c.0.s8 %v7220
          %v7222 = vlaneseq
          %v7223 = vshrl.u32 %v7222, 7
          %v7224 = vsub.s32 %v7221, %v7223
          %v7225 = vrot.slane %v7211, %v7224
          %v7226 = vcombine.low %v7218, %v7225
          %v7227 = vcombine.low %v4089, %v4096
          %v7228 = vcombine.low %v4103, %v4110
          %v7230 = vunpack.c.l.s4 1983009808
          %v7231 = vunpack.c.0.s8 %v7230
          %v7232 = vlaneseq
          %v7233 = vshrl.u32 %v7232, 7
          %v7234 = vsub.s32 %v7231, %v7233
          %v7235 = vrot.slane %v7227, %v7234
          %v7237 = vunpack.c.l.s4 1983009808
          %v7238 = vunpack.c.0.s8 %v7237
          %v7239 = vlaneseq
          %v7240 = vshrl.u32 %v7239, 7
          %v7241 = vsub.s32 %v7238, %v7240
          %v7242 = vrot.slane %v7228, %v7241
          %v7243 = vcombine.low %v7235, %v7242
          %v7244 = vcombine.low %v4117, %v4124
          %v7245 = vcombine.low %v4131, %v4138
          %v7247 = vunpack.c.l.s4 1983009808
          %v7248 = vunpack.c.0.s8 %v7247
          %v7249 = vlaneseq
          %v7250 = vshrl.u32 %v7249, 7
          %v7251 = vsub.s32 %v7248, %v7250
          %v7252 = vrot.slane %v7244, %v7251
          %v7254 = vunpack.c.l.s4 1983009808
          %v7255 = vunpack.c.0.s8 %v7254
          %v7256 = vlaneseq
          %v7257 = vshrl.u32 %v7256, 7
          %v7258 = vsub.s32 %v7255, %v7257
          %v7259 = vrot.slane %v7245, %v7258
          %v7260 = vcombine.low %v7252, %v7259
          %v7261 = vcombine.low %v4145, %v4152
          %v7262 = vcombine.low %v4159, %v4166
          %v7264 = vunpack.c.l.s4 1983009808
          %v7265 = vunpack.c.0.s8 %v7264
          %v7266 = vlaneseq
          %v7267 = vshrl.u32 %v7266, 7
          %v7268 = vsub.s32 %v7265, %v7267
          %v7269 = vrot.slane %v7261, %v7268
          %v7271 = vunpack.c.l.s4 1983009808
          %v7272 = vunpack.c.0.s8 %v7271
          %v7273 = vlaneseq
          %v7274 = vshrl.u32 %v7273, 7
          %v7275 = vsub.s32 %v7272, %v7274
          %v7276 = vrot.slane %v7262, %v7275
          %v7277 = vcombine.low %v7269, %v7276
          %v7278 = vcombine.low %v4173, %v4180
          %v7279 = vcombine.low %v4187, %v4194
          %v7281 = vunpack.c.l.s4 1983009808
          %v7282 = vunpack.c.0.s8 %v7281
          %v7283 = vlaneseq
          %v7284 = vshrl.u32 %v7283, 7
          %v7285 = vsub.s32 %v7282, %v7284
          %v7286 = vrot.slane %v7278, %v7285
          %v7288 = vunpack.c.l.s4 1983009808
          %v7289 = vunpack.c.0.s8 %v7288
          %v7290 = vlaneseq
          %v7291 = vshrl.u32 %v7290, 7
          %v7292 = vsub.s32 %v7289, %v7291
          %v7293 = vrot.slane %v7279, %v7292
          %v7294 = vcombine.low %v7286, %v7293
          %v7295 = vcombine.low %v4201, %v4208
          %v7296 = vcombine.low %v4215, %v4222
          %v7298 = vunpack.c.l.s4 1983009808
          %v7299 = vunpack.c.0.s8 %v7298
          %v7300 = vlaneseq
          %v7301 = vshrl.u32 %v7300, 7
          %v7302 = vsub.s32 %v7299, %v7301
          %v7303 = vrot.slane %v7295, %v7302
          %v7305 = vunpack.c.l.s4 1983009808
          %v7306 = vunpack.c.0.s8 %v7305
          %v7307 = vlaneseq
          %v7308 = vshrl.u32 %v7307, 7
          %v7309 = vsub.s32 %v7306, %v7308
          %v7310 = vrot.slane %v7296, %v7309
          %v7311 = vcombine.low %v7303, %v7310
          %v7312 = vcombine.low %v4229, %v4236
          %v7313 = vcombine.low %v4243, %v4250
          %v7315 = vunpack.c.l.s4 1983009808
          %v7316 = vunpack.c.0.s8 %v7315
          %v7317 = vlaneseq
          %v7318 = vshrl.u32 %v7317, 7
          %v7319 = vsub.s32 %v7316, %v7318
          %v7320 = vrot.slane %v7312, %v7319
          %v7322 = vunpack.c.l.s4 1983009808
          %v7323 = vunpack.c.0.s8 %v7322
          %v7324 = vlaneseq
          %v7325 = vshrl.u32 %v7324, 7
          %v7326 = vsub.s32 %v7323, %v7325
          %v7327 = vrot.slane %v7313, %v7326
          %v7328 = vcombine.low %v7320, %v7327
          %v7329 = vcombine.low %v4257, %v4264
          %v7330 = vcombine.low %v4271, %v4278
          %v7332 = vunpack.c.l.s4 1983009808
          %v7333 = vunpack.c.0.s8 %v7332
          %v7334 = vlaneseq
          %v7335 = vshrl.u32 %v7334, 7
          %v7336 = vsub.s32 %v7333, %v7335
          %v7337 = vrot.slane %v7329, %v7336
          %v7339 = vunpack.c.l.s4 1983009808
          %v7340 = vunpack.c.0.s8 %v7339
          %v7341 = vlaneseq
          %v7342 = vshrl.u32 %v7341, 7
          %v7343 = vsub.s32 %v7340, %v7342
          %v7344 = vrot.slane %v7330, %v7343
          %v7345 = vcombine.low %v7337, %v7344
          %v7346 = vcombine.low %v4285, %v4292
          %v7347 = vcombine.low %v4299, %v4306
          %v7349 = vunpack.c.l.s4 1983009808
          %v7350 = vunpack.c.0.s8 %v7349
          %v7351 = vlaneseq
          %v7352 = vshrl.u32 %v7351, 7
          %v7353 = vsub.s32 %v7350, %v7352
          %v7354 = vrot.slane %v7346, %v7353
          %v7356 = vunpack.c.l.s4 1983009808
          %v7357 = vunpack.c.0.s8 %v7356
          %v7358 = vlaneseq
          %v7359 = vshrl.u32 %v7358, 7
          %v7360 = vsub.s32 %v7357, %v7359
          %v7361 = vrot.slane %v7347, %v7360
          %v7362 = vcombine.low %v7354, %v7361
          %v7363 = vcombine.low %v4313, %v4320
          %v7364 = vcombine.low %v4327, %v4334
          %v7366 = vunpack.c.l.s4 1983009808
          %v7367 = vunpack.c.0.s8 %v7366
          %v7368 = vlaneseq
          %v7369 = vshrl.u32 %v7368, 7
          %v7370 = vsub.s32 %v7367, %v7369
          %v7371 = vrot.slane %v7363, %v7370
          %v7373 = vunpack.c.l.s4 1983009808
          %v7374 = vunpack.c.0.s8 %v7373
          %v7375 = vlaneseq
          %v7376 = vshrl.u32 %v7375, 7
          %v7377 = vsub.s32 %v7374, %v7376
          %v7378 = vrot.slane %v7364, %v7377
          %v7379 = vcombine.low %v7371, %v7378
          %v7380 = vcombine.low %v4341, %v4348
          %v7381 = vcombine.low %v4355, %v4362
          %v7383 = vunpack.c.l.s4 1983009808
          %v7384 = vunpack.c.0.s8 %v7383
          %v7385 = vlaneseq
          %v7386 = vshrl.u32 %v7385, 7
          %v7387 = vsub.s32 %v7384, %v7386
          %v7388 = vrot.slane %v7380, %v7387
          %v7390 = vunpack.c.l.s4 1983009808
          %v7391 = vunpack.c.0.s8 %v7390
          %v7392 = vlaneseq
          %v7393 = vshrl.u32 %v7392, 7
          %v7394 = vsub.s32 %v7391, %v7393
          %v7395 = vrot.slane %v7381, %v7394
          %v7396 = vcombine.low %v7388, %v7395
          %v7397 = vcombine.low %v4369, %v4376
          %v7398 = vcombine.low %v4383, %v4390
          %v7400 = vunpack.c.l.s4 1983009808
          %v7401 = vunpack.c.0.s8 %v7400
          %v7402 = vlaneseq
          %v7403 = vshrl.u32 %v7402, 7
          %v7404 = vsub.s32 %v7401, %v7403
          %v7405 = vrot.slane %v7397, %v7404
          %v7407 = vunpack.c.l.s4 1983009808
          %v7408 = vunpack.c.0.s8 %v7407
          %v7409 = vlaneseq
          %v7410 = vshrl.u32 %v7409, 7
          %v7411 = vsub.s32 %v7408, %v7410
          %v7412 = vrot.slane %v7398, %v7411
          %v7413 = vcombine.low %v7405, %v7412
          %v7414 = vcombine.low %v4397, %v4404
          %v7415 = vcombine.low %v4411, %v4418
          %v7417 = vunpack.c.l.s4 1983009808
          %v7418 = vunpack.c.0.s8 %v7417
          %v7419 = vlaneseq
          %v7420 = vshrl.u32 %v7419, 7
          %v7421 = vsub.s32 %v7418, %v7420
          %v7422 = vrot.slane %v7414, %v7421
          %v7424 = vunpack.c.l.s4 1983009808
          %v7425 = vunpack.c.0.s8 %v7424
          %v7426 = vlaneseq
          %v7427 = vshrl.u32 %v7426, 7
          %v7428 = vsub.s32 %v7425, %v7427
          %v7429 = vrot.slane %v7415, %v7428
          %v7430 = vcombine.low %v7422, %v7429
          %v7431 = vcombine.low %v4425, %v4432
          %v7432 = vcombine.low %v4439, %v4446
          %v7434 = vunpack.c.l.s4 1983009808
          %v7435 = vunpack.c.0.s8 %v7434
          %v7436 = vlaneseq
          %v7437 = vshrl.u32 %v7436, 7
          %v7438 = vsub.s32 %v7435, %v7437
          %v7439 = vrot.slane %v7431, %v7438
          %v7441 = vunpack.c.l.s4 1983009808
          %v7442 = vunpack.c.0.s8 %v7441
          %v7443 = vlaneseq
          %v7444 = vshrl.u32 %v7443, 7
          %v7445 = vsub.s32 %v7442, %v7444
          %v7446 = vrot.slane %v7432, %v7445
          %v7447 = vcombine.low %v7439, %v7446
          %v7448 = vcombine.low %v4453, %v4460
          %v7449 = vcombine.low %v4467, %v4474
          %v7451 = vunpack.c.l.s4 1983009808
          %v7452 = vunpack.c.0.s8 %v7451
          %v7453 = vlaneseq
          %v7454 = vshrl.u32 %v7453, 7
          %v7455 = vsub.s32 %v7452, %v7454
          %v7456 = vrot.slane %v7448, %v7455
          %v7458 = vunpack.c.l.s4 1983009808
          %v7459 = vunpack.c.0.s8 %v7458
          %v7460 = vlaneseq
          %v7461 = vshrl.u32 %v7460, 7
          %v7462 = vsub.s32 %v7459, %v7461
          %v7463 = vrot.slane %v7449, %v7462
          %v7464 = vcombine.low %v7456, %v7463
          %v7465 = vcombine.low %v4481, %v4488
          %v7466 = vcombine.low %v4495, %v4502
          %v7468 = vunpack.c.l.s4 1983009808
          %v7469 = vunpack.c.0.s8 %v7468
          %v7470 = vlaneseq
          %v7471 = vshrl.u32 %v7470, 7
          %v7472 = vsub.s32 %v7469, %v7471
          %v7473 = vrot.slane %v7465, %v7472
          %v7475 = vunpack.c.l.s4 1983009808
          %v7476 = vunpack.c.0.s8 %v7475
          %v7477 = vlaneseq
          %v7478 = vshrl.u32 %v7477, 7
          %v7479 = vsub.s32 %v7476, %v7478
          %v7480 = vrot.slane %v7466, %v7479
          %v7481 = vcombine.low %v7473, %v7480
          %v7482 = vcombine.low %v4509, %v4516
          %v7483 = vcombine.low %v4523, %v4530
          %v7485 = vunpack.c.l.s4 1983009808
          %v7486 = vunpack.c.0.s8 %v7485
          %v7487 = vlaneseq
          %v7488 = vshrl.u32 %v7487, 7
          %v7489 = vsub.s32 %v7486, %v7488
          %v7490 = vrot.slane %v7482, %v7489
          %v7492 = vunpack.c.l.s4 1983009808
          %v7493 = vunpack.c.0.s8 %v7492
          %v7494 = vlaneseq
          %v7495 = vshrl.u32 %v7494, 7
          %v7496 = vsub.s32 %v7493, %v7495
          %v7497 = vrot.slane %v7483, %v7496
          %v7498 = vcombine.low %v7490, %v7497
          %v7499 = vcombine.low %v4537, %v4544
          %v7500 = vcombine.low %v4551, %v4558
          %v7502 = vunpack.c.l.s4 1983009808
          %v7503 = vunpack.c.0.s8 %v7502
          %v7504 = vlaneseq
          %v7505 = vshrl.u32 %v7504, 7
          %v7506 = vsub.s32 %v7503, %v7505
          %v7507 = vrot.slane %v7499, %v7506
          %v7509 = vunpack.c.l.s4 1983009808
          %v7510 = vunpack.c.0.s8 %v7509
          %v7511 = vlaneseq
          %v7512 = vshrl.u32 %v7511, 7
          %v7513 = vsub.s32 %v7510, %v7512
          %v7514 = vrot.slane %v7500, %v7513
          %v7515 = vcombine.low %v7507, %v7514
          %v7516 = vcombine.low %v4565, %v4572
          %v7517 = vcombine.low %v4579, %v4586
          %v7519 = vunpack.c.l.s4 1983009808
          %v7520 = vunpack.c.0.s8 %v7519
          %v7521 = vlaneseq
          %v7522 = vshrl.u32 %v7521, 7
          %v7523 = vsub.s32 %v7520, %v7522
          %v7524 = vrot.slane %v7516, %v7523
          %v7526 = vunpack.c.l.s4 1983009808
          %v7527 = vunpack.c.0.s8 %v7526
          %v7528 = vlaneseq
          %v7529 = vshrl.u32 %v7528, 7
          %v7530 = vsub.s32 %v7527, %v7529
          %v7531 = vrot.slane %v7517, %v7530
          %v7532 = vcombine.low %v7524, %v7531
          %v7533 = vcombine.low %v4593, %v4600
          %v7534 = vcombine.low %v4607, %v4614
          %v7536 = vunpack.c.l.s4 1983009808
          %v7537 = vunpack.c.0.s8 %v7536
          %v7538 = vlaneseq
          %v7539 = vshrl.u32 %v7538, 7
          %v7540 = vsub.s32 %v7537, %v7539
          %v7541 = vrot.slane %v7533, %v7540
          %v7543 = vunpack.c.l.s4 1983009808
          %v7544 = vunpack.c.0.s8 %v7543
          %v7545 = vlaneseq
          %v7546 = vshrl.u32 %v7545, 7
          %v7547 = vsub.s32 %v7544, %v7546
          %v7548 = vrot.slane %v7534, %v7547
          %v7549 = vcombine.low %v7541, %v7548
          %v7550 = vcombine.low %v4621, %v4628
          %v7551 = vcombine.low %v4635, %v4642
          %v7553 = vunpack.c.l.s4 1983009808
          %v7554 = vunpack.c.0.s8 %v7553
          %v7555 = vlaneseq
          %v7556 = vshrl.u32 %v7555, 7
          %v7557 = vsub.s32 %v7554, %v7556
          %v7558 = vrot.slane %v7550, %v7557
          %v7560 = vunpack.c.l.s4 1983009808
          %v7561 = vunpack.c.0.s8 %v7560
          %v7562 = vlaneseq
          %v7563 = vshrl.u32 %v7562, 7
          %v7564 = vsub.s32 %v7561, %v7563
          %v7565 = vrot.slane %v7551, %v7564
          %v7566 = vcombine.low %v7558, %v7565
          %v7567 = vcombine.low %v4649, %v4656
          %v7568 = vcombine.low %v4663, %v4670
          %v7570 = vunpack.c.l.s4 1983009808
          %v7571 = vunpack.c.0.s8 %v7570
          %v7572 = vlaneseq
          %v7573 = vshrl.u32 %v7572, 7
          %v7574 = vsub.s32 %v7571, %v7573
          %v7575 = vrot.slane %v7567, %v7574
          %v7577 = vunpack.c.l.s4 1983009808
          %v7578 = vunpack.c.0.s8 %v7577
          %v7579 = vlaneseq
          %v7580 = vshrl.u32 %v7579, 7
          %v7581 = vsub.s32 %v7578, %v7580
          %v7582 = vrot.slane %v7568, %v7581
          %v7583 = vcombine.low %v7575, %v7582
          %v7584 = vcombine.low %v4677, %v4684
          %v7585 = vcombine.low %v4691, %v4698
          %v7587 = vunpack.c.l.s4 1983009808
          %v7588 = vunpack.c.0.s8 %v7587
          %v7589 = vlaneseq
          %v7590 = vshrl.u32 %v7589, 7
          %v7591 = vsub.s32 %v7588, %v7590
          %v7592 = vrot.slane %v7584, %v7591
          %v7594 = vunpack.c.l.s4 1983009808
          %v7595 = vunpack.c.0.s8 %v7594
          %v7596 = vlaneseq
          %v7597 = vshrl.u32 %v7596, 7
          %v7598 = vsub.s32 %v7595, %v7597
          %v7599 = vrot.slane %v7585, %v7598
          %v7600 = vcombine.low %v7592, %v7599
          %v7601 = vcombine.low %v4705, %v4712
          %v7602 = vcombine.low %v4719, %v4726
          %v7604 = vunpack.c.l.s4 1983009808
          %v7605 = vunpack.c.0.s8 %v7604
          %v7606 = vlaneseq
          %v7607 = vshrl.u32 %v7606, 7
          %v7608 = vsub.s32 %v7605, %v7607
          %v7609 = vrot.slane %v7601, %v7608
          %v7611 = vunpack.c.l.s4 1983009808
          %v7612 = vunpack.c.0.s8 %v7611
          %v7613 = vlaneseq
          %v7614 = vshrl.u32 %v7613, 7
          %v7615 = vsub.s32 %v7612, %v7614
          %v7616 = vrot.slane %v7602, %v7615
          %v7617 = vcombine.low %v7609, %v7616
          %v7618 = vcombine.low %v4733, %v4740
          %v7619 = vcombine.low %v4747, %v4754
          %v7621 = vunpack.c.l.s4 1983009808
          %v7622 = vunpack.c.0.s8 %v7621
          %v7623 = vlaneseq
          %v7624 = vshrl.u32 %v7623, 7
          %v7625 = vsub.s32 %v7622, %v7624
          %v7626 = vrot.slane %v7618, %v7625
          %v7628 = vunpack.c.l.s4 1983009808
          %v7629 = vunpack.c.0.s8 %v7628
          %v7630 = vlaneseq
          %v7631 = vshrl.u32 %v7630, 7
          %v7632 = vsub.s32 %v7629, %v7631
          %v7633 = vrot.slane %v7619, %v7632
          %v7634 = vcombine.low %v7626, %v7633
          %v7635 = vcombine.low %v4761, %v4768
          %v7636 = vcombine.low %v4775, %v4782
          %v7638 = vunpack.c.l.s4 1983009808
          %v7639 = vunpack.c.0.s8 %v7638
          %v7640 = vlaneseq
          %v7641 = vshrl.u32 %v7640, 7
          %v7642 = vsub.s32 %v7639, %v7641
          %v7643 = vrot.slane %v7635, %v7642
          %v7645 = vunpack.c.l.s4 1983009808
          %v7646 = vunpack.c.0.s8 %v7645
          %v7647 = vlaneseq
          %v7648 = vshrl.u32 %v7647, 7
          %v7649 = vsub.s32 %v7646, %v7648
          %v7650 = vrot.slane %v7636, %v7649
          %v7651 = vcombine.low %v7643, %v7650
          %v7652 = vcombine.low %v4789, %v4796
          %v7653 = vcombine.low %v4803, %v4810
          %v7655 = vunpack.c.l.s4 1983009808
          %v7656 = vunpack.c.0.s8 %v7655
          %v7657 = vlaneseq
          %v7658 = vshrl.u32 %v7657, 7
          %v7659 = vsub.s32 %v7656, %v7658
          %v7660 = vrot.slane %v7652, %v7659
          %v7662 = vunpack.c.l.s4 1983009808
          %v7663 = vunpack.c.0.s8 %v7662
          %v7664 = vlaneseq
          %v7665 = vshrl.u32 %v7664, 7
          %v7666 = vsub.s32 %v7663, %v7665
          %v7667 = vrot.slane %v7653, %v7666
          %v7668 = vcombine.low %v7660, %v7667
          %v7669 = vcombine.low %v4817, %v4824
          %v7670 = vcombine.low %v4831, %v4838
          %v7672 = vunpack.c.l.s4 1983009808
          %v7673 = vunpack.c.0.s8 %v7672
          %v7674 = vlaneseq
          %v7675 = vshrl.u32 %v7674, 7
          %v7676 = vsub.s32 %v7673, %v7675
          %v7677 = vrot.slane %v7669, %v7676
          %v7679 = vunpack.c.l.s4 1983009808
          %v7680 = vunpack.c.0.s8 %v7679
          %v7681 = vlaneseq
          %v7682 = vshrl.u32 %v7681, 7
          %v7683 = vsub.s32 %v7680, %v7682
          %v7684 = vrot.slane %v7670, %v7683
          %v7685 = vcombine.low %v7677, %v7684
          %v7686 = vcombine.low %v4845, %v4852
          %v7687 = vcombine.low %v4859, %v4866
          %v7689 = vunpack.c.l.s4 1983009808
          %v7690 = vunpack.c.0.s8 %v7689
          %v7691 = vlaneseq
          %v7692 = vshrl.u32 %v7691, 7
          %v7693 = vsub.s32 %v7690, %v7692
          %v7694 = vrot.slane %v7686, %v7693
          %v7696 = vunpack.c.l.s4 1983009808
          %v7697 = vunpack.c.0.s8 %v7696
          %v7698 = vlaneseq
          %v7699 = vshrl.u32 %v7698, 7
          %v7700 = vsub.s32 %v7697, %v7699
          %v7701 = vrot.slane %v7687, %v7700
          %v7702 = vcombine.low %v7694, %v7701
          %v7703 = vcombine.low %v4873, %v4880
          %v7704 = vcombine.low %v4887, %v4894
          %v7706 = vunpack.c.l.s4 1983009808
          %v7707 = vunpack.c.0.s8 %v7706
          %v7708 = vlaneseq
          %v7709 = vshrl.u32 %v7708, 7
          %v7710 = vsub.s32 %v7707, %v7709
          %v7711 = vrot.slane %v7703, %v7710
          %v7713 = vunpack.c.l.s4 1983009808
          %v7714 = vunpack.c.0.s8 %v7713
          %v7715 = vlaneseq
          %v7716 = vshrl.u32 %v7715, 7
          %v7717 = vsub.s32 %v7714, %v7716
          %v7718 = vrot.slane %v7704, %v7717
          %v7719 = vcombine.low %v7711, %v7718
          %v7720 = vcombine.low %v4901, %v4908
          %v7721 = vcombine.low %v4915, %v4922
          %v7723 = vunpack.c.l.s4 1983009808
          %v7724 = vunpack.c.0.s8 %v7723
          %v7725 = vlaneseq
          %v7726 = vshrl.u32 %v7725, 7
          %v7727 = vsub.s32 %v7724, %v7726
          %v7728 = vrot.slane %v7720, %v7727
          %v7730 = vunpack.c.l.s4 1983009808
          %v7731 = vunpack.c.0.s8 %v7730
          %v7732 = vlaneseq
          %v7733 = vshrl.u32 %v7732, 7
          %v7734 = vsub.s32 %v7731, %v7733
          %v7735 = vrot.slane %v7721, %v7734
          %v7736 = vcombine.low %v7728, %v7735
          %v7737 = vcombine.low %v4929, %v4936
          %v7738 = vcombine.low %v4943, %v4950
          %v7740 = vunpack.c.l.s4 1983009808
          %v7741 = vunpack.c.0.s8 %v7740
          %v7742 = vlaneseq
          %v7743 = vshrl.u32 %v7742, 7
          %v7744 = vsub.s32 %v7741, %v7743
          %v7745 = vrot.slane %v7737, %v7744
          %v7747 = vunpack.c.l.s4 1983009808
          %v7748 = vunpack.c.0.s8 %v7747
          %v7749 = vlaneseq
          %v7750 = vshrl.u32 %v7749, 7
          %v7751 = vsub.s32 %v7748, %v7750
          %v7752 = vrot.slane %v7738, %v7751
          %v7753 = vcombine.low %v7745, %v7752
          %v7754 = vcombine.low %v4957, %v4964
          %v7755 = vcombine.low %v4971, %v4978
          %v7757 = vunpack.c.l.s4 1983009808
          %v7758 = vunpack.c.0.s8 %v7757
          %v7759 = vlaneseq
          %v7760 = vshrl.u32 %v7759, 7
          %v7761 = vsub.s32 %v7758, %v7760
          %v7762 = vrot.slane %v7754, %v7761
          %v7764 = vunpack.c.l.s4 1983009808
          %v7765 = vunpack.c.0.s8 %v7764
          %v7766 = vlaneseq
          %v7767 = vshrl.u32 %v7766, 7
          %v7768 = vsub.s32 %v7765, %v7767
          %v7769 = vrot.slane %v7755, %v7768
          %v7770 = vcombine.low %v7762, %v7769
          %v7771 = vcombine.low %v4985, %v4992
          %v7772 = vcombine.low %v4999, %v5006
          %v7774 = vunpack.c.l.s4 1983009808
          %v7775 = vunpack.c.0.s8 %v7774
          %v7776 = vlaneseq
          %v7777 = vshrl.u32 %v7776, 7
          %v7778 = vsub.s32 %v7775, %v7777
          %v7779 = vrot.slane %v7771, %v7778
          %v7781 = vunpack.c.l.s4 1983009808
          %v7782 = vunpack.c.0.s8 %v7781
          %v7783 = vlaneseq
          %v7784 = vshrl.u32 %v7783, 7
          %v7785 = vsub.s32 %v7782, %v7784
          %v7786 = vrot.slane %v7772, %v7785
          %v7787 = vcombine.low %v7779, %v7786
          %v7788 = vcombine.low %v5013, %v5020
          %v7789 = vcombine.low %v5027, %v5034
          %v7791 = vunpack.c.l.s4 1983009808
          %v7792 = vunpack.c.0.s8 %v7791
          %v7793 = vlaneseq
          %v7794 = vshrl.u32 %v7793, 7
          %v7795 = vsub.s32 %v7792, %v7794
          %v7796 = vrot.slane %v7788, %v7795
          %v7798 = vunpack.c.l.s4 1983009808
          %v7799 = vunpack.c.0.s8 %v7798
          %v7800 = vlaneseq
          %v7801 = vshrl.u32 %v7800, 7
          %v7802 = vsub.s32 %v7799, %v7801
          %v7803 = vrot.slane %v7789, %v7802
          %v7804 = vcombine.low %v7796, %v7803
          %v7805 = vcombine.low %v5041, %v5048
          %v7806 = vcombine.low %v5055, %v5062
          %v7808 = vunpack.c.l.s4 1983009808
          %v7809 = vunpack.c.0.s8 %v7808
          %v7810 = vlaneseq
          %v7811 = vshrl.u32 %v7810, 7
          %v7812 = vsub.s32 %v7809, %v7811
          %v7813 = vrot.slane %v7805, %v7812
          %v7815 = vunpack.c.l.s4 1983009808
          %v7816 = vunpack.c.0.s8 %v7815
          %v7817 = vlaneseq
          %v7818 = vshrl.u32 %v7817, 7
          %v7819 = vsub.s32 %v7816, %v7818
          %v7820 = vrot.slane %v7806, %v7819
          %v7821 = vcombine.low %v7813, %v7820
          %v7822 = vcombine.low %v5069, %v5076
          %v7823 = vcombine.low %v5083, %v5090
          %v7825 = vunpack.c.l.s4 1983009808
          %v7826 = vunpack.c.0.s8 %v7825
          %v7827 = vlaneseq
          %v7828 = vshrl.u32 %v7827, 7
          %v7829 = vsub.s32 %v7826, %v7828
          %v7830 = vrot.slane %v7822, %v7829
          %v7832 = vunpack.c.l.s4 1983009808
          %v7833 = vunpack.c.0.s8 %v7832
          %v7834 = vlaneseq
          %v7835 = vshrl.u32 %v7834, 7
          %v7836 = vsub.s32 %v7833, %v7835
          %v7837 = vrot.slane %v7823, %v7836
          %v7838 = vcombine.low %v7830, %v7837
          %v7839 = vcombine.low %v5097, %v5104
          %v7840 = vcombine.low %v5111, %v5118
          %v7842 = vunpack.c.l.s4 1983009808
          %v7843 = vunpack.c.0.s8 %v7842
          %v7844 = vlaneseq
          %v7845 = vshrl.u32 %v7844, 7
          %v7846 = vsub.s32 %v7843, %v7845
          %v7847 = vrot.slane %v7839, %v7846
          %v7849 = vunpack.c.l.s4 1983009808
          %v7850 = vunpack.c.0.s8 %v7849
          %v7851 = vlaneseq
          %v7852 = vshrl.u32 %v7851, 7
          %v7853 = vsub.s32 %v7850, %v7852
          %v7854 = vrot.slane %v7840, %v7853
          %v7855 = vcombine.low %v7847, %v7854
          %v7856 = vcombine.low %v5125, %v5132
          %v7857 = vcombine.low %v5139, %v5146
          %v7859 = vunpack.c.l.s4 1983009808
          %v7860 = vunpack.c.0.s8 %v7859
          %v7861 = vlaneseq
          %v7862 = vshrl.u32 %v7861, 7
          %v7863 = vsub.s32 %v7860, %v7862
          %v7864 = vrot.slane %v7856, %v7863
          %v7866 = vunpack.c.l.s4 1983009808
          %v7867 = vunpack.c.0.s8 %v7866
          %v7868 = vlaneseq
          %v7869 = vshrl.u32 %v7868, 7
          %v7870 = vsub.s32 %v7867, %v7869
          %v7871 = vrot.slane %v7857, %v7870
          %v7872 = vcombine.low %v7864, %v7871
          %v7873 = vcombine.low %v5153, %v5160
          %v7874 = vcombine.low %v5167, %v5174
          %v7876 = vunpack.c.l.s4 1983009808
          %v7877 = vunpack.c.0.s8 %v7876
          %v7878 = vlaneseq
          %v7879 = vshrl.u32 %v7878, 7
          %v7880 = vsub.s32 %v7877, %v7879
          %v7881 = vrot.slane %v7873, %v7880
          %v7883 = vunpack.c.l.s4 1983009808
          %v7884 = vunpack.c.0.s8 %v7883
          %v7885 = vlaneseq
          %v7886 = vshrl.u32 %v7885, 7
          %v7887 = vsub.s32 %v7884, %v7886
          %v7888 = vrot.slane %v7874, %v7887
          %v7889 = vcombine.low %v7881, %v7888
          %v7890 = vcombine.low %v5181, %v5188
          %v7891 = vcombine.low %v5195, %v5202
          %v7893 = vunpack.c.l.s4 1983009808
          %v7894 = vunpack.c.0.s8 %v7893
          %v7895 = vlaneseq
          %v7896 = vshrl.u32 %v7895, 7
          %v7897 = vsub.s32 %v7894, %v7896
          %v7898 = vrot.slane %v7890, %v7897
          %v7900 = vunpack.c.l.s4 1983009808
          %v7901 = vunpack.c.0.s8 %v7900
          %v7902 = vlaneseq
          %v7903 = vshrl.u32 %v7902, 7
          %v7904 = vsub.s32 %v7901, %v7903
          %v7905 = vrot.slane %v7891, %v7904
          %v7906 = vcombine.low %v7898, %v7905
          %v7907 = vcombine.low %v5209, %v5216
          %v7908 = vcombine.low %v5223, %v5230
          %v7910 = vunpack.c.l.s4 1983009808
          %v7911 = vunpack.c.0.s8 %v7910
          %v7912 = vlaneseq
          %v7913 = vshrl.u32 %v7912, 7
          %v7914 = vsub.s32 %v7911, %v7913
          %v7915 = vrot.slane %v7907, %v7914
          %v7917 = vunpack.c.l.s4 1983009808
          %v7918 = vunpack.c.0.s8 %v7917
          %v7919 = vlaneseq
          %v7920 = vshrl.u32 %v7919, 7
          %v7921 = vsub.s32 %v7918, %v7920
          %v7922 = vrot.slane %v7908, %v7921
          %v7923 = vcombine.low %v7915, %v7922
          %v7924 = vcombine.low %v5237, %v5244
          %v7925 = vcombine.low %v5251, %v5258
          %v7927 = vunpack.c.l.s4 1983009808
          %v7928 = vunpack.c.0.s8 %v7927
          %v7929 = vlaneseq
          %v7930 = vshrl.u32 %v7929, 7
          %v7931 = vsub.s32 %v7928, %v7930
          %v7932 = vrot.slane %v7924, %v7931
          %v7934 = vunpack.c.l.s4 1983009808
          %v7935 = vunpack.c.0.s8 %v7934
          %v7936 = vlaneseq
          %v7937 = vshrl.u32 %v7936, 7
          %v7938 = vsub.s32 %v7935, %v7937
          %v7939 = vrot.slane %v7925, %v7938
          %v7940 = vcombine.low %v7932, %v7939
          %v7941 = vcombine.low %v5265, %v5272
          %v7942 = vcombine.low %v5279, %v5286
          %v7944 = vunpack.c.l.s4 1983009808
          %v7945 = vunpack.c.0.s8 %v7944
          %v7946 = vlaneseq
          %v7947 = vshrl.u32 %v7946, 7
          %v7948 = vsub.s32 %v7945, %v7947
          %v7949 = vrot.slane %v7941, %v7948
          %v7951 = vunpack.c.l.s4 1983009808
          %v7952 = vunpack.c.0.s8 %v7951
          %v7953 = vlaneseq
          %v7954 = vshrl.u32 %v7953, 7
          %v7955 = vsub.s32 %v7952, %v7954
          %v7956 = vrot.slane %v7942, %v7955
          %v7957 = vcombine.low %v7949, %v7956
          %v7958 = vcombine.low %v5293, %v5300
          %v7959 = vcombine.low %v5307, %v5314
          %v7961 = vunpack.c.l.s4 1983009808
          %v7962 = vunpack.c.0.s8 %v7961
          %v7963 = vlaneseq
          %v7964 = vshrl.u32 %v7963, 7
          %v7965 = vsub.s32 %v7962, %v7964
          %v7966 = vrot.slane %v7958, %v7965
          %v7968 = vunpack.c.l.s4 1983009808
          %v7969 = vunpack.c.0.s8 %v7968
          %v7970 = vlaneseq
          %v7971 = vshrl.u32 %v7970, 7
          %v7972 = vsub.s32 %v7969, %v7971
          %v7973 = vrot.slane %v7959, %v7972
          %v7974 = vcombine.low %v7966, %v7973
          %v7975 = vcombine.low %v5321, %v5328
          %v7976 = vcombine.low %v5335, %v5342
          %v7978 = vunpack.c.l.s4 1983009808
          %v7979 = vunpack.c.0.s8 %v7978
          %v7980 = vlaneseq
          %v7981 = vshrl.u32 %v7980, 7
          %v7982 = vsub.s32 %v7979, %v7981
          %v7983 = vrot.slane %v7975, %v7982
          %v7985 = vunpack.c.l.s4 1983009808
          %v7986 = vunpack.c.0.s8 %v7985
          %v7987 = vlaneseq
          %v7988 = vshrl.u32 %v7987, 7
          %v7989 = vsub.s32 %v7986, %v7988
          %v7990 = vrot.slane %v7976, %v7989
          %v7991 = vcombine.low %v7983, %v7990
          %v7992 = vcombine.low %v5349, %v5356
          %v7993 = vcombine.low %v5363, %v5370
          %v7995 = vunpack.c.l.s4 1983009808
          %v7996 = vunpack.c.0.s8 %v7995
          %v7997 = vlaneseq
          %v7998 = vshrl.u32 %v7997, 7
          %v7999 = vsub.s32 %v7996, %v7998
          %v8000 = vrot.slane %v7992, %v7999
          %v8002 = vunpack.c.l.s4 1983009808
          %v8003 = vunpack.c.0.s8 %v8002
          %v8004 = vlaneseq
          %v8005 = vshrl.u32 %v8004, 7
          %v8006 = vsub.s32 %v8003, %v8005
          %v8007 = vrot.slane %v7993, %v8006
          %v8008 = vcombine.low %v8000, %v8007
          %v8009 = vcombine.low %v5377, %v5384
          %v8010 = vcombine.low %v5391, %v5398
          %v8012 = vunpack.c.l.s4 1983009808
          %v8013 = vunpack.c.0.s8 %v8012
          %v8014 = vlaneseq
          %v8015 = vshrl.u32 %v8014, 7
          %v8016 = vsub.s32 %v8013, %v8015
          %v8017 = vrot.slane %v8009, %v8016
          %v8019 = vunpack.c.l.s4 1983009808
          %v8020 = vunpack.c.0.s8 %v8019
          %v8021 = vlaneseq
          %v8022 = vshrl.u32 %v8021, 7
          %v8023 = vsub.s32 %v8020, %v8022
          %v8024 = vrot.slane %v8010, %v8023
          %v8025 = vcombine.low %v8017, %v8024
          %v8026 = vcombine.low %v5405, %v5412
          %v8027 = vcombine.low %v5419, %v5426
          %v8029 = vunpack.c.l.s4 1983009808
          %v8030 = vunpack.c.0.s8 %v8029
          %v8031 = vlaneseq
          %v8032 = vshrl.u32 %v8031, 7
          %v8033 = vsub.s32 %v8030, %v8032
          %v8034 = vrot.slane %v8026, %v8033
          %v8036 = vunpack.c.l.s4 1983009808
          %v8037 = vunpack.c.0.s8 %v8036
          %v8038 = vlaneseq
          %v8039 = vshrl.u32 %v8038, 7
          %v8040 = vsub.s32 %v8037, %v8039
          %v8041 = vrot.slane %v8027, %v8040
          %v8042 = vcombine.low %v8034, %v8041
          %v8043 = vcombine.low %v5433, %v5440
          %v8044 = vcombine.low %v5447, %v5454
          %v8046 = vunpack.c.l.s4 1983009808
          %v8047 = vunpack.c.0.s8 %v8046
          %v8048 = vlaneseq
          %v8049 = vshrl.u32 %v8048, 7
          %v8050 = vsub.s32 %v8047, %v8049
          %v8051 = vrot.slane %v8043, %v8050
          %v8053 = vunpack.c.l.s4 1983009808
          %v8054 = vunpack.c.0.s8 %v8053
          %v8055 = vlaneseq
          %v8056 = vshrl.u32 %v8055, 7
          %v8057 = vsub.s32 %v8054, %v8056
          %v8058 = vrot.slane %v8044, %v8057
          %v8059 = vcombine.low %v8051, %v8058
          %v8060 = vcombine.low %v5461, %v5468
          %v8061 = vcombine.low %v5475, %v5482
          %v8063 = vunpack.c.l.s4 1983009808
          %v8064 = vunpack.c.0.s8 %v8063
          %v8065 = vlaneseq
          %v8066 = vshrl.u32 %v8065, 7
          %v8067 = vsub.s32 %v8064, %v8066
          %v8068 = vrot.slane %v8060, %v8067
          %v8070 = vunpack.c.l.s4 1983009808
          %v8071 = vunpack.c.0.s8 %v8070
          %v8072 = vlaneseq
          %v8073 = vshrl.u32 %v8072, 7
          %v8074 = vsub.s32 %v8071, %v8073
          %v8075 = vrot.slane %v8061, %v8074
          %v8076 = vcombine.low %v8068, %v8075
          %v8077 = vcombine.low %v5489, %v5496
          %v8078 = vcombine.low %v5503, %v5510
          %v8080 = vunpack.c.l.s4 1983009808
          %v8081 = vunpack.c.0.s8 %v8080
          %v8082 = vlaneseq
          %v8083 = vshrl.u32 %v8082, 7
          %v8084 = vsub.s32 %v8081, %v8083
          %v8085 = vrot.slane %v8077, %v8084
          %v8087 = vunpack.c.l.s4 1983009808
          %v8088 = vunpack.c.0.s8 %v8087
          %v8089 = vlaneseq
          %v8090 = vshrl.u32 %v8089, 7
          %v8091 = vsub.s32 %v8088, %v8090
          %v8092 = vrot.slane %v8078, %v8091
          %v8093 = vcombine.low %v8085, %v8092
          %v8094 = vcombine.low %v5517, %v5524
          %v8095 = vcombine.low %v5531, %v5538
          %v8097 = vunpack.c.l.s4 1983009808
          %v8098 = vunpack.c.0.s8 %v8097
          %v8099 = vlaneseq
          %v8100 = vshrl.u32 %v8099, 7
          %v8101 = vsub.s32 %v8098, %v8100
          %v8102 = vrot.slane %v8094, %v8101
          %v8104 = vunpack.c.l.s4 1983009808
          %v8105 = vunpack.c.0.s8 %v8104
          %v8106 = vlaneseq
          %v8107 = vshrl.u32 %v8106, 7
          %v8108 = vsub.s32 %v8105, %v8107
          %v8109 = vrot.slane %v8095, %v8108
          %v8110 = vcombine.low %v8102, %v8109
          %v8111 = vcombine.low %v5545, %v5552
          %v8112 = vcombine.low %v5559, %v5566
          %v8114 = vunpack.c.l.s4 1983009808
          %v8115 = vunpack.c.0.s8 %v8114
          %v8116 = vlaneseq
          %v8117 = vshrl.u32 %v8116, 7
          %v8118 = vsub.s32 %v8115, %v8117
          %v8119 = vrot.slane %v8111, %v8118
          %v8121 = vunpack.c.l.s4 1983009808
          %v8122 = vunpack.c.0.s8 %v8121
          %v8123 = vlaneseq
          %v8124 = vshrl.u32 %v8123, 7
          %v8125 = vsub.s32 %v8122, %v8124
          %v8126 = vrot.slane %v8112, %v8125
          %v8127 = vcombine.low %v8119, %v8126
          %v8128 = vcombine.low %v5573, %v5580
          %v8129 = vcombine.low %v5587, %v5594
          %v8131 = vunpack.c.l.s4 1983009808
          %v8132 = vunpack.c.0.s8 %v8131
          %v8133 = vlaneseq
          %v8134 = vshrl.u32 %v8133, 7
          %v8135 = vsub.s32 %v8132, %v8134
          %v8136 = vrot.slane %v8128, %v8135
          %v8138 = vunpack.c.l.s4 1983009808
          %v8139 = vunpack.c.0.s8 %v8138
          %v8140 = vlaneseq
          %v8141 = vshrl.u32 %v8140, 7
          %v8142 = vsub.s32 %v8139, %v8141
          %v8143 = vrot.slane %v8129, %v8142
          %v8144 = vcombine.low %v8136, %v8143
          %v8145 = vcombine.low %v5601, %v5608
          %v8146 = vcombine.low %v5615, %v5622
          %v8148 = vunpack.c.l.s4 1983009808
          %v8149 = vunpack.c.0.s8 %v8148
          %v8150 = vlaneseq
          %v8151 = vshrl.u32 %v8150, 7
          %v8152 = vsub.s32 %v8149, %v8151
          %v8153 = vrot.slane %v8145, %v8152
          %v8155 = vunpack.c.l.s4 1983009808
          %v8156 = vunpack.c.0.s8 %v8155
          %v8157 = vlaneseq
          %v8158 = vshrl.u32 %v8157, 7
          %v8159 = vsub.s32 %v8156, %v8158
          %v8160 = vrot.slane %v8146, %v8159
          %v8161 = vcombine.low %v8153, %v8160
          %v8162 = vcombine.low %v5629, %v5636
          %v8163 = vcombine.low %v5643, %v5650
          %v8165 = vunpack.c.l.s4 1983009808
          %v8166 = vunpack.c.0.s8 %v8165
          %v8167 = vlaneseq
          %v8168 = vshrl.u32 %v8167, 7
          %v8169 = vsub.s32 %v8166, %v8168
          %v8170 = vrot.slane %v8162, %v8169
          %v8172 = vunpack.c.l.s4 1983009808
          %v8173 = vunpack.c.0.s8 %v8172
          %v8174 = vlaneseq
          %v8175 = vshrl.u32 %v8174, 7
          %v8176 = vsub.s32 %v8173, %v8175
          %v8177 = vrot.slane %v8163, %v8176
          %v8178 = vcombine.low %v8170, %v8177
          %v8179 = vcombine.low %v5657, %v5664
          %v8180 = vcombine.low %v5671, %v5678
          %v8182 = vunpack.c.l.s4 1983009808
          %v8183 = vunpack.c.0.s8 %v8182
          %v8184 = vlaneseq
          %v8185 = vshrl.u32 %v8184, 7
          %v8186 = vsub.s32 %v8183, %v8185
          %v8187 = vrot.slane %v8179, %v8186
          %v8189 = vunpack.c.l.s4 1983009808
          %v8190 = vunpack.c.0.s8 %v8189
          %v8191 = vlaneseq
          %v8192 = vshrl.u32 %v8191, 7
          %v8193 = vsub.s32 %v8190, %v8192
          %v8194 = vrot.slane %v8180, %v8193
          %v8195 = vcombine.low %v8187, %v8194
          %v8196 = vcombine.low %v5685, %v5692
          %v8197 = vcombine.low %v5699, %v5706
          %v8199 = vunpack.c.l.s4 1983009808
          %v8200 = vunpack.c.0.s8 %v8199
          %v8201 = vlaneseq
          %v8202 = vshrl.u32 %v8201, 7
          %v8203 = vsub.s32 %v8200, %v8202
          %v8204 = vrot.slane %v8196, %v8203
          %v8206 = vunpack.c.l.s4 1983009808
          %v8207 = vunpack.c.0.s8 %v8206
          %v8208 = vlaneseq
          %v8209 = vshrl.u32 %v8208, 7
          %v8210 = vsub.s32 %v8207, %v8209
          %v8211 = vrot.slane %v8197, %v8210
          %v8212 = vcombine.low %v8204, %v8211
          %v8213 = vcombine.low %v5713, %v5720
          %v8214 = vcombine.low %v5727, %v5734
          %v8216 = vunpack.c.l.s4 1983009808
          %v8217 = vunpack.c.0.s8 %v8216
          %v8218 = vlaneseq
          %v8219 = vshrl.u32 %v8218, 7
          %v8220 = vsub.s32 %v8217, %v8219
          %v8221 = vrot.slane %v8213, %v8220
          %v8223 = vunpack.c.l.s4 1983009808
          %v8224 = vunpack.c.0.s8 %v8223
          %v8225 = vlaneseq
          %v8226 = vshrl.u32 %v8225, 7
          %v8227 = vsub.s32 %v8224, %v8226
          %v8228 = vrot.slane %v8214, %v8227
          %v8229 = vcombine.low %v8221, %v8228
          %v8230 = vcombine.low %v5741, %v5748
          %v8231 = vcombine.low %v5755, %v5762
          %v8233 = vunpack.c.l.s4 1983009808
          %v8234 = vunpack.c.0.s8 %v8233
          %v8235 = vlaneseq
          %v8236 = vshrl.u32 %v8235, 7
          %v8237 = vsub.s32 %v8234, %v8236
          %v8238 = vrot.slane %v8230, %v8237
          %v8240 = vunpack.c.l.s4 1983009808
          %v8241 = vunpack.c.0.s8 %v8240
          %v8242 = vlaneseq
          %v8243 = vshrl.u32 %v8242, 7
          %v8244 = vsub.s32 %v8241, %v8243
          %v8245 = vrot.slane %v8231, %v8244
          %v8246 = vcombine.low %v8238, %v8245
          %v8247 = vcombine.low %v5769, %v5776
          %v8248 = vcombine.low %v5783, %v5790
          %v8250 = vunpack.c.l.s4 1983009808
          %v8251 = vunpack.c.0.s8 %v8250
          %v8252 = vlaneseq
          %v8253 = vshrl.u32 %v8252, 7
          %v8254 = vsub.s32 %v8251, %v8253
          %v8255 = vrot.slane %v8247, %v8254
          %v8257 = vunpack.c.l.s4 1983009808
          %v8258 = vunpack.c.0.s8 %v8257
          %v8259 = vlaneseq
          %v8260 = vshrl.u32 %v8259, 7
          %v8261 = vsub.s32 %v8258, %v8260
          %v8262 = vrot.slane %v8248, %v8261
          %v8263 = vcombine.low %v8255, %v8262
          %v8264 = vcombine.low %v5797, %v5804
          %v8265 = vcombine.low %v5811, %v5818
          %v8267 = vunpack.c.l.s4 1983009808
          %v8268 = vunpack.c.0.s8 %v8267
          %v8269 = vlaneseq
          %v8270 = vshrl.u32 %v8269, 7
          %v8271 = vsub.s32 %v8268, %v8270
          %v8272 = vrot.slane %v8264, %v8271
          %v8274 = vunpack.c.l.s4 1983009808
          %v8275 = vunpack.c.0.s8 %v8274
          %v8276 = vlaneseq
          %v8277 = vshrl.u32 %v8276, 7
          %v8278 = vsub.s32 %v8275, %v8277
          %v8279 = vrot.slane %v8265, %v8278
          %v8280 = vcombine.low %v8272, %v8279
          %v8281 = vcombine.low %v5825, %v5832
          %v8282 = vcombine.low %v5839, %v5846
          %v8284 = vunpack.c.l.s4 1983009808
          %v8285 = vunpack.c.0.s8 %v8284
          %v8286 = vlaneseq
          %v8287 = vshrl.u32 %v8286, 7
          %v8288 = vsub.s32 %v8285, %v8287
          %v8289 = vrot.slane %v8281, %v8288
          %v8291 = vunpack.c.l.s4 1983009808
          %v8292 = vunpack.c.0.s8 %v8291
          %v8293 = vlaneseq
          %v8294 = vshrl.u32 %v8293, 7
          %v8295 = vsub.s32 %v8292, %v8294
          %v8296 = vrot.slane %v8282, %v8295
          %v8297 = vcombine.low %v8289, %v8296
          %v8298 = vcombine.low %v5853, %v5860
          %v8299 = vcombine.low %v5867, %v5874
          %v8301 = vunpack.c.l.s4 1983009808
          %v8302 = vunpack.c.0.s8 %v8301
          %v8303 = vlaneseq
          %v8304 = vshrl.u32 %v8303, 7
          %v8305 = vsub.s32 %v8302, %v8304
          %v8306 = vrot.slane %v8298, %v8305
          %v8308 = vunpack.c.l.s4 1983009808
          %v8309 = vunpack.c.0.s8 %v8308
          %v8310 = vlaneseq
          %v8311 = vshrl.u32 %v8310, 7
          %v8312 = vsub.s32 %v8309, %v8311
          %v8313 = vrot.slane %v8299, %v8312
          %v8314 = vcombine.low %v8306, %v8313
          %v8315 = vcombine.low %v5881, %v5888
          %v8316 = vcombine.low %v5895, %v5902
          %v8318 = vunpack.c.l.s4 1983009808
          %v8319 = vunpack.c.0.s8 %v8318
          %v8320 = vlaneseq
          %v8321 = vshrl.u32 %v8320, 7
          %v8322 = vsub.s32 %v8319, %v8321
          %v8323 = vrot.slane %v8315, %v8322
          %v8325 = vunpack.c.l.s4 1983009808
          %v8326 = vunpack.c.0.s8 %v8325
          %v8327 = vlaneseq
          %v8328 = vshrl.u32 %v8327, 7
          %v8329 = vsub.s32 %v8326, %v8328
          %v8330 = vrot.slane %v8316, %v8329
          %v8331 = vcombine.low %v8323, %v8330
          %v8332 = vcombine.low %v5909, %v5916
          %v8333 = vcombine.low %v5923, %v5930
          %v8335 = vunpack.c.l.s4 1983009808
          %v8336 = vunpack.c.0.s8 %v8335
          %v8337 = vlaneseq
          %v8338 = vshrl.u32 %v8337, 7
          %v8339 = vsub.s32 %v8336, %v8338
          %v8340 = vrot.slane %v8332, %v8339
          %v8342 = vunpack.c.l.s4 1983009808
          %v8343 = vunpack.c.0.s8 %v8342
          %v8344 = vlaneseq
          %v8345 = vshrl.u32 %v8344, 7
          %v8346 = vsub.s32 %v8343, %v8345
          %v8347 = vrot.slane %v8333, %v8346
          %v8348 = vcombine.low %v8340, %v8347
          %v8349 = vcombine.low %v5937, %v5944
          %v8350 = vcombine.low %v5951, %v5958
          %v8352 = vunpack.c.l.s4 1983009808
          %v8353 = vunpack.c.0.s8 %v8352
          %v8354 = vlaneseq
          %v8355 = vshrl.u32 %v8354, 7
          %v8356 = vsub.s32 %v8353, %v8355
          %v8357 = vrot.slane %v8349, %v8356
          %v8359 = vunpack.c.l.s4 1983009808
          %v8360 = vunpack.c.0.s8 %v8359
          %v8361 = vlaneseq
          %v8362 = vshrl.u32 %v8361, 7
          %v8363 = vsub.s32 %v8360, %v8362
          %v8364 = vrot.slane %v8350, %v8363
          %v8365 = vcombine.low %v8357, %v8364
          %v8366 = vcombine.low %v5965, %v5972
          %v8367 = vcombine.low %v5979, %v5986
          %v8369 = vunpack.c.l.s4 1983009808
          %v8370 = vunpack.c.0.s8 %v8369
          %v8371 = vlaneseq
          %v8372 = vshrl.u32 %v8371, 7
          %v8373 = vsub.s32 %v8370, %v8372
          %v8374 = vrot.slane %v8366, %v8373
          %v8376 = vunpack.c.l.s4 1983009808
          %v8377 = vunpack.c.0.s8 %v8376
          %v8378 = vlaneseq
          %v8379 = vshrl.u32 %v8378, 7
          %v8380 = vsub.s32 %v8377, %v8379
          %v8381 = vrot.slane %v8367, %v8380
          %v8382 = vcombine.low %v8374, %v8381
          %v8383 = vcombine.low %v5993, %v6000
          %v8384 = vcombine.low %v6007, %v6014
          %v8386 = vunpack.c.l.s4 1983009808
          %v8387 = vunpack.c.0.s8 %v8386
          %v8388 = vlaneseq
          %v8389 = vshrl.u32 %v8388, 7
          %v8390 = vsub.s32 %v8387, %v8389
          %v8391 = vrot.slane %v8383, %v8390
          %v8393 = vunpack.c.l.s4 1983009808
          %v8394 = vunpack.c.0.s8 %v8393
          %v8395 = vlaneseq
          %v8396 = vshrl.u32 %v8395, 7
          %v8397 = vsub.s32 %v8394, %v8396
          %v8398 = vrot.slane %v8384, %v8397
          %v8399 = vcombine.low %v8391, %v8398
          %v8400 = vcombine.low %v6021, %v6028
          %v8401 = vcombine.low %v6035, %v6042
          %v8403 = vunpack.c.l.s4 1983009808
          %v8404 = vunpack.c.0.s8 %v8403
          %v8405 = vlaneseq
          %v8406 = vshrl.u32 %v8405, 7
          %v8407 = vsub.s32 %v8404, %v8406
          %v8408 = vrot.slane %v8400, %v8407
          %v8410 = vunpack.c.l.s4 1983009808
          %v8411 = vunpack.c.0.s8 %v8410
          %v8412 = vlaneseq
          %v8413 = vshrl.u32 %v8412, 7
          %v8414 = vsub.s32 %v8411, %v8413
          %v8415 = vrot.slane %v8401, %v8414
          %v8416 = vcombine.low %v8408, %v8415
          %v8417 = vcombine.low %v6049, %v6056
          %v8418 = vcombine.low %v6063, %v6070
          %v8420 = vunpack.c.l.s4 1983009808
          %v8421 = vunpack.c.0.s8 %v8420
          %v8422 = vlaneseq
          %v8423 = vshrl.u32 %v8422, 7
          %v8424 = vsub.s32 %v8421, %v8423
          %v8425 = vrot.slane %v8417, %v8424
          %v8427 = vunpack.c.l.s4 1983009808
          %v8428 = vunpack.c.0.s8 %v8427
          %v8429 = vlaneseq
          %v8430 = vshrl.u32 %v8429, 7
          %v8431 = vsub.s32 %v8428, %v8430
          %v8432 = vrot.slane %v8418, %v8431
          %v8433 = vcombine.low %v8425, %v8432
          %v8434 = vcombine.low %v6077, %v6084
          %v8435 = vcombine.low %v6091, %v6098
          %v8437 = vunpack.c.l.s4 1983009808
          %v8438 = vunpack.c.0.s8 %v8437
          %v8439 = vlaneseq
          %v8440 = vshrl.u32 %v8439, 7
          %v8441 = vsub.s32 %v8438, %v8440
          %v8442 = vrot.slane %v8434, %v8441
          %v8444 = vunpack.c.l.s4 1983009808
          %v8445 = vunpack.c.0.s8 %v8444
          %v8446 = vlaneseq
          %v8447 = vshrl.u32 %v8446, 7
          %v8448 = vsub.s32 %v8445, %v8447
          %v8449 = vrot.slane %v8435, %v8448
          %v8450 = vcombine.low %v8442, %v8449
          %v8451 = vcombine.low %v6105, %v6112
          %v8452 = vcombine.low %v6119, %v6126
          %v8454 = vunpack.c.l.s4 1983009808
          %v8455 = vunpack.c.0.s8 %v8454
          %v8456 = vlaneseq
          %v8457 = vshrl.u32 %v8456, 7
          %v8458 = vsub.s32 %v8455, %v8457
          %v8459 = vrot.slane %v8451, %v8458
          %v8461 = vunpack.c.l.s4 1983009808
          %v8462 = vunpack.c.0.s8 %v8461
          %v8463 = vlaneseq
          %v8464 = vshrl.u32 %v8463, 7
          %v8465 = vsub.s32 %v8462, %v8464
          %v8466 = vrot.slane %v8452, %v8465
          %v8467 = vcombine.low %v8459, %v8466
          %v8468 = vcombine.low %v6133, %v6140
          %v8469 = vcombine.low %v6147, %v6154
          %v8471 = vunpack.c.l.s4 1983009808
          %v8472 = vunpack.c.0.s8 %v8471
          %v8473 = vlaneseq
          %v8474 = vshrl.u32 %v8473, 7
          %v8475 = vsub.s32 %v8472, %v8474
          %v8476 = vrot.slane %v8468, %v8475
          %v8478 = vunpack.c.l.s4 1983009808
          %v8479 = vunpack.c.0.s8 %v8478
          %v8480 = vlaneseq
          %v8481 = vshrl.u32 %v8480, 7
          %v8482 = vsub.s32 %v8479, %v8481
          %v8483 = vrot.slane %v8469, %v8482
          %v8484 = vcombine.low %v8476, %v8483
          %v8485 = vcombine.low %v6161, %v6168
          %v8486 = vcombine.low %v6175, %v6182
          %v8488 = vunpack.c.l.s4 1983009808
          %v8489 = vunpack.c.0.s8 %v8488
          %v8490 = vlaneseq
          %v8491 = vshrl.u32 %v8490, 7
          %v8492 = vsub.s32 %v8489, %v8491
          %v8493 = vrot.slane %v8485, %v8492
          %v8495 = vunpack.c.l.s4 1983009808
          %v8496 = vunpack.c.0.s8 %v8495
          %v8497 = vlaneseq
          %v8498 = vshrl.u32 %v8497, 7
          %v8499 = vsub.s32 %v8496, %v8498
          %v8500 = vrot.slane %v8486, %v8499
          %v8501 = vcombine.low %v8493, %v8500
          %v8502 = vcombine.low %v6189, %v6196
          %v8503 = vcombine.low %v6203, %v6210
          %v8505 = vunpack.c.l.s4 1983009808
          %v8506 = vunpack.c.0.s8 %v8505
          %v8507 = vlaneseq
          %v8508 = vshrl.u32 %v8507, 7
          %v8509 = vsub.s32 %v8506, %v8508
          %v8510 = vrot.slane %v8502, %v8509
          %v8512 = vunpack.c.l.s4 1983009808
          %v8513 = vunpack.c.0.s8 %v8512
          %v8514 = vlaneseq
          %v8515 = vshrl.u32 %v8514, 7
          %v8516 = vsub.s32 %v8513, %v8515
          %v8517 = vrot.slane %v8503, %v8516
          %v8518 = vcombine.low %v8510, %v8517
          %v8519 = vcombine.low %v6217, %v6224
          %v8520 = vcombine.low %v6231, %v6238
          %v8522 = vunpack.c.l.s4 1983009808
          %v8523 = vunpack.c.0.s8 %v8522
          %v8524 = vlaneseq
          %v8525 = vshrl.u32 %v8524, 7
          %v8526 = vsub.s32 %v8523, %v8525
          %v8527 = vrot.slane %v8519, %v8526
          %v8529 = vunpack.c.l.s4 1983009808
          %v8530 = vunpack.c.0.s8 %v8529
          %v8531 = vlaneseq
          %v8532 = vshrl.u32 %v8531, 7
          %v8533 = vsub.s32 %v8530, %v8532
          %v8534 = vrot.slane %v8520, %v8533
          %v8535 = vcombine.low %v8527, %v8534
          %v8536 = vcombine.low %v6245, %v6252
          %v8537 = vcombine.low %v6259, %v6266
          %v8539 = vunpack.c.l.s4 1983009808
          %v8540 = vunpack.c.0.s8 %v8539
          %v8541 = vlaneseq
          %v8542 = vshrl.u32 %v8541, 7
          %v8543 = vsub.s32 %v8540, %v8542
          %v8544 = vrot.slane %v8536, %v8543
          %v8546 = vunpack.c.l.s4 1983009808
          %v8547 = vunpack.c.0.s8 %v8546
          %v8548 = vlaneseq
          %v8549 = vshrl.u32 %v8548, 7
          %v8550 = vsub.s32 %v8547, %v8549
          %v8551 = vrot.slane %v8537, %v8550
          %v8552 = vcombine.low %v8544, %v8551
          %v8553 = vcombine.low %v6273, %v6280
          %v8554 = vcombine.low %v6287, %v6294
          %v8556 = vunpack.c.l.s4 1983009808
          %v8557 = vunpack.c.0.s8 %v8556
          %v8558 = vlaneseq
          %v8559 = vshrl.u32 %v8558, 7
          %v8560 = vsub.s32 %v8557, %v8559
          %v8561 = vrot.slane %v8553, %v8560
          %v8563 = vunpack.c.l.s4 1983009808
          %v8564 = vunpack.c.0.s8 %v8563
          %v8565 = vlaneseq
          %v8566 = vshrl.u32 %v8565, 7
          %v8567 = vsub.s32 %v8564, %v8566
          %v8568 = vrot.slane %v8554, %v8567
          %v8569 = vcombine.low %v8561, %v8568
          %v8570 = vcombine.low %v6301, %v6308
          %v8571 = vcombine.low %v6315, %v6322
          %v8573 = vunpack.c.l.s4 1983009808
          %v8574 = vunpack.c.0.s8 %v8573
          %v8575 = vlaneseq
          %v8576 = vshrl.u32 %v8575, 7
          %v8577 = vsub.s32 %v8574, %v8576
          %v8578 = vrot.slane %v8570, %v8577
          %v8580 = vunpack.c.l.s4 1983009808
          %v8581 = vunpack.c.0.s8 %v8580
          %v8582 = vlaneseq
          %v8583 = vshrl.u32 %v8582, 7
          %v8584 = vsub.s32 %v8581, %v8583
          %v8585 = vrot.slane %v8571, %v8584
          %v8586 = vcombine.low %v8578, %v8585
          %v8587 = vcombine.low %v6329, %v6336
          %v8588 = vcombine.low %v6343, %v6350
          %v8590 = vunpack.c.l.s4 1983009808
          %v8591 = vunpack.c.0.s8 %v8590
          %v8592 = vlaneseq
          %v8593 = vshrl.u32 %v8592, 7
          %v8594 = vsub.s32 %v8591, %v8593
          %v8595 = vrot.slane %v8587, %v8594
          %v8597 = vunpack.c.l.s4 1983009808
          %v8598 = vunpack.c.0.s8 %v8597
          %v8599 = vlaneseq
          %v8600 = vshrl.u32 %v8599, 7
          %v8601 = vsub.s32 %v8598, %v8600
          %v8602 = vrot.slane %v8588, %v8601
          %v8603 = vcombine.low %v8595, %v8602
          %v8604 = vcombine.low %v6357, %v6364
          %v8605 = vcombine.low %v6371, %v6378
          %v8607 = vunpack.c.l.s4 1983009808
          %v8608 = vunpack.c.0.s8 %v8607
          %v8609 = vlaneseq
          %v8610 = vshrl.u32 %v8609, 7
          %v8611 = vsub.s32 %v8608, %v8610
          %v8612 = vrot.slane %v8604, %v8611
          %v8614 = vunpack.c.l.s4 1983009808
          %v8615 = vunpack.c.0.s8 %v8614
          %v8616 = vlaneseq
          %v8617 = vshrl.u32 %v8616, 7
          %v8618 = vsub.s32 %v8615, %v8617
          %v8619 = vrot.slane %v8605, %v8618
          %v8620 = vcombine.low %v8612, %v8619
          %v8621 = vcombine.low %v6385, %v6392
          %v8622 = vcombine.low %v6399, %v6406
          %v8624 = vunpack.c.l.s4 1983009808
          %v8625 = vunpack.c.0.s8 %v8624
          %v8626 = vlaneseq
          %v8627 = vshrl.u32 %v8626, 7
          %v8628 = vsub.s32 %v8625, %v8627
          %v8629 = vrot.slane %v8621, %v8628
          %v8631 = vunpack.c.l.s4 1983009808
          %v8632 = vunpack.c.0.s8 %v8631
          %v8633 = vlaneseq
          %v8634 = vshrl.u32 %v8633, 7
          %v8635 = vsub.s32 %v8632, %v8634
          %v8636 = vrot.slane %v8622, %v8635
          %v8637 = vcombine.low %v8629, %v8636
          %v8638 = vcombine.low %v6413, %v6420
          %v8639 = vcombine.low %v6427, %v6434
          %v8641 = vunpack.c.l.s4 1983009808
          %v8642 = vunpack.c.0.s8 %v8641
          %v8643 = vlaneseq
          %v8644 = vshrl.u32 %v8643, 7
          %v8645 = vsub.s32 %v8642, %v8644
          %v8646 = vrot.slane %v8638, %v8645
          %v8648 = vunpack.c.l.s4 1983009808
          %v8649 = vunpack.c.0.s8 %v8648
          %v8650 = vlaneseq
          %v8651 = vshrl.u32 %v8650, 7
          %v8652 = vsub.s32 %v8649, %v8651
          %v8653 = vrot.slane %v8639, %v8652
          %v8654 = vcombine.low %v8646, %v8653
          %v8655 = vcombine.low %v6441, %v6448
          %v8656 = vcombine.low %v6455, %v6462
          %v8658 = vunpack.c.l.s4 1983009808
          %v8659 = vunpack.c.0.s8 %v8658
          %v8660 = vlaneseq
          %v8661 = vshrl.u32 %v8660, 7
          %v8662 = vsub.s32 %v8659, %v8661
          %v8663 = vrot.slane %v8655, %v8662
          %v8665 = vunpack.c.l.s4 1983009808
          %v8666 = vunpack.c.0.s8 %v8665
          %v8667 = vlaneseq
          %v8668 = vshrl.u32 %v8667, 7
          %v8669 = vsub.s32 %v8666, %v8668
          %v8670 = vrot.slane %v8656, %v8669
          %v8671 = vcombine.low %v8663, %v8670
          %v8672 = vcombine.low %v6469, %v6476
          %v8673 = vcombine.low %v6483, %v6490
          %v8675 = vunpack.c.l.s4 1983009808
          %v8676 = vunpack.c.0.s8 %v8675
          %v8677 = vlaneseq
          %v8678 = vshrl.u32 %v8677, 7
          %v8679 = vsub.s32 %v8676, %v8678
          %v8680 = vrot.slane %v8672, %v8679
          %v8682 = vunpack.c.l.s4 1983009808
          %v8683 = vunpack.c.0.s8 %v8682
          %v8684 = vlaneseq
          %v8685 = vshrl.u32 %v8684, 7
          %v8686 = vsub.s32 %v8683, %v8685
          %v8687 = vrot.slane %v8673, %v8686
          %v8688 = vcombine.low %v8680, %v8687
          %v8689 = vcombine.low %v6497, %v6504
          %v8690 = vcombine.low %v6511, %v6518
          %v8692 = vunpack.c.l.s4 1983009808
          %v8693 = vunpack.c.0.s8 %v8692
          %v8694 = vlaneseq
          %v8695 = vshrl.u32 %v8694, 7
          %v8696 = vsub.s32 %v8693, %v8695
          %v8697 = vrot.slane %v8689, %v8696
          %v8699 = vunpack.c.l.s4 1983009808
          %v8700 = vunpack.c.0.s8 %v8699
          %v8701 = vlaneseq
          %v8702 = vshrl.u32 %v8701, 7
          %v8703 = vsub.s32 %v8700, %v8702
          %v8704 = vrot.slane %v8690, %v8703
          %v8705 = vcombine.low %v8697, %v8704
          %v8706 = vcombine.low %v6525, %v6532
          %v8707 = vcombine.low %v6539, %v6546
          %v8709 = vunpack.c.l.s4 1983009808
          %v8710 = vunpack.c.0.s8 %v8709
          %v8711 = vlaneseq
          %v8712 = vshrl.u32 %v8711, 7
          %v8713 = vsub.s32 %v8710, %v8712
          %v8714 = vrot.slane %v8706, %v8713
          %v8716 = vunpack.c.l.s4 1983009808
          %v8717 = vunpack.c.0.s8 %v8716
          %v8718 = vlaneseq
          %v8719 = vshrl.u32 %v8718, 7
          %v8720 = vsub.s32 %v8717, %v8719
          %v8721 = vrot.slane %v8707, %v8720
          %v8722 = vcombine.low %v8714, %v8721
          %8723 = vset.pattern.permute.xlu0 0
          %8724 = vperm.xlu0 %8723, %v6563
          %v8725 = vpop.permute.xlu0 %8724
          %8726 = vset.pattern.permute.xlu0 0
          %8727 = vperm.xlu0 %8726, %v6580
          %v8728 = vpop.permute.xlu0 %8727
          %8729 = vset.pattern.permute.xlu0 0
          %8730 = vperm.xlu0 %8729, %v6597
          %v8731 = vpop.permute.xlu0 %8730
          %8732 = vset.pattern.permute.xlu0 0
          %8733 = vperm.xlu0 %8732, %v6614
          %v8734 = vpop.permute.xlu0 %8733
          %8735 = vset.pattern.permute.xlu0 0
          %8736 = vperm.xlu0 %8735, %v6631
          %v8737 = vpop.permute.xlu0 %8736
          %8738 = vset.pattern.permute.xlu0 0
          %8739 = vperm.xlu0 %8738, %v6648
          %v8740 = vpop.permute.xlu0 %8739
          %8741 = vset.pattern.permute.xlu0 0
          %8742 = vperm.xlu0 %8741, %v6665
          %v8743 = vpop.permute.xlu0 %8742
          %8744 = vset.pattern.permute.xlu0 0
          %8745 = vperm.xlu0 %8744, %v6682
          %v8746 = vpop.permute.xlu0 %8745
          %8747 = vset.pattern.permute.xlu0 0
          %8748 = vperm.xlu0 %8747, %v6699
          %v8749 = vpop.permute.xlu0 %8748
          %8750 = vset.pattern.permute.xlu0 0
          %8751 = vperm.xlu0 %8750, %v6716
          %v8752 = vpop.permute.xlu0 %8751
          %8753 = vset.pattern.permute.xlu0 0
          %8754 = vperm.xlu0 %8753, %v6733
          %v8755 = vpop.permute.xlu0 %8754
          %8756 = vset.pattern.permute.xlu0 0
          %8757 = vperm.xlu0 %8756, %v6750
          %v8758 = vpop.permute.xlu0 %8757
          %8759 = vset.pattern.permute.xlu0 0
          %8760 = vperm.xlu0 %8759, %v6767
          %v8761 = vpop.permute.xlu0 %8760
          %8762 = vset.pattern.permute.xlu0 0
          %8763 = vperm.xlu0 %8762, %v6784
          %v8764 = vpop.permute.xlu0 %8763
          %8765 = vset.pattern.permute.xlu0 0
          %8766 = vperm.xlu0 %8765, %v6801
          %v8767 = vpop.permute.xlu0 %8766
          %8768 = vset.pattern.permute.xlu0 0
          %8769 = vperm.xlu0 %8768, %v6818
          %v8770 = vpop.permute.xlu0 %8769
          %8771 = vset.pattern.permute.xlu0 0
          %8772 = vperm.xlu0 %8771, %v6835
          %v8773 = vpop.permute.xlu0 %8772
          %8774 = vset.pattern.permute.xlu0 0
          %8775 = vperm.xlu0 %8774, %v6852
          %v8776 = vpop.permute.xlu0 %8775
          %8777 = vset.pattern.permute.xlu0 0
          %8778 = vperm.xlu0 %8777, %v6869
          %v8779 = vpop.permute.xlu0 %8778
          %8780 = vset.pattern.permute.xlu0 0
          %8781 = vperm.xlu0 %8780, %v6886
          %v8782 = vpop.permute.xlu0 %8781
          %8783 = vset.pattern.permute.xlu0 0
          %8784 = vperm.xlu0 %8783, %v6903
          %v8785 = vpop.permute.xlu0 %8784
          %8786 = vset.pattern.permute.xlu0 0
          %8787 = vperm.xlu0 %8786, %v6920
          %v8788 = vpop.permute.xlu0 %8787
          %8789 = vset.pattern.permute.xlu0 0
          %8790 = vperm.xlu0 %8789, %v6937
          %v8791 = vpop.permute.xlu0 %8790
          %8792 = vset.pattern.permute.xlu0 0
          %8793 = vperm.xlu0 %8792, %v6954
          %v8794 = vpop.permute.xlu0 %8793
          %8795 = vset.pattern.permute.xlu0 0
          %8796 = vperm.xlu0 %8795, %v6971
          %v8797 = vpop.permute.xlu0 %8796
          %8798 = vset.pattern.permute.xlu0 0
          %8799 = vperm.xlu0 %8798, %v6988
          %v8800 = vpop.permute.xlu0 %8799
          %8801 = vset.pattern.permute.xlu0 0
          %8802 = vperm.xlu0 %8801, %v7005
          %v8803 = vpop.permute.xlu0 %8802
          %8804 = vset.pattern.permute.xlu0 0
          %8805 = vperm.xlu0 %8804, %v7022
          %v8806 = vpop.permute.xlu0 %8805
          %8807 = vset.pattern.permute.xlu0 0
          %8808 = vperm.xlu0 %8807, %v7039
          %v8809 = vpop.permute.xlu0 %8808
          %8810 = vset.pattern.permute.xlu0 0
          %8811 = vperm.xlu0 %8810, %v7056
          %v8812 = vpop.permute.xlu0 %8811
          %8813 = vset.pattern.permute.xlu0 0
          %8814 = vperm.xlu0 %8813, %v7073
          %v8815 = vpop.permute.xlu0 %8814
          %8816 = vset.pattern.permute.xlu0 0
          %8817 = vperm.xlu0 %8816, %v7090
          %v8818 = vpop.permute.xlu0 %8817
          %8819 = vset.pattern.permute.xlu0 0
          %8820 = vperm.xlu0 %8819, %v7107
          %v8821 = vpop.permute.xlu0 %8820
          %8822 = vset.pattern.permute.xlu0 0
          %8823 = vperm.xlu0 %8822, %v7124
          %v8824 = vpop.permute.xlu0 %8823
          %8825 = vset.pattern.permute.xlu0 0
          %8826 = vperm.xlu0 %8825, %v7141
          %v8827 = vpop.permute.xlu0 %8826
          %8828 = vset.pattern.permute.xlu0 0
          %8829 = vperm.xlu0 %8828, %v7158
          %v8830 = vpop.permute.xlu0 %8829
          %8831 = vset.pattern.permute.xlu0 0
          %8832 = vperm.xlu0 %8831, %v7175
          %v8833 = vpop.permute.xlu0 %8832
          %8834 = vset.pattern.permute.xlu0 0
          %8835 = vperm.xlu0 %8834, %v7192
          %v8836 = vpop.permute.xlu0 %8835
          %8837 = vset.pattern.permute.xlu0 0
          %8838 = vperm.xlu0 %8837, %v7209
          %v8839 = vpop.permute.xlu0 %8838
          %8840 = vset.pattern.permute.xlu0 0
          %8841 = vperm.xlu0 %8840, %v7226
          %v8842 = vpop.permute.xlu0 %8841
          %8843 = vset.pattern.permute.xlu0 0
          %8844 = vperm.xlu0 %8843, %v7243
          %v8845 = vpop.permute.xlu0 %8844
          %8846 = vset.pattern.permute.xlu0 0
          %8847 = vperm.xlu0 %8846, %v7260
          %v8848 = vpop.permute.xlu0 %8847
          %8849 = vset.pattern.permute.xlu0 0
          %8850 = vperm.xlu0 %8849, %v7277
          %v8851 = vpop.permute.xlu0 %8850
          %8852 = vset.pattern.permute.xlu0 0
          %8853 = vperm.xlu0 %8852, %v7294
          %v8854 = vpop.permute.xlu0 %8853
          %8855 = vset.pattern.permute.xlu0 0
          %8856 = vperm.xlu0 %8855, %v7311
          %v8857 = vpop.permute.xlu0 %8856
          %8858 = vset.pattern.permute.xlu0 0
          %8859 = vperm.xlu0 %8858, %v7328
          %v8860 = vpop.permute.xlu0 %8859
          %8861 = vset.pattern.permute.xlu0 0
          %8862 = vperm.xlu0 %8861, %v7345
          %v8863 = vpop.permute.xlu0 %8862
          %8864 = vset.pattern.permute.xlu0 0
          %8865 = vperm.xlu0 %8864, %v7362
          %v8866 = vpop.permute.xlu0 %8865
          %8867 = vset.pattern.permute.xlu0 0
          %8868 = vperm.xlu0 %8867, %v7379
          %v8869 = vpop.permute.xlu0 %8868
          %8870 = vset.pattern.permute.xlu0 0
          %8871 = vperm.xlu0 %8870, %v7396
          %v8872 = vpop.permute.xlu0 %8871
          %8873 = vset.pattern.permute.xlu0 0
          %8874 = vperm.xlu0 %8873, %v7413
          %v8875 = vpop.permute.xlu0 %8874
          %8876 = vset.pattern.permute.xlu0 0
          %8877 = vperm.xlu0 %8876, %v7430
          %v8878 = vpop.permute.xlu0 %8877
          %8879 = vset.pattern.permute.xlu0 0
          %8880 = vperm.xlu0 %8879, %v7447
          %v8881 = vpop.permute.xlu0 %8880
          %8882 = vset.pattern.permute.xlu0 0
          %8883 = vperm.xlu0 %8882, %v7464
          %v8884 = vpop.permute.xlu0 %8883
          %8885 = vset.pattern.permute.xlu0 0
          %8886 = vperm.xlu0 %8885, %v7481
          %v8887 = vpop.permute.xlu0 %8886
          %8888 = vset.pattern.permute.xlu0 0
          %8889 = vperm.xlu0 %8888, %v7498
          %v8890 = vpop.permute.xlu0 %8889
          %8891 = vset.pattern.permute.xlu0 0
          %8892 = vperm.xlu0 %8891, %v7515
          %v8893 = vpop.permute.xlu0 %8892
          %8894 = vset.pattern.permute.xlu0 0
          %8895 = vperm.xlu0 %8894, %v7532
          %v8896 = vpop.permute.xlu0 %8895
          %8897 = vset.pattern.permute.xlu0 0
          %8898 = vperm.xlu0 %8897, %v7549
          %v8899 = vpop.permute.xlu0 %8898
          %8900 = vset.pattern.permute.xlu0 0
          %8901 = vperm.xlu0 %8900, %v7566
          %v8902 = vpop.permute.xlu0 %8901
          %8903 = vset.pattern.permute.xlu0 0
          %8904 = vperm.xlu0 %8903, %v7583
          %v8905 = vpop.permute.xlu0 %8904
          %8906 = vset.pattern.permute.xlu0 0
          %8907 = vperm.xlu0 %8906, %v7600
          %v8908 = vpop.permute.xlu0 %8907
          %8909 = vset.pattern.permute.xlu0 0
          %8910 = vperm.xlu0 %8909, %v7617
          %v8911 = vpop.permute.xlu0 %8910
          %8912 = vset.pattern.permute.xlu0 0
          %8913 = vperm.xlu0 %8912, %v7634
          %v8914 = vpop.permute.xlu0 %8913
          %8915 = vset.pattern.permute.xlu0 0
          %8916 = vperm.xlu0 %8915, %v7651
          %v8917 = vpop.permute.xlu0 %8916
          %8918 = vset.pattern.permute.xlu0 0
          %8919 = vperm.xlu0 %8918, %v7668
          %v8920 = vpop.permute.xlu0 %8919
          %8921 = vset.pattern.permute.xlu0 0
          %8922 = vperm.xlu0 %8921, %v7685
          %v8923 = vpop.permute.xlu0 %8922
          %8924 = vset.pattern.permute.xlu0 0
          %8925 = vperm.xlu0 %8924, %v7702
          %v8926 = vpop.permute.xlu0 %8925
          %8927 = vset.pattern.permute.xlu0 0
          %8928 = vperm.xlu0 %8927, %v7719
          %v8929 = vpop.permute.xlu0 %8928
          %8930 = vset.pattern.permute.xlu0 0
          %8931 = vperm.xlu0 %8930, %v7736
          %v8932 = vpop.permute.xlu0 %8931
          %8933 = vset.pattern.permute.xlu0 0
          %8934 = vperm.xlu0 %8933, %v7753
          %v8935 = vpop.permute.xlu0 %8934
          %8936 = vset.pattern.permute.xlu0 0
          %8937 = vperm.xlu0 %8936, %v7770
          %v8938 = vpop.permute.xlu0 %8937
          %8939 = vset.pattern.permute.xlu0 0
          %8940 = vperm.xlu0 %8939, %v7787
          %v8941 = vpop.permute.xlu0 %8940
          %8942 = vset.pattern.permute.xlu0 0
          %8943 = vperm.xlu0 %8942, %v7804
          %v8944 = vpop.permute.xlu0 %8943
          %8945 = vset.pattern.permute.xlu0 0
          %8946 = vperm.xlu0 %8945, %v7821
          %v8947 = vpop.permute.xlu0 %8946
          %8948 = vset.pattern.permute.xlu0 0
          %8949 = vperm.xlu0 %8948, %v7838
          %v8950 = vpop.permute.xlu0 %8949
          %8951 = vset.pattern.permute.xlu0 0
          %8952 = vperm.xlu0 %8951, %v7855
          %v8953 = vpop.permute.xlu0 %8952
          %8954 = vset.pattern.permute.xlu0 0
          %8955 = vperm.xlu0 %8954, %v7872
          %v8956 = vpop.permute.xlu0 %8955
          %8957 = vset.pattern.permute.xlu0 0
          %8958 = vperm.xlu0 %8957, %v7889
          %v8959 = vpop.permute.xlu0 %8958
          %8960 = vset.pattern.permute.xlu0 0
          %8961 = vperm.xlu0 %8960, %v7906
          %v8962 = vpop.permute.xlu0 %8961
          %8963 = vset.pattern.permute.xlu0 0
          %8964 = vperm.xlu0 %8963, %v7923
          %v8965 = vpop.permute.xlu0 %8964
          %8966 = vset.pattern.permute.xlu0 0
          %8967 = vperm.xlu0 %8966, %v7940
          %v8968 = vpop.permute.xlu0 %8967
          %8969 = vset.pattern.permute.xlu0 0
          %8970 = vperm.xlu0 %8969, %v7957
          %v8971 = vpop.permute.xlu0 %8970
          %8972 = vset.pattern.permute.xlu0 0
          %8973 = vperm.xlu0 %8972, %v7974
          %v8974 = vpop.permute.xlu0 %8973
          %8975 = vset.pattern.permute.xlu0 0
          %8976 = vperm.xlu0 %8975, %v7991
          %v8977 = vpop.permute.xlu0 %8976
          %8978 = vset.pattern.permute.xlu0 0
          %8979 = vperm.xlu0 %8978, %v8008
          %v8980 = vpop.permute.xlu0 %8979
          %8981 = vset.pattern.permute.xlu0 0
          %8982 = vperm.xlu0 %8981, %v8025
          %v8983 = vpop.permute.xlu0 %8982
          %8984 = vset.pattern.permute.xlu0 0
          %8985 = vperm.xlu0 %8984, %v8042
          %v8986 = vpop.permute.xlu0 %8985
          %8987 = vset.pattern.permute.xlu0 0
          %8988 = vperm.xlu0 %8987, %v8059
          %v8989 = vpop.permute.xlu0 %8988
          %8990 = vset.pattern.permute.xlu0 0
          %8991 = vperm.xlu0 %8990, %v8076
          %v8992 = vpop.permute.xlu0 %8991
          %8993 = vset.pattern.permute.xlu0 0
          %8994 = vperm.xlu0 %8993, %v8093
          %v8995 = vpop.permute.xlu0 %8994
          %8996 = vset.pattern.permute.xlu0 0
          %8997 = vperm.xlu0 %8996, %v8110
          %v8998 = vpop.permute.xlu0 %8997
          %8999 = vset.pattern.permute.xlu0 0
          %9000 = vperm.xlu0 %8999, %v8127
          %v9001 = vpop.permute.xlu0 %9000
          %9002 = vset.pattern.permute.xlu0 0
          %9003 = vperm.xlu0 %9002, %v8144
          %v9004 = vpop.permute.xlu0 %9003
          %9005 = vset.pattern.permute.xlu0 0
          %9006 = vperm.xlu0 %9005, %v8161
          %v9007 = vpop.permute.xlu0 %9006
          %9008 = vset.pattern.permute.xlu0 0
          %9009 = vperm.xlu0 %9008, %v8178
          %v9010 = vpop.permute.xlu0 %9009
          %9011 = vset.pattern.permute.xlu0 0
          %9012 = vperm.xlu0 %9011, %v8195
          %v9013 = vpop.permute.xlu0 %9012
          %9014 = vset.pattern.permute.xlu0 0
          %9015 = vperm.xlu0 %9014, %v8212
          %v9016 = vpop.permute.xlu0 %9015
          %9017 = vset.pattern.permute.xlu0 0
          %9018 = vperm.xlu0 %9017, %v8229
          %v9019 = vpop.permute.xlu0 %9018
          %9020 = vset.pattern.permute.xlu0 0
          %9021 = vperm.xlu0 %9020, %v8246
          %v9022 = vpop.permute.xlu0 %9021
          %9023 = vset.pattern.permute.xlu0 0
          %9024 = vperm.xlu0 %9023, %v8263
          %v9025 = vpop.permute.xlu0 %9024
          %9026 = vset.pattern.permute.xlu0 0
          %9027 = vperm.xlu0 %9026, %v8280
          %v9028 = vpop.permute.xlu0 %9027
          %9029 = vset.pattern.permute.xlu0 0
          %9030 = vperm.xlu0 %9029, %v8297
          %v9031 = vpop.permute.xlu0 %9030
          %9032 = vset.pattern.permute.xlu0 0
          %9033 = vperm.xlu0 %9032, %v8314
          %v9034 = vpop.permute.xlu0 %9033
          %9035 = vset.pattern.permute.xlu0 0
          %9036 = vperm.xlu0 %9035, %v8331
          %v9037 = vpop.permute.xlu0 %9036
          %9038 = vset.pattern.permute.xlu0 0
          %9039 = vperm.xlu0 %9038, %v8348
          %v9040 = vpop.permute.xlu0 %9039
          %9041 = vset.pattern.permute.xlu0 0
          %9042 = vperm.xlu0 %9041, %v8365
          %v9043 = vpop.permute.xlu0 %9042
          %9044 = vset.pattern.permute.xlu0 0
          %9045 = vperm.xlu0 %9044, %v8382
          %v9046 = vpop.permute.xlu0 %9045
          %9047 = vset.pattern.permute.xlu0 0
          %9048 = vperm.xlu0 %9047, %v8399
          %v9049 = vpop.permute.xlu0 %9048
          %9050 = vset.pattern.permute.xlu0 0
          %9051 = vperm.xlu0 %9050, %v8416
          %v9052 = vpop.permute.xlu0 %9051
          %9053 = vset.pattern.permute.xlu0 0
          %9054 = vperm.xlu0 %9053, %v8433
          %v9055 = vpop.permute.xlu0 %9054
          %9056 = vset.pattern.permute.xlu0 0
          %9057 = vperm.xlu0 %9056, %v8450
          %v9058 = vpop.permute.xlu0 %9057
          %9059 = vset.pattern.permute.xlu0 0
          %9060 = vperm.xlu0 %9059, %v8467
          %v9061 = vpop.permute.xlu0 %9060
          %9062 = vset.pattern.permute.xlu0 0
          %9063 = vperm.xlu0 %9062, %v8484
          %v9064 = vpop.permute.xlu0 %9063
          %9065 = vset.pattern.permute.xlu0 0
          %9066 = vperm.xlu0 %9065, %v8501
          %v9067 = vpop.permute.xlu0 %9066
          %9068 = vset.pattern.permute.xlu0 0
          %9069 = vperm.xlu0 %9068, %v8518
          %v9070 = vpop.permute.xlu0 %9069
          %9071 = vset.pattern.permute.xlu0 0
          %9072 = vperm.xlu0 %9071, %v8535
          %v9073 = vpop.permute.xlu0 %9072
          %9074 = vset.pattern.permute.xlu0 0
          %9075 = vperm.xlu0 %9074, %v8552
          %v9076 = vpop.permute.xlu0 %9075
          %9077 = vset.pattern.permute.xlu0 0
          %9078 = vperm.xlu0 %9077, %v8569
          %v9079 = vpop.permute.xlu0 %9078
          %9080 = vset.pattern.permute.xlu0 0
          %9081 = vperm.xlu0 %9080, %v8586
          %v9082 = vpop.permute.xlu0 %9081
          %9083 = vset.pattern.permute.xlu0 0
          %9084 = vperm.xlu0 %9083, %v8603
          %v9085 = vpop.permute.xlu0 %9084
          %9086 = vset.pattern.permute.xlu0 0
          %9087 = vperm.xlu0 %9086, %v8620
          %v9088 = vpop.permute.xlu0 %9087
          %9089 = vset.pattern.permute.xlu0 0
          %9090 = vperm.xlu0 %9089, %v8637
          %v9091 = vpop.permute.xlu0 %9090
          %9092 = vset.pattern.permute.xlu0 0
          %9093 = vperm.xlu0 %9092, %v8654
          %v9094 = vpop.permute.xlu0 %9093
          %9095 = vset.pattern.permute.xlu0 0
          %9096 = vperm.xlu0 %9095, %v8671
          %v9097 = vpop.permute.xlu0 %9096
          %9098 = vset.pattern.permute.xlu0 0
          %9099 = vperm.xlu0 %9098, %v8688
          %v9100 = vpop.permute.xlu0 %9099
          %9101 = vset.pattern.permute.xlu0 0
          %9102 = vperm.xlu0 %9101, %v8705
          %v9103 = vpop.permute.xlu0 %9102
          %9104 = vset.pattern.permute.xlu0 0
          %9105 = vperm.xlu0 %9104, %v8722
          %v9106 = vpop.permute.xlu0 %9105
          %v9107 = vlaneseq
          %v9108 = vand.u32 %v9107, 127
          %v9109 = vlaneseq
          %v9110 = vshrl.u32 %v9109, 7
          %v9111 = vsub.s32 %v9108, %v9110
          %v9112 = vrot.slane %v8725, %v9111
          %v9113 = vadd.s32 %v9108, 4294967288
          %v9114 = vlaneseq
          %v9115 = vshrl.u32 %v9114, 7
          %v9116 = vsub.s32 %v9113, %v9115
          %v9117 = vrot.slane %v8728, %v9116
          %vm9118 = vcmask 130112
          %v9119 = vsel %vm9118, %v9117, %v9112
          %v9120 = vadd.s32 %v9108, 4294967280
          %v9121 = vlaneseq
          %v9122 = vshrl.u32 %v9121, 7
          %v9123 = vsub.s32 %v9120, %v9122
          %v9124 = vrot.slane %v8731, %v9123
          %vm9125 = vcmask 195712
          %v9126 = vsel %vm9125, %v9124, %v9119
          %v9127 = vadd.s32 %v9108, 4294967272
          %v9128 = vlaneseq
          %v9129 = vshrl.u32 %v9128, 7
          %v9130 = vsub.s32 %v9127, %v9129
          %v9131 = vrot.slane %v8734, %v9130
          %vm9132 = vcmask 261312
          %v9133 = vsel %vm9132, %v9131, %v9126
          %v9134 = vadd.s32 %v9108, 4294967264
          %v9135 = vlaneseq
          %v9136 = vshrl.u32 %v9135, 7
          %v9137 = vsub.s32 %v9134, %v9136
          %v9138 = vrot.slane %v8737, %v9137
          %vm9139 = vcmask 326912
          %v9140 = vsel %vm9139, %v9138, %v9133
          %v9141 = vadd.s32 %v9108, 4294967256
          %v9142 = vlaneseq
          %v9143 = vshrl.u32 %v9142, 7
          %v9144 = vsub.s32 %v9141, %v9143
          %v9145 = vrot.slane %v8740, %v9144
          %vm9146 = vcmask 392512
          %v9147 = vsel %vm9146, %v9145, %v9140
          %v9148 = vadd.s32 %v9108, 4294967248
          %v9149 = vlaneseq
          %v9150 = vshrl.u32 %v9149, 7
          %v9151 = vsub.s32 %v9148, %v9150
          %v9152 = vrot.slane %v8743, %v9151
          %vm9153 = vcmask 458112
          %v9154 = vsel %vm9153, %v9152, %v9147
          %v9155 = vadd.s32 %v9108, 4294967240
          %v9156 = vlaneseq
          %v9157 = vshrl.u32 %v9156, 7
          %v9158 = vsub.s32 %v9155, %v9157
          %v9159 = vrot.slane %v8746, %v9158
          %vm9160 = vcmask 523712
          %v9161 = vsel %vm9160, %v9159, %v9154
          %v9162 = vadd.s32 %v9108, 4294967232
          %v9163 = vlaneseq
          %v9164 = vshrl.u32 %v9163, 7
          %v9165 = vsub.s32 %v9162, %v9164
          %v9166 = vrot.slane %v8749, %v9165
          %vm9167 = vcmask 589312
          %v9168 = vsel %vm9167, %v9166, %v9161
          %v9169 = vadd.s32 %v9108, 4294967224
          %v9170 = vlaneseq
          %v9171 = vshrl.u32 %v9170, 7
          %v9172 = vsub.s32 %v9169, %v9171
          %v9173 = vrot.slane %v8752, %v9172
          %vm9174 = vcmask 654912
          %v9175 = vsel %vm9174, %v9173, %v9168
          %v9176 = vadd.s32 %v9108, 4294967216
          %v9177 = vlaneseq
          %v9178 = vshrl.u32 %v9177, 7
          %v9179 = vsub.s32 %v9176, %v9178
          %v9180 = vrot.slane %v8755, %v9179
          %vm9181 = vcmask 720512
          %v9182 = vsel %vm9181, %v9180, %v9175
          %v9183 = vadd.s32 %v9108, 4294967208
          %v9184 = vlaneseq
          %v9185 = vshrl.u32 %v9184, 7
          %v9186 = vsub.s32 %v9183, %v9185
          %v9187 = vrot.slane %v8758, %v9186
          %vm9188 = vcmask 786112
          %v9189 = vsel %vm9188, %v9187, %v9182
          %v9190 = vadd.s32 %v9108, 4294967200
          %v9191 = vlaneseq
          %v9192 = vshrl.u32 %v9191, 7
          %v9193 = vsub.s32 %v9190, %v9192
          %v9194 = vrot.slane %v8761, %v9193
          %vm9195 = vcmask 851712
          %v9196 = vsel %vm9195, %v9194, %v9189
          %v9197 = vadd.s32 %v9108, 4294967192
          %v9198 = vlaneseq
          %v9199 = vshrl.u32 %v9198, 7
          %v9200 = vsub.s32 %v9197, %v9199
          %v9201 = vrot.slane %v8764, %v9200
          %vm9202 = vcmask 917312
          %v9203 = vsel %vm9202, %v9201, %v9196
          %v9204 = vadd.s32 %v9108, 4294967184
          %v9205 = vlaneseq
          %v9206 = vshrl.u32 %v9205, 7
          %v9207 = vsub.s32 %v9204, %v9206
          %v9208 = vrot.slane %v8767, %v9207
          %vm9209 = vcmask 982912
          %v9210 = vsel %vm9209, %v9208, %v9203
          %v9211 = vadd.s32 %v9108, 4294967176
          %v9212 = vlaneseq
          %v9213 = vshrl.u32 %v9212, 7
          %v9214 = vsub.s32 %v9211, %v9213
          %v9215 = vrot.slane %v8770, %v9214
          %vm9216 = vcmask 1048512
          %v9217 = vsel %vm9216, %v9215, %v9210
          %v9218 = vlaneseq
          %v9219 = vshrl.u32 %v9218, 7
          %v9220 = vsub.s32 %v9108, %v9219
          %v9221 = vrot.slane %v8773, %v9220
          %v9222 = vlaneseq
          %v9223 = vshrl.u32 %v9222, 7
          %v9224 = vsub.s32 %v9113, %v9223
          %v9225 = vrot.slane %v8776, %v9224
          %v9226 = vsel %vm9118, %v9225, %v9221
          %v9227 = vlaneseq
          %v9228 = vshrl.u32 %v9227, 7
          %v9229 = vsub.s32 %v9120, %v9228
          %v9230 = vrot.slane %v8779, %v9229
          %v9231 = vsel %vm9125, %v9230, %v9226
          %v9232 = vlaneseq
          %v9233 = vshrl.u32 %v9232, 7
          %v9234 = vsub.s32 %v9127, %v9233
          %v9235 = vrot.slane %v8782, %v9234
          %v9236 = vsel %vm9132, %v9235, %v9231
          %v9237 = vlaneseq
          %v9238 = vshrl.u32 %v9237, 7
          %v9239 = vsub.s32 %v9134, %v9238
          %v9240 = vrot.slane %v8785, %v9239
          %v9241 = vsel %vm9139, %v9240, %v9236
          %v9242 = vlaneseq
          %v9243 = vshrl.u32 %v9242, 7
          %v9244 = vsub.s32 %v9141, %v9243
          %v9245 = vrot.slane %v8788, %v9244
          %v9246 = vsel %vm9146, %v9245, %v9241
          %v9247 = vlaneseq
          %v9248 = vshrl.u32 %v9247, 7
          %v9249 = vsub.s32 %v9148, %v9248
          %v9250 = vrot.slane %v8791, %v9249
          %v9251 = vsel %vm9153, %v9250, %v9246
          %v9252 = vlaneseq
          %v9253 = vshrl.u32 %v9252, 7
          %v9254 = vsub.s32 %v9155, %v9253
          %v9255 = vrot.slane %v8794, %v9254
          %v9256 = vsel %vm9160, %v9255, %v9251
          %v9257 = vlaneseq
          %v9258 = vshrl.u32 %v9257, 7
          %v9259 = vsub.s32 %v9162, %v9258
          %v9260 = vrot.slane %v8797, %v9259
          %v9261 = vsel %vm9167, %v9260, %v9256
          %v9262 = vlaneseq
          %v9263 = vshrl.u32 %v9262, 7
          %v9264 = vsub.s32 %v9169, %v9263
          %v9265 = vrot.slane %v8800, %v9264
          %v9266 = vsel %vm9174, %v9265, %v9261
          %v9267 = vlaneseq
          %v9268 = vshrl.u32 %v9267, 7
          %v9269 = vsub.s32 %v9176, %v9268
          %v9270 = vrot.slane %v8803, %v9269
          %v9271 = vsel %vm9181, %v9270, %v9266
          %v9272 = vlaneseq
          %v9273 = vshrl.u32 %v9272, 7
          %v9274 = vsub.s32 %v9183, %v9273
          %v9275 = vrot.slane %v8806, %v9274
          %v9276 = vsel %vm9188, %v9275, %v9271
          %v9277 = vlaneseq
          %v9278 = vshrl.u32 %v9277, 7
          %v9279 = vsub.s32 %v9190, %v9278
          %v9280 = vrot.slane %v8809, %v9279
          %v9281 = vsel %vm9195, %v9280, %v9276
          %v9282 = vlaneseq
          %v9283 = vshrl.u32 %v9282, 7
          %v9284 = vsub.s32 %v9197, %v9283
          %v9285 = vrot.slane %v8812, %v9284
          %v9286 = vsel %vm9202, %v9285, %v9281
          %v9287 = vlaneseq
          %v9288 = vshrl.u32 %v9287, 7
          %v9289 = vsub.s32 %v9204, %v9288
          %v9290 = vrot.slane %v8815, %v9289
          %v9291 = vsel %vm9209, %v9290, %v9286
          %v9292 = vlaneseq
          %v9293 = vshrl.u32 %v9292, 7
          %v9294 = vsub.s32 %v9211, %v9293
          %v9295 = vrot.slane %v8818, %v9294
          %v9296 = vsel %vm9216, %v9295, %v9291
          %v9297 = vlaneseq
          %v9298 = vshrl.u32 %v9297, 7
          %v9299 = vsub.s32 %v9108, %v9298
          %v9300 = vrot.slane %v8821, %v9299
          %v9301 = vlaneseq
          %v9302 = vshrl.u32 %v9301, 7
          %v9303 = vsub.s32 %v9113, %v9302
          %v9304 = vrot.slane %v8824, %v9303
          %v9305 = vsel %vm9118, %v9304, %v9300
          %v9306 = vlaneseq
          %v9307 = vshrl.u32 %v9306, 7
          %v9308 = vsub.s32 %v9120, %v9307
          %v9309 = vrot.slane %v8827, %v9308
          %v9310 = vsel %vm9125, %v9309, %v9305
          %v9311 = vlaneseq
          %v9312 = vshrl.u32 %v9311, 7
          %v9313 = vsub.s32 %v9127, %v9312
          %v9314 = vrot.slane %v8830, %v9313
          %v9315 = vsel %vm9132, %v9314, %v9310
          %v9316 = vlaneseq
          %v9317 = vshrl.u32 %v9316, 7
          %v9318 = vsub.s32 %v9134, %v9317
          %v9319 = vrot.slane %v8833, %v9318
          %v9320 = vsel %vm9139, %v9319, %v9315
          %v9321 = vlaneseq
          %v9322 = vshrl.u32 %v9321, 7
          %v9323 = vsub.s32 %v9141, %v9322
          %v9324 = vrot.slane %v8836, %v9323
          %v9325 = vsel %vm9146, %v9324, %v9320
          %v9326 = vlaneseq
          %v9327 = vshrl.u32 %v9326, 7
          %v9328 = vsub.s32 %v9148, %v9327
          %v9329 = vrot.slane %v8839, %v9328
          %v9330 = vsel %vm9153, %v9329, %v9325
          %v9331 = vlaneseq
          %v9332 = vshrl.u32 %v9331, 7
          %v9333 = vsub.s32 %v9155, %v9332
          %v9334 = vrot.slane %v8842, %v9333
          %v9335 = vsel %vm9160, %v9334, %v9330
          %v9336 = vlaneseq
          %v9337 = vshrl.u32 %v9336, 7
          %v9338 = vsub.s32 %v9162, %v9337
          %v9339 = vrot.slane %v8845, %v9338
          %v9340 = vsel %vm9167, %v9339, %v9335
          %v9341 = vlaneseq
          %v9342 = vshrl.u32 %v9341, 7
          %v9343 = vsub.s32 %v9169, %v9342
          %v9344 = vrot.slane %v8848, %v9343
          %v9345 = vsel %vm9174, %v9344, %v9340
          %v9346 = vlaneseq
          %v9347 = vshrl.u32 %v9346, 7
          %v9348 = vsub.s32 %v9176, %v9347
          %v9349 = vrot.slane %v8851, %v9348
          %v9350 = vsel %vm9181, %v9349, %v9345
          %v9351 = vlaneseq
          %v9352 = vshrl.u32 %v9351, 7
          %v9353 = vsub.s32 %v9183, %v9352
          %v9354 = vrot.slane %v8854, %v9353
          %v9355 = vsel %vm9188, %v9354, %v9350
          %v9356 = vlaneseq
          %v9357 = vshrl.u32 %v9356, 7
          %v9358 = vsub.s32 %v9190, %v9357
          %v9359 = vrot.slane %v8857, %v9358
          %v9360 = vsel %vm9195, %v9359, %v9355
          %v9361 = vlaneseq
          %v9362 = vshrl.u32 %v9361, 7
          %v9363 = vsub.s32 %v9197, %v9362
          %v9364 = vrot.slane %v8860, %v9363
          %v9365 = vsel %vm9202, %v9364, %v9360
          %v9366 = vlaneseq
          %v9367 = vshrl.u32 %v9366, 7
          %v9368 = vsub.s32 %v9204, %v9367
          %v9369 = vrot.slane %v8863, %v9368
          %v9370 = vsel %vm9209, %v9369, %v9365
          %v9371 = vlaneseq
          %v9372 = vshrl.u32 %v9371, 7
          %v9373 = vsub.s32 %v9211, %v9372
          %v9374 = vrot.slane %v8866, %v9373
          %v9375 = vsel %vm9216, %v9374, %v9370
          %v9376 = vlaneseq
          %v9377 = vshrl.u32 %v9376, 7
          %v9378 = vsub.s32 %v9108, %v9377
          %v9379 = vrot.slane %v8869, %v9378
          %v9380 = vlaneseq
          %v9381 = vshrl.u32 %v9380, 7
          %v9382 = vsub.s32 %v9113, %v9381
          %v9383 = vrot.slane %v8872, %v9382
          %v9384 = vsel %vm9118, %v9383, %v9379
          %v9385 = vlaneseq
          %v9386 = vshrl.u32 %v9385, 7
          %v9387 = vsub.s32 %v9120, %v9386
          %v9388 = vrot.slane %v8875, %v9387
          %v9389 = vsel %vm9125, %v9388, %v9384
          %v9390 = vlaneseq
          %v9391 = vshrl.u32 %v9390, 7
          %v9392 = vsub.s32 %v9127, %v9391
          %v9393 = vrot.slane %v8878, %v9392
          %v9394 = vsel %vm9132, %v9393, %v9389
          %v9395 = vlaneseq
          %v9396 = vshrl.u32 %v9395, 7
          %v9397 = vsub.s32 %v9134, %v9396
          %v9398 = vrot.slane %v8881, %v9397
          %v9399 = vsel %vm9139, %v9398, %v9394
          %v9400 = vlaneseq
          %v9401 = vshrl.u32 %v9400, 7
          %v9402 = vsub.s32 %v9141, %v9401
          %v9403 = vrot.slane %v8884, %v9402
          %v9404 = vsel %vm9146, %v9403, %v9399
          %v9405 = vlaneseq
          %v9406 = vshrl.u32 %v9405, 7
          %v9407 = vsub.s32 %v9148, %v9406
          %v9408 = vrot.slane %v8887, %v9407
          %v9409 = vsel %vm9153, %v9408, %v9404
          %v9410 = vlaneseq
          %v9411 = vshrl.u32 %v9410, 7
          %v9412 = vsub.s32 %v9155, %v9411
          %v9413 = vrot.slane %v8890, %v9412
          %v9414 = vsel %vm9160, %v9413, %v9409
          %v9415 = vlaneseq
          %v9416 = vshrl.u32 %v9415, 7
          %v9417 = vsub.s32 %v9162, %v9416
          %v9418 = vrot.slane %v8893, %v9417
          %v9419 = vsel %vm9167, %v9418, %v9414
          %v9420 = vlaneseq
          %v9421 = vshrl.u32 %v9420, 7
          %v9422 = vsub.s32 %v9169, %v9421
          %v9423 = vrot.slane %v8896, %v9422
          %v9424 = vsel %vm9174, %v9423, %v9419
          %v9425 = vlaneseq
          %v9426 = vshrl.u32 %v9425, 7
          %v9427 = vsub.s32 %v9176, %v9426
          %v9428 = vrot.slane %v8899, %v9427
          %v9429 = vsel %vm9181, %v9428, %v9424
          %v9430 = vlaneseq
          %v9431 = vshrl.u32 %v9430, 7
          %v9432 = vsub.s32 %v9183, %v9431
          %v9433 = vrot.slane %v8902, %v9432
          %v9434 = vsel %vm9188, %v9433, %v9429
          %v9435 = vlaneseq
          %v9436 = vshrl.u32 %v9435, 7
          %v9437 = vsub.s32 %v9190, %v9436
          %v9438 = vrot.slane %v8905, %v9437
          %v9439 = vsel %vm9195, %v9438, %v9434
          %v9440 = vlaneseq
          %v9441 = vshrl.u32 %v9440, 7
          %v9442 = vsub.s32 %v9197, %v9441
          %v9443 = vrot.slane %v8908, %v9442
          %v9444 = vsel %vm9202, %v9443, %v9439
          %v9445 = vlaneseq
          %v9446 = vshrl.u32 %v9445, 7
          %v9447 = vsub.s32 %v9204, %v9446
          %v9448 = vrot.slane %v8911, %v9447
          %v9449 = vsel %vm9209, %v9448, %v9444
          %v9450 = vlaneseq
          %v9451 = vshrl.u32 %v9450, 7
          %v9452 = vsub.s32 %v9211, %v9451
          %v9453 = vrot.slane %v8914, %v9452
          %v9454 = vsel %vm9216, %v9453, %v9449
          %v9455 = vlaneseq
          %v9456 = vshrl.u32 %v9455, 7
          %v9457 = vsub.s32 %v9108, %v9456
          %v9458 = vrot.slane %v8917, %v9457
          %v9459 = vlaneseq
          %v9460 = vshrl.u32 %v9459, 7
          %v9461 = vsub.s32 %v9113, %v9460
          %v9462 = vrot.slane %v8920, %v9461
          %v9463 = vsel %vm9118, %v9462, %v9458
          %v9464 = vlaneseq
          %v9465 = vshrl.u32 %v9464, 7
          %v9466 = vsub.s32 %v9120, %v9465
          %v9467 = vrot.slane %v8923, %v9466
          %v9468 = vsel %vm9125, %v9467, %v9463
          %v9469 = vlaneseq
          %v9470 = vshrl.u32 %v9469, 7
          %v9471 = vsub.s32 %v9127, %v9470
          %v9472 = vrot.slane %v8926, %v9471
          %v9473 = vsel %vm9132, %v9472, %v9468
          %v9474 = vlaneseq
          %v9475 = vshrl.u32 %v9474, 7
          %v9476 = vsub.s32 %v9134, %v9475
          %v9477 = vrot.slane %v8929, %v9476
          %v9478 = vsel %vm9139, %v9477, %v9473
          %v9479 = vlaneseq
          %v9480 = vshrl.u32 %v9479, 7
          %v9481 = vsub.s32 %v9141, %v9480
          %v9482 = vrot.slane %v8932, %v9481
          %v9483 = vsel %vm9146, %v9482, %v9478
          %v9484 = vlaneseq
          %v9485 = vshrl.u32 %v9484, 7
          %v9486 = vsub.s32 %v9148, %v9485
          %v9487 = vrot.slane %v8935, %v9486
          %v9488 = vsel %vm9153, %v9487, %v9483
          %v9489 = vlaneseq
          %v9490 = vshrl.u32 %v9489, 7
          %v9491 = vsub.s32 %v9155, %v9490
          %v9492 = vrot.slane %v8938, %v9491
          %v9493 = vsel %vm9160, %v9492, %v9488
          %v9494 = vlaneseq
          %v9495 = vshrl.u32 %v9494, 7
          %v9496 = vsub.s32 %v9162, %v9495
          %v9497 = vrot.slane %v8941, %v9496
          %v9498 = vsel %vm9167, %v9497, %v9493
          %v9499 = vlaneseq
          %v9500 = vshrl.u32 %v9499, 7
          %v9501 = vsub.s32 %v9169, %v9500
          %v9502 = vrot.slane %v8944, %v9501
          %v9503 = vsel %vm9174, %v9502, %v9498
          %v9504 = vlaneseq
          %v9505 = vshrl.u32 %v9504, 7
          %v9506 = vsub.s32 %v9176, %v9505
          %v9507 = vrot.slane %v8947, %v9506
          %v9508 = vsel %vm9181, %v9507, %v9503
          %v9509 = vlaneseq
          %v9510 = vshrl.u32 %v9509, 7
          %v9511 = vsub.s32 %v9183, %v9510
          %v9512 = vrot.slane %v8950, %v9511
          %v9513 = vsel %vm9188, %v9512, %v9508
          %v9514 = vlaneseq
          %v9515 = vshrl.u32 %v9514, 7
          %v9516 = vsub.s32 %v9190, %v9515
          %v9517 = vrot.slane %v8953, %v9516
          %v9518 = vsel %vm9195, %v9517, %v9513
          %v9519 = vlaneseq
          %v9520 = vshrl.u32 %v9519, 7
          %v9521 = vsub.s32 %v9197, %v9520
          %v9522 = vrot.slane %v8956, %v9521
          %v9523 = vsel %vm9202, %v9522, %v9518
          %v9524 = vlaneseq
          %v9525 = vshrl.u32 %v9524, 7
          %v9526 = vsub.s32 %v9204, %v9525
          %v9527 = vrot.slane %v8959, %v9526
          %v9528 = vsel %vm9209, %v9527, %v9523
          %v9529 = vlaneseq
          %v9530 = vshrl.u32 %v9529, 7
          %v9531 = vsub.s32 %v9211, %v9530
          %v9532 = vrot.slane %v8962, %v9531
          %v9533 = vsel %vm9216, %v9532, %v9528
          %v9534 = vlaneseq
          %v9535 = vshrl.u32 %v9534, 7
          %v9536 = vsub.s32 %v9108, %v9535
          %v9537 = vrot.slane %v8965, %v9536
          %v9538 = vlaneseq
          %v9539 = vshrl.u32 %v9538, 7
          %v9540 = vsub.s32 %v9113, %v9539
          %v9541 = vrot.slane %v8968, %v9540
          %v9542 = vsel %vm9118, %v9541, %v9537
          %v9543 = vlaneseq
          %v9544 = vshrl.u32 %v9543, 7
          %v9545 = vsub.s32 %v9120, %v9544
          %v9546 = vrot.slane %v8971, %v9545
          %v9547 = vsel %vm9125, %v9546, %v9542
          %v9548 = vlaneseq
          %v9549 = vshrl.u32 %v9548, 7
          %v9550 = vsub.s32 %v9127, %v9549
          %v9551 = vrot.slane %v8974, %v9550
          %v9552 = vsel %vm9132, %v9551, %v9547
          %v9553 = vlaneseq
          %v9554 = vshrl.u32 %v9553, 7
          %v9555 = vsub.s32 %v9134, %v9554
          %v9556 = vrot.slane %v8977, %v9555
          %v9557 = vsel %vm9139, %v9556, %v9552
          %v9558 = vlaneseq
          %v9559 = vshrl.u32 %v9558, 7
          %v9560 = vsub.s32 %v9141, %v9559
          %v9561 = vrot.slane %v8980, %v9560
          %v9562 = vsel %vm9146, %v9561, %v9557
          %v9563 = vlaneseq
          %v9564 = vshrl.u32 %v9563, 7
          %v9565 = vsub.s32 %v9148, %v9564
          %v9566 = vrot.slane %v8983, %v9565
          %v9567 = vsel %vm9153, %v9566, %v9562
          %v9568 = vlaneseq
          %v9569 = vshrl.u32 %v9568, 7
          %v9570 = vsub.s32 %v9155, %v9569
          %v9571 = vrot.slane %v8986, %v9570
          %v9572 = vsel %vm9160, %v9571, %v9567
          %v9573 = vlaneseq
          %v9574 = vshrl.u32 %v9573, 7
          %v9575 = vsub.s32 %v9162, %v9574
          %v9576 = vrot.slane %v8989, %v9575
          %v9577 = vsel %vm9167, %v9576, %v9572
          %v9578 = vlaneseq
          %v9579 = vshrl.u32 %v9578, 7
          %v9580 = vsub.s32 %v9169, %v9579
          %v9581 = vrot.slane %v8992, %v9580
          %v9582 = vsel %vm9174, %v9581, %v9577
          %v9583 = vlaneseq
          %v9584 = vshrl.u32 %v9583, 7
          %v9585 = vsub.s32 %v9176, %v9584
          %v9586 = vrot.slane %v8995, %v9585
          %v9587 = vsel %vm9181, %v9586, %v9582
          %v9588 = vlaneseq
          %v9589 = vshrl.u32 %v9588, 7
          %v9590 = vsub.s32 %v9183, %v9589
          %v9591 = vrot.slane %v8998, %v9590
          %v9592 = vsel %vm9188, %v9591, %v9587
          %v9593 = vlaneseq
          %v9594 = vshrl.u32 %v9593, 7
          %v9595 = vsub.s32 %v9190, %v9594
          %v9596 = vrot.slane %v9001, %v9595
          %v9597 = vsel %vm9195, %v9596, %v9592
          %v9598 = vlaneseq
          %v9599 = vshrl.u32 %v9598, 7
          %v9600 = vsub.s32 %v9197, %v9599
          %v9601 = vrot.slane %v9004, %v9600
          %v9602 = vsel %vm9202, %v9601, %v9597
          %v9603 = vlaneseq
          %v9604 = vshrl.u32 %v9603, 7
          %v9605 = vsub.s32 %v9204, %v9604
          %v9606 = vrot.slane %v9007, %v9605
          %v9607 = vsel %vm9209, %v9606, %v9602
          %v9608 = vlaneseq
          %v9609 = vshrl.u32 %v9608, 7
          %v9610 = vsub.s32 %v9211, %v9609
          %v9611 = vrot.slane %v9010, %v9610
          %v9612 = vsel %vm9216, %v9611, %v9607
          %v9613 = vlaneseq
          %v9614 = vshrl.u32 %v9613, 7
          %v9615 = vsub.s32 %v9108, %v9614
          %v9616 = vrot.slane %v9013, %v9615
          %v9617 = vlaneseq
          %v9618 = vshrl.u32 %v9617, 7
          %v9619 = vsub.s32 %v9113, %v9618
          %v9620 = vrot.slane %v9016, %v9619
          %v9621 = vsel %vm9118, %v9620, %v9616
          %v9622 = vlaneseq
          %v9623 = vshrl.u32 %v9622, 7
          %v9624 = vsub.s32 %v9120, %v9623
          %v9625 = vrot.slane %v9019, %v9624
          %v9626 = vsel %vm9125, %v9625, %v9621
          %v9627 = vlaneseq
          %v9628 = vshrl.u32 %v9627, 7
          %v9629 = vsub.s32 %v9127, %v9628
          %v9630 = vrot.slane %v9022, %v9629
          %v9631 = vsel %vm9132, %v9630, %v9626
          %v9632 = vlaneseq
          %v9633 = vshrl.u32 %v9632, 7
          %v9634 = vsub.s32 %v9134, %v9633
          %v9635 = vrot.slane %v9025, %v9634
          %v9636 = vsel %vm9139, %v9635, %v9631
          %v9637 = vlaneseq
          %v9638 = vshrl.u32 %v9637, 7
          %v9639 = vsub.s32 %v9141, %v9638
          %v9640 = vrot.slane %v9028, %v9639
          %v9641 = vsel %vm9146, %v9640, %v9636
          %v9642 = vlaneseq
          %v9643 = vshrl.u32 %v9642, 7
          %v9644 = vsub.s32 %v9148, %v9643
          %v9645 = vrot.slane %v9031, %v9644
          %v9646 = vsel %vm9153, %v9645, %v9641
          %v9647 = vlaneseq
          %v9648 = vshrl.u32 %v9647, 7
          %v9649 = vsub.s32 %v9155, %v9648
          %v9650 = vrot.slane %v9034, %v9649
          %v9651 = vsel %vm9160, %v9650, %v9646
          %v9652 = vlaneseq
          %v9653 = vshrl.u32 %v9652, 7
          %v9654 = vsub.s32 %v9162, %v9653
          %v9655 = vrot.slane %v9037, %v9654
          %v9656 = vsel %vm9167, %v9655, %v9651
          %v9657 = vlaneseq
          %v9658 = vshrl.u32 %v9657, 7
          %v9659 = vsub.s32 %v9169, %v9658
          %v9660 = vrot.slane %v9040, %v9659
          %v9661 = vsel %vm9174, %v9660, %v9656
          %v9662 = vlaneseq
          %v9663 = vshrl.u32 %v9662, 7
          %v9664 = vsub.s32 %v9176, %v9663
          %v9665 = vrot.slane %v9043, %v9664
          %v9666 = vsel %vm9181, %v9665, %v9661
          %v9667 = vlaneseq
          %v9668 = vshrl.u32 %v9667, 7
          %v9669 = vsub.s32 %v9183, %v9668
          %v9670 = vrot.slane %v9046, %v9669
          %v9671 = vsel %vm9188, %v9670, %v9666
          %v9672 = vlaneseq
          %v9673 = vshrl.u32 %v9672, 7
          %v9674 = vsub.s32 %v9190, %v9673
          %v9675 = vrot.slane %v9049, %v9674
          %v9676 = vsel %vm9195, %v9675, %v9671
          %v9677 = vlaneseq
          %v9678 = vshrl.u32 %v9677, 7
          %v9679 = vsub.s32 %v9197, %v9678
          %v9680 = vrot.slane %v9052, %v9679
          %v9681 = vsel %vm9202, %v9680, %v9676
          %v9682 = vlaneseq
          %v9683 = vshrl.u32 %v9682, 7
          %v9684 = vsub.s32 %v9204, %v9683
          %v9685 = vrot.slane %v9055, %v9684
          %v9686 = vsel %vm9209, %v9685, %v9681
          %v9687 = vlaneseq
          %v9688 = vshrl.u32 %v9687, 7
          %v9689 = vsub.s32 %v9211, %v9688
          %v9690 = vrot.slane %v9058, %v9689
          %v9691 = vsel %vm9216, %v9690, %v9686
          %v9692 = vlaneseq
          %v9693 = vshrl.u32 %v9692, 7
          %v9694 = vsub.s32 %v9108, %v9693
          %v9695 = vrot.slane %v9061, %v9694
          %v9696 = vlaneseq
          %v9697 = vshrl.u32 %v9696, 7
          %v9698 = vsub.s32 %v9113, %v9697
          %v9699 = vrot.slane %v9064, %v9698
          %v9700 = vsel %vm9118, %v9699, %v9695
          %v9701 = vlaneseq
          %v9702 = vshrl.u32 %v9701, 7
          %v9703 = vsub.s32 %v9120, %v9702
          %v9704 = vrot.slane %v9067, %v9703
          %v9705 = vsel %vm9125, %v9704, %v9700
          %v9706 = vlaneseq
          %v9707 = vshrl.u32 %v9706, 7
          %v9708 = vsub.s32 %v9127, %v9707
          %v9709 = vrot.slane %v9070, %v9708
          %v9710 = vsel %vm9132, %v9709, %v9705
          %v9711 = vlaneseq
          %v9712 = vshrl.u32 %v9711, 7
          %v9713 = vsub.s32 %v9134, %v9712
          %v9714 = vrot.slane %v9073, %v9713
          %v9715 = vsel %vm9139, %v9714, %v9710
          %v9716 = vlaneseq
          %v9717 = vshrl.u32 %v9716, 7
          %v9718 = vsub.s32 %v9141, %v9717
          %v9719 = vrot.slane %v9076, %v9718
          %v9720 = vsel %vm9146, %v9719, %v9715
          %v9721 = vlaneseq
          %v9722 = vshrl.u32 %v9721, 7
          %v9723 = vsub.s32 %v9148, %v9722
          %v9724 = vrot.slane %v9079, %v9723
          %v9725 = vsel %vm9153, %v9724, %v9720
          %v9726 = vlaneseq
          %v9727 = vshrl.u32 %v9726, 7
          %v9728 = vsub.s32 %v9155, %v9727
          %v9729 = vrot.slane %v9082, %v9728
          %v9730 = vsel %vm9160, %v9729, %v9725
          %v9731 = vlaneseq
          %v9732 = vshrl.u32 %v9731, 7
          %v9733 = vsub.s32 %v9162, %v9732
          %v9734 = vrot.slane %v9085, %v9733
          %v9735 = vsel %vm9167, %v9734, %v9730
          %v9736 = vlaneseq
          %v9737 = vshrl.u32 %v9736, 7
          %v9738 = vsub.s32 %v9169, %v9737
          %v9739 = vrot.slane %v9088, %v9738
          %v9740 = vsel %vm9174, %v9739, %v9735
          %v9741 = vlaneseq
          %v9742 = vshrl.u32 %v9741, 7
          %v9743 = vsub.s32 %v9176, %v9742
          %v9744 = vrot.slane %v9091, %v9743
          %v9745 = vsel %vm9181, %v9744, %v9740
          %v9746 = vlaneseq
          %v9747 = vshrl.u32 %v9746, 7
          %v9748 = vsub.s32 %v9183, %v9747
          %v9749 = vrot.slane %v9094, %v9748
          %v9750 = vsel %vm9188, %v9749, %v9745
          %v9751 = vlaneseq
          %v9752 = vshrl.u32 %v9751, 7
          %v9753 = vsub.s32 %v9190, %v9752
          %v9754 = vrot.slane %v9097, %v9753
          %v9755 = vsel %vm9195, %v9754, %v9750
          %v9756 = vlaneseq
          %v9757 = vshrl.u32 %v9756, 7
          %v9758 = vsub.s32 %v9197, %v9757
          %v9759 = vrot.slane %v9100, %v9758
          %v9760 = vsel %vm9202, %v9759, %v9755
          %v9761 = vlaneseq
          %v9762 = vshrl.u32 %v9761, 7
          %v9763 = vsub.s32 %v9204, %v9762
          %v9764 = vrot.slane %v9103, %v9763
          %v9765 = vsel %vm9209, %v9764, %v9760
          %v9766 = vlaneseq
          %v9767 = vshrl.u32 %v9766, 7
          %v9768 = vsub.s32 %v9211, %v9767
          %v9769 = vrot.slane %v9106, %v9768
          %v9770 = vsel %vm9216, %v9769, %v9765
          %vm9771 = vcmask 1041409
          %v9772 = vsel %vm9771, %v9533, %v9217
          %v9773 = vsel %vm9771, %v9612, %v9296
          %v9774 = vsel %vm9771, %v9691, %v9375
          %v9775 = vsel %vm9771, %v9770, %v9454
          %v9776 = vcombine.low %v9772, %v9773
          %v9777 = vcombine.low %v9774, %v9775
          %v9779 = vunpack.c.l.s4 1983009808
          %v9780 = vunpack.c.0.s8 %v9779
          %v9781 = vlaneseq
          %v9782 = vshrl.u32 %v9781, 7
          %v9783 = vsub.s32 %v9780, %v9782
          %v9784 = vrot.slane %v9776, %v9783
          %v9786 = vunpack.c.l.s4 1983009808
          %v9787 = vunpack.c.0.s8 %v9786
          %v9788 = vlaneseq
          %v9789 = vshrl.u32 %v9788, 7
          %v9790 = vsub.s32 %v9787, %v9789
          %v9791 = vrot.slane %v9777, %v9790
          %v9792 = vcombine.low %v9784, %v9791
          %9794 = vst [vmem:[%s1264] sm:$0xff] %v9792
        $region88: #{tpu_custom_call.1} parent=71 // pred_fallthru
          _
        %s9795 = sand.u32 %s78, 1
        %s9796 = scalar_lea.sflag [#allocation5], %s9795
        %s9797 = sand.u32 %s78, 1
        %s9798 = smul.addr %s9797, 8
        %s9799 = scalar_lea.vmem [#allocation4], %s9798
        // Predicated region
        $region89: #{tpu_custom_call.1} parent=71 // pred_check
          %p9800 = pneg %p88
        $region90: #{tpu_custom_call.1} parent=71 // pred_check_branch
          %9802 = sbr.rel (%p9800) target = $region92
        $region91: #{tpu_custom_call.1} parent=71 // pred_region
          %s9804 = ssub.s32 128, 128
          %9805 = vsyncadd %s9796, %s9804
          %s9806 = smul.addr %s21, 4
          %s9807 = smul.addr %s20, 4
          %s9808 = sadd.s32 %s9806, %s9807
          %s9809 = smul.addr %s9808, 32
          %s9810 = scalar_lea.hbm %s1, %s9809
          %s9812 = sshll.u32 %s9799, 4
          %s9813 = int_to_ptr.vmem [resolvable:$true] %s9812
          %9815 = dma.vmem_to_hbm [thread:$0]  %s9813, 128, %s9810, %s9796
        $region92: #{tpu_custom_call.1} parent=71 // pred_fallthru
          _
      $region72: #{tpu_custom_call.1} parent=5 // pred_fallthru
        _
      %p9816 = scmp.le.s32.totalorder 2, %s10
      // Predicated region
      $region93: #{tpu_custom_call.1} parent=5 // pred_check
        %p9817 = pneg %p9816
      $region94: #{tpu_custom_call.1} parent=5 // pred_check_branch
        %9819 = sbr.rel (%p9817) target = $region96
      $region95: #{tpu_custom_call.1} parent=5 // pred_region
        %s9820 = ssub.s32 %s10, 2
        // Predicated region
        $region97: #{tpu_custom_call.1} parent=95 // pred_check
          %p9821 = pneg %p94
        $region98: #{tpu_custom_call.1} parent=95 // pred_check_branch
          %9823 = sbr.rel (%p9821) target = $region100
        $region99: #{tpu_custom_call.1} parent=95 // pred_region
          %s9824 = sand.u32 %s79, 1
          %s9825 = scalar_lea.sflag [#allocation5], %s9824
          %s9826 = sand.u32 %s79, 1
          %s9827 = smul.addr %s9826, 8
          %s9828 = scalar_lea.vmem [#allocation4], %s9827
          %9829 = dma.done %s9825, 128
        $region100: #{tpu_custom_call.1} parent=95 // pred_fallthru
          _
      $region96: #{tpu_custom_call.1} parent=5 // pred_fallthru
        _
    $region6: #{tpu_custom_call.1} parent=1 // loop_footer
      %s14 = sadd.s32 1, %s10
    $region7: #{tpu_custom_call.1} parent=1 // loop_footer_branch
      %9 = sbr.rel target = $region3
    $region8: #{tpu_custom_call.1} parent=1 // loop_exit
      _
    %9830 = vsyncpa [#allocation5], 1
    %s9831 = scalar_lea.sflag [#allocation5], 1
    %9832 = vsyncpa %s9831, 1

</llo_original>
